<compile_context>
chip_gen: v5e
topology: v5e:2x2
jax: 0.10.0
libtpu: 0.0.40
codegen_flags: <defaults>
</compile_context>

<pallas_src>
import jax
import jax.numpy as jnp
from jax import lax
from jax.experimental import pallas as pl
from jax.experimental.pallas import tpu as pltpu


_TAPS = tuple((dy, dx) for dy in range(3) for dx in range(3))


# ---------------------------------------------------------------------------
# Fused DQN forward kernel
# ---------------------------------------------------------------------------
def _dqn_kernel(x_ref, w1_ref, b1_ref, w2_ref, b2_ref,
                w1r_ref, fb1_ref, w2f_ref, fb2_ref, w3f_ref, fb3_ref,
                o_ref, h1p_scr, h2_scr, z1_acc):
    k = pl.program_id(0)
    nk = pl.num_programs(0)

    n = x_ref.shape[0]
    H = x_ref.shape[1] - 2          # input arrives spatially pre-padded by 1
    W = x_ref.shape[2] - 2
    C1 = w1_ref.shape[1]
    C2 = w2_ref.shape[2]
    HW = H * W
    tpk = h2_scr.shape[2]           # TP * C2  (fc1 K-tile width)
    TP = tpk // C2

    # -- grid step 0: conv1 (VPU) + conv2 (MXU) + repack, all VMEM-resident ---
    @pl.when(k == 0)
    def _():
        # conv1 + ReLU: Cin=1, K=9 -> shift-and-FMA on the VPU beats the MXU.
        w1 = w1_ref[...]                                    # (9, C1) f32
        acc1 = jnp.zeros((n, H, W, C1), jnp.float32)
        for t, (dy, dx) in enumerate(_TAPS):
            tap = x_ref[:, dy:dy + H, dx:dx + W, :]         # (n, H, W, 1) f32
            acc1 = acc1 + tap * w1[t:t + 1, :]              # lane-broadcast FMA
        h1 = jnp.maximum(acc1 + b1_ref[...], 0.0)           # (n, H, W, C1)

        # Zero-padded conv2 input in VMEM scratch; ref windowing only.
        h1p_scr[...] = jnp.zeros(h1p_scr.shape, h1p_scr.dtype)
        h1p_scr[:, 1:H + 1, 1:W + 1, :] = h1

        # conv2 + ReLU: shift-and-accumulate -> 9 dense (n*HW, C1)x(C1, C2)
        # MXU matmuls, f32 accumulation.
        acc2 = jnp.zeros((n * HW, C2), jnp.float32)
        for t, (dy, dx) in enumerate(_TAPS):
            tap = h1p_scr[:, dy:dy + H, dx:dx + W, :]       # (n, H, W, C1) f32
            tap2 = tap.reshape(n * HW, C1).astype(jnp.bfloat16)
            acc2 = acc2 + jnp.dot(tap2, w2_ref[t],
                                  preferred_element_type=jnp.float32)
        h2 = jnp.maximum(acc2 + b2_ref[...], 0.0)           # (n*HW, C2) f32

        # Repack conv2 output ONCE into the flat fc1 layout (pixel-major,
        # channel-minor, bf16) so every grid step's fc1 tile is one 2-D dot.
        h2_3d = h2.reshape(n, HW, C2)
        for p in range(HW):
            blk, j = p // TP, p % TP
            h2_scr[blk, :, j * C2:(j + 1) * C2] = h2_3d[:, p, :].astype(h2_scr.dtype)

        z1_acc[...] = jnp.zeros_like(z1_acc)

    # -- every step: one K-tile of fc1 as a single dense 2-D MXU dot ----------
    lhs = h2_scr[k]                                         # (n, TP*C2) bf16
    z1_acc[...] += jnp.dot(lhs, w1r_ref[...],
                           preferred_element_type=jnp.float32)

    # -- last step: fc1 epilogue + fc2 + fc3, single output store -------------
    @pl.when(k == nk - 1)
    def _():
        z1 = jnp.maximum(z1_acc[...] + fb1_ref[...], 0.0)   # (n, 512) f32
        z2 = jnp.dot(z1.astype(jnp.bfloat16), w2f_ref[...],
                     preferred_element_type=jnp.float32) + fb2_ref[...]
        z2 = jnp.maximum(z2, 0.0)                           # (n, 1024)
        z3 = jnp.dot(z2.astype(jnp.bfloat16), w3f_ref[...],
                     preferred_element_type=jnp.float32) + fb3_ref[...]
        o_ref[...] = z3.astype(o_ref.dtype)                 # (n, A)


# ---------------------------------------------------------------------------
# Wrapper: one-time weight re-layout (load-time work) + single pallas_call
# ---------------------------------------------------------------------------
def _conv_w_taps(w_oihw):
    """PyTorch (Cout, Cin, KH, KW) -> per-tap matmul slices (KH*KW, Cin, Cout)."""
    Cout, Cin, KH, KW = w_oihw.shape
    return jnp.transpose(w_oihw, (2, 3, 1, 0)).reshape(KH * KW, Cin, Cout)


def dqn_forward(x_nchw, params, *, fc1_k_tile_pixels=32):
    # fc1_k_tile_pixels: 32 is a good default on v7x/v6e; use 8-16 on v5e to
    # stream the fc1 weight DMA in finer blocks behind the conv work.
    N, Cin, H, W = x_nchw.shape
    HW = H * W
    C1 = params["conv1_w"].shape[0]
    C2 = params["conv2_w"].shape[0]
    D1 = params["fc1_w"].shape[1]
    D2 = params["fc2_w"].shape[1]
    A = params["fc3_w"].shape[1]

    TP = fc1_k_tile_pixels if HW % fc1_k_tile_pixels == 0 else HW
    nk = HW // TP
    tpk = TP * C2

    # One-time layout glue (weights + a tiny input transpose/pad).  In a real
    # deployment this is done once at weight-load time.
    xp = jnp.pad(jnp.transpose(x_nchw, (0, 2, 3, 1)).astype(jnp.float32),
                 ((0, 0), (1, 1), (1, 1), (0, 0)))                  # (N,H+2,W+2,1)
    w1 = _conv_w_taps(params["conv1_w"]).reshape(9 * Cin, C1).astype(jnp.float32)
    b1 = params["conv1_b"].reshape(1, C1).astype(jnp.float32)
    w2 = _conv_w_taps(params["conv2_w"]).astype(jnp.bfloat16)       # (9, C1, C2)
    b2 = params["conv2_b"].reshape(1, C2).astype(jnp.float32)
    # fc1 rows: NCHW-flatten index (c*HW + p) -> pixel-major (p*C2 + c)
    w1r = (params["fc1_w"].reshape(C2, HW, D1).transpose(1, 0, 2)
           .reshape(HW * C2, D1).astype(jnp.bfloat16))
    fb1 = params["fc1_b"].reshape(1, D1).astype(jnp.float32)
    w2f = params["fc2_w"].astype(jnp.bfloat16)
    fb2 = params["fc2_b"].reshape(1, D2).astype(jnp.float32)
    w3f = params["fc3_w"].astype(jnp.bfloat16)
    fb3 = params["fc3_b"].reshape(1, A).astype(jnp.float32)

    def const_spec(shape):
        zeros = (0,) * len(shape)
        return pl.BlockSpec(shape, lambda k, _z=zeros: _z)

    # ~double-buffered big weight blocks + slack; well under VMEM on all gens.
    vmem_limit = 2 * 2 * (tpk * D1 + D1 * D2) + 12 * 1024 * 1024

    return pl.pallas_call(
        _dqn_kernel,
        out_shape=jax.ShapeDtypeStruct((N, A), jnp.float32),
        grid_spec=pltpu.PrefetchScalarGridSpec(
            num_scalar_prefetch=0,
            grid=(nk,),
            in_specs=[
                const_spec((N, H + 2, W + 2, Cin)),               # padded image
                const_spec((9 * Cin, C1)),                        # conv1 taps
                const_spec((1, C1)),                              # conv1 bias
                const_spec((9, C1, C2)),                          # conv2 taps
                const_spec((1, C2)),                              # conv2 bias
                pl.BlockSpec((tpk, D1), lambda k: (k, 0)),        # fc1 W (K-tiled)
                const_spec((1, D1)),                              # fc1 bias
                const_spec((D1, D2)),                             # fc2 W
                const_spec((1, D2)),                              # fc2 bias
                const_spec((D2, A)),                              # fc3 W
                const_spec((1, A)),                               # fc3 bias
            ],
            out_specs=pl.BlockSpec((N, A), lambda k: (0, 0)),
            scratch_shapes=[
                pltpu.VMEM((N, H + 2, W + 2, C1), jnp.float32),   # padded conv2 input
                pltpu.VMEM((nk, N, tpk), jnp.bfloat16),           # flat fc1 activations
                pltpu.VMEM((N, D1), jnp.float32),                 # fc1 accumulator
            ],
        ),
        compiler_params=pltpu.CompilerParams(
            dimension_semantics=("arbitrary",),                   # fc1 K reduction axis
            vmem_limit_bytes=vmem_limit,
        ),
    )(xp, w1, b1, w2, b2, w1r, fb1, w2f, fb2, w3f, fb3)


# ---------------------------------------------------------------------------
# Pure-JAX reference with PyTorch semantics (NCHW conv, NCHW flatten)
# ---------------------------------------------------------------------------
def reference_forward(x_nchw, params):
    dn = ("NCHW", "OIHW", "NCHW")
    y = lax.conv_general_dilated(x_nchw, params["conv1_w"], (1, 1),
                                 ((1, 1), (1, 1)), dimension_numbers=dn)
    y = jnp.maximum(y + params["conv1_b"][None, :, None, None], 0.0)
    y = lax.conv_general_dilated(y, params["conv2_w"], (1, 1),
                                 ((1, 1), (1, 1)), dimension_numbers=dn)
    y = jnp.maximum(y + params["conv2_b"][None, :, None, None], 0.0)
    feat = y.reshape(y.shape[0], -1)
    z = jnp.maximum(feat @ params["fc1_w"] + params["fc1_b"], 0.0)
    z = jnp.maximum(z @ params["fc2_w"] + params["fc2_b"], 0.0)
    return z @ params["fc3_w"] + params["fc3_b"]


# ---------------------------------------------------------------------------
if __name__ == "__main__":
    N, H, W = 2, 8, 8            # input_shape = (1, 8, 8), batch = 2
    num_actions = 4

    key = jax.random.PRNGKey(0)
    ks = jax.random.split(key, 11)
    params = {
        "conv1_w": jax.random.normal(ks[0], (32, 1, 3, 3), jnp.float32) * 0.1,
        "conv1_b": jax.random.normal(ks[1], (32,), jnp.float32) * 0.1,
        "conv2_w": jax.random.normal(ks[2], (64, 32, 3, 3), jnp.float32) * 0.05,
        "conv2_b": jax.random.normal(ks[3], (64,), jnp.float32) * 0.05,
        "fc1_w":   jax.random.normal(ks[4], (64 * H * W, 512), jnp.float32) * 0.02,
        "fc1_b":   jax.random.normal(ks[5], (512,), jnp.float32) * 0.02,
        "fc2_w":   jax.random.normal(ks[6], (512, 1024), jnp.float32) * 0.05,
        "fc2_b":   jax.random.normal(ks[7], (1024,), jnp.float32) * 0.05,
        "fc3_w":   jax.random.normal(ks[8], (1024, num_actions), jnp.float32) * 0.05,
        "fc3_b":   jax.random.normal(ks[9], (num_actions,), jnp.float32) * 0.05,
    }
    x = jax.random.normal(ks[10], (N, 1, H, W), jnp.float32)

    fwd = jax.jit(dqn_forward)
    out = jax.block_until_ready(fwd(x, params))
    ref = jax.block_until_ready(reference_forward(x, params))

    assert out.shape == (N, num_actions), out.shape
    max_err = float(jnp.max(jnp.abs(out - ref)))
    assert max_err < 5e-2, f"mismatch vs reference: max_err={max_err}"
    print("KERNEL_OK")
</pallas_src>

<mosaic_0001>
module attributes {stable_mosaic.version = 11 : i64} {
  func.func @_dqn_kernel(%arg0: i32, %arg1: memref<2x10x10x1xf32, #tpu.memory_space<vmem>>, %arg2: memref<9x32xf32, #tpu.memory_space<vmem>>, %arg3: memref<1x32xf32, #tpu.memory_space<vmem>>, %arg4: memref<9x32x64xbf16, #tpu.memory_space<vmem>>, %arg5: memref<1x64xf32, #tpu.memory_space<vmem>>, %arg6: memref<2048x512xbf16, #tpu.memory_space<vmem>>, %arg7: memref<1x512xf32, #tpu.memory_space<vmem>>, %arg8: memref<512x1024xbf16, #tpu.memory_space<vmem>>, %arg9: memref<1x1024xf32, #tpu.memory_space<vmem>>, %arg10: memref<1024x4xbf16, #tpu.memory_space<vmem>>, %arg11: memref<1x4xf32, #tpu.memory_space<vmem>>, %arg12: memref<2x4xf32, #tpu.memory_space<vmem>>, %arg13: memref<2x10x10x32xf32, #tpu.memory_space<vmem>>, %arg14: memref<2x2x2048xbf16, #tpu.memory_space<vmem>>, %arg15: memref<2x512xf32, #tpu.memory_space<vmem>>) attributes {dimension_semantics = [#tpu.dimension_semantics<arbitrary>], iteration_bounds = array<i64: 2>, scalar_prefetch = 0 : i64, scratch_operands = 3 : i64, tpu.core_type = #tpu.core_type<tc>, window_params = [{pipeline_mode = #tpu.pipeline_mode<synchronous>, transform_indices = @transform_0, window_bounds = array<i64: 2, 10, 10, 1>}, {pipeline_mode = #tpu.pipeline_mode<synchronous>, transform_indices = @transform_1, window_bounds = array<i64: 9, 32>}, {pipeline_mode = #tpu.pipeline_mode<synchronous>, transform_indices = @transform_2, window_bounds = array<i64: 1, 32>}, {pipeline_mode = #tpu.pipeline_mode<synchronous>, transform_indices = @transform_3, window_bounds = array<i64: 9, 32, 64>}, {pipeline_mode = #tpu.pipeline_mode<synchronous>, transform_indices = @transform_4, window_bounds = array<i64: 1, 64>}, {transform_indices = @transform_5, window_bounds = array<i64: 2048, 512>}, {pipeline_mode = #tpu.pipeline_mode<synchronous>, transform_indices = @transform_6, window_bounds = array<i64: 1, 512>}, {pipeline_mode = #tpu.pipeline_mode<synchronous>, transform_indices = @transform_7, window_bounds = array<i64: 512, 1024>}, {pipeline_mode = #tpu.pipeline_mode<synchronous>, transform_indices = @transform_8, window_bounds = array<i64: 1, 1024>}, {pipeline_mode = #tpu.pipeline_mode<synchronous>, transform_indices = @transform_9, window_bounds = array<i64: 1024, 4>}, {pipeline_mode = #tpu.pipeline_mode<synchronous>, transform_indices = @transform_10, window_bounds = array<i64: 1, 4>}, {pipeline_mode = #tpu.pipeline_mode<synchronous>, transform_indices = @transform_11, window_bounds = array<i64: 2, 4>}]} {
    %c0_i32 = arith.constant 0 : i32
    %0 = arith.cmpi eq, %arg0, %c0_i32 : i32
    %1 = arith.extui %0 : i1 to i32
    %c0_i32_0 = arith.constant 0 : i32
    %2 = arith.cmpi ne, %1, %c0_i32_0 : i32
    scf.if %2 {
      %c0_9 = arith.constant 0 : index
      %c0_10 = arith.constant 0 : index
      %14 = vector.load %arg2[%c0_9, %c0_10] : memref<9x32xf32, #tpu.memory_space<vmem>>, vector<9x32xf32>
      %cst_11 = arith.constant 0.000000e+00 : f32
      %15 = vector.broadcast %cst_11 : f32 to vector<2x8x8x32xf32>
      %c0_12 = arith.constant 0 : index
      %c0_13 = arith.constant 0 : index
      %c0_14 = arith.constant 0 : index
      %c0_15 = arith.constant 0 : index
      %16 = vector.load %arg1[%c0_12, %c0_13, %c0_14, %c0_15] : memref<2x10x10x1xf32, #tpu.memory_space<vmem>>, vector<2x8x8x1xf32>
      %17 = vector.extract_strided_slice %14 {offsets = [0, 0], sizes = [1, 32], strides = [1, 1]} : vector<9x32xf32> to vector<1x32xf32>
      %18 = vector.shape_cast %17 : vector<1x32xf32> to vector<1x1x1x32xf32>
      %19 = vector.broadcast %16 : vector<2x8x8x1xf32> to vector<2x8x8x32xf32>
      %20 = vector.broadcast %18 : vector<1x1x1x32xf32> to vector<2x8x8x32xf32>
      %21 = arith.mulf %19, %20 : vector<2x8x8x32xf32>
      %22 = arith.addf %15, %21 : vector<2x8x8x32xf32>
      %c0_16 = arith.constant 0 : index
      %c0_17 = arith.constant 0 : index
      %c1 = arith.constant 1 : index
      %c0_18 = arith.constant 0 : index
      %23 = vector.load %arg1[%c0_16, %c0_17, %c1, %c0_18] : memref<2x10x10x1xf32, #tpu.memory_space<vmem>>, vector<2x8x8x1xf32>
      %24 = vector.extract_strided_slice %14 {offsets = [1, 0], sizes = [1, 32], strides = [1, 1]} : vector<9x32xf32> to vector<1x32xf32>
      %25 = vector.shape_cast %24 : vector<1x32xf32> to vector<1x1x1x32xf32>
      %26 = vector.broadcast %23 : vector<2x8x8x1xf32> to vector<2x8x8x32xf32>
      %27 = vector.broadcast %25 : vector<1x1x1x32xf32> to vector<2x8x8x32xf32>
      %28 = arith.mulf %26, %27 : vector<2x8x8x32xf32>
      %29 = arith.addf %22, %28 : vector<2x8x8x32xf32>
      %c0_19 = arith.constant 0 : index
      %c0_20 = arith.constant 0 : index
      %c2 = arith.constant 2 : index
      %c0_21 = arith.constant 0 : index
      %30 = vector.load %arg1[%c0_19, %c0_20, %c2, %c0_21] : memref<2x10x10x1xf32, #tpu.memory_space<vmem>>, vector<2x8x8x1xf32>
      %31 = vector.extract_strided_slice %14 {offsets = [2, 0], sizes = [1, 32], strides = [1, 1]} : vector<9x32xf32> to vector<1x32xf32>
      %32 = vector.shape_cast %31 : vector<1x32xf32> to vector<1x1x1x32xf32>
      %33 = vector.broadcast %30 : vector<2x8x8x1xf32> to vector<2x8x8x32xf32>
      %34 = vector.broadcast %32 : vector<1x1x1x32xf32> to vector<2x8x8x32xf32>
      %35 = arith.mulf %33, %34 : vector<2x8x8x32xf32>
      %36 = arith.addf %29, %35 : vector<2x8x8x32xf32>
      %c0_22 = arith.constant 0 : index
      %c1_23 = arith.constant 1 : index
      %c0_24 = arith.constant 0 : index
      %c0_25 = arith.constant 0 : index
      %37 = vector.load %arg1[%c0_22, %c1_23, %c0_24, %c0_25] : memref<2x10x10x1xf32, #tpu.memory_space<vmem>>, vector<2x8x8x1xf32>
      %38 = vector.extract_strided_slice %14 {offsets = [3, 0], sizes = [1, 32], strides = [1, 1]} : vector<9x32xf32> to vector<1x32xf32>
      %39 = vector.shape_cast %38 : vector<1x32xf32> to vector<1x1x1x32xf32>
      %40 = vector.broadcast %37 : vector<2x8x8x1xf32> to vector<2x8x8x32xf32>
      %41 = vector.broadcast %39 : vector<1x1x1x32xf32> to vector<2x8x8x32xf32>
      %42 = arith.mulf %40, %41 : vector<2x8x8x32xf32>
      %43 = arith.addf %36, %42 : vector<2x8x8x32xf32>
      %c0_26 = arith.constant 0 : index
      %c1_27 = arith.constant 1 : index
      %c1_28 = arith.constant 1 : index
      %c0_29 = arith.constant 0 : index
      %44 = vector.load %arg1[%c0_26, %c1_27, %c1_28, %c0_29] : memref<2x10x10x1xf32, #tpu.memory_space<vmem>>, vector<2x8x8x1xf32>
      %45 = vector.extract_strided_slice %14 {offsets = [4, 0], sizes = [1, 32], strides = [1, 1]} : vector<9x32xf32> to vector<1x32xf32>
      %46 = vector.shape_cast %45 : vector<1x32xf32> to vector<1x1x1x32xf32>
      %47 = vector.broadcast %44 : vector<2x8x8x1xf32> to vector<2x8x8x32xf32>
      %48 = vector.broadcast %46 : vector<1x1x1x32xf32> to vector<2x8x8x32xf32>
      %49 = arith.mulf %47, %48 : vector<2x8x8x32xf32>
      %50 = arith.addf %43, %49 : vector<2x8x8x32xf32>
      %c0_30 = arith.constant 0 : index
      %c1_31 = arith.constant 1 : index
      %c2_32 = arith.constant 2 : index
      %c0_33 = arith.constant 0 : index
      %51 = vector.load %arg1[%c0_30, %c1_31, %c2_32, %c0_33] : memref<2x10x10x1xf32, #tpu.memory_space<vmem>>, vector<2x8x8x1xf32>
      %52 = vector.extract_strided_slice %14 {offsets = [5, 0], sizes = [1, 32], strides = [1, 1]} : vector<9x32xf32> to vector<1x32xf32>
      %53 = vector.shape_cast %52 : vector<1x32xf32> to vector<1x1x1x32xf32>
      %54 = vector.broadcast %51 : vector<2x8x8x1xf32> to vector<2x8x8x32xf32>
      %55 = vector.broadcast %53 : vector<1x1x1x32xf32> to vector<2x8x8x32xf32>
      %56 = arith.mulf %54, %55 : vector<2x8x8x32xf32>
      %57 = arith.addf %50, %56 : vector<2x8x8x32xf32>
      %c0_34 = arith.constant 0 : index
      %c2_35 = arith.constant 2 : index
      %c0_36 = arith.constant 0 : index
      %c0_37 = arith.constant 0 : index
      %58 = vector.load %arg1[%c0_34, %c2_35, %c0_36, %c0_37] : memref<2x10x10x1xf32, #tpu.memory_space<vmem>>, vector<2x8x8x1xf32>
      %59 = vector.extract_strided_slice %14 {offsets = [6, 0], sizes = [1, 32], strides = [1, 1]} : vector<9x32xf32> to vector<1x32xf32>
      %60 = vector.shape_cast %59 : vector<1x32xf32> to vector<1x1x1x32xf32>
      %61 = vector.broadcast %58 : vector<2x8x8x1xf32> to vector<2x8x8x32xf32>
      %62 = vector.broadcast %60 : vector<1x1x1x32xf32> to vector<2x8x8x32xf32>
      %63 = arith.mulf %61, %62 : vector<2x8x8x32xf32>
      %64 = arith.addf %57, %63 : vector<2x8x8x32xf32>
      %c0_38 = arith.constant 0 : index
      %c2_39 = arith.constant 2 : index
      %c1_40 = arith.constant 1 : index
      %c0_41 = arith.constant 0 : index
      %65 = vector.load %arg1[%c0_38, %c2_39, %c1_40, %c0_41] : memref<2x10x10x1xf32, #tpu.memory_space<vmem>>, vector<2x8x8x1xf32>
      %66 = vector.extract_strided_slice %14 {offsets = [7, 0], sizes = [1, 32], strides = [1, 1]} : vector<9x32xf32> to vector<1x32xf32>
      %67 = vector.shape_cast %66 : vector<1x32xf32> to vector<1x1x1x32xf32>
      %68 = vector.broadcast %65 : vector<2x8x8x1xf32> to vector<2x8x8x32xf32>
      %69 = vector.broadcast %67 : vector<1x1x1x32xf32> to vector<2x8x8x32xf32>
      %70 = arith.mulf %68, %69 : vector<2x8x8x32xf32>
      %71 = arith.addf %64, %70 : vector<2x8x8x32xf32>
      %c0_42 = arith.constant 0 : index
      %c2_43 = arith.constant 2 : index
      %c2_44 = arith.constant 2 : index
      %c0_45 = arith.constant 0 : index
      %72 = vector.load %arg1[%c0_42, %c2_43, %c2_44, %c0_45] : memref<2x10x10x1xf32, #tpu.memory_space<vmem>>, vector<2x8x8x1xf32>
      %73 = vector.extract_strided_slice %14 {offsets = [8, 0], sizes = [1, 32], strides = [1, 1]} : vector<9x32xf32> to vector<1x32xf32>
      %74 = vector.shape_cast %73 : vector<1x32xf32> to vector<1x1x1x32xf32>
      %75 = vector.broadcast %72 : vector<2x8x8x1xf32> to vector<2x8x8x32xf32>
      %76 = vector.broadcast %74 : vector<1x1x1x32xf32> to vector<2x8x8x32xf32>
      %77 = arith.mulf %75, %76 : vector<2x8x8x32xf32>
      %78 = arith.addf %71, %77 : vector<2x8x8x32xf32>
      %c0_46 = arith.constant 0 : index
      %c0_47 = arith.constant 0 : index
      %79 = vector.load %arg3[%c0_46, %c0_47] : memref<1x32xf32, #tpu.memory_space<vmem>>, vector<1x32xf32>
      %80 = vector.shape_cast %79 : vector<1x32xf32> to vector<1x1x1x32xf32>
      %81 = vector.broadcast %80 : vector<1x1x1x32xf32> to vector<2x8x8x32xf32>
      %82 = arith.addf %78, %81 : vector<2x8x8x32xf32>
      %cst_48 = arith.constant 0.000000e+00 : f32
      %83 = vector.broadcast %cst_48 : f32 to vector<2x8x8x32xf32>
      %84 = arith.maximumf %82, %83 : vector<2x8x8x32xf32>
      %cst_49 = arith.constant 0.000000e+00 : f32
      %85 = vector.broadcast %cst_49 : f32 to vector<2x10x10x32xf32>
      %c0_50 = arith.constant 0 : index
      %c0_51 = arith.constant 0 : index
      %c0_52 = arith.constant 0 : index
      %c0_53 = arith.constant 0 : index
      %86 = vector.load %arg13[%c0_50, %c0_51, %c0_52, %c0_53] : memref<2x10x10x32xf32, #tpu.memory_space<vmem>>, vector<2x10x10x32xf32>
      tpu.vector_store %arg13[%c0_50, %c0_51, %c0_52, %c0_53], %85 {strides = array<i32>} : memref<2x10x10x32xf32, #tpu.memory_space<vmem>>, vector<2x10x10x32xf32>,
      %c0_54 = arith.constant 0 : index
      %c1_55 = arith.constant 1 : index
      %c1_56 = arith.constant 1 : index
      %c0_57 = arith.constant 0 : index
      %87 = vector.load %arg13[%c0_54, %c1_55, %c1_56, %c0_57] : memref<2x10x10x32xf32, #tpu.memory_space<vmem>>, vector<2x8x8x32xf32>
      tpu.vector_store %arg13[%c0_54, %c1_55, %c1_56, %c0_57], %84 {strides = array<i32>} : memref<2x10x10x32xf32, #tpu.memory_space<vmem>>, vector<2x8x8x32xf32>,
      %cst_58 = arith.constant 0.000000e+00 : f32
      %88 = vector.broadcast %cst_58 : f32 to vector<128x64xf32>
      %c0_59 = arith.constant 0 : index
      %c0_60 = arith.constant 0 : index
      %c0_61 = arith.constant 0 : index
      %c0_62 = arith.constant 0 : index
      %89 = vector.load %arg13[%c0_59, %c0_60, %c0_61, %c0_62] : memref<2x10x10x32xf32, #tpu.memory_space<vmem>>, vector<2x8x8x32xf32>
      %90 = vector.shape_cast %89 : vector<2x8x8x32xf32> to vector<128x32xf32>
      %91 = arith.truncf %90 : vector<128x32xf32> to vector<128x32xbf16>
      %c0_63 = arith.constant 0 : index
      %c0_64 = arith.constant 0 : index
      %c0_65 = arith.constant 0 : index
      %92 = vector.load %arg4[%c0_63, %c0_64, %c0_65] : memref<9x32x64xbf16, #tpu.memory_space<vmem>>, vector<1x32x64xbf16>
      %93 = vector.shape_cast %92 : vector<1x32x64xbf16> to vector<32x64xbf16>
      %cst_66 = arith.constant dense<0.000000e+00> : vector<128x64xf32>
      %94 = tpu.matmul %91, %93, %cst_66 {dimension_numbers = #tpu.dot_dimension_numbers<[1], [0], [0], [1], [0, 0, 1, 1], [], []>} : vector<128x32xbf16>, vector<32x64xbf16>, vector<128x64xf32> -> vector<128x64xf32>
      %95 = arith.addf %88, %94 : vector<128x64xf32>
      %c0_67 = arith.constant 0 : index
      %c0_68 = arith.constant 0 : index
      %c1_69 = arith.constant 1 : index
      %c0_70 = arith.constant 0 : index
      %96 = vector.load %arg13[%c0_67, %c0_68, %c1_69, %c0_70] : memref<2x10x10x32xf32, #tpu.memory_space<vmem>>, vector<2x8x8x32xf32>
      %97 = vector.shape_cast %96 : vector<2x8x8x32xf32> to vector<128x32xf32>
      %98 = arith.truncf %97 : vector<128x32xf32> to vector<128x32xbf16>
      %c1_71 = arith.constant 1 : index
      %c0_72 = arith.constant 0 : index
      %c0_73 = arith.constant 0 : index
      %99 = vector.load %arg4[%c1_71, %c0_72, %c0_73] : memref<9x32x64xbf16, #tpu.memory_space<vmem>>, vector<1x32x64xbf16>
      %100 = vector.shape_cast %99 : vector<1x32x64xbf16> to vector<32x64xbf16>
      %cst_74 = arith.constant dense<0.000000e+00> : vector<128x64xf32>
      %101 = tpu.matmul %98, %100, %cst_74 {dimension_numbers = #tpu.dot_dimension_numbers<[1], [0], [0], [1], [0, 0, 1, 1], [], []>} : vector<128x32xbf16>, vector<32x64xbf16>, vector<128x64xf32> -> vector<128x64xf32>
      %102 = arith.addf %95, %101 : vector<128x64xf32>
      %c0_75 = arith.constant 0 : index
      %c0_76 = arith.constant 0 : index
      %c2_77 = arith.constant 2 : index
      %c0_78 = arith.constant 0 : index
      %103 = vector.load %arg13[%c0_75, %c0_76, %c2_77, %c0_78] : memref<2x10x10x32xf32, #tpu.memory_space<vmem>>, vector<2x8x8x32xf32>
      %104 = vector.shape_cast %103 : vector<2x8x8x32xf32> to vector<128x32xf32>
      %105 = arith.truncf %104 : vector<128x32xf32> to vector<128x32xbf16>
      %c2_79 = arith.constant 2 : index
      %c0_80 = arith.constant 0 : index
      %c0_81 = arith.constant 0 : index
      %106 = vector.load %arg4[%c2_79, %c0_80, %c0_81] : memref<9x32x64xbf16, #tpu.memory_space<vmem>>, vector<1x32x64xbf16>
      %107 = vector.shape_cast %106 : vector<1x32x64xbf16> to vector<32x64xbf16>
      %cst_82 = arith.constant dense<0.000000e+00> : vector<128x64xf32>
      %108 = tpu.matmul %105, %107, %cst_82 {dimension_numbers = #tpu.dot_dimension_numbers<[1], [0], [0], [1], [0, 0, 1, 1], [], []>} : vector<128x32xbf16>, vector<32x64xbf16>, vector<128x64xf32> -> vector<128x64xf32>
      %109 = arith.addf %102, %108 : vector<128x64xf32>
      %c0_83 = arith.constant 0 : index
      %c1_84 = arith.constant 1 : index
      %c0_85 = arith.constant 0 : index
      %c0_86 = arith.constant 0 : index
      %110 = vector.load %arg13[%c0_83, %c1_84, %c0_85, %c0_86] : memref<2x10x10x32xf32, #tpu.memory_space<vmem>>, vector<2x8x8x32xf32>
      %111 = vector.shape_cast %110 : vector<2x8x8x32xf32> to vector<128x32xf32>
      %112 = arith.truncf %111 : vector<128x32xf32> to vector<128x32xbf16>
      %c3 = arith.constant 3 : index
      %c0_87 = arith.constant 0 : index
      %c0_88 = arith.constant 0 : index
      %113 = vector.load %arg4[%c3, %c0_87, %c0_88] : memref<9x32x64xbf16, #tpu.memory_space<vmem>>, vector<1x32x64xbf16>
      %114 = vector.shape_cast %113 : vector<1x32x64xbf16> to vector<32x64xbf16>
      %cst_89 = arith.constant dense<0.000000e+00> : vector<128x64xf32>
      %115 = tpu.matmul %112, %114, %cst_89 {dimension_numbers = #tpu.dot_dimension_numbers<[1], [0], [0], [1], [0, 0, 1, 1], [], []>} : vector<128x32xbf16>, vector<32x64xbf16>, vector<128x64xf32> -> vector<128x64xf32>
      %116 = arith.addf %109, %115 : vector<128x64xf32>
      %c0_90 = arith.constant 0 : index
      %c1_91 = arith.constant 1 : index
      %c1_92 = arith.constant 1 : index
      %c0_93 = arith.constant 0 : index
      %117 = vector.load %arg13[%c0_90, %c1_91, %c1_92, %c0_93] : memref<2x10x10x32xf32, #tpu.memory_space<vmem>>, vector<2x8x8x32xf32>
      %118 = vector.shape_cast %117 : vector<2x8x8x32xf32> to vector<128x32xf32>
      %119 = arith.truncf %118 : vector<128x32xf32> to vector<128x32xbf16>
      %c4 = arith.constant 4 : index
      %c0_94 = arith.constant 0 : index
      %c0_95 = arith.constant 0 : index
      %120 = vector.load %arg4[%c4, %c0_94, %c0_95] : memref<9x32x64xbf16, #tpu.memory_space<vmem>>, vector<1x32x64xbf16>
      %121 = vector.shape_cast %120 : vector<1x32x64xbf16> to vector<32x64xbf16>
      %cst_96 = arith.constant dense<0.000000e+00> : vector<128x64xf32>
      %122 = tpu.matmul %119, %121, %cst_96 {dimension_numbers = #tpu.dot_dimension_numbers<[1], [0], [0], [1], [0, 0, 1, 1], [], []>} : vector<128x32xbf16>, vector<32x64xbf16>, vector<128x64xf32> -> vector<128x64xf32>
      %123 = arith.addf %116, %122 : vector<128x64xf32>
      %c0_97 = arith.constant 0 : index
      %c1_98 = arith.constant 1 : index
      %c2_99 = arith.constant 2 : index
      %c0_100 = arith.constant 0 : index
      %124 = vector.load %arg13[%c0_97, %c1_98, %c2_99, %c0_100] : memref<2x10x10x32xf32, #tpu.memory_space<vmem>>, vector<2x8x8x32xf32>
      %125 = vector.shape_cast %124 : vector<2x8x8x32xf32> to vector<128x32xf32>
      %126 = arith.truncf %125 : vector<128x32xf32> to vector<128x32xbf16>
      %c5 = arith.constant 5 : index
      %c0_101 = arith.constant 0 : index
      %c0_102 = arith.constant 0 : index
      %127 = vector.load %arg4[%c5, %c0_101, %c0_102] : memref<9x32x64xbf16, #tpu.memory_space<vmem>>, vector<1x32x64xbf16>
      %128 = vector.shape_cast %127 : vector<1x32x64xbf16> to vector<32x64xbf16>
      %cst_103 = arith.constant dense<0.000000e+00> : vector<128x64xf32>
      %129 = tpu.matmul %126, %128, %cst_103 {dimension_numbers = #tpu.dot_dimension_numbers<[1], [0], [0], [1], [0, 0, 1, 1], [], []>} : vector<128x32xbf16>, vector<32x64xbf16>, vector<128x64xf32> -> vector<128x64xf32>
      %130 = arith.addf %123, %129 : vector<128x64xf32>
      %c0_104 = arith.constant 0 : index
      %c2_105 = arith.constant 2 : index
      %c0_106 = arith.constant 0 : index
      %c0_107 = arith.constant 0 : index
      %131 = vector.load %arg13[%c0_104, %c2_105, %c0_106, %c0_107] : memref<2x10x10x32xf32, #tpu.memory_space<vmem>>, vector<2x8x8x32xf32>
      %132 = vector.shape_cast %131 : vector<2x8x8x32xf32> to vector<128x32xf32>
      %133 = arith.truncf %132 : vector<128x32xf32> to vector<128x32xbf16>
      %c6 = arith.constant 6 : index
      %c0_108 = arith.constant 0 : index
      %c0_109 = arith.constant 0 : index
      %134 = vector.load %arg4[%c6, %c0_108, %c0_109] : memref<9x32x64xbf16, #tpu.memory_space<vmem>>, vector<1x32x64xbf16>
      %135 = vector.shape_cast %134 : vector<1x32x64xbf16> to vector<32x64xbf16>
      %cst_110 = arith.constant dense<0.000000e+00> : vector<128x64xf32>
      %136 = tpu.matmul %133, %135, %cst_110 {dimension_numbers = #tpu.dot_dimension_numbers<[1], [0], [0], [1], [0, 0, 1, 1], [], []>} : vector<128x32xbf16>, vector<32x64xbf16>, vector<128x64xf32> -> vector<128x64xf32>
      %137 = arith.addf %130, %136 : vector<128x64xf32>
      %c0_111 = arith.constant 0 : index
      %c2_112 = arith.constant 2 : index
      %c1_113 = arith.constant 1 : index
      %c0_114 = arith.constant 0 : index
      %138 = vector.load %arg13[%c0_111, %c2_112, %c1_113, %c0_114] : memref<2x10x10x32xf32, #tpu.memory_space<vmem>>, vector<2x8x8x32xf32>
      %139 = vector.shape_cast %138 : vector<2x8x8x32xf32> to vector<128x32xf32>
      %140 = arith.truncf %139 : vector<128x32xf32> to vector<128x32xbf16>
      %c7 = arith.constant 7 : index
      %c0_115 = arith.constant 0 : index
      %c0_116 = arith.constant 0 : index
      %141 = vector.load %arg4[%c7, %c0_115, %c0_116] : memref<9x32x64xbf16, #tpu.memory_space<vmem>>, vector<1x32x64xbf16>
      %142 = vector.shape_cast %141 : vector<1x32x64xbf16> to vector<32x64xbf16>
      %cst_117 = arith.constant dense<0.000000e+00> : vector<128x64xf32>
      %143 = tpu.matmul %140, %142, %cst_117 {dimension_numbers = #tpu.dot_dimension_numbers<[1], [0], [0], [1], [0, 0, 1, 1], [], []>} : vector<128x32xbf16>, vector<32x64xbf16>, vector<128x64xf32> -> vector<128x64xf32>
      %144 = arith.addf %137, %143 : vector<128x64xf32>
      %c0_118 = arith.constant 0 : index
      %c2_119 = arith.constant 2 : index
      %c2_120 = arith.constant 2 : index
      %c0_121 = arith.constant 0 : index
      %145 = vector.load %arg13[%c0_118, %c2_119, %c2_120, %c0_121] : memref<2x10x10x32xf32, #tpu.memory_space<vmem>>, vector<2x8x8x32xf32>
      %146 = vector.shape_cast %145 : vector<2x8x8x32xf32> to vector<128x32xf32>
      %147 = arith.truncf %146 : vector<128x32xf32> to vector<128x32xbf16>
      %c8 = arith.constant 8 : index
      %c0_122 = arith.constant 0 : index
      %c0_123 = arith.constant 0 : index
      %148 = vector.load %arg4[%c8, %c0_122, %c0_123] : memref<9x32x64xbf16, #tpu.memory_space<vmem>>, vector<1x32x64xbf16>
      %149 = vector.shape_cast %148 : vector<1x32x64xbf16> to vector<32x64xbf16>
      %cst_124 = arith.constant dense<0.000000e+00> : vector<128x64xf32>
      %150 = tpu.matmul %147, %149, %cst_124 {dimension_numbers = #tpu.dot_dimension_numbers<[1], [0], [0], [1], [0, 0, 1, 1], [], []>} : vector<128x32xbf16>, vector<32x64xbf16>, vector<128x64xf32> -> vector<128x64xf32>
      %151 = arith.addf %144, %150 : vector<128x64xf32>
      %c0_125 = arith.constant 0 : index
      %c0_126 = arith.constant 0 : index
      %152 = vector.load %arg5[%c0_125, %c0_126] : memref<1x64xf32, #tpu.memory_space<vmem>>, vector<1x64xf32>
      %153 = vector.broadcast %152 : vector<1x64xf32> to vector<128x64xf32>
      %154 = arith.addf %151, %153 : vector<128x64xf32>
      %cst_127 = arith.constant 0.000000e+00 : f32
      %155 = vector.broadcast %cst_127 : f32 to vector<128x64xf32>
      %156 = arith.maximumf %154, %155 : vector<128x64xf32>
      %157 = vector.shape_cast %156 : vector<128x64xf32> to vector<2x64x64xf32>
      %158 = vector.extract_strided_slice %157 {offsets = [0, 0, 0], sizes = [2, 1, 64], strides = [1, 1, 1]} : vector<2x64x64xf32> to vector<2x1x64xf32>
      %159 = vector.shape_cast %158 : vector<2x1x64xf32> to vector<2x64xf32>
      %160 = arith.truncf %159 : vector<2x64xf32> to vector<2x64xbf16>
      %c0_128 = arith.constant 0 : index
      %c0_129 = arith.constant 0 : index
      %c0_130 = arith.constant 0 : index
      %161 = vector.load %arg14[%c0_128, %c0_129, %c0_130] : memref<2x2x2048xbf16, #tpu.memory_space<vmem>>, vector<1x2x64xbf16>
      %162 = vector.shape_cast %161 : vector<1x2x64xbf16> to vector<2x64xbf16>
      %163 = vector.shape_cast %160 : vector<2x64xbf16> to vector<1x2x64xbf16>
      tpu.vector_store %arg14[%c0_128, %c0_129, %c0_130], %163 {strides = array<i32>} : memref<2x2x2048xbf16, #tpu.memory_space<vmem>>, vector<1x2x64xbf16>,
      %164 = vector.extract_strided_slice %157 {offsets = [0, 1, 0], sizes = [2, 1, 64], strides = [1, 1, 1]} : vector<2x64x64xf32> to vector<2x1x64xf32>
      %165 = vector.shape_cast %164 : vector<2x1x64xf32> to vector<2x64xf32>
      %166 = arith.truncf %165 : vector<2x64xf32> to vector<2x64xbf16>
      %c0_131 = arith.constant 0 : index
      %c0_132 = arith.constant 0 : index
      %c64 = arith.constant 64 : index
      %167 = vector.load %arg14[%c0_131, %c0_132, %c64] : memref<2x2x2048xbf16, #tpu.memory_space<vmem>>, vector<1x2x64xbf16>
      %168 = vector.shape_cast %167 : vector<1x2x64xbf16> to vector<2x64xbf16>
      %169 = vector.shape_cast %166 : vector<2x64xbf16> to vector<1x2x64xbf16>
      tpu.vector_store %arg14[%c0_131, %c0_132, %c64], %169 {strides = array<i32>} : memref<2x2x2048xbf16, #tpu.memory_space<vmem>>, vector<1x2x64xbf16>,
      %170 = vector.extract_strided_slice %157 {offsets = [0, 2, 0], sizes = [2, 1, 64], strides = [1, 1, 1]} : vector<2x64x64xf32> to vector<2x1x64xf32>
      %171 = vector.shape_cast %170 : vector<2x1x64xf32> to vector<2x64xf32>
      %172 = arith.truncf %171 : vector<2x64xf32> to vector<2x64xbf16>
      %c0_133 = arith.constant 0 : index
      %c0_134 = arith.constant 0 : index
      %c128 = arith.constant 128 : index
      %173 = vector.load %arg14[%c0_133, %c0_134, %c128] : memref<2x2x2048xbf16, #tpu.memory_space<vmem>>, vector<1x2x64xbf16>
      %174 = vector.shape_cast %173 : vector<1x2x64xbf16> to vector<2x64xbf16>
      %175 = vector.shape_cast %172 : vector<2x64xbf16> to vector<1x2x64xbf16>
      tpu.vector_store %arg14[%c0_133, %c0_134, %c128], %175 {strides = array<i32>} : memref<2x2x2048xbf16, #tpu.memory_space<vmem>>, vector<1x2x64xbf16>,
      %176 = vector.extract_strided_slice %157 {offsets = [0, 3, 0], sizes = [2, 1, 64], strides = [1, 1, 1]} : vector<2x64x64xf32> to vector<2x1x64xf32>
      %177 = vector.shape_cast %176 : vector<2x1x64xf32> to vector<2x64xf32>
      %178 = arith.truncf %177 : vector<2x64xf32> to vector<2x64xbf16>
      %c0_135 = arith.constant 0 : index
      %c0_136 = arith.constant 0 : index
      %c192 = arith.constant 192 : index
      %179 = vector.load %arg14[%c0_135, %c0_136, %c192] : memref<2x2x2048xbf16, #tpu.memory_space<vmem>>, vector<1x2x64xbf16>
      %180 = vector.shape_cast %179 : vector<1x2x64xbf16> to vector<2x64xbf16>
      %181 = vector.shape_cast %178 : vector<2x64xbf16> to vector<1x2x64xbf16>
      tpu.vector_store %arg14[%c0_135, %c0_136, %c192], %181 {strides = array<i32>} : memref<2x2x2048xbf16, #tpu.memory_space<vmem>>, vector<1x2x64xbf16>,
      %182 = vector.extract_strided_slice %157 {offsets = [0, 4, 0], sizes = [2, 1, 64], strides = [1, 1, 1]} : vector<2x64x64xf32> to vector<2x1x64xf32>
      %183 = vector.shape_cast %182 : vector<2x1x64xf32> to vector<2x64xf32>
      %184 = arith.truncf %183 : vector<2x64xf32> to vector<2x64xbf16>
      %c0_137 = arith.constant 0 : index
      %c0_138 = arith.constant 0 : index
      %c256 = arith.constant 256 : index
      %185 = vector.load %arg14[%c0_137, %c0_138, %c256] : memref<2x2x2048xbf16, #tpu.memory_space<vmem>>, vector<1x2x64xbf16>
      %186 = vector.shape_cast %185 : vector<1x2x64xbf16> to vector<2x64xbf16>
      %187 = vector.shape_cast %184 : vector<2x64xbf16> to vector<1x2x64xbf16>
      tpu.vector_store %arg14[%c0_137, %c0_138, %c256], %187 {strides = array<i32>} : memref<2x2x2048xbf16, #tpu.memory_space<vmem>>, vector<1x2x64xbf16>,
      %188 = vector.extract_strided_slice %157 {offsets = [0, 5, 0], sizes = [2, 1, 64], strides = [1, 1, 1]} : vector<2x64x64xf32> to vector<2x1x64xf32>
      %189 = vector.shape_cast %188 : vector<2x1x64xf32> to vector<2x64xf32>
      %190 = arith.truncf %189 : vector<2x64xf32> to vector<2x64xbf16>
      %c0_139 = arith.constant 0 : index
      %c0_140 = arith.constant 0 : index
      %c320 = arith.constant 320 : index
      %191 = vector.load %arg14[%c0_139, %c0_140, %c320] : memref<2x2x2048xbf16, #tpu.memory_space<vmem>>, vector<1x2x64xbf16>
      %192 = vector.shape_cast %191 : vector<1x2x64xbf16> to vector<2x64xbf16>
      %193 = vector.shape_cast %190 : vector<2x64xbf16> to vector<1x2x64xbf16>
      tpu.vector_store %arg14[%c0_139, %c0_140, %c320], %193 {strides = array<i32>} : memref<2x2x2048xbf16, #tpu.memory_space<vmem>>, vector<1x2x64xbf16>,
      %194 = vector.extract_strided_slice %157 {offsets = [0, 6, 0], sizes = [2, 1, 64], strides = [1, 1, 1]} : vector<2x64x64xf32> to vector<2x1x64xf32>
      %195 = vector.shape_cast %194 : vector<2x1x64xf32> to vector<2x64xf32>
      %196 = arith.truncf %195 : vector<2x64xf32> to vector<2x64xbf16>
      %c0_141 = arith.constant 0 : index
      %c0_142 = arith.constant 0 : index
      %c384 = arith.constant 384 : index
      %197 = vector.load %arg14[%c0_141, %c0_142, %c384] : memref<2x2x2048xbf16, #tpu.memory_space<vmem>>, vector<1x2x64xbf16>
      %198 = vector.shape_cast %197 : vector<1x2x64xbf16> to vector<2x64xbf16>
      %199 = vector.shape_cast %196 : vector<2x64xbf16> to vector<1x2x64xbf16>
      tpu.vector_store %arg14[%c0_141, %c0_142, %c384], %199 {strides = array<i32>} : memref<2x2x2048xbf16, #tpu.memory_space<vmem>>, vector<1x2x64xbf16>,
      %200 = vector.extract_strided_slice %157 {offsets = [0, 7, 0], sizes = [2, 1, 64], strides = [1, 1, 1]} : vector<2x64x64xf32> to vector<2x1x64xf32>
      %201 = vector.shape_cast %200 : vector<2x1x64xf32> to vector<2x64xf32>
      %202 = arith.truncf %201 : vector<2x64xf32> to vector<2x64xbf16>
      %c0_143 = arith.constant 0 : index
      %c0_144 = arith.constant 0 : index
      %c448 = arith.constant 448 : index
      %203 = vector.load %arg14[%c0_143, %c0_144, %c448] : memref<2x2x2048xbf16, #tpu.memory_space<vmem>>, vector<1x2x64xbf16>
      %204 = vector.shape_cast %203 : vector<1x2x64xbf16> to vector<2x64xbf16>
      %205 = vector.shape_cast %202 : vector<2x64xbf16> to vector<1x2x64xbf16>
      tpu.vector_store %arg14[%c0_143, %c0_144, %c448], %205 {strides = array<i32>} : memref<2x2x2048xbf16, #tpu.memory_space<vmem>>, vector<1x2x64xbf16>,
      %206 = vector.extract_strided_slice %157 {offsets = [0, 8, 0], sizes = [2, 1, 64], strides = [1, 1, 1]} : vector<2x64x64xf32> to vector<2x1x64xf32>
      %207 = vector.shape_cast %206 : vector<2x1x64xf32> to vector<2x64xf32>
      %208 = arith.truncf %207 : vector<2x64xf32> to vector<2x64xbf16>
      %c0_145 = arith.constant 0 : index
      %c0_146 = arith.constant 0 : index
      %c512 = arith.constant 512 : index
      %209 = vector.load %arg14[%c0_145, %c0_146, %c512] : memref<2x2x2048xbf16, #tpu.memory_space<vmem>>, vector<1x2x64xbf16>
      %210 = vector.shape_cast %209 : vector<1x2x64xbf16> to vector<2x64xbf16>
      %211 = vector.shape_cast %208 : vector<2x64xbf16> to vector<1x2x64xbf16>
      tpu.vector_store %arg14[%c0_145, %c0_146, %c512], %211 {strides = array<i32>} : memref<2x2x2048xbf16, #tpu.memory_space<vmem>>, vector<1x2x64xbf16>,
      %212 = vector.extract_strided_slice %157 {offsets = [0, 9, 0], sizes = [2, 1, 64], strides = [1, 1, 1]} : vector<2x64x64xf32> to vector<2x1x64xf32>
      %213 = vector.shape_cast %212 : vector<2x1x64xf32> to vector<2x64xf32>
      %214 = arith.truncf %213 : vector<2x64xf32> to vector<2x64xbf16>
      %c0_147 = arith.constant 0 : index
      %c0_148 = arith.constant 0 : index
      %c576 = arith.constant 576 : index
      %215 = vector.load %arg14[%c0_147, %c0_148, %c576] : memref<2x2x2048xbf16, #tpu.memory_space<vmem>>, vector<1x2x64xbf16>
      %216 = vector.shape_cast %215 : vector<1x2x64xbf16> to vector<2x64xbf16>
      %217 = vector.shape_cast %214 : vector<2x64xbf16> to vector<1x2x64xbf16>
      tpu.vector_store %arg14[%c0_147, %c0_148, %c576], %217 {strides = array<i32>} : memref<2x2x2048xbf16, #tpu.memory_space<vmem>>, vector<1x2x64xbf16>,
      %218 = vector.extract_strided_slice %157 {offsets = [0, 10, 0], sizes = [2, 1, 64], strides = [1, 1, 1]} : vector<2x64x64xf32> to vector<2x1x64xf32>
      %219 = vector.shape_cast %218 : vector<2x1x64xf32> to vector<2x64xf32>
      %220 = arith.truncf %219 : vector<2x64xf32> to vector<2x64xbf16>
      %c0_149 = arith.constant 0 : index
      %c0_150 = arith.constant 0 : index
      %c640 = arith.constant 640 : index
      %221 = vector.load %arg14[%c0_149, %c0_150, %c640] : memref<2x2x2048xbf16, #tpu.memory_space<vmem>>, vector<1x2x64xbf16>
      %222 = vector.shape_cast %221 : vector<1x2x64xbf16> to vector<2x64xbf16>
      %223 = vector.shape_cast %220 : vector<2x64xbf16> to vector<1x2x64xbf16>
      tpu.vector_store %arg14[%c0_149, %c0_150, %c640], %223 {strides = array<i32>} : memref<2x2x2048xbf16, #tpu.memory_space<vmem>>, vector<1x2x64xbf16>,
      %224 = vector.extract_strided_slice %157 {offsets = [0, 11, 0], sizes = [2, 1, 64], strides = [1, 1, 1]} : vector<2x64x64xf32> to vector<2x1x64xf32>
      %225 = vector.shape_cast %224 : vector<2x1x64xf32> to vector<2x64xf32>
      %226 = arith.truncf %225 : vector<2x64xf32> to vector<2x64xbf16>
      %c0_151 = arith.constant 0 : index
      %c0_152 = arith.constant 0 : index
      %c704 = arith.constant 704 : index
      %227 = vector.load %arg14[%c0_151, %c0_152, %c704] : memref<2x2x2048xbf16, #tpu.memory_space<vmem>>, vector<1x2x64xbf16>
      %228 = vector.shape_cast %227 : vector<1x2x64xbf16> to vector<2x64xbf16>
      %229 = vector.shape_cast %226 : vector<2x64xbf16> to vector<1x2x64xbf16>
      tpu.vector_store %arg14[%c0_151, %c0_152, %c704], %229 {strides = array<i32>} : memref<2x2x2048xbf16, #tpu.memory_space<vmem>>, vector<1x2x64xbf16>,
      %230 = vector.extract_strided_slice %157 {offsets = [0, 12, 0], sizes = [2, 1, 64], strides = [1, 1, 1]} : vector<2x64x64xf32> to vector<2x1x64xf32>
      %231 = vector.shape_cast %230 : vector<2x1x64xf32> to vector<2x64xf32>
      %232 = arith.truncf %231 : vector<2x64xf32> to vector<2x64xbf16>
      %c0_153 = arith.constant 0 : index
      %c0_154 = arith.constant 0 : index
      %c768 = arith.constant 768 : index
      %233 = vector.load %arg14[%c0_153, %c0_154, %c768] : memref<2x2x2048xbf16, #tpu.memory_space<vmem>>, vector<1x2x64xbf16>
      %234 = vector.shape_cast %233 : vector<1x2x64xbf16> to vector<2x64xbf16>
      %235 = vector.shape_cast %232 : vector<2x64xbf16> to vector<1x2x64xbf16>
      tpu.vector_store %arg14[%c0_153, %c0_154, %c768], %235 {strides = array<i32>} : memref<2x2x2048xbf16, #tpu.memory_space<vmem>>, vector<1x2x64xbf16>,
      %236 = vector.extract_strided_slice %157 {offsets = [0, 13, 0], sizes = [2, 1, 64], strides = [1, 1, 1]} : vector<2x64x64xf32> to vector<2x1x64xf32>
      %237 = vector.shape_cast %236 : vector<2x1x64xf32> to vector<2x64xf32>
      %238 = arith.truncf %237 : vector<2x64xf32> to vector<2x64xbf16>
      %c0_155 = arith.constant 0 : index
      %c0_156 = arith.constant 0 : index
      %c832 = arith.constant 832 : index
      %239 = vector.load %arg14[%c0_155, %c0_156, %c832] : memref<2x2x2048xbf16, #tpu.memory_space<vmem>>, vector<1x2x64xbf16>
      %240 = vector.shape_cast %239 : vector<1x2x64xbf16> to vector<2x64xbf16>
      %241 = vector.shape_cast %238 : vector<2x64xbf16> to vector<1x2x64xbf16>
      tpu.vector_store %arg14[%c0_155, %c0_156, %c832], %241 {strides = array<i32>} : memref<2x2x2048xbf16, #tpu.memory_space<vmem>>, vector<1x2x64xbf16>,
      %242 = vector.extract_strided_slice %157 {offsets = [0, 14, 0], sizes = [2, 1, 64], strides = [1, 1, 1]} : vector<2x64x64xf32> to vector<2x1x64xf32>
      %243 = vector.shape_cast %242 : vector<2x1x64xf32> to vector<2x64xf32>
      %244 = arith.truncf %243 : vector<2x64xf32> to vector<2x64xbf16>
      %c0_157 = arith.constant 0 : index
      %c0_158 = arith.constant 0 : index
      %c896 = arith.constant 896 : index
      %245 = vector.load %arg14[%c0_157, %c0_158, %c896] : memref<2x2x2048xbf16, #tpu.memory_space<vmem>>, vector<1x2x64xbf16>
      %246 = vector.shape_cast %245 : vector<1x2x64xbf16> to vector<2x64xbf16>
      %247 = vector.shape_cast %244 : vector<2x64xbf16> to vector<1x2x64xbf16>
      tpu.vector_store %arg14[%c0_157, %c0_158, %c896], %247 {strides = array<i32>} : memref<2x2x2048xbf16, #tpu.memory_space<vmem>>, vector<1x2x64xbf16>,
      %248 = vector.extract_strided_slice %157 {offsets = [0, 15, 0], sizes = [2, 1, 64], strides = [1, 1, 1]} : vector<2x64x64xf32> to vector<2x1x64xf32>
      %249 = vector.shape_cast %248 : vector<2x1x64xf32> to vector<2x64xf32>
      %250 = arith.truncf %249 : vector<2x64xf32> to vector<2x64xbf16>
      %c0_159 = arith.constant 0 : index
      %c0_160 = arith.constant 0 : index
      %c960 = arith.constant 960 : index
      %251 = vector.load %arg14[%c0_159, %c0_160, %c960] : memref<2x2x2048xbf16, #tpu.memory_space<vmem>>, vector<1x2x64xbf16>
      %252 = vector.shape_cast %251 : vector<1x2x64xbf16> to vector<2x64xbf16>
      %253 = vector.shape_cast %250 : vector<2x64xbf16> to vector<1x2x64xbf16>
      tpu.vector_store %arg14[%c0_159, %c0_160, %c960], %253 {strides = array<i32>} : memref<2x2x2048xbf16, #tpu.memory_space<vmem>>, vector<1x2x64xbf16>,
      %254 = vector.extract_strided_slice %157 {offsets = [0, 16, 0], sizes = [2, 1, 64], strides = [1, 1, 1]} : vector<2x64x64xf32> to vector<2x1x64xf32>
      %255 = vector.shape_cast %254 : vector<2x1x64xf32> to vector<2x64xf32>
      %256 = arith.truncf %255 : vector<2x64xf32> to vector<2x64xbf16>
      %c0_161 = arith.constant 0 : index
      %c0_162 = arith.constant 0 : index
      %c1024 = arith.constant 1024 : index
      %257 = vector.load %arg14[%c0_161, %c0_162, %c1024] : memref<2x2x2048xbf16, #tpu.memory_space<vmem>>, vector<1x2x64xbf16>
      %258 = vector.shape_cast %257 : vector<1x2x64xbf16> to vector<2x64xbf16>
      %259 = vector.shape_cast %256 : vector<2x64xbf16> to vector<1x2x64xbf16>
      tpu.vector_store %arg14[%c0_161, %c0_162, %c1024], %259 {strides = array<i32>} : memref<2x2x2048xbf16, #tpu.memory_space<vmem>>, vector<1x2x64xbf16>,
      %260 = vector.extract_strided_slice %157 {offsets = [0, 17, 0], sizes = [2, 1, 64], strides = [1, 1, 1]} : vector<2x64x64xf32> to vector<2x1x64xf32>
      %261 = vector.shape_cast %260 : vector<2x1x64xf32> to vector<2x64xf32>
      %262 = arith.truncf %261 : vector<2x64xf32> to vector<2x64xbf16>
      %c0_163 = arith.constant 0 : index
      %c0_164 = arith.constant 0 : index
      %c1088 = arith.constant 1088 : index
      %263 = vector.load %arg14[%c0_163, %c0_164, %c1088] : memref<2x2x2048xbf16, #tpu.memory_space<vmem>>, vector<1x2x64xbf16>
      %264 = vector.shape_cast %263 : vector<1x2x64xbf16> to vector<2x64xbf16>
      %265 = vector.shape_cast %262 : vector<2x64xbf16> to vector<1x2x64xbf16>
      tpu.vector_store %arg14[%c0_163, %c0_164, %c1088], %265 {strides = array<i32>} : memref<2x2x2048xbf16, #tpu.memory_space<vmem>>, vector<1x2x64xbf16>,
      %266 = vector.extract_strided_slice %157 {offsets = [0, 18, 0], sizes = [2, 1, 64], strides = [1, 1, 1]} : vector<2x64x64xf32> to vector<2x1x64xf32>
      %267 = vector.shape_cast %266 : vector<2x1x64xf32> to vector<2x64xf32>
      %268 = arith.truncf %267 : vector<2x64xf32> to vector<2x64xbf16>
      %c0_165 = arith.constant 0 : index
      %c0_166 = arith.constant 0 : index
      %c1152 = arith.constant 1152 : index
      %269 = vector.load %arg14[%c0_165, %c0_166, %c1152] : memref<2x2x2048xbf16, #tpu.memory_space<vmem>>, vector<1x2x64xbf16>
      %270 = vector.shape_cast %269 : vector<1x2x64xbf16> to vector<2x64xbf16>
      %271 = vector.shape_cast %268 : vector<2x64xbf16> to vector<1x2x64xbf16>
      tpu.vector_store %arg14[%c0_165, %c0_166, %c1152], %271 {strides = array<i32>} : memref<2x2x2048xbf16, #tpu.memory_space<vmem>>, vector<1x2x64xbf16>,
      %272 = vector.extract_strided_slice %157 {offsets = [0, 19, 0], sizes = [2, 1, 64], strides = [1, 1, 1]} : vector<2x64x64xf32> to vector<2x1x64xf32>
      %273 = vector.shape_cast %272 : vector<2x1x64xf32> to vector<2x64xf32>
      %274 = arith.truncf %273 : vector<2x64xf32> to vector<2x64xbf16>
      %c0_167 = arith.constant 0 : index
      %c0_168 = arith.constant 0 : index
      %c1216 = arith.constant 1216 : index
      %275 = vector.load %arg14[%c0_167, %c0_168, %c1216] : memref<2x2x2048xbf16, #tpu.memory_space<vmem>>, vector<1x2x64xbf16>
      %276 = vector.shape_cast %275 : vector<1x2x64xbf16> to vector<2x64xbf16>
      %277 = vector.shape_cast %274 : vector<2x64xbf16> to vector<1x2x64xbf16>
      tpu.vector_store %arg14[%c0_167, %c0_168, %c1216], %277 {strides = array<i32>} : memref<2x2x2048xbf16, #tpu.memory_space<vmem>>, vector<1x2x64xbf16>,
      %278 = vector.extract_strided_slice %157 {offsets = [0, 20, 0], sizes = [2, 1, 64], strides = [1, 1, 1]} : vector<2x64x64xf32> to vector<2x1x64xf32>
      %279 = vector.shape_cast %278 : vector<2x1x64xf32> to vector<2x64xf32>
      %280 = arith.truncf %279 : vector<2x64xf32> to vector<2x64xbf16>
      %c0_169 = arith.constant 0 : index
      %c0_170 = arith.constant 0 : index
      %c1280 = arith.constant 1280 : index
      %281 = vector.load %arg14[%c0_169, %c0_170, %c1280] : memref<2x2x2048xbf16, #tpu.memory_space<vmem>>, vector<1x2x64xbf16>
      %282 = vector.shape_cast %281 : vector<1x2x64xbf16> to vector<2x64xbf16>
      %283 = vector.shape_cast %280 : vector<2x64xbf16> to vector<1x2x64xbf16>
      tpu.vector_store %arg14[%c0_169, %c0_170, %c1280], %283 {strides = array<i32>} : memref<2x2x2048xbf16, #tpu.memory_space<vmem>>, vector<1x2x64xbf16>,
      %284 = vector.extract_strided_slice %157 {offsets = [0, 21, 0], sizes = [2, 1, 64], strides = [1, 1, 1]} : vector<2x64x64xf32> to vector<2x1x64xf32>
      %285 = vector.shape_cast %284 : vector<2x1x64xf32> to vector<2x64xf32>
      %286 = arith.truncf %285 : vector<2x64xf32> to vector<2x64xbf16>
      %c0_171 = arith.constant 0 : index
      %c0_172 = arith.constant 0 : index
      %c1344 = arith.constant 1344 : index
      %287 = vector.load %arg14[%c0_171, %c0_172, %c1344] : memref<2x2x2048xbf16, #tpu.memory_space<vmem>>, vector<1x2x64xbf16>
      %288 = vector.shape_cast %287 : vector<1x2x64xbf16> to vector<2x64xbf16>
      %289 = vector.shape_cast %286 : vector<2x64xbf16> to vector<1x2x64xbf16>
      tpu.vector_store %arg14[%c0_171, %c0_172, %c1344], %289 {strides = array<i32>} : memref<2x2x2048xbf16, #tpu.memory_space<vmem>>, vector<1x2x64xbf16>,
      %290 = vector.extract_strided_slice %157 {offsets = [0, 22, 0], sizes = [2, 1, 64], strides = [1, 1, 1]} : vector<2x64x64xf32> to vector<2x1x64xf32>
      %291 = vector.shape_cast %290 : vector<2x1x64xf32> to vector<2x64xf32>
      %292 = arith.truncf %291 : vector<2x64xf32> to vector<2x64xbf16>
      %c0_173 = arith.constant 0 : index
      %c0_174 = arith.constant 0 : index
      %c1408 = arith.constant 1408 : index
      %293 = vector.load %arg14[%c0_173, %c0_174, %c1408] : memref<2x2x2048xbf16, #tpu.memory_space<vmem>>, vector<1x2x64xbf16>
      %294 = vector.shape_cast %293 : vector<1x2x64xbf16> to vector<2x64xbf16>
      %295 = vector.shape_cast %292 : vector<2x64xbf16> to vector<1x2x64xbf16>
      tpu.vector_store %arg14[%c0_173, %c0_174, %c1408], %295 {strides = array<i32>} : memref<2x2x2048xbf16, #tpu.memory_space<vmem>>, vector<1x2x64xbf16>,
      %296 = vector.extract_strided_slice %157 {offsets = [0, 23, 0], sizes = [2, 1, 64], strides = [1, 1, 1]} : vector<2x64x64xf32> to vector<2x1x64xf32>
      %297 = vector.shape_cast %296 : vector<2x1x64xf32> to vector<2x64xf32>
      %298 = arith.truncf %297 : vector<2x64xf32> to vector<2x64xbf16>
      %c0_175 = arith.constant 0 : index
      %c0_176 = arith.constant 0 : index
      %c1472 = arith.constant 1472 : index
      %299 = vector.load %arg14[%c0_175, %c0_176, %c1472] : memref<2x2x2048xbf16, #tpu.memory_space<vmem>>, vector<1x2x64xbf16>
      %300 = vector.shape_cast %299 : vector<1x2x64xbf16> to vector<2x64xbf16>
      %301 = vector.shape_cast %298 : vector<2x64xbf16> to vector<1x2x64xbf16>
      tpu.vector_store %arg14[%c0_175, %c0_176, %c1472], %301 {strides = array<i32>} : memref<2x2x2048xbf16, #tpu.memory_space<vmem>>, vector<1x2x64xbf16>,
      %302 = vector.extract_strided_slice %157 {offsets = [0, 24, 0], sizes = [2, 1, 64], strides = [1, 1, 1]} : vector<2x64x64xf32> to vector<2x1x64xf32>
      %303 = vector.shape_cast %302 : vector<2x1x64xf32> to vector<2x64xf32>
      %304 = arith.truncf %303 : vector<2x64xf32> to vector<2x64xbf16>
      %c0_177 = arith.constant 0 : index
      %c0_178 = arith.constant 0 : index
      %c1536 = arith.constant 1536 : index
      %305 = vector.load %arg14[%c0_177, %c0_178, %c1536] : memref<2x2x2048xbf16, #tpu.memory_space<vmem>>, vector<1x2x64xbf16>
      %306 = vector.shape_cast %305 : vector<1x2x64xbf16> to vector<2x64xbf16>
      %307 = vector.shape_cast %304 : vector<2x64xbf16> to vector<1x2x64xbf16>
      tpu.vector_store %arg14[%c0_177, %c0_178, %c1536], %307 {strides = array<i32>} : memref<2x2x2048xbf16, #tpu.memory_space<vmem>>, vector<1x2x64xbf16>,
      %308 = vector.extract_strided_slice %157 {offsets = [0, 25, 0], sizes = [2, 1, 64], strides = [1, 1, 1]} : vector<2x64x64xf32> to vector<2x1x64xf32>
      %309 = vector.shape_cast %308 : vector<2x1x64xf32> to vector<2x64xf32>
      %310 = arith.truncf %309 : vector<2x64xf32> to vector<2x64xbf16>
      %c0_179 = arith.constant 0 : index
      %c0_180 = arith.constant 0 : index
      %c1600 = arith.constant 1600 : index
      %311 = vector.load %arg14[%c0_179, %c0_180, %c1600] : memref<2x2x2048xbf16, #tpu.memory_space<vmem>>, vector<1x2x64xbf16>
      %312 = vector.shape_cast %311 : vector<1x2x64xbf16> to vector<2x64xbf16>
      %313 = vector.shape_cast %310 : vector<2x64xbf16> to vector<1x2x64xbf16>
      tpu.vector_store %arg14[%c0_179, %c0_180, %c1600], %313 {strides = array<i32>} : memref<2x2x2048xbf16, #tpu.memory_space<vmem>>, vector<1x2x64xbf16>,
      %314 = vector.extract_strided_slice %157 {offsets = [0, 26, 0], sizes = [2, 1, 64], strides = [1, 1, 1]} : vector<2x64x64xf32> to vector<2x1x64xf32>
      %315 = vector.shape_cast %314 : vector<2x1x64xf32> to vector<2x64xf32>
      %316 = arith.truncf %315 : vector<2x64xf32> to vector<2x64xbf16>
      %c0_181 = arith.constant 0 : index
      %c0_182 = arith.constant 0 : index
      %c1664 = arith.constant 1664 : index
      %317 = vector.load %arg14[%c0_181, %c0_182, %c1664] : memref<2x2x2048xbf16, #tpu.memory_space<vmem>>, vector<1x2x64xbf16>
      %318 = vector.shape_cast %317 : vector<1x2x64xbf16> to vector<2x64xbf16>
      %319 = vector.shape_cast %316 : vector<2x64xbf16> to vector<1x2x64xbf16>
      tpu.vector_store %arg14[%c0_181, %c0_182, %c1664], %319 {strides = array<i32>} : memref<2x2x2048xbf16, #tpu.memory_space<vmem>>, vector<1x2x64xbf16>,
      %320 = vector.extract_strided_slice %157 {offsets = [0, 27, 0], sizes = [2, 1, 64], strides = [1, 1, 1]} : vector<2x64x64xf32> to vector<2x1x64xf32>
      %321 = vector.shape_cast %320 : vector<2x1x64xf32> to vector<2x64xf32>
      %322 = arith.truncf %321 : vector<2x64xf32> to vector<2x64xbf16>
      %c0_183 = arith.constant 0 : index
      %c0_184 = arith.constant 0 : index
      %c1728 = arith.constant 1728 : index
      %323 = vector.load %arg14[%c0_183, %c0_184, %c1728] : memref<2x2x2048xbf16, #tpu.memory_space<vmem>>, vector<1x2x64xbf16>
      %324 = vector.shape_cast %323 : vector<1x2x64xbf16> to vector<2x64xbf16>
      %325 = vector.shape_cast %322 : vector<2x64xbf16> to vector<1x2x64xbf16>
      tpu.vector_store %arg14[%c0_183, %c0_184, %c1728], %325 {strides = array<i32>} : memref<2x2x2048xbf16, #tpu.memory_space<vmem>>, vector<1x2x64xbf16>,
      %326 = vector.extract_strided_slice %157 {offsets = [0, 28, 0], sizes = [2, 1, 64], strides = [1, 1, 1]} : vector<2x64x64xf32> to vector<2x1x64xf32>
      %327 = vector.shape_cast %326 : vector<2x1x64xf32> to vector<2x64xf32>
      %328 = arith.truncf %327 : vector<2x64xf32> to vector<2x64xbf16>
      %c0_185 = arith.constant 0 : index
      %c0_186 = arith.constant 0 : index
      %c1792 = arith.constant 1792 : index
      %329 = vector.load %arg14[%c0_185, %c0_186, %c1792] : memref<2x2x2048xbf16, #tpu.memory_space<vmem>>, vector<1x2x64xbf16>
      %330 = vector.shape_cast %329 : vector<1x2x64xbf16> to vector<2x64xbf16>
      %331 = vector.shape_cast %328 : vector<2x64xbf16> to vector<1x2x64xbf16>
      tpu.vector_store %arg14[%c0_185, %c0_186, %c1792], %331 {strides = array<i32>} : memref<2x2x2048xbf16, #tpu.memory_space<vmem>>, vector<1x2x64xbf16>,
      %332 = vector.extract_strided_slice %157 {offsets = [0, 29, 0], sizes = [2, 1, 64], strides = [1, 1, 1]} : vector<2x64x64xf32> to vector<2x1x64xf32>
      %333 = vector.shape_cast %332 : vector<2x1x64xf32> to vector<2x64xf32>
      %334 = arith.truncf %333 : vector<2x64xf32> to vector<2x64xbf16>
      %c0_187 = arith.constant 0 : index
      %c0_188 = arith.constant 0 : index
      %c1856 = arith.constant 1856 : index
      %335 = vector.load %arg14[%c0_187, %c0_188, %c1856] : memref<2x2x2048xbf16, #tpu.memory_space<vmem>>, vector<1x2x64xbf16>
      %336 = vector.shape_cast %335 : vector<1x2x64xbf16> to vector<2x64xbf16>
      %337 = vector.shape_cast %334 : vector<2x64xbf16> to vector<1x2x64xbf16>
      tpu.vector_store %arg14[%c0_187, %c0_188, %c1856], %337 {strides = array<i32>} : memref<2x2x2048xbf16, #tpu.memory_space<vmem>>, vector<1x2x64xbf16>,
      %338 = vector.extract_strided_slice %157 {offsets = [0, 30, 0], sizes = [2, 1, 64], strides = [1, 1, 1]} : vector<2x64x64xf32> to vector<2x1x64xf32>
      %339 = vector.shape_cast %338 : vector<2x1x64xf32> to vector<2x64xf32>
      %340 = arith.truncf %339 : vector<2x64xf32> to vector<2x64xbf16>
      %c0_189 = arith.constant 0 : index
      %c0_190 = arith.constant 0 : index
      %c1920 = arith.constant 1920 : index
      %341 = vector.load %arg14[%c0_189, %c0_190, %c1920] : memref<2x2x2048xbf16, #tpu.memory_space<vmem>>, vector<1x2x64xbf16>
      %342 = vector.shape_cast %341 : vector<1x2x64xbf16> to vector<2x64xbf16>
      %343 = vector.shape_cast %340 : vector<2x64xbf16> to vector<1x2x64xbf16>
      tpu.vector_store %arg14[%c0_189, %c0_190, %c1920], %343 {strides = array<i32>} : memref<2x2x2048xbf16, #tpu.memory_space<vmem>>, vector<1x2x64xbf16>,
      %344 = vector.extract_strided_slice %157 {offsets = [0, 31, 0], sizes = [2, 1, 64], strides = [1, 1, 1]} : vector<2x64x64xf32> to vector<2x1x64xf32>
      %345 = vector.shape_cast %344 : vector<2x1x64xf32> to vector<2x64xf32>
      %346 = arith.truncf %345 : vector<2x64xf32> to vector<2x64xbf16>
      %c0_191 = arith.constant 0 : index
      %c0_192 = arith.constant 0 : index
      %c1984 = arith.constant 1984 : index
      %347 = vector.load %arg14[%c0_191, %c0_192, %c1984] : memref<2x2x2048xbf16, #tpu.memory_space<vmem>>, vector<1x2x64xbf16>
      %348 = vector.shape_cast %347 : vector<1x2x64xbf16> to vector<2x64xbf16>
      %349 = vector.shape_cast %346 : vector<2x64xbf16> to vector<1x2x64xbf16>
      tpu.vector_store %arg14[%c0_191, %c0_192, %c1984], %349 {strides = array<i32>} : memref<2x2x2048xbf16, #tpu.memory_space<vmem>>, vector<1x2x64xbf16>,
      %350 = vector.extract_strided_slice %157 {offsets = [0, 32, 0], sizes = [2, 1, 64], strides = [1, 1, 1]} : vector<2x64x64xf32> to vector<2x1x64xf32>
      %351 = vector.shape_cast %350 : vector<2x1x64xf32> to vector<2x64xf32>
      %352 = arith.truncf %351 : vector<2x64xf32> to vector<2x64xbf16>
      %c1_193 = arith.constant 1 : index
      %c0_194 = arith.constant 0 : index
      %c0_195 = arith.constant 0 : index
      %353 = vector.load %arg14[%c1_193, %c0_194, %c0_195] : memref<2x2x2048xbf16, #tpu.memory_space<vmem>>, vector<1x2x64xbf16>
      %354 = vector.shape_cast %353 : vector<1x2x64xbf16> to vector<2x64xbf16>
      %355 = vector.shape_cast %352 : vector<2x64xbf16> to vector<1x2x64xbf16>
      tpu.vector_store %arg14[%c1_193, %c0_194, %c0_195], %355 {strides = array<i32>} : memref<2x2x2048xbf16, #tpu.memory_space<vmem>>, vector<1x2x64xbf16>,
      %356 = vector.extract_strided_slice %157 {offsets = [0, 33, 0], sizes = [2, 1, 64], strides = [1, 1, 1]} : vector<2x64x64xf32> to vector<2x1x64xf32>
      %357 = vector.shape_cast %356 : vector<2x1x64xf32> to vector<2x64xf32>
      %358 = arith.truncf %357 : vector<2x64xf32> to vector<2x64xbf16>
      %c1_196 = arith.constant 1 : index
      %c0_197 = arith.constant 0 : index
      %c64_198 = arith.constant 64 : index
      %359 = vector.load %arg14[%c1_196, %c0_197, %c64_198] : memref<2x2x2048xbf16, #tpu.memory_space<vmem>>, vector<1x2x64xbf16>
      %360 = vector.shape_cast %359 : vector<1x2x64xbf16> to vector<2x64xbf16>
      %361 = vector.shape_cast %358 : vector<2x64xbf16> to vector<1x2x64xbf16>
      tpu.vector_store %arg14[%c1_196, %c0_197, %c64_198], %361 {strides = array<i32>} : memref<2x2x2048xbf16, #tpu.memory_space<vmem>>, vector<1x2x64xbf16>,
      %362 = vector.extract_strided_slice %157 {offsets = [0, 34, 0], sizes = [2, 1, 64], strides = [1, 1, 1]} : vector<2x64x64xf32> to vector<2x1x64xf32>
      %363 = vector.shape_cast %362 : vector<2x1x64xf32> to vector<2x64xf32>
      %364 = arith.truncf %363 : vector<2x64xf32> to vector<2x64xbf16>
      %c1_199 = arith.constant 1 : index
      %c0_200 = arith.constant 0 : index
      %c128_201 = arith.constant 128 : index
      %365 = vector.load %arg14[%c1_199, %c0_200, %c128_201] : memref<2x2x2048xbf16, #tpu.memory_space<vmem>>, vector<1x2x64xbf16>
      %366 = vector.shape_cast %365 : vector<1x2x64xbf16> to vector<2x64xbf16>
      %367 = vector.shape_cast %364 : vector<2x64xbf16> to vector<1x2x64xbf16>
      tpu.vector_store %arg14[%c1_199, %c0_200, %c128_201], %367 {strides = array<i32>} : memref<2x2x2048xbf16, #tpu.memory_space<vmem>>, vector<1x2x64xbf16>,
      %368 = vector.extract_strided_slice %157 {offsets = [0, 35, 0], sizes = [2, 1, 64], strides = [1, 1, 1]} : vector<2x64x64xf32> to vector<2x1x64xf32>
      %369 = vector.shape_cast %368 : vector<2x1x64xf32> to vector<2x64xf32>
      %370 = arith.truncf %369 : vector<2x64xf32> to vector<2x64xbf16>
      %c1_202 = arith.constant 1 : index
      %c0_203 = arith.constant 0 : index
      %c192_204 = arith.constant 192 : index
      %371 = vector.load %arg14[%c1_202, %c0_203, %c192_204] : memref<2x2x2048xbf16, #tpu.memory_space<vmem>>, vector<1x2x64xbf16>
      %372 = vector.shape_cast %371 : vector<1x2x64xbf16> to vector<2x64xbf16>
      %373 = vector.shape_cast %370 : vector<2x64xbf16> to vector<1x2x64xbf16>
      tpu.vector_store %arg14[%c1_202, %c0_203, %c192_204], %373 {strides = array<i32>} : memref<2x2x2048xbf16, #tpu.memory_space<vmem>>, vector<1x2x64xbf16>,
      %374 = vector.extract_strided_slice %157 {offsets = [0, 36, 0], sizes = [2, 1, 64], strides = [1, 1, 1]} : vector<2x64x64xf32> to vector<2x1x64xf32>
      %375 = vector.shape_cast %374 : vector<2x1x64xf32> to vector<2x64xf32>
      %376 = arith.truncf %375 : vector<2x64xf32> to vector<2x64xbf16>
      %c1_205 = arith.constant 1 : index
      %c0_206 = arith.constant 0 : index
      %c256_207 = arith.constant 256 : index
      %377 = vector.load %arg14[%c1_205, %c0_206, %c256_207] : memref<2x2x2048xbf16, #tpu.memory_space<vmem>>, vector<1x2x64xbf16>
      %378 = vector.shape_cast %377 : vector<1x2x64xbf16> to vector<2x64xbf16>
      %379 = vector.shape_cast %376 : vector<2x64xbf16> to vector<1x2x64xbf16>
      tpu.vector_store %arg14[%c1_205, %c0_206, %c256_207], %379 {strides = array<i32>} : memref<2x2x2048xbf16, #tpu.memory_space<vmem>>, vector<1x2x64xbf16>,
      %380 = vector.extract_strided_slice %157 {offsets = [0, 37, 0], sizes = [2, 1, 64], strides = [1, 1, 1]} : vector<2x64x64xf32> to vector<2x1x64xf32>
      %381 = vector.shape_cast %380 : vector<2x1x64xf32> to vector<2x64xf32>
      %382 = arith.truncf %381 : vector<2x64xf32> to vector<2x64xbf16>
      %c1_208 = arith.constant 1 : index
      %c0_209 = arith.constant 0 : index
      %c320_210 = arith.constant 320 : index
      %383 = vector.load %arg14[%c1_208, %c0_209, %c320_210] : memref<2x2x2048xbf16, #tpu.memory_space<vmem>>, vector<1x2x64xbf16>
      %384 = vector.shape_cast %383 : vector<1x2x64xbf16> to vector<2x64xbf16>
      %385 = vector.shape_cast %382 : vector<2x64xbf16> to vector<1x2x64xbf16>
      tpu.vector_store %arg14[%c1_208, %c0_209, %c320_210], %385 {strides = array<i32>} : memref<2x2x2048xbf16, #tpu.memory_space<vmem>>, vector<1x2x64xbf16>,
      %386 = vector.extract_strided_slice %157 {offsets = [0, 38, 0], sizes = [2, 1, 64], strides = [1, 1, 1]} : vector<2x64x64xf32> to vector<2x1x64xf32>
      %387 = vector.shape_cast %386 : vector<2x1x64xf32> to vector<2x64xf32>
      %388 = arith.truncf %387 : vector<2x64xf32> to vector<2x64xbf16>
      %c1_211 = arith.constant 1 : index
      %c0_212 = arith.constant 0 : index
      %c384_213 = arith.constant 384 : index
      %389 = vector.load %arg14[%c1_211, %c0_212, %c384_213] : memref<2x2x2048xbf16, #tpu.memory_space<vmem>>, vector<1x2x64xbf16>
      %390 = vector.shape_cast %389 : vector<1x2x64xbf16> to vector<2x64xbf16>
      %391 = vector.shape_cast %388 : vector<2x64xbf16> to vector<1x2x64xbf16>
      tpu.vector_store %arg14[%c1_211, %c0_212, %c384_213], %391 {strides = array<i32>} : memref<2x2x2048xbf16, #tpu.memory_space<vmem>>, vector<1x2x64xbf16>,
      %392 = vector.extract_strided_slice %157 {offsets = [0, 39, 0], sizes = [2, 1, 64], strides = [1, 1, 1]} : vector<2x64x64xf32> to vector<2x1x64xf32>
      %393 = vector.shape_cast %392 : vector<2x1x64xf32> to vector<2x64xf32>
      %394 = arith.truncf %393 : vector<2x64xf32> to vector<2x64xbf16>
      %c1_214 = arith.constant 1 : index
      %c0_215 = arith.constant 0 : index
      %c448_216 = arith.constant 448 : index
      %395 = vector.load %arg14[%c1_214, %c0_215, %c448_216] : memref<2x2x2048xbf16, #tpu.memory_space<vmem>>, vector<1x2x64xbf16>
      %396 = vector.shape_cast %395 : vector<1x2x64xbf16> to vector<2x64xbf16>
      %397 = vector.shape_cast %394 : vector<2x64xbf16> to vector<1x2x64xbf16>
      tpu.vector_store %arg14[%c1_214, %c0_215, %c448_216], %397 {strides = array<i32>} : memref<2x2x2048xbf16, #tpu.memory_space<vmem>>, vector<1x2x64xbf16>,
      %398 = vector.extract_strided_slice %157 {offsets = [0, 40, 0], sizes = [2, 1, 64], strides = [1, 1, 1]} : vector<2x64x64xf32> to vector<2x1x64xf32>
      %399 = vector.shape_cast %398 : vector<2x1x64xf32> to vector<2x64xf32>
      %400 = arith.truncf %399 : vector<2x64xf32> to vector<2x64xbf16>
      %c1_217 = arith.constant 1 : index
      %c0_218 = arith.constant 0 : index
      %c512_219 = arith.constant 512 : index
      %401 = vector.load %arg14[%c1_217, %c0_218, %c512_219] : memref<2x2x2048xbf16, #tpu.memory_space<vmem>>, vector<1x2x64xbf16>
      %402 = vector.shape_cast %401 : vector<1x2x64xbf16> to vector<2x64xbf16>
      %403 = vector.shape_cast %400 : vector<2x64xbf16> to vector<1x2x64xbf16>
      tpu.vector_store %arg14[%c1_217, %c0_218, %c512_219], %403 {strides = array<i32>} : memref<2x2x2048xbf16, #tpu.memory_space<vmem>>, vector<1x2x64xbf16>,
      %404 = vector.extract_strided_slice %157 {offsets = [0, 41, 0], sizes = [2, 1, 64], strides = [1, 1, 1]} : vector<2x64x64xf32> to vector<2x1x64xf32>
      %405 = vector.shape_cast %404 : vector<2x1x64xf32> to vector<2x64xf32>
      %406 = arith.truncf %405 : vector<2x64xf32> to vector<2x64xbf16>
      %c1_220 = arith.constant 1 : index
      %c0_221 = arith.constant 0 : index
      %c576_222 = arith.constant 576 : index
      %407 = vector.load %arg14[%c1_220, %c0_221, %c576_222] : memref<2x2x2048xbf16, #tpu.memory_space<vmem>>, vector<1x2x64xbf16>
      %408 = vector.shape_cast %407 : vector<1x2x64xbf16> to vector<2x64xbf16>
      %409 = vector.shape_cast %406 : vector<2x64xbf16> to vector<1x2x64xbf16>
      tpu.vector_store %arg14[%c1_220, %c0_221, %c576_222], %409 {strides = array<i32>} : memref<2x2x2048xbf16, #tpu.memory_space<vmem>>, vector<1x2x64xbf16>,
      %410 = vector.extract_strided_slice %157 {offsets = [0, 42, 0], sizes = [2, 1, 64], strides = [1, 1, 1]} : vector<2x64x64xf32> to vector<2x1x64xf32>
      %411 = vector.shape_cast %410 : vector<2x1x64xf32> to vector<2x64xf32>
      %412 = arith.truncf %411 : vector<2x64xf32> to vector<2x64xbf16>
      %c1_223 = arith.constant 1 : index
      %c0_224 = arith.constant 0 : index
      %c640_225 = arith.constant 640 : index
      %413 = vector.load %arg14[%c1_223, %c0_224, %c640_225] : memref<2x2x2048xbf16, #tpu.memory_space<vmem>>, vector<1x2x64xbf16>
      %414 = vector.shape_cast %413 : vector<1x2x64xbf16> to vector<2x64xbf16>
      %415 = vector.shape_cast %412 : vector<2x64xbf16> to vector<1x2x64xbf16>
      tpu.vector_store %arg14[%c1_223, %c0_224, %c640_225], %415 {strides = array<i32>} : memref<2x2x2048xbf16, #tpu.memory_space<vmem>>, vector<1x2x64xbf16>,
      %416 = vector.extract_strided_slice %157 {offsets = [0, 43, 0], sizes = [2, 1, 64], strides = [1, 1, 1]} : vector<2x64x64xf32> to vector<2x1x64xf32>
      %417 = vector.shape_cast %416 : vector<2x1x64xf32> to vector<2x64xf32>
      %418 = arith.truncf %417 : vector<2x64xf32> to vector<2x64xbf16>
      %c1_226 = arith.constant 1 : index
      %c0_227 = arith.constant 0 : index
      %c704_228 = arith.constant 704 : index
      %419 = vector.load %arg14[%c1_226, %c0_227, %c704_228] : memref<2x2x2048xbf16, #tpu.memory_space<vmem>>, vector<1x2x64xbf16>
      %420 = vector.shape_cast %419 : vector<1x2x64xbf16> to vector<2x64xbf16>
      %421 = vector.shape_cast %418 : vector<2x64xbf16> to vector<1x2x64xbf16>
      tpu.vector_store %arg14[%c1_226, %c0_227, %c704_228], %421 {strides = array<i32>} : memref<2x2x2048xbf16, #tpu.memory_space<vmem>>, vector<1x2x64xbf16>,
      %422 = vector.extract_strided_slice %157 {offsets = [0, 44, 0], sizes = [2, 1, 64], strides = [1, 1, 1]} : vector<2x64x64xf32> to vector<2x1x64xf32>
      %423 = vector.shape_cast %422 : vector<2x1x64xf32> to vector<2x64xf32>
      %424 = arith.truncf %423 : vector<2x64xf32> to vector<2x64xbf16>
      %c1_229 = arith.constant 1 : index
      %c0_230 = arith.constant 0 : index
      %c768_231 = arith.constant 768 : index
      %425 = vector.load %arg14[%c1_229, %c0_230, %c768_231] : memref<2x2x2048xbf16, #tpu.memory_space<vmem>>, vector<1x2x64xbf16>
      %426 = vector.shape_cast %425 : vector<1x2x64xbf16> to vector<2x64xbf16>
      %427 = vector.shape_cast %424 : vector<2x64xbf16> to vector<1x2x64xbf16>
      tpu.vector_store %arg14[%c1_229, %c0_230, %c768_231], %427 {strides = array<i32>} : memref<2x2x2048xbf16, #tpu.memory_space<vmem>>, vector<1x2x64xbf16>,
      %428 = vector.extract_strided_slice %157 {offsets = [0, 45, 0], sizes = [2, 1, 64], strides = [1, 1, 1]} : vector<2x64x64xf32> to vector<2x1x64xf32>
      %429 = vector.shape_cast %428 : vector<2x1x64xf32> to vector<2x64xf32>
      %430 = arith.truncf %429 : vector<2x64xf32> to vector<2x64xbf16>
      %c1_232 = arith.constant 1 : index
      %c0_233 = arith.constant 0 : index
      %c832_234 = arith.constant 832 : index
      %431 = vector.load %arg14[%c1_232, %c0_233, %c832_234] : memref<2x2x2048xbf16, #tpu.memory_space<vmem>>, vector<1x2x64xbf16>
      %432 = vector.shape_cast %431 : vector<1x2x64xbf16> to vector<2x64xbf16>
      %433 = vector.shape_cast %430 : vector<2x64xbf16> to vector<1x2x64xbf16>
      tpu.vector_store %arg14[%c1_232, %c0_233, %c832_234], %433 {strides = array<i32>} : memref<2x2x2048xbf16, #tpu.memory_space<vmem>>, vector<1x2x64xbf16>,
      %434 = vector.extract_strided_slice %157 {offsets = [0, 46, 0], sizes = [2, 1, 64], strides = [1, 1, 1]} : vector<2x64x64xf32> to vector<2x1x64xf32>
      %435 = vector.shape_cast %434 : vector<2x1x64xf32> to vector<2x64xf32>
      %436 = arith.truncf %435 : vector<2x64xf32> to vector<2x64xbf16>
      %c1_235 = arith.constant 1 : index
      %c0_236 = arith.constant 0 : index
      %c896_237 = arith.constant 896 : index
      %437 = vector.load %arg14[%c1_235, %c0_236, %c896_237] : memref<2x2x2048xbf16, #tpu.memory_space<vmem>>, vector<1x2x64xbf16>
      %438 = vector.shape_cast %437 : vector<1x2x64xbf16> to vector<2x64xbf16>
      %439 = vector.shape_cast %436 : vector<2x64xbf16> to vector<1x2x64xbf16>
      tpu.vector_store %arg14[%c1_235, %c0_236, %c896_237], %439 {strides = array<i32>} : memref<2x2x2048xbf16, #tpu.memory_space<vmem>>, vector<1x2x64xbf16>,
      %440 = vector.extract_strided_slice %157 {offsets = [0, 47, 0], sizes = [2, 1, 64], strides = [1, 1, 1]} : vector<2x64x64xf32> to vector<2x1x64xf32>
      %441 = vector.shape_cast %440 : vector<2x1x64xf32> to vector<2x64xf32>
      %442 = arith.truncf %441 : vector<2x64xf32> to vector<2x64xbf16>
      %c1_238 = arith.constant 1 : index
      %c0_239 = arith.constant 0 : index
      %c960_240 = arith.constant 960 : index
      %443 = vector.load %arg14[%c1_238, %c0_239, %c960_240] : memref<2x2x2048xbf16, #tpu.memory_space<vmem>>, vector<1x2x64xbf16>
      %444 = vector.shape_cast %443 : vector<1x2x64xbf16> to vector<2x64xbf16>
      %445 = vector.shape_cast %442 : vector<2x64xbf16> to vector<1x2x64xbf16>
      tpu.vector_store %arg14[%c1_238, %c0_239, %c960_240], %445 {strides = array<i32>} : memref<2x2x2048xbf16, #tpu.memory_space<vmem>>, vector<1x2x64xbf16>,
      %446 = vector.extract_strided_slice %157 {offsets = [0, 48, 0], sizes = [2, 1, 64], strides = [1, 1, 1]} : vector<2x64x64xf32> to vector<2x1x64xf32>
      %447 = vector.shape_cast %446 : vector<2x1x64xf32> to vector<2x64xf32>
      %448 = arith.truncf %447 : vector<2x64xf32> to vector<2x64xbf16>
      %c1_241 = arith.constant 1 : index
      %c0_242 = arith.constant 0 : index
      %c1024_243 = arith.constant 1024 : index
      %449 = vector.load %arg14[%c1_241, %c0_242, %c1024_243] : memref<2x2x2048xbf16, #tpu.memory_space<vmem>>, vector<1x2x64xbf16>
      %450 = vector.shape_cast %449 : vector<1x2x64xbf16> to vector<2x64xbf16>
      %451 = vector.shape_cast %448 : vector<2x64xbf16> to vector<1x2x64xbf16>
      tpu.vector_store %arg14[%c1_241, %c0_242, %c1024_243], %451 {strides = array<i32>} : memref<2x2x2048xbf16, #tpu.memory_space<vmem>>, vector<1x2x64xbf16>,
      %452 = vector.extract_strided_slice %157 {offsets = [0, 49, 0], sizes = [2, 1, 64], strides = [1, 1, 1]} : vector<2x64x64xf32> to vector<2x1x64xf32>
      %453 = vector.shape_cast %452 : vector<2x1x64xf32> to vector<2x64xf32>
      %454 = arith.truncf %453 : vector<2x64xf32> to vector<2x64xbf16>
      %c1_244 = arith.constant 1 : index
      %c0_245 = arith.constant 0 : index
      %c1088_246 = arith.constant 1088 : index
      %455 = vector.load %arg14[%c1_244, %c0_245, %c1088_246] : memref<2x2x2048xbf16, #tpu.memory_space<vmem>>, vector<1x2x64xbf16>
      %456 = vector.shape_cast %455 : vector<1x2x64xbf16> to vector<2x64xbf16>
      %457 = vector.shape_cast %454 : vector<2x64xbf16> to vector<1x2x64xbf16>
      tpu.vector_store %arg14[%c1_244, %c0_245, %c1088_246], %457 {strides = array<i32>} : memref<2x2x2048xbf16, #tpu.memory_space<vmem>>, vector<1x2x64xbf16>,
      %458 = vector.extract_strided_slice %157 {offsets = [0, 50, 0], sizes = [2, 1, 64], strides = [1, 1, 1]} : vector<2x64x64xf32> to vector<2x1x64xf32>
      %459 = vector.shape_cast %458 : vector<2x1x64xf32> to vector<2x64xf32>
      %460 = arith.truncf %459 : vector<2x64xf32> to vector<2x64xbf16>
      %c1_247 = arith.constant 1 : index
      %c0_248 = arith.constant 0 : index
      %c1152_249 = arith.constant 1152 : index
      %461 = vector.load %arg14[%c1_247, %c0_248, %c1152_249] : memref<2x2x2048xbf16, #tpu.memory_space<vmem>>, vector<1x2x64xbf16>
      %462 = vector.shape_cast %461 : vector<1x2x64xbf16> to vector<2x64xbf16>
      %463 = vector.shape_cast %460 : vector<2x64xbf16> to vector<1x2x64xbf16>
      tpu.vector_store %arg14[%c1_247, %c0_248, %c1152_249], %463 {strides = array<i32>} : memref<2x2x2048xbf16, #tpu.memory_space<vmem>>, vector<1x2x64xbf16>,
      %464 = vector.extract_strided_slice %157 {offsets = [0, 51, 0], sizes = [2, 1, 64], strides = [1, 1, 1]} : vector<2x64x64xf32> to vector<2x1x64xf32>
      %465 = vector.shape_cast %464 : vector<2x1x64xf32> to vector<2x64xf32>
      %466 = arith.truncf %465 : vector<2x64xf32> to vector<2x64xbf16>
      %c1_250 = arith.constant 1 : index
      %c0_251 = arith.constant 0 : index
      %c1216_252 = arith.constant 1216 : index
      %467 = vector.load %arg14[%c1_250, %c0_251, %c1216_252] : memref<2x2x2048xbf16, #tpu.memory_space<vmem>>, vector<1x2x64xbf16>
      %468 = vector.shape_cast %467 : vector<1x2x64xbf16> to vector<2x64xbf16>
      %469 = vector.shape_cast %466 : vector<2x64xbf16> to vector<1x2x64xbf16>
      tpu.vector_store %arg14[%c1_250, %c0_251, %c1216_252], %469 {strides = array<i32>} : memref<2x2x2048xbf16, #tpu.memory_space<vmem>>, vector<1x2x64xbf16>,
      %470 = vector.extract_strided_slice %157 {offsets = [0, 52, 0], sizes = [2, 1, 64], strides = [1, 1, 1]} : vector<2x64x64xf32> to vector<2x1x64xf32>
      %471 = vector.shape_cast %470 : vector<2x1x64xf32> to vector<2x64xf32>
      %472 = arith.truncf %471 : vector<2x64xf32> to vector<2x64xbf16>
      %c1_253 = arith.constant 1 : index
      %c0_254 = arith.constant 0 : index
      %c1280_255 = arith.constant 1280 : index
      %473 = vector.load %arg14[%c1_253, %c0_254, %c1280_255] : memref<2x2x2048xbf16, #tpu.memory_space<vmem>>, vector<1x2x64xbf16>
      %474 = vector.shape_cast %473 : vector<1x2x64xbf16> to vector<2x64xbf16>
      %475 = vector.shape_cast %472 : vector<2x64xbf16> to vector<1x2x64xbf16>
      tpu.vector_store %arg14[%c1_253, %c0_254, %c1280_255], %475 {strides = array<i32>} : memref<2x2x2048xbf16, #tpu.memory_space<vmem>>, vector<1x2x64xbf16>,
      %476 = vector.extract_strided_slice %157 {offsets = [0, 53, 0], sizes = [2, 1, 64], strides = [1, 1, 1]} : vector<2x64x64xf32> to vector<2x1x64xf32>
      %477 = vector.shape_cast %476 : vector<2x1x64xf32> to vector<2x64xf32>
      %478 = arith.truncf %477 : vector<2x64xf32> to vector<2x64xbf16>
      %c1_256 = arith.constant 1 : index
      %c0_257 = arith.constant 0 : index
      %c1344_258 = arith.constant 1344 : index
      %479 = vector.load %arg14[%c1_256, %c0_257, %c1344_258] : memref<2x2x2048xbf16, #tpu.memory_space<vmem>>, vector<1x2x64xbf16>
      %480 = vector.shape_cast %479 : vector<1x2x64xbf16> to vector<2x64xbf16>
      %481 = vector.shape_cast %478 : vector<2x64xbf16> to vector<1x2x64xbf16>
      tpu.vector_store %arg14[%c1_256, %c0_257, %c1344_258], %481 {strides = array<i32>} : memref<2x2x2048xbf16, #tpu.memory_space<vmem>>, vector<1x2x64xbf16>,
      %482 = vector.extract_strided_slice %157 {offsets = [0, 54, 0], sizes = [2, 1, 64], strides = [1, 1, 1]} : vector<2x64x64xf32> to vector<2x1x64xf32>
      %483 = vector.shape_cast %482 : vector<2x1x64xf32> to vector<2x64xf32>
      %484 = arith.truncf %483 : vector<2x64xf32> to vector<2x64xbf16>
      %c1_259 = arith.constant 1 : index
      %c0_260 = arith.constant 0 : index
      %c1408_261 = arith.constant 1408 : index
      %485 = vector.load %arg14[%c1_259, %c0_260, %c1408_261] : memref<2x2x2048xbf16, #tpu.memory_space<vmem>>, vector<1x2x64xbf16>
      %486 = vector.shape_cast %485 : vector<1x2x64xbf16> to vector<2x64xbf16>
      %487 = vector.shape_cast %484 : vector<2x64xbf16> to vector<1x2x64xbf16>
      tpu.vector_store %arg14[%c1_259, %c0_260, %c1408_261], %487 {strides = array<i32>} : memref<2x2x2048xbf16, #tpu.memory_space<vmem>>, vector<1x2x64xbf16>,
      %488 = vector.extract_strided_slice %157 {offsets = [0, 55, 0], sizes = [2, 1, 64], strides = [1, 1, 1]} : vector<2x64x64xf32> to vector<2x1x64xf32>
      %489 = vector.shape_cast %488 : vector<2x1x64xf32> to vector<2x64xf32>
      %490 = arith.truncf %489 : vector<2x64xf32> to vector<2x64xbf16>
      %c1_262 = arith.constant 1 : index
      %c0_263 = arith.constant 0 : index
      %c1472_264 = arith.constant 1472 : index
      %491 = vector.load %arg14[%c1_262, %c0_263, %c1472_264] : memref<2x2x2048xbf16, #tpu.memory_space<vmem>>, vector<1x2x64xbf16>
      %492 = vector.shape_cast %491 : vector<1x2x64xbf16> to vector<2x64xbf16>
      %493 = vector.shape_cast %490 : vector<2x64xbf16> to vector<1x2x64xbf16>
      tpu.vector_store %arg14[%c1_262, %c0_263, %c1472_264], %493 {strides = array<i32>} : memref<2x2x2048xbf16, #tpu.memory_space<vmem>>, vector<1x2x64xbf16>,
      %494 = vector.extract_strided_slice %157 {offsets = [0, 56, 0], sizes = [2, 1, 64], strides = [1, 1, 1]} : vector<2x64x64xf32> to vector<2x1x64xf32>
      %495 = vector.shape_cast %494 : vector<2x1x64xf32> to vector<2x64xf32>
      %496 = arith.truncf %495 : vector<2x64xf32> to vector<2x64xbf16>
      %c1_265 = arith.constant 1 : index
      %c0_266 = arith.constant 0 : index
      %c1536_267 = arith.constant 1536 : index
      %497 = vector.load %arg14[%c1_265, %c0_266, %c1536_267] : memref<2x2x2048xbf16, #tpu.memory_space<vmem>>, vector<1x2x64xbf16>
      %498 = vector.shape_cast %497 : vector<1x2x64xbf16> to vector<2x64xbf16>
      %499 = vector.shape_cast %496 : vector<2x64xbf16> to vector<1x2x64xbf16>
      tpu.vector_store %arg14[%c1_265, %c0_266, %c1536_267], %499 {strides = array<i32>} : memref<2x2x2048xbf16, #tpu.memory_space<vmem>>, vector<1x2x64xbf16>,
      %500 = vector.extract_strided_slice %157 {offsets = [0, 57, 0], sizes = [2, 1, 64], strides = [1, 1, 1]} : vector<2x64x64xf32> to vector<2x1x64xf32>
      %501 = vector.shape_cast %500 : vector<2x1x64xf32> to vector<2x64xf32>
      %502 = arith.truncf %501 : vector<2x64xf32> to vector<2x64xbf16>
      %c1_268 = arith.constant 1 : index
      %c0_269 = arith.constant 0 : index
      %c1600_270 = arith.constant 1600 : index
      %503 = vector.load %arg14[%c1_268, %c0_269, %c1600_270] : memref<2x2x2048xbf16, #tpu.memory_space<vmem>>, vector<1x2x64xbf16>
      %504 = vector.shape_cast %503 : vector<1x2x64xbf16> to vector<2x64xbf16>
      %505 = vector.shape_cast %502 : vector<2x64xbf16> to vector<1x2x64xbf16>
      tpu.vector_store %arg14[%c1_268, %c0_269, %c1600_270], %505 {strides = array<i32>} : memref<2x2x2048xbf16, #tpu.memory_space<vmem>>, vector<1x2x64xbf16>,
      %506 = vector.extract_strided_slice %157 {offsets = [0, 58, 0], sizes = [2, 1, 64], strides = [1, 1, 1]} : vector<2x64x64xf32> to vector<2x1x64xf32>
      %507 = vector.shape_cast %506 : vector<2x1x64xf32> to vector<2x64xf32>
      %508 = arith.truncf %507 : vector<2x64xf32> to vector<2x64xbf16>
      %c1_271 = arith.constant 1 : index
      %c0_272 = arith.constant 0 : index
      %c1664_273 = arith.constant 1664 : index
      %509 = vector.load %arg14[%c1_271, %c0_272, %c1664_273] : memref<2x2x2048xbf16, #tpu.memory_space<vmem>>, vector<1x2x64xbf16>
      %510 = vector.shape_cast %509 : vector<1x2x64xbf16> to vector<2x64xbf16>
      %511 = vector.shape_cast %508 : vector<2x64xbf16> to vector<1x2x64xbf16>
      tpu.vector_store %arg14[%c1_271, %c0_272, %c1664_273], %511 {strides = array<i32>} : memref<2x2x2048xbf16, #tpu.memory_space<vmem>>, vector<1x2x64xbf16>,
      %512 = vector.extract_strided_slice %157 {offsets = [0, 59, 0], sizes = [2, 1, 64], strides = [1, 1, 1]} : vector<2x64x64xf32> to vector<2x1x64xf32>
      %513 = vector.shape_cast %512 : vector<2x1x64xf32> to vector<2x64xf32>
      %514 = arith.truncf %513 : vector<2x64xf32> to vector<2x64xbf16>
      %c1_274 = arith.constant 1 : index
      %c0_275 = arith.constant 0 : index
      %c1728_276 = arith.constant 1728 : index
      %515 = vector.load %arg14[%c1_274, %c0_275, %c1728_276] : memref<2x2x2048xbf16, #tpu.memory_space<vmem>>, vector<1x2x64xbf16>
      %516 = vector.shape_cast %515 : vector<1x2x64xbf16> to vector<2x64xbf16>
      %517 = vector.shape_cast %514 : vector<2x64xbf16> to vector<1x2x64xbf16>
      tpu.vector_store %arg14[%c1_274, %c0_275, %c1728_276], %517 {strides = array<i32>} : memref<2x2x2048xbf16, #tpu.memory_space<vmem>>, vector<1x2x64xbf16>,
      %518 = vector.extract_strided_slice %157 {offsets = [0, 60, 0], sizes = [2, 1, 64], strides = [1, 1, 1]} : vector<2x64x64xf32> to vector<2x1x64xf32>
      %519 = vector.shape_cast %518 : vector<2x1x64xf32> to vector<2x64xf32>
      %520 = arith.truncf %519 : vector<2x64xf32> to vector<2x64xbf16>
      %c1_277 = arith.constant 1 : index
      %c0_278 = arith.constant 0 : index
      %c1792_279 = arith.constant 1792 : index
      %521 = vector.load %arg14[%c1_277, %c0_278, %c1792_279] : memref<2x2x2048xbf16, #tpu.memory_space<vmem>>, vector<1x2x64xbf16>
      %522 = vector.shape_cast %521 : vector<1x2x64xbf16> to vector<2x64xbf16>
      %523 = vector.shape_cast %520 : vector<2x64xbf16> to vector<1x2x64xbf16>
      tpu.vector_store %arg14[%c1_277, %c0_278, %c1792_279], %523 {strides = array<i32>} : memref<2x2x2048xbf16, #tpu.memory_space<vmem>>, vector<1x2x64xbf16>,
      %524 = vector.extract_strided_slice %157 {offsets = [0, 61, 0], sizes = [2, 1, 64], strides = [1, 1, 1]} : vector<2x64x64xf32> to vector<2x1x64xf32>
      %525 = vector.shape_cast %524 : vector<2x1x64xf32> to vector<2x64xf32>
      %526 = arith.truncf %525 : vector<2x64xf32> to vector<2x64xbf16>
      %c1_280 = arith.constant 1 : index
      %c0_281 = arith.constant 0 : index
      %c1856_282 = arith.constant 1856 : index
      %527 = vector.load %arg14[%c1_280, %c0_281, %c1856_282] : memref<2x2x2048xbf16, #tpu.memory_space<vmem>>, vector<1x2x64xbf16>
      %528 = vector.shape_cast %527 : vector<1x2x64xbf16> to vector<2x64xbf16>
      %529 = vector.shape_cast %526 : vector<2x64xbf16> to vector<1x2x64xbf16>
      tpu.vector_store %arg14[%c1_280, %c0_281, %c1856_282], %529 {strides = array<i32>} : memref<2x2x2048xbf16, #tpu.memory_space<vmem>>, vector<1x2x64xbf16>,
      %530 = vector.extract_strided_slice %157 {offsets = [0, 62, 0], sizes = [2, 1, 64], strides = [1, 1, 1]} : vector<2x64x64xf32> to vector<2x1x64xf32>
      %531 = vector.shape_cast %530 : vector<2x1x64xf32> to vector<2x64xf32>
      %532 = arith.truncf %531 : vector<2x64xf32> to vector<2x64xbf16>
      %c1_283 = arith.constant 1 : index
      %c0_284 = arith.constant 0 : index
      %c1920_285 = arith.constant 1920 : index
      %533 = vector.load %arg14[%c1_283, %c0_284, %c1920_285] : memref<2x2x2048xbf16, #tpu.memory_space<vmem>>, vector<1x2x64xbf16>
      %534 = vector.shape_cast %533 : vector<1x2x64xbf16> to vector<2x64xbf16>
      %535 = vector.shape_cast %532 : vector<2x64xbf16> to vector<1x2x64xbf16>
      tpu.vector_store %arg14[%c1_283, %c0_284, %c1920_285], %535 {strides = array<i32>} : memref<2x2x2048xbf16, #tpu.memory_space<vmem>>, vector<1x2x64xbf16>,
      %536 = vector.extract_strided_slice %157 {offsets = [0, 63, 0], sizes = [2, 1, 64], strides = [1, 1, 1]} : vector<2x64x64xf32> to vector<2x1x64xf32>
      %537 = vector.shape_cast %536 : vector<2x1x64xf32> to vector<2x64xf32>
      %538 = arith.truncf %537 : vector<2x64xf32> to vector<2x64xbf16>
      %c1_286 = arith.constant 1 : index
      %c0_287 = arith.constant 0 : index
      %c1984_288 = arith.constant 1984 : index
      %539 = vector.load %arg14[%c1_286, %c0_287, %c1984_288] : memref<2x2x2048xbf16, #tpu.memory_space<vmem>>, vector<1x2x64xbf16>
      %540 = vector.shape_cast %539 : vector<1x2x64xbf16> to vector<2x64xbf16>
      %541 = vector.shape_cast %538 : vector<2x64xbf16> to vector<1x2x64xbf16>
      tpu.vector_store %arg14[%c1_286, %c0_287, %c1984_288], %541 {strides = array<i32>} : memref<2x2x2048xbf16, #tpu.memory_space<vmem>>, vector<1x2x64xbf16>,
      %cst_289 = arith.constant 0.000000e+00 : f32
      %542 = vector.broadcast %cst_289 : f32 to vector<2x512xf32>
      %c0_290 = arith.constant 0 : index
      %c0_291 = arith.constant 0 : index
      %543 = vector.load %arg15[%c0_290, %c0_291] : memref<2x512xf32, #tpu.memory_space<vmem>>, vector<2x512xf32>
      tpu.vector_store %arg15[%c0_290, %c0_291], %542 {strides = array<i32>} : memref<2x512xf32, #tpu.memory_space<vmem>>, vector<2x512xf32>,
    } else {
    }
    %3 = arith.index_cast %arg0 : i32 to index
    %c0 = arith.constant 0 : index
    %c0_1 = arith.constant 0 : index
    %4 = vector.load %arg14[%3, %c0, %c0_1] : memref<2x2x2048xbf16, #tpu.memory_space<vmem>>, vector<1x2x2048xbf16>
    %5 = vector.shape_cast %4 : vector<1x2x2048xbf16> to vector<2x2048xbf16>
    %c0_2 = arith.constant 0 : index
    %c0_3 = arith.constant 0 : index
    %6 = vector.load %arg15[%c0_2, %c0_3] : memref<2x512xf32, #tpu.memory_space<vmem>>, vector<2x512xf32>
    %c0_4 = arith.constant 0 : index
    %c0_5 = arith.constant 0 : index
    %7 = vector.load %arg6[%c0_4, %c0_5] : memref<2048x512xbf16, #tpu.memory_space<vmem>>, vector<2048x512xbf16>
    %cst = arith.constant dense<0.000000e+00> : vector<2x512xf32>
    %8 = tpu.matmul %5, %7, %cst {dimension_numbers = #tpu.dot_dimension_numbers<[1], [0], [0], [1], [0, 0, 1, 1], [], []>} : vector<2x2048xbf16>, vector<2048x512xbf16>, vector<2x512xf32> -> vector<2x512xf32>
    %9 = arith.addf %6, %8 : vector<2x512xf32>
    %c0_6 = arith.constant 0 : index
    %c0_7 = arith.constant 0 : index
    %10 = vector.load %arg15[%c0_6, %c0_7] : memref<2x512xf32, #tpu.memory_space<vmem>>, vector<2x512xf32>
    tpu.vector_store %arg15[%c0_6, %c0_7], %9 {strides = array<i32>} : memref<2x512xf32, #tpu.memory_space<vmem>>, vector<2x512xf32>,
    %c1_i32 = arith.constant 1 : i32
    %11 = arith.cmpi eq, %arg0, %c1_i32 : i32
    %12 = arith.extui %11 : i1 to i32
    %c0_i32_8 = arith.constant 0 : i32
    %13 = arith.cmpi ne, %12, %c0_i32_8 : i32
    scf.if %13 {
      %c0_9 = arith.constant 0 : index
      %c0_10 = arith.constant 0 : index
      %14 = vector.load %arg15[%c0_9, %c0_10] : memref<2x512xf32, #tpu.memory_space<vmem>>, vector<2x512xf32>
      %c0_11 = arith.constant 0 : index
      %c0_12 = arith.constant 0 : index
      %15 = vector.load %arg7[%c0_11, %c0_12] : memref<1x512xf32, #tpu.memory_space<vmem>>, vector<1x512xf32>
      %16 = vector.broadcast %15 : vector<1x512xf32> to vector<2x512xf32>
      %17 = arith.addf %14, %16 : vector<2x512xf32>
      %cst_13 = arith.constant 0.000000e+00 : f32
      %18 = vector.broadcast %cst_13 : f32 to vector<2x512xf32>
      %19 = arith.maximumf %17, %18 : vector<2x512xf32>
      %20 = arith.truncf %19 : vector<2x512xf32> to vector<2x512xbf16>
      %c0_14 = arith.constant 0 : index
      %c0_15 = arith.constant 0 : index
      %21 = vector.load %arg8[%c0_14, %c0_15] : memref<512x1024xbf16, #tpu.memory_space<vmem>>, vector<512x1024xbf16>
      %cst_16 = arith.constant dense<0.000000e+00> : vector<2x1024xf32>
      %22 = tpu.matmul %20, %21, %cst_16 {dimension_numbers = #tpu.dot_dimension_numbers<[1], [0], [0], [1], [0, 0, 1, 1], [], []>} : vector<2x512xbf16>, vector<512x1024xbf16>, vector<2x1024xf32> -> vector<2x1024xf32>
      %c0_17 = arith.constant 0 : index
      %c0_18 = arith.constant 0 : index
      %23 = vector.load %arg9[%c0_17, %c0_18] : memref<1x1024xf32, #tpu.memory_space<vmem>>, vector<1x1024xf32>
      %24 = vector.broadcast %23 : vector<1x1024xf32> to vector<2x1024xf32>
      %25 = arith.addf %22, %24 : vector<2x1024xf32>
      %cst_19 = arith.constant 0.000000e+00 : f32
      %26 = vector.broadcast %cst_19 : f32 to vector<2x1024xf32>
      %27 = arith.maximumf %25, %26 : vector<2x1024xf32>
      %28 = arith.truncf %27 : vector<2x1024xf32> to vector<2x1024xbf16>
      %c0_20 = arith.constant 0 : index
      %c0_21 = arith.constant 0 : index
      %29 = vector.load %arg10[%c0_20, %c0_21] : memref<1024x4xbf16, #tpu.memory_space<vmem>>, vector<1024x4xbf16>
      %cst_22 = arith.constant dense<0.000000e+00> : vector<2x4xf32>
      %30 = tpu.matmul %28, %29, %cst_22 {dimension_numbers = #tpu.dot_dimension_numbers<[1], [0], [0], [1], [0, 0, 1, 1], [], []>} : vector<2x1024xbf16>, vector<1024x4xbf16>, vector<2x4xf32> -> vector<2x4xf32>
      %c0_23 = arith.constant 0 : index
      %c0_24 = arith.constant 0 : index
      %31 = vector.load %arg11[%c0_23, %c0_24] : memref<1x4xf32, #tpu.memory_space<vmem>>, vector<1x4xf32>
      %32 = vector.broadcast %31 : vector<1x4xf32> to vector<2x4xf32>
      %33 = arith.addf %30, %32 : vector<2x4xf32>
      %c0_25 = arith.constant 0 : index
      %c0_26 = arith.constant 0 : index
      %34 = vector.load %arg12[%c0_25, %c0_26] : memref<2x4xf32, #tpu.memory_space<vmem>>, vector<2x4xf32>
      tpu.vector_store %arg12[%c0_25, %c0_26], %33 {strides = array<i32>} : memref<2x4xf32, #tpu.memory_space<vmem>>, vector<2x4xf32>,
    } else {
    }
    return
  }
  func.func @transform_0(%arg0: i32) -> (i32, i32, i32, i32) {
    %c0_i32 = arith.constant 0 : i32
    %c0_i32_0 = arith.constant 0 : i32
    %c0_i32_1 = arith.constant 0 : i32
    %c0_i32_2 = arith.constant 0 : i32
    %c0_i32_3 = arith.constant 0 : i32
    return %c0_i32, %c0_i32_0, %c0_i32_1, %c0_i32_2 : i32, i32, i32, i32
  }
  func.func @transform_1(%arg0: i32) -> (i32, i32) {
    %c0_i32 = arith.constant 0 : i32
    %c0_i32_0 = arith.constant 0 : i32
    %c0_i32_1 = arith.constant 0 : i32
    return %c0_i32, %c0_i32_0 : i32, i32
  }
  func.func @transform_2(%arg0: i32) -> (i32, i32) {
    %c0_i32 = arith.constant 0 : i32
    %c0_i32_0 = arith.constant 0 : i32
    %c0_i32_1 = arith.constant 0 : i32
    return %c0_i32, %c0_i32_0 : i32, i32
  }
  func.func @transform_3(%arg0: i32) -> (i32, i32, i32) {
    %c0_i32 = arith.constant 0 : i32
    %c0_i32_0 = arith.constant 0 : i32
    %c0_i32_1 = arith.constant 0 : i32
    %c0_i32_2 = arith.constant 0 : i32
    return %c0_i32, %c0_i32_0, %c0_i32_1 : i32, i32, i32
  }
  func.func @transform_4(%arg0: i32) -> (i32, i32) {
    %c0_i32 = arith.constant 0 : i32
    %c0_i32_0 = arith.constant 0 : i32
    %c0_i32_1 = arith.constant 0 : i32
    return %c0_i32, %c0_i32_0 : i32, i32
  }
  func.func @transform_5(%arg0: i32) -> (i32, i32) {
    %c0_i32 = arith.constant 0 : i32
    %c0_i32_0 = arith.constant 0 : i32
    return %arg0, %c0_i32 : i32, i32
  }
  func.func @transform_6(%arg0: i32) -> (i32, i32) {
    %c0_i32 = arith.constant 0 : i32
    %c0_i32_0 = arith.constant 0 : i32
    %c0_i32_1 = arith.constant 0 : i32
    return %c0_i32, %c0_i32_0 : i32, i32
  }
  func.func @transform_7(%arg0: i32) -> (i32, i32) {
    %c0_i32 = arith.constant 0 : i32
    %c0_i32_0 = arith.constant 0 : i32
    %c0_i32_1 = arith.constant 0 : i32
    return %c0_i32, %c0_i32_0 : i32, i32
  }
  func.func @transform_8(%arg0: i32) -> (i32, i32) {
    %c0_i32 = arith.constant 0 : i32
    %c0_i32_0 = arith.constant 0 : i32
    %c0_i32_1 = arith.constant 0 : i32
    return %c0_i32, %c0_i32_0 : i32, i32
  }
  func.func @transform_9(%arg0: i32) -> (i32, i32) {
    %c0_i32 = arith.constant 0 : i32
    %c0_i32_0 = arith.constant 0 : i32
    %c0_i32_1 = arith.constant 0 : i32
    return %c0_i32, %c0_i32_0 : i32, i32
  }
  func.func @transform_10(%arg0: i32) -> (i32, i32) {
    %c0_i32 = arith.constant 0 : i32
    %c0_i32_0 = arith.constant 0 : i32
    %c0_i32_1 = arith.constant 0 : i32
    return %c0_i32, %c0_i32_0 : i32, i32
  }
  func.func @transform_11(%arg0: i32) -> (i32, i32) {
    %c0_i32 = arith.constant 0 : i32
    %c0_i32_0 = arith.constant 0 : i32
    %c0_i32_1 = arith.constant 0 : i32
    return %c0_i32, %c0_i32_0 : i32, i32
  }
}

</mosaic_0001>

<llo_original>
// kernel: dqn_forward.1
$region0: #{dqn_forward.1}
  #allocation0 [shape = 'u32[]', space=smem, size = 0x4, offset = 0x4, fixed_abs, tag = 'smem constant byte address 0x4 - core index']
  #allocation1 [shape = 'u32[72,128]{1,0:T(1,128)}', space=vmem, size = 0x9000, scoped, tag = 'internal scratch']
  #allocation2 [shape = 'f32[2,10,10,32]{3,2,1,0:T(8,128)}', space=vmem, size = 0x28000, scoped, tag = 'scratch operand']
  #allocation3 [shape = 'bf16[2,2,2048]{2,1,0:T(2,128)(2,1)}', space=vmem, size = 0x4000, scoped, tag = 'scratch operand']
  #allocation4 [shape = 'f32[2,512]{1,0:T(2,128)}', space=vmem, size = 0x1000, scoped, tag = 'scratch operand']
  %s0 = inlined_call_operand.vmem [shape: f32[2,10,10,1], index: 0, kind: input, shape index: {}]
  %s1 = inlined_call_operand.vmem [shape: f32[9,32], index: 1, kind: input, shape index: {}]
  %s2 = inlined_call_operand.vmem [shape: f32[1,32], index: 2, kind: input, shape index: {}]
  %s3 = inlined_call_operand.vmem [shape: bf16[9,32,64], index: 3, kind: input, shape index: {}]
  %s4 = inlined_call_operand.vmem [shape: f32[1,64], index: 4, kind: input, shape index: {}]
  %s5 = inlined_call_operand.vmem [shape: bf16[4096,512], index: 5, kind: input, shape index: {}]
  %s6 = inlined_call_operand.vmem [shape: f32[1,512], index: 6, kind: input, shape index: {}]
  %s7 = inlined_call_operand.vmem [shape: bf16[512,1024], index: 7, kind: input, shape index: {}]
  %s8 = inlined_call_operand.vmem [shape: f32[1,1024], index: 8, kind: input, shape index: {}]
  %s9 = inlined_call_operand.vmem [shape: bf16[1024,4], index: 9, kind: input, shape index: {}]
  %s10 = inlined_call_operand.vmem [shape: f32[1,4], index: 10, kind: input, shape index: {}]
  %s11 = inlined_call_operand.hbm [shape: f32[2,4], index: 11, kind: output, shape index: {}]
  %s12 = sld [smem:[#allocation0]]
  $region85: #{dqn_forward.1} parent=0
    _
  %s14 = ssub.s32 1, %s12
  %s15 = scalar_select 0, %s14, %s12
  $region1: #{dqn_forward.1} parent=0
    #allocation5 [shape = 'u8[1024]{0}', space=vmem, size = 0x400, scoped, tag = 'output window, operand 0, single buffered']
    #allocation6 [shape = 's32[2]{0}', space=sflag, size = 0x8, scoped, tag = 'scoped memory for dqn_forward.1']
    %16 = vsyncpa [#allocation6], 0
    loop: start=0, step=1, limit=4
    $region2: #{dqn_forward.1} parent=1 // loop_pre_header
      _
    $region3: #{dqn_forward.1} parent=1 // loop_header
      %s18 = sphi 0, %s22
      %p19 = scmp.ge.s32.totalorder %s18, 4
      %s26 = sphi 0, %s26
      %s28 = sphi 0, %s26
      %s29 = sphi 0, %s28
      %s43 = sphi 0, %s29
      %s47 = sphi 0, %s47
      %s49 = sphi 0, %s47
      %s50 = sphi 0, %s49
      %s64 = sphi 0, %s50
      %s68 = sphi 0, %s68
      %s70 = sphi 0, %s68
      %s71 = sphi 0, %s70
      %s85 = sphi 0, %s71
      %s89 = sphi 0, %s89
      %s91 = sphi 0, %s89
      %s92 = sphi 0, %s91
      %s106 = sphi 0, %s92
      %s110 = sphi 0, %s110
      %s112 = sphi 0, %s110
      %s113 = sphi 0, %s112
      %s127 = sphi 0, %s113
      %s133 = sphi 0, %s135
      %s136 = sphi 0, %s133
      %s137 = sphi 0, %s136
      %s153 = sphi 0, %s137
      %s157 = sphi 0, %s157
      %s159 = sphi 0, %s157
      %s160 = sphi 0, %s159
      %s174 = sphi 0, %s160
      %s178 = sphi 0, %s178
      %s180 = sphi 0, %s178
      %s181 = sphi 0, %s180
      %s195 = sphi 0, %s181
      %s199 = sphi 0, %s199
      %s201 = sphi 0, %s199
      %s202 = sphi 0, %s201
      %s216 = sphi 0, %s202
      %s220 = sphi 0, %s220
      %s222 = sphi 0, %s220
      %s223 = sphi 0, %s222
      %s237 = sphi 0, %s223
      %s241 = sphi 0, %s241
      %s243 = sphi 0, %s241
      %s244 = sphi 0, %s243
      %s258 = sphi 0, %s244
      %s262 = sphi 0, %s262
      %s264 = sphi 0, %s262
      %s265 = sphi 0, %s264
      %s279 = sphi 0, %s265
    $region4: #{dqn_forward.1} parent=1 // loop_header_branch
      %21 = sbr.rel (%p19) target = $region8
    $region5: #{dqn_forward.1} parent=1 // loop_body
      %s23 = ssub.s32 %s18, 1
      %s24 = ssub.s32 %s18, 2
      %s25 = sadd.s32 %s18, 1
      %s27 = sadd.s32 %s26, 1
      %p30 = scmp.eq.s32.totalorder %s18, 1
      %p31 = scmp.ne.s32.totalorder %s26, %s28
      %p32 = scmp.eq.s32.totalorder %s18, 0
      %p33 = por %p31, %p32
      %p34 = scmp.ne.s32.totalorder %s26, %s28
      %p35 = scmp.eq.s32.totalorder %s23, 1
      %p36 = por %p34, %p35
      %p37 = scmp.ne.s32.totalorder %s28, %s29
      %p38 = scmp.eq.s32.totalorder %s23, 0
      %p39 = por %p37, %p38
      %p40 = scmp.ne.s32.totalorder %s28, %s29
      %p41 = scmp.eq.s32.totalorder %s24, 1
      %p42 = por %p40, %p41
      %p44 = scmp.ne.s32.totalorder %s29, %s43
      %p45 = scmp.eq.s32.totalorder %s24, 0
      %p46 = por %p44, %p45
      %s48 = sadd.s32 %s47, 1
      %p51 = scmp.eq.s32.totalorder %s18, 1
      %p52 = scmp.ne.s32.totalorder %s47, %s49
      %p53 = scmp.eq.s32.totalorder %s18, 0
      %p54 = por %p52, %p53
      %p55 = scmp.ne.s32.totalorder %s47, %s49
      %p56 = scmp.eq.s32.totalorder %s23, 1
      %p57 = por %p55, %p56
      %p58 = scmp.ne.s32.totalorder %s49, %s50
      %p59 = scmp.eq.s32.totalorder %s23, 0
      %p60 = por %p58, %p59
      %p61 = scmp.ne.s32.totalorder %s49, %s50
      %p62 = scmp.eq.s32.totalorder %s24, 1
      %p63 = por %p61, %p62
      %p65 = scmp.ne.s32.totalorder %s50, %s64
      %p66 = scmp.eq.s32.totalorder %s24, 0
      %p67 = por %p65, %p66
      %s69 = sadd.s32 %s68, 1
      %p72 = scmp.eq.s32.totalorder %s18, 1
      %p73 = scmp.ne.s32.totalorder %s68, %s70
      %p74 = scmp.eq.s32.totalorder %s18, 0
      %p75 = por %p73, %p74
      %p76 = scmp.ne.s32.totalorder %s68, %s70
      %p77 = scmp.eq.s32.totalorder %s23, 1
      %p78 = por %p76, %p77
      %p79 = scmp.ne.s32.totalorder %s70, %s71
      %p80 = scmp.eq.s32.totalorder %s23, 0
      %p81 = por %p79, %p80
      %p82 = scmp.ne.s32.totalorder %s70, %s71
      %p83 = scmp.eq.s32.totalorder %s24, 1
      %p84 = por %p82, %p83
      %p86 = scmp.ne.s32.totalorder %s71, %s85
      %p87 = scmp.eq.s32.totalorder %s24, 0
      %p88 = por %p86, %p87
      %s90 = sadd.s32 %s89, 1
      %p93 = scmp.eq.s32.totalorder %s18, 1
      %p94 = scmp.ne.s32.totalorder %s89, %s91
      %p95 = scmp.eq.s32.totalorder %s18, 0
      %p96 = por %p94, %p95
      %p97 = scmp.ne.s32.totalorder %s89, %s91
      %p98 = scmp.eq.s32.totalorder %s23, 1
      %p99 = por %p97, %p98
      %p100 = scmp.ne.s32.totalorder %s91, %s92
      %p101 = scmp.eq.s32.totalorder %s23, 0
      %p102 = por %p100, %p101
      %p103 = scmp.ne.s32.totalorder %s91, %s92
      %p104 = scmp.eq.s32.totalorder %s24, 1
      %p105 = por %p103, %p104
      %p107 = scmp.ne.s32.totalorder %s92, %s106
      %p108 = scmp.eq.s32.totalorder %s24, 0
      %p109 = por %p107, %p108
      %s111 = sadd.s32 %s110, 1
      %p114 = scmp.eq.s32.totalorder %s18, 1
      %p115 = scmp.ne.s32.totalorder %s110, %s112
      %p116 = scmp.eq.s32.totalorder %s18, 0
      %p117 = por %p115, %p116
      %p118 = scmp.ne.s32.totalorder %s110, %s112
      %p119 = scmp.eq.s32.totalorder %s23, 1
      %p120 = por %p118, %p119
      %p121 = scmp.ne.s32.totalorder %s112, %s113
      %p122 = scmp.eq.s32.totalorder %s23, 0
      %p123 = por %p121, %p122
      %p124 = scmp.ne.s32.totalorder %s112, %s113
      %p125 = scmp.eq.s32.totalorder %s24, 1
      %p126 = por %p124, %p125
      %p128 = scmp.ne.s32.totalorder %s113, %s127
      %p129 = scmp.eq.s32.totalorder %s24, 0
      %p130 = por %p128, %p129
      %s131 = ssub.s32 %s18, %s25
      %p132 = scmp.eq.s32.totalorder %s131, 0
      %s134 = sadd.s32 %s133, 1
      %s135 = scalar_select %p132, %s133, %s134
      %p138 = pneg %p132
      %p139 = scmp.eq.s32.totalorder %s18, 1
      %p140 = por %p138, %p139
      %p141 = scmp.ne.s32.totalorder %s133, %s136
      %p142 = scmp.eq.s32.totalorder %s18, 0
      %p143 = por %p141, %p142
      %p144 = scmp.ne.s32.totalorder %s133, %s136
      %p145 = scmp.eq.s32.totalorder %s23, 1
      %p146 = por %p144, %p145
      %p147 = scmp.ne.s32.totalorder %s136, %s137
      %p148 = scmp.eq.s32.totalorder %s23, 0
      %p149 = por %p147, %p148
      %p150 = scmp.ne.s32.totalorder %s136, %s137
      %p151 = scmp.eq.s32.totalorder %s24, 1
      %p152 = por %p150, %p151
      %p154 = scmp.ne.s32.totalorder %s137, %s153
      %p155 = scmp.eq.s32.totalorder %s24, 0
      %p156 = por %p154, %p155
      %s158 = sadd.s32 %s157, 1
      %p161 = scmp.eq.s32.totalorder %s18, 1
      %p162 = scmp.ne.s32.totalorder %s157, %s159
      %p163 = scmp.eq.s32.totalorder %s18, 0
      %p164 = por %p162, %p163
      %p165 = scmp.ne.s32.totalorder %s157, %s159
      %p166 = scmp.eq.s32.totalorder %s23, 1
      %p167 = por %p165, %p166
      %p168 = scmp.ne.s32.totalorder %s159, %s160
      %p169 = scmp.eq.s32.totalorder %s23, 0
      %p170 = por %p168, %p169
      %p171 = scmp.ne.s32.totalorder %s159, %s160
      %p172 = scmp.eq.s32.totalorder %s24, 1
      %p173 = por %p171, %p172
      %p175 = scmp.ne.s32.totalorder %s160, %s174
      %p176 = scmp.eq.s32.totalorder %s24, 0
      %p177 = por %p175, %p176
      %s179 = sadd.s32 %s178, 1
      %p182 = scmp.eq.s32.totalorder %s18, 1
      %p183 = scmp.ne.s32.totalorder %s178, %s180
      %p184 = scmp.eq.s32.totalorder %s18, 0
      %p185 = por %p183, %p184
      %p186 = scmp.ne.s32.totalorder %s178, %s180
      %p187 = scmp.eq.s32.totalorder %s23, 1
      %p188 = por %p186, %p187
      %p189 = scmp.ne.s32.totalorder %s180, %s181
      %p190 = scmp.eq.s32.totalorder %s23, 0
      %p191 = por %p189, %p190
      %p192 = scmp.ne.s32.totalorder %s180, %s181
      %p193 = scmp.eq.s32.totalorder %s24, 1
      %p194 = por %p192, %p193
      %p196 = scmp.ne.s32.totalorder %s181, %s195
      %p197 = scmp.eq.s32.totalorder %s24, 0
      %p198 = por %p196, %p197
      %s200 = sadd.s32 %s199, 1
      %p203 = scmp.eq.s32.totalorder %s18, 1
      %p204 = scmp.ne.s32.totalorder %s199, %s201
      %p205 = scmp.eq.s32.totalorder %s18, 0
      %p206 = por %p204, %p205
      %p207 = scmp.ne.s32.totalorder %s199, %s201
      %p208 = scmp.eq.s32.totalorder %s23, 1
      %p209 = por %p207, %p208
      %p210 = scmp.ne.s32.totalorder %s201, %s202
      %p211 = scmp.eq.s32.totalorder %s23, 0
      %p212 = por %p210, %p211
      %p213 = scmp.ne.s32.totalorder %s201, %s202
      %p214 = scmp.eq.s32.totalorder %s24, 1
      %p215 = por %p213, %p214
      %p217 = scmp.ne.s32.totalorder %s202, %s216
      %p218 = scmp.eq.s32.totalorder %s24, 0
      %p219 = por %p217, %p218
      %s221 = sadd.s32 %s220, 1
      %p224 = scmp.eq.s32.totalorder %s18, 1
      %p225 = scmp.ne.s32.totalorder %s220, %s222
      %p226 = scmp.eq.s32.totalorder %s18, 0
      %p227 = por %p225, %p226
      %p228 = scmp.ne.s32.totalorder %s220, %s222
      %p229 = scmp.eq.s32.totalorder %s23, 1
      %p230 = por %p228, %p229
      %p231 = scmp.ne.s32.totalorder %s222, %s223
      %p232 = scmp.eq.s32.totalorder %s23, 0
      %p233 = por %p231, %p232
      %p234 = scmp.ne.s32.totalorder %s222, %s223
      %p235 = scmp.eq.s32.totalorder %s24, 1
      %p236 = por %p234, %p235
      %p238 = scmp.ne.s32.totalorder %s223, %s237
      %p239 = scmp.eq.s32.totalorder %s24, 0
      %p240 = por %p238, %p239
      %s242 = sadd.s32 %s241, 1
      %p245 = scmp.eq.s32.totalorder %s18, 1
      %p246 = scmp.ne.s32.totalorder %s241, %s243
      %p247 = scmp.eq.s32.totalorder %s18, 0
      %p248 = por %p246, %p247
      %p249 = scmp.ne.s32.totalorder %s241, %s243
      %p250 = scmp.eq.s32.totalorder %s23, 1
      %p251 = por %p249, %p250
      %p252 = scmp.ne.s32.totalorder %s243, %s244
      %p253 = scmp.eq.s32.totalorder %s23, 0
      %p254 = por %p252, %p253
      %p255 = scmp.ne.s32.totalorder %s243, %s244
      %p256 = scmp.eq.s32.totalorder %s24, 1
      %p257 = por %p255, %p256
      %p259 = scmp.ne.s32.totalorder %s244, %s258
      %p260 = scmp.eq.s32.totalorder %s24, 0
      %p261 = por %p259, %p260
      %s263 = sadd.s32 %s262, 1
      %p266 = scmp.eq.s32.totalorder %s18, 1
      %p267 = scmp.ne.s32.totalorder %s262, %s264
      %p268 = scmp.eq.s32.totalorder %s18, 0
      %p269 = por %p267, %p268
      %p270 = scmp.ne.s32.totalorder %s262, %s264
      %p271 = scmp.eq.s32.totalorder %s23, 1
      %p272 = por %p270, %p271
      %p273 = scmp.ne.s32.totalorder %s264, %s265
      %p274 = scmp.eq.s32.totalorder %s23, 0
      %p275 = por %p273, %p274
      %p276 = scmp.ne.s32.totalorder %s264, %s265
      %p277 = scmp.eq.s32.totalorder %s24, 1
      %p278 = por %p276, %p277
      %p280 = scmp.ne.s32.totalorder %s265, %s279
      %p281 = scmp.eq.s32.totalorder %s24, 0
      %p282 = por %p280, %p281
      %p283 = scmp.le.s32.totalorder 1, %s18
      %p284 = scmp.lt.s32.totalorder %s18, 3
      %p285 = pnand %p283, %p284
      %p286 = pneg %p285
      // Predicated region
      $region9: #{dqn_forward.1} parent=5 // pred_check
        _
      $region10: #{dqn_forward.1} parent=5 // pred_check_branch
        %288 = sbr.rel (%p285) target = $region12
      $region11: #{dqn_forward.1} parent=5 // pred_region
        %s289 = ssub.s32 %s18, 1
        // Predicated region
        $region13: #{dqn_forward.1} parent=11 // pred_check
          %p290 = pneg %p39
        $region14: #{dqn_forward.1} parent=11 // pred_check_branch
          %292 = sbr.rel (%p290) target = $region16
        $region15: #{dqn_forward.1} parent=11 // pred_region
          _
        $region16: #{dqn_forward.1} parent=11 // pred_fallthru
          _
        // Predicated region
        $region17: #{dqn_forward.1} parent=11 // pred_check
          %p293 = pneg %p60
        $region18: #{dqn_forward.1} parent=11 // pred_check_branch
          %295 = sbr.rel (%p293) target = $region20
        $region19: #{dqn_forward.1} parent=11 // pred_region
          _
        $region20: #{dqn_forward.1} parent=11 // pred_fallthru
          _
        // Predicated region
        $region21: #{dqn_forward.1} parent=11 // pred_check
          %p296 = pneg %p81
        $region22: #{dqn_forward.1} parent=11 // pred_check_branch
          %298 = sbr.rel (%p296) target = $region24
        $region23: #{dqn_forward.1} parent=11 // pred_region
          _
        $region24: #{dqn_forward.1} parent=11 // pred_fallthru
          _
        // Predicated region
        $region25: #{dqn_forward.1} parent=11 // pred_check
          %p299 = pneg %p102
        $region26: #{dqn_forward.1} parent=11 // pred_check_branch
          %301 = sbr.rel (%p299) target = $region28
        $region27: #{dqn_forward.1} parent=11 // pred_region
          _
        $region28: #{dqn_forward.1} parent=11 // pred_fallthru
          _
        // Predicated region
        $region29: #{dqn_forward.1} parent=11 // pred_check
          %p302 = pneg %p123
        $region30: #{dqn_forward.1} parent=11 // pred_check_branch
          %304 = sbr.rel (%p302) target = $region32
        $region31: #{dqn_forward.1} parent=11 // pred_region
          _
        $region32: #{dqn_forward.1} parent=11 // pred_fallthru
          _
        // Predicated region
        $region33: #{dqn_forward.1} parent=11 // pred_check
          %p305 = pneg %p170
        $region34: #{dqn_forward.1} parent=11 // pred_check_branch
          %307 = sbr.rel (%p305) target = $region36
        $region35: #{dqn_forward.1} parent=11 // pred_region
          _
        $region36: #{dqn_forward.1} parent=11 // pred_fallthru
          _
        // Predicated region
        $region37: #{dqn_forward.1} parent=11 // pred_check
          %p308 = pneg %p191
        $region38: #{dqn_forward.1} parent=11 // pred_check_branch
          %310 = sbr.rel (%p308) target = $region40
        $region39: #{dqn_forward.1} parent=11 // pred_region
          _
        $region40: #{dqn_forward.1} parent=11 // pred_fallthru
          _
        // Predicated region
        $region41: #{dqn_forward.1} parent=11 // pred_check
          %p311 = pneg %p212
        $region42: #{dqn_forward.1} parent=11 // pred_check_branch
          %313 = sbr.rel (%p311) target = $region44
        $region43: #{dqn_forward.1} parent=11 // pred_region
          _
        $region44: #{dqn_forward.1} parent=11 // pred_fallthru
          _
        // Predicated region
        $region45: #{dqn_forward.1} parent=11 // pred_check
          %p314 = pneg %p233
        $region46: #{dqn_forward.1} parent=11 // pred_check_branch
          %316 = sbr.rel (%p314) target = $region48
        $region47: #{dqn_forward.1} parent=11 // pred_region
          _
        $region48: #{dqn_forward.1} parent=11 // pred_fallthru
          _
        // Predicated region
        $region49: #{dqn_forward.1} parent=11 // pred_check
          %p317 = pneg %p254
        $region50: #{dqn_forward.1} parent=11 // pred_check_branch
          %319 = sbr.rel (%p317) target = $region52
        $region51: #{dqn_forward.1} parent=11 // pred_region
          _
        $region52: #{dqn_forward.1} parent=11 // pred_fallthru
          _
      $region12: #{dqn_forward.1} parent=5 // pred_fallthru
        _
      %p320 = scmp.lt.s32.totalorder %s18, 2
      // Predicated region
      $region53: #{dqn_forward.1} parent=5 // pred_check
        %p321 = pneg %p320
      $region54: #{dqn_forward.1} parent=5 // pred_check_branch
        %323 = sbr.rel (%p321) target = $region56
      $region55: #{dqn_forward.1} parent=5 // pred_region
        // Predicated region
        $region57: #{dqn_forward.1} parent=55 // pred_check
          %p324 = pneg %p143
        $region58: #{dqn_forward.1} parent=55 // pred_check_branch
          %326 = sbr.rel (%p324) target = $region60
        $region59: #{dqn_forward.1} parent=55 // pred_region
          %s327 = smul.u32 256, %s18
          %p328 = scmp.lt.s32.totalorder %s327, 511
          %s329 = scalar_select %p328, %s327, 511
          %s330 = smul.addr %s329, 4
          %s331 = smul.addr %s330, 4
          %s332 = scalar_lea.vmem %s5, %s331
          %s333 = smul.u32 256, %s18
        $region60: #{dqn_forward.1} parent=55 // pred_fallthru
          _
      $region56: #{dqn_forward.1} parent=5 // pred_fallthru
        _
      %p334 = scmp.le.s32.totalorder 1, %s18
      %p335 = scmp.lt.s32.totalorder %s18, 3
      %p336 = pnand %p334, %p335
      %p337 = pneg %p336
      // Predicated region
      $region61: #{dqn_forward.1} parent=5 // pred_check
        _
      $region62: #{dqn_forward.1} parent=5 // pred_check_branch
        %339 = sbr.rel (%p336) target = $region64
      $region63: #{dqn_forward.1} parent=5 // pred_region
        %s340 = ssub.s32 %s18, 1
        %p341 = pneg %p39
        %p342 = pneg %p36
        %p343 = pneg %p60
        %p344 = pneg %p57
        %p345 = pneg %p81
        %p346 = pneg %p78
        %p347 = pneg %p102
        %p348 = pneg %p99
        %p349 = pneg %p123
        %p350 = pneg %p120
        %s351 = smul.u32 256, %s23
        %p352 = scmp.lt.s32.totalorder %s351, 511
        %s353 = scalar_select %p352, %s351, 511
        %s354 = smul.addr %s353, 4
        %s355 = smul.addr %s354, 4
        %s356 = scalar_lea.vmem %s5, %s355
        %p357 = pneg %p149
        %p358 = pneg %p146
        %p359 = pneg %p170
        %p360 = pneg %p167
        %p361 = pneg %p191
        %p362 = pneg %p188
        %p363 = pneg %p212
        %p364 = pneg %p209
        %p365 = pneg %p233
        %p366 = pneg %p230
        %p367 = pneg %p254
        %p368 = pneg %p251
        %p369 = pneg %p275
        %p370 = pneg %p272
        %s371 = smul.u32 256, %s23
        %p372 = scmp.lt.s32.totalorder %s371, 511
        %s373 = scalar_select %p372, %s371, 511
        %s374 = smul.addr %s373, 4
        %s375 = smul.addr %s374, 4
        %s376 = scalar_lea.vmem %s5, %s375
        %s377 = smul.u32 256, %s23
        %p379 = scmp.eq.s32.totalorder %s23, 0
        // Predicated region
        $region65: #{dqn_forward.1} parent=63 // pred_check
          %p380 = pneg %p379
        $region66: #{dqn_forward.1} parent=63 // pred_check_branch
          %382 = sbr.rel (%p380) target = $region68
        $region67: #{dqn_forward.1} parent=63 // pred_region
          %v383 = vld [vmem:[%s1] sm:$0xff]
          %v384 = vld [vmem:[%s1 + $0x8] sm:$0x1]
          %v385 = vld [vmem:[%s0] sm:$0xff]
          %v386 = vld [vmem:[%s0 + $0x10] sm:$0xff]
          %v387 = vld [vmem:[%s0 + $0x20] sm:$0xff]
          %v388 = vld [vmem:[%s0 + $0x30] sm:$0xff]
          %v389 = vld [vmem:[%s0 + $0x40] sm:$0xff]
          %v390 = vld [vmem:[%s0 + $0x50] sm:$0xff]
          %v391 = vld [vmem:[%s0 + $0x60] sm:$0xff]
          %v392 = vld [vmem:[%s0 + $0x70] sm:$0xff]
          %v393 = vld [vmem:[%s0 + $0xa0] sm:$0xff]
          %v394 = vld [vmem:[%s0 + $0xb0] sm:$0xff]
          %v395 = vld [vmem:[%s0 + $0xc0] sm:$0xff]
          %v396 = vld [vmem:[%s0 + $0xd0] sm:$0xff]
          %v397 = vld [vmem:[%s0 + $0xe0] sm:$0xff]
          %v398 = vld [vmem:[%s0 + $0xf0] sm:$0xff]
          %v399 = vld [vmem:[%s0 + $0x100] sm:$0xff]
          %v400 = vld [vmem:[%s0 + $0x110] sm:$0xff]
          %402 = vset.pattern.permute.xlu0 0
          %403 = vperm.xlu0 %402, %v385
          %v404 = vpop.permute.xlu0 %403
          %407 = vset.pattern.permute.xlu0 0
          %408 = vperm.xlu0 %407, %v386
          %v409 = vpop.permute.xlu0 %408
          %412 = vset.pattern.permute.xlu0 0
          %413 = vperm.xlu0 %412, %v387
          %v414 = vpop.permute.xlu0 %413
          %417 = vset.pattern.permute.xlu0 0
          %418 = vperm.xlu0 %417, %v388
          %v419 = vpop.permute.xlu0 %418
          %422 = vset.pattern.permute.xlu0 0
          %423 = vperm.xlu0 %422, %v389
          %v424 = vpop.permute.xlu0 %423
          %427 = vset.pattern.permute.xlu0 0
          %428 = vperm.xlu0 %427, %v390
          %v429 = vpop.permute.xlu0 %428
          %432 = vset.pattern.permute.xlu0 0
          %433 = vperm.xlu0 %432, %v391
          %v434 = vpop.permute.xlu0 %433
          %437 = vset.pattern.permute.xlu0 0
          %438 = vperm.xlu0 %437, %v392
          %v439 = vpop.permute.xlu0 %438
          %442 = vset.pattern.permute.xlu0 0
          %443 = vperm.xlu0 %442, %v393
          %v444 = vpop.permute.xlu0 %443
          %447 = vset.pattern.permute.xlu0 0
          %448 = vperm.xlu0 %447, %v394
          %v449 = vpop.permute.xlu0 %448
          %452 = vset.pattern.permute.xlu0 0
          %453 = vperm.xlu0 %452, %v395
          %v454 = vpop.permute.xlu0 %453
          %457 = vset.pattern.permute.xlu0 0
          %458 = vperm.xlu0 %457, %v396
          %v459 = vpop.permute.xlu0 %458
          %462 = vset.pattern.permute.xlu0 0
          %463 = vperm.xlu0 %462, %v397
          %v464 = vpop.permute.xlu0 %463
          %467 = vset.pattern.permute.xlu0 0
          %468 = vperm.xlu0 %467, %v398
          %v469 = vpop.permute.xlu0 %468
          %472 = vset.pattern.permute.xlu0 0
          %473 = vperm.xlu0 %472, %v399
          %v474 = vpop.permute.xlu0 %473
          %477 = vset.pattern.permute.xlu0 0
          %478 = vperm.xlu0 %477, %v400
          %v479 = vpop.permute.xlu0 %478
          %v481 = vperm.slane %v383, 0
          %v482 = vmul.f32 %v404, %v481
          %v483 = vmul.f32 %v409, %v481
          %v484 = vmul.f32 %v414, %v481
          %v485 = vmul.f32 %v419, %v481
          %v486 = vmul.f32 %v424, %v481
          %v487 = vmul.f32 %v429, %v481
          %v488 = vmul.f32 %v434, %v481
          %v489 = vmul.f32 %v439, %v481
          %v490 = vmul.f32 %v444, %v481
          %v491 = vmul.f32 %v449, %v481
          %v492 = vmul.f32 %v454, %v481
          %v493 = vmul.f32 %v459, %v481
          %v494 = vmul.f32 %v464, %v481
          %v495 = vmul.f32 %v469, %v481
          %v496 = vmul.f32 %v474, %v481
          %v497 = vmul.f32 %v479, %v481
          %v498 = vadd.f32 %v482, 0.0
          %v499 = vadd.f32 %v483, 0.0
          %v500 = vadd.f32 %v484, 0.0
          %v501 = vadd.f32 %v485, 0.0
          %v502 = vadd.f32 %v486, 0.0
          %v503 = vadd.f32 %v487, 0.0
          %v504 = vadd.f32 %v488, 0.0
          %v505 = vadd.f32 %v489, 0.0
          %v506 = vadd.f32 %v490, 0.0
          %v507 = vadd.f32 %v491, 0.0
          %v508 = vadd.f32 %v492, 0.0
          %v509 = vadd.f32 %v493, 0.0
          %v510 = vadd.f32 %v494, 0.0
          %v511 = vadd.f32 %v495, 0.0
          %v512 = vadd.f32 %v496, 0.0
          %v513 = vadd.f32 %v497, 0.0
          %v514 = vld [vmem:[%s0 + $0x1] sm:$0xff]
          %v515 = vld [vmem:[%s0 + $0x11] sm:$0xff]
          %v516 = vld [vmem:[%s0 + $0x21] sm:$0xff]
          %v517 = vld [vmem:[%s0 + $0x31] sm:$0xff]
          %v518 = vld [vmem:[%s0 + $0x41] sm:$0xff]
          %v519 = vld [vmem:[%s0 + $0x51] sm:$0xff]
          %v520 = vld [vmem:[%s0 + $0x61] sm:$0xff]
          %v521 = vld [vmem:[%s0 + $0x71] sm:$0xff]
          %v522 = vld [vmem:[%s0 + $0xa1] sm:$0xff]
          %v523 = vld [vmem:[%s0 + $0xb1] sm:$0xff]
          %v524 = vld [vmem:[%s0 + $0xc1] sm:$0xff]
          %v525 = vld [vmem:[%s0 + $0xd1] sm:$0xff]
          %v526 = vld [vmem:[%s0 + $0xe1] sm:$0xff]
          %v527 = vld [vmem:[%s0 + $0xf1] sm:$0xff]
          %v528 = vld [vmem:[%s0 + $0x101] sm:$0xff]
          %v529 = vld [vmem:[%s0 + $0x111] sm:$0xff]
          %531 = vset.pattern.permute.xlu0 0
          %532 = vperm.xlu0 %531, %v514
          %v533 = vpop.permute.xlu0 %532
          %536 = vset.pattern.permute.xlu0 0
          %537 = vperm.xlu0 %536, %v515
          %v538 = vpop.permute.xlu0 %537
          %541 = vset.pattern.permute.xlu0 0
          %542 = vperm.xlu0 %541, %v516
          %v543 = vpop.permute.xlu0 %542
          %546 = vset.pattern.permute.xlu0 0
          %547 = vperm.xlu0 %546, %v517
          %v548 = vpop.permute.xlu0 %547
          %551 = vset.pattern.permute.xlu0 0
          %552 = vperm.xlu0 %551, %v518
          %v553 = vpop.permute.xlu0 %552
          %556 = vset.pattern.permute.xlu0 0
          %557 = vperm.xlu0 %556, %v519
          %v558 = vpop.permute.xlu0 %557
          %561 = vset.pattern.permute.xlu0 0
          %562 = vperm.xlu0 %561, %v520
          %v563 = vpop.permute.xlu0 %562
          %566 = vset.pattern.permute.xlu0 0
          %567 = vperm.xlu0 %566, %v521
          %v568 = vpop.permute.xlu0 %567
          %571 = vset.pattern.permute.xlu0 0
          %572 = vperm.xlu0 %571, %v522
          %v573 = vpop.permute.xlu0 %572
          %576 = vset.pattern.permute.xlu0 0
          %577 = vperm.xlu0 %576, %v523
          %v578 = vpop.permute.xlu0 %577
          %581 = vset.pattern.permute.xlu0 0
          %582 = vperm.xlu0 %581, %v524
          %v583 = vpop.permute.xlu0 %582
          %586 = vset.pattern.permute.xlu0 0
          %587 = vperm.xlu0 %586, %v525
          %v588 = vpop.permute.xlu0 %587
          %591 = vset.pattern.permute.xlu0 0
          %592 = vperm.xlu0 %591, %v526
          %v593 = vpop.permute.xlu0 %592
          %596 = vset.pattern.permute.xlu0 0
          %597 = vperm.xlu0 %596, %v527
          %v598 = vpop.permute.xlu0 %597
          %601 = vset.pattern.permute.xlu0 0
          %602 = vperm.xlu0 %601, %v528
          %v603 = vpop.permute.xlu0 %602
          %606 = vset.pattern.permute.xlu0 0
          %607 = vperm.xlu0 %606, %v529
          %v608 = vpop.permute.xlu0 %607
          %v610 = vperm.slane %v383, 1
          %v611 = vmul.f32 %v533, %v610
          %v612 = vmul.f32 %v538, %v610
          %v613 = vmul.f32 %v543, %v610
          %v614 = vmul.f32 %v548, %v610
          %v615 = vmul.f32 %v553, %v610
          %v616 = vmul.f32 %v558, %v610
          %v617 = vmul.f32 %v563, %v610
          %v618 = vmul.f32 %v568, %v610
          %v619 = vmul.f32 %v573, %v610
          %v620 = vmul.f32 %v578, %v610
          %v621 = vmul.f32 %v583, %v610
          %v622 = vmul.f32 %v588, %v610
          %v623 = vmul.f32 %v593, %v610
          %v624 = vmul.f32 %v598, %v610
          %v625 = vmul.f32 %v603, %v610
          %v626 = vmul.f32 %v608, %v610
          %v627 = vadd.f32 %v498, %v611
          %v628 = vadd.f32 %v499, %v612
          %v629 = vadd.f32 %v500, %v613
          %v630 = vadd.f32 %v501, %v614
          %v631 = vadd.f32 %v502, %v615
          %v632 = vadd.f32 %v503, %v616
          %v633 = vadd.f32 %v504, %v617
          %v634 = vadd.f32 %v505, %v618
          %v635 = vadd.f32 %v506, %v619
          %v636 = vadd.f32 %v507, %v620
          %v637 = vadd.f32 %v508, %v621
          %v638 = vadd.f32 %v509, %v622
          %v639 = vadd.f32 %v510, %v623
          %v640 = vadd.f32 %v511, %v624
          %v641 = vadd.f32 %v512, %v625
          %v642 = vadd.f32 %v513, %v626
          %v643 = vld [vmem:[%s0 + $0x2] sm:$0xff]
          %v644 = vld [vmem:[%s0 + $0x12] sm:$0xff]
          %v645 = vld [vmem:[%s0 + $0x22] sm:$0xff]
          %v646 = vld [vmem:[%s0 + $0x32] sm:$0xff]
          %v647 = vld [vmem:[%s0 + $0x42] sm:$0xff]
          %v648 = vld [vmem:[%s0 + $0x52] sm:$0xff]
          %v649 = vld [vmem:[%s0 + $0x62] sm:$0xff]
          %v650 = vld [vmem:[%s0 + $0x72] sm:$0xff]
          %v651 = vld [vmem:[%s0 + $0xa2] sm:$0xff]
          %v652 = vld [vmem:[%s0 + $0xb2] sm:$0xff]
          %v653 = vld [vmem:[%s0 + $0xc2] sm:$0xff]
          %v654 = vld [vmem:[%s0 + $0xd2] sm:$0xff]
          %v655 = vld [vmem:[%s0 + $0xe2] sm:$0xff]
          %v656 = vld [vmem:[%s0 + $0xf2] sm:$0xff]
          %v657 = vld [vmem:[%s0 + $0x102] sm:$0xff]
          %v658 = vld [vmem:[%s0 + $0x112] sm:$0xff]
          %660 = vset.pattern.permute.xlu0 0
          %661 = vperm.xlu0 %660, %v643
          %v662 = vpop.permute.xlu0 %661
          %665 = vset.pattern.permute.xlu0 0
          %666 = vperm.xlu0 %665, %v644
          %v667 = vpop.permute.xlu0 %666
          %670 = vset.pattern.permute.xlu0 0
          %671 = vperm.xlu0 %670, %v645
          %v672 = vpop.permute.xlu0 %671
          %675 = vset.pattern.permute.xlu0 0
          %676 = vperm.xlu0 %675, %v646
          %v677 = vpop.permute.xlu0 %676
          %680 = vset.pattern.permute.xlu0 0
          %681 = vperm.xlu0 %680, %v647
          %v682 = vpop.permute.xlu0 %681
          %685 = vset.pattern.permute.xlu0 0
          %686 = vperm.xlu0 %685, %v648
          %v687 = vpop.permute.xlu0 %686
          %690 = vset.pattern.permute.xlu0 0
          %691 = vperm.xlu0 %690, %v649
          %v692 = vpop.permute.xlu0 %691
          %695 = vset.pattern.permute.xlu0 0
          %696 = vperm.xlu0 %695, %v650
          %v697 = vpop.permute.xlu0 %696
          %700 = vset.pattern.permute.xlu0 0
          %701 = vperm.xlu0 %700, %v651
          %v702 = vpop.permute.xlu0 %701
          %705 = vset.pattern.permute.xlu0 0
          %706 = vperm.xlu0 %705, %v652
          %v707 = vpop.permute.xlu0 %706
          %710 = vset.pattern.permute.xlu0 0
          %711 = vperm.xlu0 %710, %v653
          %v712 = vpop.permute.xlu0 %711
          %715 = vset.pattern.permute.xlu0 0
          %716 = vperm.xlu0 %715, %v654
          %v717 = vpop.permute.xlu0 %716
          %720 = vset.pattern.permute.xlu0 0
          %721 = vperm.xlu0 %720, %v655
          %v722 = vpop.permute.xlu0 %721
          %725 = vset.pattern.permute.xlu0 0
          %726 = vperm.xlu0 %725, %v656
          %v727 = vpop.permute.xlu0 %726
          %730 = vset.pattern.permute.xlu0 0
          %731 = vperm.xlu0 %730, %v657
          %v732 = vpop.permute.xlu0 %731
          %735 = vset.pattern.permute.xlu0 0
          %736 = vperm.xlu0 %735, %v658
          %v737 = vpop.permute.xlu0 %736
          %v739 = vperm.slane %v383, 2
          %v740 = vmul.f32 %v662, %v739
          %v741 = vmul.f32 %v667, %v739
          %v742 = vmul.f32 %v672, %v739
          %v743 = vmul.f32 %v677, %v739
          %v744 = vmul.f32 %v682, %v739
          %v745 = vmul.f32 %v687, %v739
          %v746 = vmul.f32 %v692, %v739
          %v747 = vmul.f32 %v697, %v739
          %v748 = vmul.f32 %v702, %v739
          %v749 = vmul.f32 %v707, %v739
          %v750 = vmul.f32 %v712, %v739
          %v751 = vmul.f32 %v717, %v739
          %v752 = vmul.f32 %v722, %v739
          %v753 = vmul.f32 %v727, %v739
          %v754 = vmul.f32 %v732, %v739
          %v755 = vmul.f32 %v737, %v739
          %v756 = vadd.f32 %v627, %v740
          %v757 = vadd.f32 %v628, %v741
          %v758 = vadd.f32 %v629, %v742
          %v759 = vadd.f32 %v630, %v743
          %v760 = vadd.f32 %v631, %v744
          %v761 = vadd.f32 %v632, %v745
          %v762 = vadd.f32 %v633, %v746
          %v763 = vadd.f32 %v634, %v747
          %v764 = vadd.f32 %v635, %v748
          %v765 = vadd.f32 %v636, %v749
          %v766 = vadd.f32 %v637, %v750
          %v767 = vadd.f32 %v638, %v751
          %v768 = vadd.f32 %v639, %v752
          %v769 = vadd.f32 %v640, %v753
          %v770 = vadd.f32 %v641, %v754
          %v771 = vadd.f32 %v642, %v755
          %s772 = scalar_lea.vmem %s0, 16
          %v773 = vld [vmem:[%s772] sm:$0xff]
          %v774 = vld [vmem:[%s772 + $0x10] sm:$0xff]
          %v775 = vld [vmem:[%s772 + $0x20] sm:$0xff]
          %v776 = vld [vmem:[%s772 + $0x30] sm:$0xff]
          %v777 = vld [vmem:[%s772 + $0x40] sm:$0xff]
          %v778 = vld [vmem:[%s772 + $0x50] sm:$0xff]
          %v779 = vld [vmem:[%s772 + $0x60] sm:$0xff]
          %v780 = vld [vmem:[%s772 + $0x70] sm:$0xff]
          %v781 = vld [vmem:[%s772 + $0xa0] sm:$0xff]
          %v782 = vld [vmem:[%s772 + $0xb0] sm:$0xff]
          %v783 = vld [vmem:[%s772 + $0xc0] sm:$0xff]
          %v784 = vld [vmem:[%s772 + $0xd0] sm:$0xff]
          %v785 = vld [vmem:[%s772 + $0xe0] sm:$0xff]
          %v786 = vld [vmem:[%s772 + $0xf0] sm:$0xff]
          %v787 = vld [vmem:[%s772 + $0x100] sm:$0xff]
          %v788 = vld [vmem:[%s772 + $0x110] sm:$0xff]
          %790 = vset.pattern.permute.xlu0 0
          %791 = vperm.xlu0 %790, %v773
          %v792 = vpop.permute.xlu0 %791
          %795 = vset.pattern.permute.xlu0 0
          %796 = vperm.xlu0 %795, %v774
          %v797 = vpop.permute.xlu0 %796
          %800 = vset.pattern.permute.xlu0 0
          %801 = vperm.xlu0 %800, %v775
          %v802 = vpop.permute.xlu0 %801
          %805 = vset.pattern.permute.xlu0 0
          %806 = vperm.xlu0 %805, %v776
          %v807 = vpop.permute.xlu0 %806
          %810 = vset.pattern.permute.xlu0 0
          %811 = vperm.xlu0 %810, %v777
          %v812 = vpop.permute.xlu0 %811
          %815 = vset.pattern.permute.xlu0 0
          %816 = vperm.xlu0 %815, %v778
          %v817 = vpop.permute.xlu0 %816
          %820 = vset.pattern.permute.xlu0 0
          %821 = vperm.xlu0 %820, %v779
          %v822 = vpop.permute.xlu0 %821
          %825 = vset.pattern.permute.xlu0 0
          %826 = vperm.xlu0 %825, %v780
          %v827 = vpop.permute.xlu0 %826
          %830 = vset.pattern.permute.xlu0 0
          %831 = vperm.xlu0 %830, %v781
          %v832 = vpop.permute.xlu0 %831
          %835 = vset.pattern.permute.xlu0 0
          %836 = vperm.xlu0 %835, %v782
          %v837 = vpop.permute.xlu0 %836
          %840 = vset.pattern.permute.xlu0 0
          %841 = vperm.xlu0 %840, %v783
          %v842 = vpop.permute.xlu0 %841
          %845 = vset.pattern.permute.xlu0 0
          %846 = vperm.xlu0 %845, %v784
          %v847 = vpop.permute.xlu0 %846
          %850 = vset.pattern.permute.xlu0 0
          %851 = vperm.xlu0 %850, %v785
          %v852 = vpop.permute.xlu0 %851
          %855 = vset.pattern.permute.xlu0 0
          %856 = vperm.xlu0 %855, %v786
          %v857 = vpop.permute.xlu0 %856
          %860 = vset.pattern.permute.xlu0 0
          %861 = vperm.xlu0 %860, %v787
          %v862 = vpop.permute.xlu0 %861
          %865 = vset.pattern.permute.xlu0 0
          %866 = vperm.xlu0 %865, %v788
          %v867 = vpop.permute.xlu0 %866
          %v869 = vperm.slane %v383, 3
          %v870 = vmul.f32 %v792, %v869
          %v871 = vmul.f32 %v797, %v869
          %v872 = vmul.f32 %v802, %v869
          %v873 = vmul.f32 %v807, %v869
          %v874 = vmul.f32 %v812, %v869
          %v875 = vmul.f32 %v817, %v869
          %v876 = vmul.f32 %v822, %v869
          %v877 = vmul.f32 %v827, %v869
          %v878 = vmul.f32 %v832, %v869
          %v879 = vmul.f32 %v837, %v869
          %v880 = vmul.f32 %v842, %v869
          %v881 = vmul.f32 %v847, %v869
          %v882 = vmul.f32 %v852, %v869
          %v883 = vmul.f32 %v857, %v869
          %v884 = vmul.f32 %v862, %v869
          %v885 = vmul.f32 %v867, %v869
          %v886 = vadd.f32 %v756, %v870
          %v887 = vadd.f32 %v757, %v871
          %v888 = vadd.f32 %v758, %v872
          %v889 = vadd.f32 %v759, %v873
          %v890 = vadd.f32 %v760, %v874
          %v891 = vadd.f32 %v761, %v875
          %v892 = vadd.f32 %v762, %v876
          %v893 = vadd.f32 %v763, %v877
          %v894 = vadd.f32 %v764, %v878
          %v895 = vadd.f32 %v765, %v879
          %v896 = vadd.f32 %v766, %v880
          %v897 = vadd.f32 %v767, %v881
          %v898 = vadd.f32 %v768, %v882
          %v899 = vadd.f32 %v769, %v883
          %v900 = vadd.f32 %v770, %v884
          %v901 = vadd.f32 %v771, %v885
          %v902 = vld [vmem:[%s772 + $0x1] sm:$0xff]
          %v903 = vld [vmem:[%s772 + $0x11] sm:$0xff]
          %v904 = vld [vmem:[%s772 + $0x21] sm:$0xff]
          %v905 = vld [vmem:[%s772 + $0x31] sm:$0xff]
          %v906 = vld [vmem:[%s772 + $0x41] sm:$0xff]
          %v907 = vld [vmem:[%s772 + $0x51] sm:$0xff]
          %v908 = vld [vmem:[%s772 + $0x61] sm:$0xff]
          %v909 = vld [vmem:[%s772 + $0x71] sm:$0xff]
          %v910 = vld [vmem:[%s772 + $0xa1] sm:$0xff]
          %v911 = vld [vmem:[%s772 + $0xb1] sm:$0xff]
          %v912 = vld [vmem:[%s772 + $0xc1] sm:$0xff]
          %v913 = vld [vmem:[%s772 + $0xd1] sm:$0xff]
          %v914 = vld [vmem:[%s772 + $0xe1] sm:$0xff]
          %v915 = vld [vmem:[%s772 + $0xf1] sm:$0xff]
          %v916 = vld [vmem:[%s772 + $0x101] sm:$0xff]
          %v917 = vld [vmem:[%s772 + $0x111] sm:$0xff]
          %919 = vset.pattern.permute.xlu0 0
          %920 = vperm.xlu0 %919, %v902
          %v921 = vpop.permute.xlu0 %920
          %924 = vset.pattern.permute.xlu0 0
          %925 = vperm.xlu0 %924, %v903
          %v926 = vpop.permute.xlu0 %925
          %929 = vset.pattern.permute.xlu0 0
          %930 = vperm.xlu0 %929, %v904
          %v931 = vpop.permute.xlu0 %930
          %934 = vset.pattern.permute.xlu0 0
          %935 = vperm.xlu0 %934, %v905
          %v936 = vpop.permute.xlu0 %935
          %939 = vset.pattern.permute.xlu0 0
          %940 = vperm.xlu0 %939, %v906
          %v941 = vpop.permute.xlu0 %940
          %944 = vset.pattern.permute.xlu0 0
          %945 = vperm.xlu0 %944, %v907
          %v946 = vpop.permute.xlu0 %945
          %949 = vset.pattern.permute.xlu0 0
          %950 = vperm.xlu0 %949, %v908
          %v951 = vpop.permute.xlu0 %950
          %954 = vset.pattern.permute.xlu0 0
          %955 = vperm.xlu0 %954, %v909
          %v956 = vpop.permute.xlu0 %955
          %959 = vset.pattern.permute.xlu0 0
          %960 = vperm.xlu0 %959, %v910
          %v961 = vpop.permute.xlu0 %960
          %964 = vset.pattern.permute.xlu0 0
          %965 = vperm.xlu0 %964, %v911
          %v966 = vpop.permute.xlu0 %965
          %969 = vset.pattern.permute.xlu0 0
          %970 = vperm.xlu0 %969, %v912
          %v971 = vpop.permute.xlu0 %970
          %974 = vset.pattern.permute.xlu0 0
          %975 = vperm.xlu0 %974, %v913
          %v976 = vpop.permute.xlu0 %975
          %979 = vset.pattern.permute.xlu0 0
          %980 = vperm.xlu0 %979, %v914
          %v981 = vpop.permute.xlu0 %980
          %984 = vset.pattern.permute.xlu0 0
          %985 = vperm.xlu0 %984, %v915
          %v986 = vpop.permute.xlu0 %985
          %989 = vset.pattern.permute.xlu0 0
          %990 = vperm.xlu0 %989, %v916
          %v991 = vpop.permute.xlu0 %990
          %994 = vset.pattern.permute.xlu0 0
          %995 = vperm.xlu0 %994, %v917
          %v996 = vpop.permute.xlu0 %995
          %v998 = vperm.slane %v383, 4
          %v999 = vmul.f32 %v921, %v998
          %v1000 = vmul.f32 %v926, %v998
          %v1001 = vmul.f32 %v931, %v998
          %v1002 = vmul.f32 %v936, %v998
          %v1003 = vmul.f32 %v941, %v998
          %v1004 = vmul.f32 %v946, %v998
          %v1005 = vmul.f32 %v951, %v998
          %v1006 = vmul.f32 %v956, %v998
          %v1007 = vmul.f32 %v961, %v998
          %v1008 = vmul.f32 %v966, %v998
          %v1009 = vmul.f32 %v971, %v998
          %v1010 = vmul.f32 %v976, %v998
          %v1011 = vmul.f32 %v981, %v998
          %v1012 = vmul.f32 %v986, %v998
          %v1013 = vmul.f32 %v991, %v998
          %v1014 = vmul.f32 %v996, %v998
          %v1015 = vadd.f32 %v886, %v999
          %v1016 = vadd.f32 %v887, %v1000
          %v1017 = vadd.f32 %v888, %v1001
          %v1018 = vadd.f32 %v889, %v1002
          %v1019 = vadd.f32 %v890, %v1003
          %v1020 = vadd.f32 %v891, %v1004
          %v1021 = vadd.f32 %v892, %v1005
          %v1022 = vadd.f32 %v893, %v1006
          %v1023 = vadd.f32 %v894, %v1007
          %v1024 = vadd.f32 %v895, %v1008
          %v1025 = vadd.f32 %v896, %v1009
          %v1026 = vadd.f32 %v897, %v1010
          %v1027 = vadd.f32 %v898, %v1011
          %v1028 = vadd.f32 %v899, %v1012
          %v1029 = vadd.f32 %v900, %v1013
          %v1030 = vadd.f32 %v901, %v1014
          %v1031 = vld [vmem:[%s772 + $0x2] sm:$0xff]
          %v1032 = vld [vmem:[%s772 + $0x12] sm:$0xff]
          %v1033 = vld [vmem:[%s772 + $0x22] sm:$0xff]
          %v1034 = vld [vmem:[%s772 + $0x32] sm:$0xff]
          %v1035 = vld [vmem:[%s772 + $0x42] sm:$0xff]
          %v1036 = vld [vmem:[%s772 + $0x52] sm:$0xff]
          %v1037 = vld [vmem:[%s772 + $0x62] sm:$0xff]
          %v1038 = vld [vmem:[%s772 + $0x72] sm:$0xff]
          %v1039 = vld [vmem:[%s772 + $0xa2] sm:$0xff]
          %v1040 = vld [vmem:[%s772 + $0xb2] sm:$0xff]
          %v1041 = vld [vmem:[%s772 + $0xc2] sm:$0xff]
          %v1042 = vld [vmem:[%s772 + $0xd2] sm:$0xff]
          %v1043 = vld [vmem:[%s772 + $0xe2] sm:$0xff]
          %v1044 = vld [vmem:[%s772 + $0xf2] sm:$0xff]
          %v1045 = vld [vmem:[%s772 + $0x102] sm:$0xff]
          %v1046 = vld [vmem:[%s772 + $0x112] sm:$0xff]
          %1048 = vset.pattern.permute.xlu0 0
          %1049 = vperm.xlu0 %1048, %v1031
          %v1050 = vpop.permute.xlu0 %1049
          %1053 = vset.pattern.permute.xlu0 0
          %1054 = vperm.xlu0 %1053, %v1032
          %v1055 = vpop.permute.xlu0 %1054
          %1058 = vset.pattern.permute.xlu0 0
          %1059 = vperm.xlu0 %1058, %v1033
          %v1060 = vpop.permute.xlu0 %1059
          %1063 = vset.pattern.permute.xlu0 0
          %1064 = vperm.xlu0 %1063, %v1034
          %v1065 = vpop.permute.xlu0 %1064
          %1068 = vset.pattern.permute.xlu0 0
          %1069 = vperm.xlu0 %1068, %v1035
          %v1070 = vpop.permute.xlu0 %1069
          %1073 = vset.pattern.permute.xlu0 0
          %1074 = vperm.xlu0 %1073, %v1036
          %v1075 = vpop.permute.xlu0 %1074
          %1078 = vset.pattern.permute.xlu0 0
          %1079 = vperm.xlu0 %1078, %v1037
          %v1080 = vpop.permute.xlu0 %1079
          %1083 = vset.pattern.permute.xlu0 0
          %1084 = vperm.xlu0 %1083, %v1038
          %v1085 = vpop.permute.xlu0 %1084
          %1088 = vset.pattern.permute.xlu0 0
          %1089 = vperm.xlu0 %1088, %v1039
          %v1090 = vpop.permute.xlu0 %1089
          %1093 = vset.pattern.permute.xlu0 0
          %1094 = vperm.xlu0 %1093, %v1040
          %v1095 = vpop.permute.xlu0 %1094
          %1098 = vset.pattern.permute.xlu0 0
          %1099 = vperm.xlu0 %1098, %v1041
          %v1100 = vpop.permute.xlu0 %1099
          %1103 = vset.pattern.permute.xlu0 0
          %1104 = vperm.xlu0 %1103, %v1042
          %v1105 = vpop.permute.xlu0 %1104
          %1108 = vset.pattern.permute.xlu0 0
          %1109 = vperm.xlu0 %1108, %v1043
          %v1110 = vpop.permute.xlu0 %1109
          %1113 = vset.pattern.permute.xlu0 0
          %1114 = vperm.xlu0 %1113, %v1044
          %v1115 = vpop.permute.xlu0 %1114
          %1118 = vset.pattern.permute.xlu0 0
          %1119 = vperm.xlu0 %1118, %v1045
          %v1120 = vpop.permute.xlu0 %1119
          %1123 = vset.pattern.permute.xlu0 0
          %1124 = vperm.xlu0 %1123, %v1046
          %v1125 = vpop.permute.xlu0 %1124
          %v1127 = vperm.slane %v383, 5
          %v1128 = vmul.f32 %v1050, %v1127
          %v1129 = vmul.f32 %v1055, %v1127
          %v1130 = vmul.f32 %v1060, %v1127
          %v1131 = vmul.f32 %v1065, %v1127
          %v1132 = vmul.f32 %v1070, %v1127
          %v1133 = vmul.f32 %v1075, %v1127
          %v1134 = vmul.f32 %v1080, %v1127
          %v1135 = vmul.f32 %v1085, %v1127
          %v1136 = vmul.f32 %v1090, %v1127
          %v1137 = vmul.f32 %v1095, %v1127
          %v1138 = vmul.f32 %v1100, %v1127
          %v1139 = vmul.f32 %v1105, %v1127
          %v1140 = vmul.f32 %v1110, %v1127
          %v1141 = vmul.f32 %v1115, %v1127
          %v1142 = vmul.f32 %v1120, %v1127
          %v1143 = vmul.f32 %v1125, %v1127
          %v1144 = vadd.f32 %v1015, %v1128
          %v1145 = vadd.f32 %v1016, %v1129
          %v1146 = vadd.f32 %v1017, %v1130
          %v1147 = vadd.f32 %v1018, %v1131
          %v1148 = vadd.f32 %v1019, %v1132
          %v1149 = vadd.f32 %v1020, %v1133
          %v1150 = vadd.f32 %v1021, %v1134
          %v1151 = vadd.f32 %v1022, %v1135
          %v1152 = vadd.f32 %v1023, %v1136
          %v1153 = vadd.f32 %v1024, %v1137
          %v1154 = vadd.f32 %v1025, %v1138
          %v1155 = vadd.f32 %v1026, %v1139
          %v1156 = vadd.f32 %v1027, %v1140
          %v1157 = vadd.f32 %v1028, %v1141
          %v1158 = vadd.f32 %v1029, %v1142
          %v1159 = vadd.f32 %v1030, %v1143
          %s1160 = scalar_lea.vmem %s0, 32
          %v1161 = vld [vmem:[%s1160] sm:$0xff]
          %v1162 = vld [vmem:[%s1160 + $0x10] sm:$0xff]
          %v1163 = vld [vmem:[%s1160 + $0x20] sm:$0xff]
          %v1164 = vld [vmem:[%s1160 + $0x30] sm:$0xff]
          %v1165 = vld [vmem:[%s1160 + $0x40] sm:$0xff]
          %v1166 = vld [vmem:[%s1160 + $0x50] sm:$0xff]
          %v1167 = vld [vmem:[%s1160 + $0x60] sm:$0xff]
          %v1168 = vld [vmem:[%s1160 + $0x70] sm:$0xff]
          %v1169 = vld [vmem:[%s1160 + $0xa0] sm:$0xff]
          %v1170 = vld [vmem:[%s1160 + $0xb0] sm:$0xff]
          %v1171 = vld [vmem:[%s1160 + $0xc0] sm:$0xff]
          %v1172 = vld [vmem:[%s1160 + $0xd0] sm:$0xff]
          %v1173 = vld [vmem:[%s1160 + $0xe0] sm:$0xff]
          %v1174 = vld [vmem:[%s1160 + $0xf0] sm:$0xff]
          %v1175 = vld [vmem:[%s1160 + $0x100] sm:$0xff]
          %v1176 = vld [vmem:[%s1160 + $0x110] sm:$0xff]
          %1178 = vset.pattern.permute.xlu0 0
          %1179 = vperm.xlu0 %1178, %v1161
          %v1180 = vpop.permute.xlu0 %1179
          %1183 = vset.pattern.permute.xlu0 0
          %1184 = vperm.xlu0 %1183, %v1162
          %v1185 = vpop.permute.xlu0 %1184
          %1188 = vset.pattern.permute.xlu0 0
          %1189 = vperm.xlu0 %1188, %v1163
          %v1190 = vpop.permute.xlu0 %1189
          %1193 = vset.pattern.permute.xlu0 0
          %1194 = vperm.xlu0 %1193, %v1164
          %v1195 = vpop.permute.xlu0 %1194
          %1198 = vset.pattern.permute.xlu0 0
          %1199 = vperm.xlu0 %1198, %v1165
          %v1200 = vpop.permute.xlu0 %1199
          %1203 = vset.pattern.permute.xlu0 0
          %1204 = vperm.xlu0 %1203, %v1166
          %v1205 = vpop.permute.xlu0 %1204
          %1208 = vset.pattern.permute.xlu0 0
          %1209 = vperm.xlu0 %1208, %v1167
          %v1210 = vpop.permute.xlu0 %1209
          %1213 = vset.pattern.permute.xlu0 0
          %1214 = vperm.xlu0 %1213, %v1168
          %v1215 = vpop.permute.xlu0 %1214
          %1218 = vset.pattern.permute.xlu0 0
          %1219 = vperm.xlu0 %1218, %v1169
          %v1220 = vpop.permute.xlu0 %1219
          %1223 = vset.pattern.permute.xlu0 0
          %1224 = vperm.xlu0 %1223, %v1170
          %v1225 = vpop.permute.xlu0 %1224
          %1228 = vset.pattern.permute.xlu0 0
          %1229 = vperm.xlu0 %1228, %v1171
          %v1230 = vpop.permute.xlu0 %1229
          %1233 = vset.pattern.permute.xlu0 0
          %1234 = vperm.xlu0 %1233, %v1172
          %v1235 = vpop.permute.xlu0 %1234
          %1238 = vset.pattern.permute.xlu0 0
          %1239 = vperm.xlu0 %1238, %v1173
          %v1240 = vpop.permute.xlu0 %1239
          %1243 = vset.pattern.permute.xlu0 0
          %1244 = vperm.xlu0 %1243, %v1174
          %v1245 = vpop.permute.xlu0 %1244
          %1248 = vset.pattern.permute.xlu0 0
          %1249 = vperm.xlu0 %1248, %v1175
          %v1250 = vpop.permute.xlu0 %1249
          %1253 = vset.pattern.permute.xlu0 0
          %1254 = vperm.xlu0 %1253, %v1176
          %v1255 = vpop.permute.xlu0 %1254
          %v1257 = vperm.slane %v383, 6
          %v1258 = vmul.f32 %v1180, %v1257
          %v1259 = vmul.f32 %v1185, %v1257
          %v1260 = vmul.f32 %v1190, %v1257
          %v1261 = vmul.f32 %v1195, %v1257
          %v1262 = vmul.f32 %v1200, %v1257
          %v1263 = vmul.f32 %v1205, %v1257
          %v1264 = vmul.f32 %v1210, %v1257
          %v1265 = vmul.f32 %v1215, %v1257
          %v1266 = vmul.f32 %v1220, %v1257
          %v1267 = vmul.f32 %v1225, %v1257
          %v1268 = vmul.f32 %v1230, %v1257
          %v1269 = vmul.f32 %v1235, %v1257
          %v1270 = vmul.f32 %v1240, %v1257
          %v1271 = vmul.f32 %v1245, %v1257
          %v1272 = vmul.f32 %v1250, %v1257
          %v1273 = vmul.f32 %v1255, %v1257
          %v1274 = vadd.f32 %v1144, %v1258
          %v1275 = vadd.f32 %v1145, %v1259
          %v1276 = vadd.f32 %v1146, %v1260
          %v1277 = vadd.f32 %v1147, %v1261
          %v1278 = vadd.f32 %v1148, %v1262
          %v1279 = vadd.f32 %v1149, %v1263
          %v1280 = vadd.f32 %v1150, %v1264
          %v1281 = vadd.f32 %v1151, %v1265
          %v1282 = vadd.f32 %v1152, %v1266
          %v1283 = vadd.f32 %v1153, %v1267
          %v1284 = vadd.f32 %v1154, %v1268
          %v1285 = vadd.f32 %v1155, %v1269
          %v1286 = vadd.f32 %v1156, %v1270
          %v1287 = vadd.f32 %v1157, %v1271
          %v1288 = vadd.f32 %v1158, %v1272
          %v1289 = vadd.f32 %v1159, %v1273
          %v1290 = vld [vmem:[%s1160 + $0x1] sm:$0xff]
          %v1291 = vld [vmem:[%s1160 + $0x11] sm:$0xff]
          %v1292 = vld [vmem:[%s1160 + $0x21] sm:$0xff]
          %v1293 = vld [vmem:[%s1160 + $0x31] sm:$0xff]
          %v1294 = vld [vmem:[%s1160 + $0x41] sm:$0xff]
          %v1295 = vld [vmem:[%s1160 + $0x51] sm:$0xff]
          %v1296 = vld [vmem:[%s1160 + $0x61] sm:$0xff]
          %v1297 = vld [vmem:[%s1160 + $0x71] sm:$0xff]
          %v1298 = vld [vmem:[%s1160 + $0xa1] sm:$0xff]
          %v1299 = vld [vmem:[%s1160 + $0xb1] sm:$0xff]
          %v1300 = vld [vmem:[%s1160 + $0xc1] sm:$0xff]
          %v1301 = vld [vmem:[%s1160 + $0xd1] sm:$0xff]
          %v1302 = vld [vmem:[%s1160 + $0xe1] sm:$0xff]
          %v1303 = vld [vmem:[%s1160 + $0xf1] sm:$0xff]
          %v1304 = vld [vmem:[%s1160 + $0x101] sm:$0xff]
          %v1305 = vld [vmem:[%s1160 + $0x111] sm:$0xff]
          %1307 = vset.pattern.permute.xlu0 0
          %1308 = vperm.xlu0 %1307, %v1290
          %v1309 = vpop.permute.xlu0 %1308
          %1312 = vset.pattern.permute.xlu0 0
          %1313 = vperm.xlu0 %1312, %v1291
          %v1314 = vpop.permute.xlu0 %1313
          %1317 = vset.pattern.permute.xlu0 0
          %1318 = vperm.xlu0 %1317, %v1292
          %v1319 = vpop.permute.xlu0 %1318
          %1322 = vset.pattern.permute.xlu0 0
          %1323 = vperm.xlu0 %1322, %v1293
          %v1324 = vpop.permute.xlu0 %1323
          %1327 = vset.pattern.permute.xlu0 0
          %1328 = vperm.xlu0 %1327, %v1294
          %v1329 = vpop.permute.xlu0 %1328
          %1332 = vset.pattern.permute.xlu0 0
          %1333 = vperm.xlu0 %1332, %v1295
          %v1334 = vpop.permute.xlu0 %1333
          %1337 = vset.pattern.permute.xlu0 0
          %1338 = vperm.xlu0 %1337, %v1296
          %v1339 = vpop.permute.xlu0 %1338
          %1342 = vset.pattern.permute.xlu0 0
          %1343 = vperm.xlu0 %1342, %v1297
          %v1344 = vpop.permute.xlu0 %1343
          %1347 = vset.pattern.permute.xlu0 0
          %1348 = vperm.xlu0 %1347, %v1298
          %v1349 = vpop.permute.xlu0 %1348
          %1352 = vset.pattern.permute.xlu0 0
          %1353 = vperm.xlu0 %1352, %v1299
          %v1354 = vpop.permute.xlu0 %1353
          %1357 = vset.pattern.permute.xlu0 0
          %1358 = vperm.xlu0 %1357, %v1300
          %v1359 = vpop.permute.xlu0 %1358
          %1362 = vset.pattern.permute.xlu0 0
          %1363 = vperm.xlu0 %1362, %v1301
          %v1364 = vpop.permute.xlu0 %1363
          %1367 = vset.pattern.permute.xlu0 0
          %1368 = vperm.xlu0 %1367, %v1302
          %v1369 = vpop.permute.xlu0 %1368
          %1372 = vset.pattern.permute.xlu0 0
          %1373 = vperm.xlu0 %1372, %v1303
          %v1374 = vpop.permute.xlu0 %1373
          %1377 = vset.pattern.permute.xlu0 0
          %1378 = vperm.xlu0 %1377, %v1304
          %v1379 = vpop.permute.xlu0 %1378
          %1382 = vset.pattern.permute.xlu0 0
          %1383 = vperm.xlu0 %1382, %v1305
          %v1384 = vpop.permute.xlu0 %1383
          %v1386 = vperm.slane %v383, 7
          %v1387 = vmul.f32 %v1309, %v1386
          %v1388 = vmul.f32 %v1314, %v1386
          %v1389 = vmul.f32 %v1319, %v1386
          %v1390 = vmul.f32 %v1324, %v1386
          %v1391 = vmul.f32 %v1329, %v1386
          %v1392 = vmul.f32 %v1334, %v1386
          %v1393 = vmul.f32 %v1339, %v1386
          %v1394 = vmul.f32 %v1344, %v1386
          %v1395 = vmul.f32 %v1349, %v1386
          %v1396 = vmul.f32 %v1354, %v1386
          %v1397 = vmul.f32 %v1359, %v1386
          %v1398 = vmul.f32 %v1364, %v1386
          %v1399 = vmul.f32 %v1369, %v1386
          %v1400 = vmul.f32 %v1374, %v1386
          %v1401 = vmul.f32 %v1379, %v1386
          %v1402 = vmul.f32 %v1384, %v1386
          %v1403 = vadd.f32 %v1274, %v1387
          %v1404 = vadd.f32 %v1275, %v1388
          %v1405 = vadd.f32 %v1276, %v1389
          %v1406 = vadd.f32 %v1277, %v1390
          %v1407 = vadd.f32 %v1278, %v1391
          %v1408 = vadd.f32 %v1279, %v1392
          %v1409 = vadd.f32 %v1280, %v1393
          %v1410 = vadd.f32 %v1281, %v1394
          %v1411 = vadd.f32 %v1282, %v1395
          %v1412 = vadd.f32 %v1283, %v1396
          %v1413 = vadd.f32 %v1284, %v1397
          %v1414 = vadd.f32 %v1285, %v1398
          %v1415 = vadd.f32 %v1286, %v1399
          %v1416 = vadd.f32 %v1287, %v1400
          %v1417 = vadd.f32 %v1288, %v1401
          %v1418 = vadd.f32 %v1289, %v1402
          %v1419 = vld [vmem:[%s1160 + $0x2] sm:$0xff]
          %v1420 = vld [vmem:[%s1160 + $0x12] sm:$0xff]
          %v1421 = vld [vmem:[%s1160 + $0x22] sm:$0xff]
          %v1422 = vld [vmem:[%s1160 + $0x32] sm:$0xff]
          %v1423 = vld [vmem:[%s1160 + $0x42] sm:$0xff]
          %v1424 = vld [vmem:[%s1160 + $0x52] sm:$0xff]
          %v1425 = vld [vmem:[%s1160 + $0x62] sm:$0xff]
          %v1426 = vld [vmem:[%s1160 + $0x72] sm:$0xff]
          %v1427 = vld [vmem:[%s1160 + $0xa2] sm:$0xff]
          %v1428 = vld [vmem:[%s1160 + $0xb2] sm:$0xff]
          %v1429 = vld [vmem:[%s1160 + $0xc2] sm:$0xff]
          %v1430 = vld [vmem:[%s1160 + $0xd2] sm:$0xff]
          %v1431 = vld [vmem:[%s1160 + $0xe2] sm:$0xff]
          %v1432 = vld [vmem:[%s1160 + $0xf2] sm:$0xff]
          %v1433 = vld [vmem:[%s1160 + $0x102] sm:$0xff]
          %v1434 = vld [vmem:[%s1160 + $0x112] sm:$0xff]
          %1436 = vset.pattern.permute.xlu0 0
          %1437 = vperm.xlu0 %1436, %v1419
          %v1438 = vpop.permute.xlu0 %1437
          %1441 = vset.pattern.permute.xlu0 0
          %1442 = vperm.xlu0 %1441, %v1420
          %v1443 = vpop.permute.xlu0 %1442
          %1446 = vset.pattern.permute.xlu0 0
          %1447 = vperm.xlu0 %1446, %v1421
          %v1448 = vpop.permute.xlu0 %1447
          %1451 = vset.pattern.permute.xlu0 0
          %1452 = vperm.xlu0 %1451, %v1422
          %v1453 = vpop.permute.xlu0 %1452
          %1456 = vset.pattern.permute.xlu0 0
          %1457 = vperm.xlu0 %1456, %v1423
          %v1458 = vpop.permute.xlu0 %1457
          %1461 = vset.pattern.permute.xlu0 0
          %1462 = vperm.xlu0 %1461, %v1424
          %v1463 = vpop.permute.xlu0 %1462
          %1466 = vset.pattern.permute.xlu0 0
          %1467 = vperm.xlu0 %1466, %v1425
          %v1468 = vpop.permute.xlu0 %1467
          %1471 = vset.pattern.permute.xlu0 0
          %1472 = vperm.xlu0 %1471, %v1426
          %v1473 = vpop.permute.xlu0 %1472
          %1476 = vset.pattern.permute.xlu0 0
          %1477 = vperm.xlu0 %1476, %v1427
          %v1478 = vpop.permute.xlu0 %1477
          %1481 = vset.pattern.permute.xlu0 0
          %1482 = vperm.xlu0 %1481, %v1428
          %v1483 = vpop.permute.xlu0 %1482
          %1486 = vset.pattern.permute.xlu0 0
          %1487 = vperm.xlu0 %1486, %v1429
          %v1488 = vpop.permute.xlu0 %1487
          %1491 = vset.pattern.permute.xlu0 0
          %1492 = vperm.xlu0 %1491, %v1430
          %v1493 = vpop.permute.xlu0 %1492
          %1496 = vset.pattern.permute.xlu0 0
          %1497 = vperm.xlu0 %1496, %v1431
          %v1498 = vpop.permute.xlu0 %1497
          %1501 = vset.pattern.permute.xlu0 0
          %1502 = vperm.xlu0 %1501, %v1432
          %v1503 = vpop.permute.xlu0 %1502
          %1506 = vset.pattern.permute.xlu0 0
          %1507 = vperm.xlu0 %1506, %v1433
          %v1508 = vpop.permute.xlu0 %1507
          %1511 = vset.pattern.permute.xlu0 0
          %1512 = vperm.xlu0 %1511, %v1434
          %v1513 = vpop.permute.xlu0 %1512
          %v1515 = vperm.slane %v384, 0
          %v1516 = vmul.f32 %v1438, %v1515
          %v1517 = vmul.f32 %v1443, %v1515
          %v1518 = vmul.f32 %v1448, %v1515
          %v1519 = vmul.f32 %v1453, %v1515
          %v1520 = vmul.f32 %v1458, %v1515
          %v1521 = vmul.f32 %v1463, %v1515
          %v1522 = vmul.f32 %v1468, %v1515
          %v1523 = vmul.f32 %v1473, %v1515
          %v1524 = vmul.f32 %v1478, %v1515
          %v1525 = vmul.f32 %v1483, %v1515
          %v1526 = vmul.f32 %v1488, %v1515
          %v1527 = vmul.f32 %v1493, %v1515
          %v1528 = vmul.f32 %v1498, %v1515
          %v1529 = vmul.f32 %v1503, %v1515
          %v1530 = vmul.f32 %v1508, %v1515
          %v1531 = vmul.f32 %v1513, %v1515
          %v1532 = vadd.f32 %v1403, %v1516
          %v1533 = vadd.f32 %v1404, %v1517
          %v1534 = vadd.f32 %v1405, %v1518
          %v1535 = vadd.f32 %v1406, %v1519
          %v1536 = vadd.f32 %v1407, %v1520
          %v1537 = vadd.f32 %v1408, %v1521
          %v1538 = vadd.f32 %v1409, %v1522
          %v1539 = vadd.f32 %v1410, %v1523
          %v1540 = vadd.f32 %v1411, %v1524
          %v1541 = vadd.f32 %v1412, %v1525
          %v1542 = vadd.f32 %v1413, %v1526
          %v1543 = vadd.f32 %v1414, %v1527
          %v1544 = vadd.f32 %v1415, %v1528
          %v1545 = vadd.f32 %v1416, %v1529
          %v1546 = vadd.f32 %v1417, %v1530
          %v1547 = vadd.f32 %v1418, %v1531
          %v1548 = vld [vmem:[%s2] sm:$0x1]
          %v1550 = vperm.slane %v1548, 0
          %v1552 = vadd.f32 %v1532, %v1550
          %v1553 = vadd.f32 %v1533, %v1550
          %v1554 = vadd.f32 %v1534, %v1550
          %v1555 = vadd.f32 %v1535, %v1550
          %v1556 = vadd.f32 %v1536, %v1550
          %v1557 = vadd.f32 %v1537, %v1550
          %v1558 = vadd.f32 %v1538, %v1550
          %v1559 = vadd.f32 %v1539, %v1550
          %v1560 = vadd.f32 %v1540, %v1550
          %v1561 = vadd.f32 %v1541, %v1550
          %v1562 = vadd.f32 %v1542, %v1550
          %v1563 = vadd.f32 %v1543, %v1550
          %v1564 = vadd.f32 %v1544, %v1550
          %v1565 = vadd.f32 %v1545, %v1550
          %v1566 = vadd.f32 %v1546, %v1550
          %v1567 = vadd.f32 %v1547, %v1550
          %v1568 = vmax.f32 %v1552, 0.0
          %v1569 = vmax.f32 %v1553, 0.0
          %v1570 = vmax.f32 %v1554, 0.0
          %v1571 = vmax.f32 %v1555, 0.0
          %v1572 = vmax.f32 %v1556, 0.0
          %v1573 = vmax.f32 %v1557, 0.0
          %v1574 = vmax.f32 %v1558, 0.0
          %v1575 = vmax.f32 %v1559, 0.0
          %v1576 = vmax.f32 %v1560, 0.0
          %v1577 = vmax.f32 %v1561, 0.0
          %v1578 = vmax.f32 %v1562, 0.0
          %v1579 = vmax.f32 %v1563, 0.0
          %v1580 = vmax.f32 %v1564, 0.0
          %v1581 = vmax.f32 %v1565, 0.0
          %v1582 = vmax.f32 %v1566, 0.0
          %v1583 = vmax.f32 %v1567, 0.0
          %vm1584 = vcmask 261120
          %1585 = vst.msk [vmem:[#allocation2] sm:$0xff] %vm1584, 0.0
          %vm1586 = vcmask 254976
          %1587 = vst.msk [vmem:[#allocation2 + $0x8] sm:$0x3] %vm1586, 0.0
          %1588 = vst.msk [vmem:[#allocation2 + $0x10] sm:$0xff] %vm1584, 0.0
          %1589 = vst.msk [vmem:[#allocation2 + $0x18] sm:$0x3] %vm1586, 0.0
          %1590 = vst.msk [vmem:[#allocation2 + $0x20] sm:$0xff] %vm1584, 0.0
          %1591 = vst.msk [vmem:[#allocation2 + $0x28] sm:$0x3] %vm1586, 0.0
          %1592 = vst.msk [vmem:[#allocation2 + $0x30] sm:$0xff] %vm1584, 0.0
          %1593 = vst.msk [vmem:[#allocation2 + $0x38] sm:$0x3] %vm1586, 0.0
          %1594 = vst.msk [vmem:[#allocation2 + $0x40] sm:$0xff] %vm1584, 0.0
          %1595 = vst.msk [vmem:[#allocation2 + $0x48] sm:$0x3] %vm1586, 0.0
          %1596 = vst.msk [vmem:[#allocation2 + $0x50] sm:$0xff] %vm1584, 0.0
          %1597 = vst.msk [vmem:[#allocation2 + $0x58] sm:$0x3] %vm1586, 0.0
          %1598 = vst.msk [vmem:[#allocation2 + $0x60] sm:$0xff] %vm1584, 0.0
          %1599 = vst.msk [vmem:[#allocation2 + $0x68] sm:$0x3] %vm1586, 0.0
          %1600 = vst.msk [vmem:[#allocation2 + $0x70] sm:$0xff] %vm1584, 0.0
          %1601 = vst.msk [vmem:[#allocation2 + $0x78] sm:$0x3] %vm1586, 0.0
          %1602 = vst.msk [vmem:[#allocation2 + $0x80] sm:$0xff] %vm1584, 0.0
          %1603 = vst.msk [vmem:[#allocation2 + $0x88] sm:$0x3] %vm1586, 0.0
          %1604 = vst.msk [vmem:[#allocation2 + $0x90] sm:$0xff] %vm1584, 0.0
          %1605 = vst.msk [vmem:[#allocation2 + $0x98] sm:$0x3] %vm1586, 0.0
          %1606 = vst.msk [vmem:[#allocation2 + $0xa0] sm:$0xff] %vm1584, 0.0
          %1607 = vst.msk [vmem:[#allocation2 + $0xa8] sm:$0x3] %vm1586, 0.0
          %1608 = vst.msk [vmem:[#allocation2 + $0xb0] sm:$0xff] %vm1584, 0.0
          %1609 = vst.msk [vmem:[#allocation2 + $0xb8] sm:$0x3] %vm1586, 0.0
          %1610 = vst.msk [vmem:[#allocation2 + $0xc0] sm:$0xff] %vm1584, 0.0
          %1611 = vst.msk [vmem:[#allocation2 + $0xc8] sm:$0x3] %vm1586, 0.0
          %1612 = vst.msk [vmem:[#allocation2 + $0xd0] sm:$0xff] %vm1584, 0.0
          %1613 = vst.msk [vmem:[#allocation2 + $0xd8] sm:$0x3] %vm1586, 0.0
          %1614 = vst.msk [vmem:[#allocation2 + $0xe0] sm:$0xff] %vm1584, 0.0
          %1615 = vst.msk [vmem:[#allocation2 + $0xe8] sm:$0x3] %vm1586, 0.0
          %1616 = vst.msk [vmem:[#allocation2 + $0xf0] sm:$0xff] %vm1584, 0.0
          %1617 = vst.msk [vmem:[#allocation2 + $0xf8] sm:$0x3] %vm1586, 0.0
          %1618 = vst.msk [vmem:[#allocation2 + $0x100] sm:$0xff] %vm1584, 0.0
          %1619 = vst.msk [vmem:[#allocation2 + $0x108] sm:$0x3] %vm1586, 0.0
          %1620 = vst.msk [vmem:[#allocation2 + $0x110] sm:$0xff] %vm1584, 0.0
          %1621 = vst.msk [vmem:[#allocation2 + $0x118] sm:$0x3] %vm1586, 0.0
          %1622 = vst.msk [vmem:[#allocation2 + $0x120] sm:$0xff] %vm1584, 0.0
          %1623 = vst.msk [vmem:[#allocation2 + $0x128] sm:$0x3] %vm1586, 0.0
          %1624 = vst.msk [vmem:[#allocation2 + $0x130] sm:$0xff] %vm1584, 0.0
          %1625 = vst.msk [vmem:[#allocation2 + $0x138] sm:$0x3] %vm1586, 0.0
          %s1626 = scalar_lea.vmem [#allocation2], 16
          %1627 = vst.msk [vmem:[%s1626 + $0x1] sm:$0xff] %vm1584, %v1568
          %1628 = vst.msk [vmem:[%s1626 + $0x11] sm:$0xff] %vm1584, %v1569
          %1629 = vst.msk [vmem:[%s1626 + $0x21] sm:$0xff] %vm1584, %v1570
          %1630 = vst.msk [vmem:[%s1626 + $0x31] sm:$0xff] %vm1584, %v1571
          %1631 = vst.msk [vmem:[%s1626 + $0x41] sm:$0xff] %vm1584, %v1572
          %1632 = vst.msk [vmem:[%s1626 + $0x51] sm:$0xff] %vm1584, %v1573
          %1633 = vst.msk [vmem:[%s1626 + $0x61] sm:$0xff] %vm1584, %v1574
          %1634 = vst.msk [vmem:[%s1626 + $0x71] sm:$0xff] %vm1584, %v1575
          %1635 = vst.msk [vmem:[%s1626 + $0xa1] sm:$0xff] %vm1584, %v1576
          %1636 = vst.msk [vmem:[%s1626 + $0xb1] sm:$0xff] %vm1584, %v1577
          %1637 = vst.msk [vmem:[%s1626 + $0xc1] sm:$0xff] %vm1584, %v1578
          %1638 = vst.msk [vmem:[%s1626 + $0xd1] sm:$0xff] %vm1584, %v1579
          %1639 = vst.msk [vmem:[%s1626 + $0xe1] sm:$0xff] %vm1584, %v1580
          %1640 = vst.msk [vmem:[%s1626 + $0xf1] sm:$0xff] %vm1584, %v1581
          %1641 = vst.msk [vmem:[%s1626 + $0x101] sm:$0xff] %vm1584, %v1582
          %1642 = vst.msk [vmem:[%s1626 + $0x111] sm:$0xff] %vm1584, %v1583
          %v1643 = vld [vmem:[#allocation2] sm:$0xff]
          %v1644 = vld [vmem:[#allocation2 + $0x10] sm:$0xff]
          %v1645 = vld [vmem:[#allocation2 + $0x20] sm:$0xff]
          %v1646 = vld [vmem:[#allocation2 + $0x30] sm:$0xff]
          %v1647 = vld [vmem:[#allocation2 + $0x40] sm:$0xff]
          %v1648 = vld [vmem:[#allocation2 + $0x50] sm:$0xff]
          %v1649 = vld [vmem:[#allocation2 + $0x60] sm:$0xff]
          %v1650 = vld [vmem:[#allocation2 + $0x70] sm:$0xff]
          %v1651 = vld [vmem:[#allocation2 + $0xa0] sm:$0xff]
          %v1652 = vld [vmem:[#allocation2 + $0xb0] sm:$0xff]
          %v1653 = vld [vmem:[#allocation2 + $0xc0] sm:$0xff]
          %v1654 = vld [vmem:[#allocation2 + $0xd0] sm:$0xff]
          %v1655 = vld [vmem:[#allocation2 + $0xe0] sm:$0xff]
          %v1656 = vld [vmem:[#allocation2 + $0xf0] sm:$0xff]
          %v1657 = vld [vmem:[#allocation2 + $0x100] sm:$0xff]
          %v1658 = vld [vmem:[#allocation2 + $0x110] sm:$0xff]
          %v1659 = vpack.c.bf16 %v1644, %v1643
          %v1660 = vpack.c.bf16 %v1646, %v1645
          %v1661 = vpack.c.bf16 %v1648, %v1647
          %v1662 = vpack.c.bf16 %v1650, %v1649
          %v1663 = vpack.c.bf16 %v1652, %v1651
          %v1664 = vpack.c.bf16 %v1654, %v1653
          %v1665 = vpack.c.bf16 %v1656, %v1655
          %v1666 = vpack.c.bf16 %v1658, %v1657
          %v1667 = vld [vmem:[%s3] sm:$0xf]
          %v1668 = vld [vmem:[%s3 + $0x4] sm:$0xf]
          %v1669 = vld [vmem:[%s3 + $0x8] sm:$0xf]
          %v1670 = vld [vmem:[%s3 + $0xc] sm:$0xf]
          %v1671 = vld [vmem:[#allocation2 + $0x1] sm:$0xff]
          %v1672 = vld [vmem:[#allocation2 + $0x11] sm:$0xff]
          %v1673 = vld [vmem:[#allocation2 + $0x21] sm:$0xff]
          %v1674 = vld [vmem:[#allocation2 + $0x31] sm:$0xff]
          %v1675 = vld [vmem:[#allocation2 + $0x41] sm:$0xff]
          %v1676 = vld [vmem:[#allocation2 + $0x51] sm:$0xff]
          %v1677 = vld [vmem:[#allocation2 + $0x61] sm:$0xff]
          %v1678 = vld [vmem:[#allocation2 + $0x71] sm:$0xff]
          %v1679 = vld [vmem:[#allocation2 + $0xa1] sm:$0xff]
          %v1680 = vld [vmem:[#allocation2 + $0xb1] sm:$0xff]
          %v1681 = vld [vmem:[#allocation2 + $0xc1] sm:$0xff]
          %v1682 = vld [vmem:[#allocation2 + $0xd1] sm:$0xff]
          %v1683 = vld [vmem:[#allocation2 + $0xe1] sm:$0xff]
          %v1684 = vld [vmem:[#allocation2 + $0xf1] sm:$0xff]
          %v1685 = vld [vmem:[#allocation2 + $0x101] sm:$0xff]
          %v1686 = vld [vmem:[#allocation2 + $0x111] sm:$0xff]
          %v1687 = vpack.c.bf16 %v1672, %v1671
          %v1688 = vpack.c.bf16 %v1674, %v1673
          %v1689 = vpack.c.bf16 %v1676, %v1675
          %v1690 = vpack.c.bf16 %v1678, %v1677
          %v1691 = vpack.c.bf16 %v1680, %v1679
          %v1692 = vpack.c.bf16 %v1682, %v1681
          %v1693 = vpack.c.bf16 %v1684, %v1683
          %v1694 = vpack.c.bf16 %v1686, %v1685
          %s1695 = scalar_lea.vmem %s3, 16
          %v1696 = vld [vmem:[%s1695] sm:$0xf]
          %v1697 = vld [vmem:[%s1695 + $0x4] sm:$0xf]
          %v1698 = vld [vmem:[%s1695 + $0x8] sm:$0xf]
          %v1699 = vld [vmem:[%s1695 + $0xc] sm:$0xf]
          %v1704 = vunpack.c.l.b16 %v1696
          %v1705 = vunpack.c.l.b16 %v1697
          %v1706 = vunpack.c.l.b16 %v1698
          %v1707 = vunpack.c.l.b16 %v1699
          %v1708 = vpack.c.b16 %v1705, %v1704
          %v1709 = vpack.c.b16 %v1707, %v1706
          %v1713 = vsel %vm1584, %v1687, 0
          %v1716 = vsel %vm1584, %v1688, 0
          %v1719 = vsel %vm1584, %v1689, 0
          %v1722 = vsel %vm1584, %v1690, 0
          %v1725 = vsel %vm1584, %v1691, 0
          %v1728 = vsel %vm1584, %v1692, 0
          %v1731 = vsel %vm1584, %v1693, 0
          %v1734 = vsel %vm1584, %v1694, 0
          %1736 = vmatpush.bf16.msra.mxu0 0
          %1737 = vmatpush.bf16.msra.mxu0 0
          %1738 = vmatpush.bf16.msra.mxu0 0
          %1739 = vmatpush.bf16.msra.mxu0 0
          %1740 = vmatpush.bf16.msra.mxu0 0
          %1741 = vmatpush.bf16.msra.mxu0 0
          %1742 = vmatpush.bf16.msra.mxu0 %v1709
          %1743 = vmatpush.bf16.msra.mxu0 %v1708
          %1744 = vmatmul.bf16.gmra.mxu0 %v1713
          %v1745 = vpop.f32.mrf.mxu0
          %v1746 = vadd.f32 0.0, %v1745
          %v1747 = vpop.f32.mrf.mxu0
          %v1748 = vadd.f32 0.0, %v1747
          %1749 = vmatmul.bf16.gmra.mxu0 %v1716
          %v1750 = vpop.f32.mrf.mxu0
          %v1751 = vadd.f32 0.0, %v1750
          %v1752 = vpop.f32.mrf.mxu0
          %v1753 = vadd.f32 0.0, %v1752
          %1754 = vmatmul.bf16.gmra.mxu0 %v1719
          %v1755 = vpop.f32.mrf.mxu0
          %v1756 = vadd.f32 0.0, %v1755
          %v1757 = vpop.f32.mrf.mxu0
          %v1758 = vadd.f32 0.0, %v1757
          %1759 = vmatmul.bf16.gmra.mxu0 %v1722
          %v1760 = vpop.f32.mrf.mxu0
          %v1761 = vadd.f32 0.0, %v1760
          %v1762 = vpop.f32.mrf.mxu0
          %v1763 = vadd.f32 0.0, %v1762
          %1764 = vmatmul.bf16.gmra.mxu0 %v1725
          %v1765 = vpop.f32.mrf.mxu0
          %v1766 = vadd.f32 0.0, %v1765
          %v1767 = vpop.f32.mrf.mxu0
          %v1768 = vadd.f32 0.0, %v1767
          %1769 = vmatmul.bf16.gmra.mxu0 %v1728
          %v1770 = vpop.f32.mrf.mxu0
          %v1771 = vadd.f32 0.0, %v1770
          %v1772 = vpop.f32.mrf.mxu0
          %v1773 = vadd.f32 0.0, %v1772
          %1774 = vmatmul.bf16.gmra.mxu0 %v1731
          %v1775 = vpop.f32.mrf.mxu0
          %v1776 = vadd.f32 0.0, %v1775
          %v1777 = vpop.f32.mrf.mxu0
          %v1778 = vadd.f32 0.0, %v1777
          %1779 = vmatmul.bf16.gmra.mxu0 %v1734
          %v1780 = vpop.f32.mrf.mxu0
          %v1781 = vadd.f32 0.0, %v1780
          %v1782 = vpop.f32.mrf.mxu0
          %v1783 = vadd.f32 0.0, %v1782
          %1784 = vdwg.mxu0
          %v1789 = vunpack.c.l.b16 %v1667
          %v1790 = vunpack.c.l.b16 %v1668
          %v1791 = vunpack.c.l.b16 %v1669
          %v1792 = vunpack.c.l.b16 %v1670
          %v1793 = vpack.c.b16 %v1790, %v1789
          %v1794 = vpack.c.b16 %v1792, %v1791
          %v1798 = vsel %vm1584, %v1659, 0
          %v1801 = vsel %vm1584, %v1660, 0
          %v1804 = vsel %vm1584, %v1661, 0
          %v1807 = vsel %vm1584, %v1662, 0
          %v1810 = vsel %vm1584, %v1663, 0
          %v1813 = vsel %vm1584, %v1664, 0
          %v1816 = vsel %vm1584, %v1665, 0
          %v1819 = vsel %vm1584, %v1666, 0
          %1821 = vmatpush.bf16.msra.mxu0 0
          %1822 = vmatpush.bf16.msra.mxu0 0
          %1823 = vmatpush.bf16.msra.mxu0 0
          %1824 = vmatpush.bf16.msra.mxu0 0
          %1825 = vmatpush.bf16.msra.mxu0 0
          %1826 = vmatpush.bf16.msra.mxu0 0
          %1827 = vmatpush.bf16.msra.mxu0 %v1794
          %1828 = vmatpush.bf16.msra.mxu0 %v1793
          %1829 = vmatmul.bf16.gmra.mxu0 %v1798
          %v1830 = vpop.f32.mrf.mxu0
          %v1831 = vadd.f32 %v1746, %v1830
          %v1832 = vpop.f32.mrf.mxu0
          %v1833 = vadd.f32 %v1748, %v1832
          %1834 = vmatmul.bf16.gmra.mxu0 %v1801
          %v1835 = vpop.f32.mrf.mxu0
          %v1836 = vadd.f32 %v1751, %v1835
          %v1837 = vpop.f32.mrf.mxu0
          %v1838 = vadd.f32 %v1753, %v1837
          %1839 = vmatmul.bf16.gmra.mxu0 %v1804
          %v1840 = vpop.f32.mrf.mxu0
          %v1841 = vadd.f32 %v1756, %v1840
          %v1842 = vpop.f32.mrf.mxu0
          %v1843 = vadd.f32 %v1758, %v1842
          %1844 = vmatmul.bf16.gmra.mxu0 %v1807
          %v1845 = vpop.f32.mrf.mxu0
          %v1846 = vadd.f32 %v1761, %v1845
          %v1847 = vpop.f32.mrf.mxu0
          %v1848 = vadd.f32 %v1763, %v1847
          %1849 = vmatmul.bf16.gmra.mxu0 %v1810
          %v1850 = vpop.f32.mrf.mxu0
          %v1851 = vadd.f32 %v1766, %v1850
          %v1852 = vpop.f32.mrf.mxu0
          %v1853 = vadd.f32 %v1768, %v1852
          %1854 = vmatmul.bf16.gmra.mxu0 %v1813
          %v1855 = vpop.f32.mrf.mxu0
          %v1856 = vadd.f32 %v1771, %v1855
          %v1857 = vpop.f32.mrf.mxu0
          %v1858 = vadd.f32 %v1773, %v1857
          %1859 = vmatmul.bf16.gmra.mxu0 %v1816
          %v1860 = vpop.f32.mrf.mxu0
          %v1861 = vadd.f32 %v1776, %v1860
          %v1862 = vpop.f32.mrf.mxu0
          %v1863 = vadd.f32 %v1778, %v1862
          %1864 = vmatmul.bf16.gmra.mxu0 %v1819
          %v1865 = vpop.f32.mrf.mxu0
          %v1866 = vadd.f32 %v1781, %v1865
          %v1867 = vpop.f32.mrf.mxu0
          %v1868 = vadd.f32 %v1783, %v1867
          %1869 = vdwg.mxu0
          %v1870 = vld [vmem:[#allocation2 + $0x2] sm:$0xff]
          %v1871 = vld [vmem:[#allocation2 + $0x12] sm:$0xff]
          %v1872 = vld [vmem:[#allocation2 + $0x22] sm:$0xff]
          %v1873 = vld [vmem:[#allocation2 + $0x32] sm:$0xff]
          %v1874 = vld [vmem:[#allocation2 + $0x42] sm:$0xff]
          %v1875 = vld [vmem:[#allocation2 + $0x52] sm:$0xff]
          %v1876 = vld [vmem:[#allocation2 + $0x62] sm:$0xff]
          %v1877 = vld [vmem:[#allocation2 + $0x72] sm:$0xff]
          %v1878 = vld [vmem:[#allocation2 + $0xa2] sm:$0xff]
          %v1879 = vld [vmem:[#allocation2 + $0xb2] sm:$0xff]
          %v1880 = vld [vmem:[#allocation2 + $0xc2] sm:$0xff]
          %v1881 = vld [vmem:[#allocation2 + $0xd2] sm:$0xff]
          %v1882 = vld [vmem:[#allocation2 + $0xe2] sm:$0xff]
          %v1883 = vld [vmem:[#allocation2 + $0xf2] sm:$0xff]
          %v1884 = vld [vmem:[#allocation2 + $0x102] sm:$0xff]
          %v1885 = vld [vmem:[#allocation2 + $0x112] sm:$0xff]
          %v1886 = vpack.c.bf16 %v1871, %v1870
          %v1887 = vpack.c.bf16 %v1873, %v1872
          %v1888 = vpack.c.bf16 %v1875, %v1874
          %v1889 = vpack.c.bf16 %v1877, %v1876
          %v1890 = vpack.c.bf16 %v1879, %v1878
          %v1891 = vpack.c.bf16 %v1881, %v1880
          %v1892 = vpack.c.bf16 %v1883, %v1882
          %v1893 = vpack.c.bf16 %v1885, %v1884
          %s1894 = scalar_lea.vmem %s3, 32
          %v1895 = vld [vmem:[%s1894] sm:$0xf]
          %v1896 = vld [vmem:[%s1894 + $0x4] sm:$0xf]
          %v1897 = vld [vmem:[%s1894 + $0x8] sm:$0xf]
          %v1898 = vld [vmem:[%s1894 + $0xc] sm:$0xf]
          %v1903 = vunpack.c.l.b16 %v1895
          %v1904 = vunpack.c.l.b16 %v1896
          %v1905 = vunpack.c.l.b16 %v1897
          %v1906 = vunpack.c.l.b16 %v1898
          %v1907 = vpack.c.b16 %v1904, %v1903
          %v1908 = vpack.c.b16 %v1906, %v1905
          %v1912 = vsel %vm1584, %v1886, 0
          %v1915 = vsel %vm1584, %v1887, 0
          %v1918 = vsel %vm1584, %v1888, 0
          %v1921 = vsel %vm1584, %v1889, 0
          %v1924 = vsel %vm1584, %v1890, 0
          %v1927 = vsel %vm1584, %v1891, 0
          %v1930 = vsel %vm1584, %v1892, 0
          %v1933 = vsel %vm1584, %v1893, 0
          %1935 = vmatpush.bf16.msra.mxu0 0
          %1936 = vmatpush.bf16.msra.mxu0 0
          %1937 = vmatpush.bf16.msra.mxu0 0
          %1938 = vmatpush.bf16.msra.mxu0 0
          %1939 = vmatpush.bf16.msra.mxu0 0
          %1940 = vmatpush.bf16.msra.mxu0 0
          %1941 = vmatpush.bf16.msra.mxu0 %v1908
          %1942 = vmatpush.bf16.msra.mxu0 %v1907
          %1943 = vmatmul.bf16.gmra.mxu0 %v1912
          %v1944 = vpop.f32.mrf.mxu0
          %v1945 = vadd.f32 0.0, %v1944
          %v1946 = vpop.f32.mrf.mxu0
          %v1947 = vadd.f32 0.0, %v1946
          %1948 = vmatmul.bf16.gmra.mxu0 %v1915
          %v1949 = vpop.f32.mrf.mxu0
          %v1950 = vadd.f32 0.0, %v1949
          %v1951 = vpop.f32.mrf.mxu0
          %v1952 = vadd.f32 0.0, %v1951
          %1953 = vmatmul.bf16.gmra.mxu0 %v1918
          %v1954 = vpop.f32.mrf.mxu0
          %v1955 = vadd.f32 0.0, %v1954
          %v1956 = vpop.f32.mrf.mxu0
          %v1957 = vadd.f32 0.0, %v1956
          %1958 = vmatmul.bf16.gmra.mxu0 %v1921
          %v1959 = vpop.f32.mrf.mxu0
          %v1960 = vadd.f32 0.0, %v1959
          %v1961 = vpop.f32.mrf.mxu0
          %v1962 = vadd.f32 0.0, %v1961
          %1963 = vmatmul.bf16.gmra.mxu0 %v1924
          %v1964 = vpop.f32.mrf.mxu0
          %v1965 = vadd.f32 0.0, %v1964
          %v1966 = vpop.f32.mrf.mxu0
          %v1967 = vadd.f32 0.0, %v1966
          %1968 = vmatmul.bf16.gmra.mxu0 %v1927
          %v1969 = vpop.f32.mrf.mxu0
          %v1970 = vadd.f32 0.0, %v1969
          %v1971 = vpop.f32.mrf.mxu0
          %v1972 = vadd.f32 0.0, %v1971
          %1973 = vmatmul.bf16.gmra.mxu0 %v1930
          %v1974 = vpop.f32.mrf.mxu0
          %v1975 = vadd.f32 0.0, %v1974
          %v1976 = vpop.f32.mrf.mxu0
          %v1977 = vadd.f32 0.0, %v1976
          %1978 = vmatmul.bf16.gmra.mxu0 %v1933
          %v1979 = vpop.f32.mrf.mxu0
          %v1980 = vadd.f32 0.0, %v1979
          %v1981 = vpop.f32.mrf.mxu0
          %v1982 = vadd.f32 0.0, %v1981
          %1983 = vdwg.mxu0
          %v1984 = vadd.f32 %v1831, %v1945
          %v1985 = vadd.f32 %v1833, %v1947
          %v1986 = vadd.f32 %v1836, %v1950
          %v1987 = vadd.f32 %v1838, %v1952
          %v1988 = vadd.f32 %v1841, %v1955
          %v1989 = vadd.f32 %v1843, %v1957
          %v1990 = vadd.f32 %v1846, %v1960
          %v1991 = vadd.f32 %v1848, %v1962
          %v1992 = vadd.f32 %v1851, %v1965
          %v1993 = vadd.f32 %v1853, %v1967
          %v1994 = vadd.f32 %v1856, %v1970
          %v1995 = vadd.f32 %v1858, %v1972
          %v1996 = vadd.f32 %v1861, %v1975
          %v1997 = vadd.f32 %v1863, %v1977
          %v1998 = vadd.f32 %v1866, %v1980
          %v1999 = vadd.f32 %v1868, %v1982
          %v2000 = vld [vmem:[%s1626] sm:$0xff]
          %v2001 = vld [vmem:[%s1626 + $0x10] sm:$0xff]
          %v2002 = vld [vmem:[%s1626 + $0x20] sm:$0xff]
          %v2003 = vld [vmem:[%s1626 + $0x30] sm:$0xff]
          %v2004 = vld [vmem:[%s1626 + $0x40] sm:$0xff]
          %v2005 = vld [vmem:[%s1626 + $0x50] sm:$0xff]
          %v2006 = vld [vmem:[%s1626 + $0x60] sm:$0xff]
          %v2007 = vld [vmem:[%s1626 + $0x70] sm:$0xff]
          %v2008 = vld [vmem:[%s1626 + $0xa0] sm:$0xff]
          %v2009 = vld [vmem:[%s1626 + $0xb0] sm:$0xff]
          %v2010 = vld [vmem:[%s1626 + $0xc0] sm:$0xff]
          %v2011 = vld [vmem:[%s1626 + $0xd0] sm:$0xff]
          %v2012 = vld [vmem:[%s1626 + $0xe0] sm:$0xff]
          %v2013 = vld [vmem:[%s1626 + $0xf0] sm:$0xff]
          %v2014 = vld [vmem:[%s1626 + $0x100] sm:$0xff]
          %v2015 = vld [vmem:[%s1626 + $0x110] sm:$0xff]
          %v2016 = vpack.c.bf16 %v2001, %v2000
          %v2017 = vpack.c.bf16 %v2003, %v2002
          %v2018 = vpack.c.bf16 %v2005, %v2004
          %v2019 = vpack.c.bf16 %v2007, %v2006
          %v2020 = vpack.c.bf16 %v2009, %v2008
          %v2021 = vpack.c.bf16 %v2011, %v2010
          %v2022 = vpack.c.bf16 %v2013, %v2012
          %v2023 = vpack.c.bf16 %v2015, %v2014
          %s2024 = scalar_lea.vmem %s3, 48
          %v2025 = vld [vmem:[%s2024] sm:$0xf]
          %v2026 = vld [vmem:[%s2024 + $0x4] sm:$0xf]
          %v2027 = vld [vmem:[%s2024 + $0x8] sm:$0xf]
          %v2028 = vld [vmem:[%s2024 + $0xc] sm:$0xf]
          %v2033 = vunpack.c.l.b16 %v2025
          %v2034 = vunpack.c.l.b16 %v2026
          %v2035 = vunpack.c.l.b16 %v2027
          %v2036 = vunpack.c.l.b16 %v2028
          %v2037 = vpack.c.b16 %v2034, %v2033
          %v2038 = vpack.c.b16 %v2036, %v2035
          %v2042 = vsel %vm1584, %v2016, 0
          %v2045 = vsel %vm1584, %v2017, 0
          %v2048 = vsel %vm1584, %v2018, 0
          %v2051 = vsel %vm1584, %v2019, 0
          %v2054 = vsel %vm1584, %v2020, 0
          %v2057 = vsel %vm1584, %v2021, 0
          %v2060 = vsel %vm1584, %v2022, 0
          %v2063 = vsel %vm1584, %v2023, 0
          %2065 = vmatpush.bf16.msra.mxu0 0
          %2066 = vmatpush.bf16.msra.mxu0 0
          %2067 = vmatpush.bf16.msra.mxu0 0
          %2068 = vmatpush.bf16.msra.mxu0 0
          %2069 = vmatpush.bf16.msra.mxu0 0
          %2070 = vmatpush.bf16.msra.mxu0 0
          %2071 = vmatpush.bf16.msra.mxu0 %v2038
          %2072 = vmatpush.bf16.msra.mxu0 %v2037
          %2073 = vmatmul.bf16.gmra.mxu0 %v2042
          %v2074 = vpop.f32.mrf.mxu0
          %v2075 = vadd.f32 0.0, %v2074
          %v2076 = vpop.f32.mrf.mxu0
          %v2077 = vadd.f32 0.0, %v2076
          %2078 = vmatmul.bf16.gmra.mxu0 %v2045
          %v2079 = vpop.f32.mrf.mxu0
          %v2080 = vadd.f32 0.0, %v2079
          %v2081 = vpop.f32.mrf.mxu0
          %v2082 = vadd.f32 0.0, %v2081
          %2083 = vmatmul.bf16.gmra.mxu0 %v2048
          %v2084 = vpop.f32.mrf.mxu0
          %v2085 = vadd.f32 0.0, %v2084
          %v2086 = vpop.f32.mrf.mxu0
          %v2087 = vadd.f32 0.0, %v2086
          %2088 = vmatmul.bf16.gmra.mxu0 %v2051
          %v2089 = vpop.f32.mrf.mxu0
          %v2090 = vadd.f32 0.0, %v2089
          %v2091 = vpop.f32.mrf.mxu0
          %v2092 = vadd.f32 0.0, %v2091
          %2093 = vmatmul.bf16.gmra.mxu0 %v2054
          %v2094 = vpop.f32.mrf.mxu0
          %v2095 = vadd.f32 0.0, %v2094
          %v2096 = vpop.f32.mrf.mxu0
          %v2097 = vadd.f32 0.0, %v2096
          %2098 = vmatmul.bf16.gmra.mxu0 %v2057
          %v2099 = vpop.f32.mrf.mxu0
          %v2100 = vadd.f32 0.0, %v2099
          %v2101 = vpop.f32.mrf.mxu0
          %v2102 = vadd.f32 0.0, %v2101
          %2103 = vmatmul.bf16.gmra.mxu0 %v2060
          %v2104 = vpop.f32.mrf.mxu0
          %v2105 = vadd.f32 0.0, %v2104
          %v2106 = vpop.f32.mrf.mxu0
          %v2107 = vadd.f32 0.0, %v2106
          %2108 = vmatmul.bf16.gmra.mxu0 %v2063
          %v2109 = vpop.f32.mrf.mxu0
          %v2110 = vadd.f32 0.0, %v2109
          %v2111 = vpop.f32.mrf.mxu0
          %v2112 = vadd.f32 0.0, %v2111
          %2113 = vdwg.mxu0
          %v2114 = vadd.f32 %v1984, %v2075
          %v2115 = vadd.f32 %v1985, %v2077
          %v2116 = vadd.f32 %v1986, %v2080
          %v2117 = vadd.f32 %v1987, %v2082
          %v2118 = vadd.f32 %v1988, %v2085
          %v2119 = vadd.f32 %v1989, %v2087
          %v2120 = vadd.f32 %v1990, %v2090
          %v2121 = vadd.f32 %v1991, %v2092
          %v2122 = vadd.f32 %v1992, %v2095
          %v2123 = vadd.f32 %v1993, %v2097
          %v2124 = vadd.f32 %v1994, %v2100
          %v2125 = vadd.f32 %v1995, %v2102
          %v2126 = vadd.f32 %v1996, %v2105
          %v2127 = vadd.f32 %v1997, %v2107
          %v2128 = vadd.f32 %v1998, %v2110
          %v2129 = vadd.f32 %v1999, %v2112
          %v2130 = vld [vmem:[%s1626 + $0x1] sm:$0xff]
          %v2131 = vld [vmem:[%s1626 + $0x11] sm:$0xff]
          %v2132 = vld [vmem:[%s1626 + $0x21] sm:$0xff]
          %v2133 = vld [vmem:[%s1626 + $0x31] sm:$0xff]
          %v2134 = vld [vmem:[%s1626 + $0x41] sm:$0xff]
          %v2135 = vld [vmem:[%s1626 + $0x51] sm:$0xff]
          %v2136 = vld [vmem:[%s1626 + $0x61] sm:$0xff]
          %v2137 = vld [vmem:[%s1626 + $0x71] sm:$0xff]
          %v2138 = vld [vmem:[%s1626 + $0xa1] sm:$0xff]
          %v2139 = vld [vmem:[%s1626 + $0xb1] sm:$0xff]
          %v2140 = vld [vmem:[%s1626 + $0xc1] sm:$0xff]
          %v2141 = vld [vmem:[%s1626 + $0xd1] sm:$0xff]
          %v2142 = vld [vmem:[%s1626 + $0xe1] sm:$0xff]
          %v2143 = vld [vmem:[%s1626 + $0xf1] sm:$0xff]
          %v2144 = vld [vmem:[%s1626 + $0x101] sm:$0xff]
          %v2145 = vld [vmem:[%s1626 + $0x111] sm:$0xff]
          %v2146 = vpack.c.bf16 %v2131, %v2130
          %v2147 = vpack.c.bf16 %v2133, %v2132
          %v2148 = vpack.c.bf16 %v2135, %v2134
          %v2149 = vpack.c.bf16 %v2137, %v2136
          %v2150 = vpack.c.bf16 %v2139, %v2138
          %v2151 = vpack.c.bf16 %v2141, %v2140
          %v2152 = vpack.c.bf16 %v2143, %v2142
          %v2153 = vpack.c.bf16 %v2145, %v2144
          %s2154 = scalar_lea.vmem %s3, 64
          %v2155 = vld [vmem:[%s2154] sm:$0xf]
          %v2156 = vld [vmem:[%s2154 + $0x4] sm:$0xf]
          %v2157 = vld [vmem:[%s2154 + $0x8] sm:$0xf]
          %v2158 = vld [vmem:[%s2154 + $0xc] sm:$0xf]
          %v2163 = vunpack.c.l.b16 %v2155
          %v2164 = vunpack.c.l.b16 %v2156
          %v2165 = vunpack.c.l.b16 %v2157
          %v2166 = vunpack.c.l.b16 %v2158
          %v2167 = vpack.c.b16 %v2164, %v2163
          %v2168 = vpack.c.b16 %v2166, %v2165
          %v2172 = vsel %vm1584, %v2146, 0
          %v2175 = vsel %vm1584, %v2147, 0
          %v2178 = vsel %vm1584, %v2148, 0
          %v2181 = vsel %vm1584, %v2149, 0
          %v2184 = vsel %vm1584, %v2150, 0
          %v2187 = vsel %vm1584, %v2151, 0
          %v2190 = vsel %vm1584, %v2152, 0
          %v2193 = vsel %vm1584, %v2153, 0
          %2195 = vmatpush.bf16.msra.mxu0 0
          %2196 = vmatpush.bf16.msra.mxu0 0
          %2197 = vmatpush.bf16.msra.mxu0 0
          %2198 = vmatpush.bf16.msra.mxu0 0
          %2199 = vmatpush.bf16.msra.mxu0 0
          %2200 = vmatpush.bf16.msra.mxu0 0
          %2201 = vmatpush.bf16.msra.mxu0 %v2168
          %2202 = vmatpush.bf16.msra.mxu0 %v2167
          %2203 = vmatmul.bf16.gmra.mxu0 %v2172
          %v2204 = vpop.f32.mrf.mxu0
          %v2205 = vadd.f32 0.0, %v2204
          %v2206 = vpop.f32.mrf.mxu0
          %v2207 = vadd.f32 0.0, %v2206
          %2208 = vmatmul.bf16.gmra.mxu0 %v2175
          %v2209 = vpop.f32.mrf.mxu0
          %v2210 = vadd.f32 0.0, %v2209
          %v2211 = vpop.f32.mrf.mxu0
          %v2212 = vadd.f32 0.0, %v2211
          %2213 = vmatmul.bf16.gmra.mxu0 %v2178
          %v2214 = vpop.f32.mrf.mxu0
          %v2215 = vadd.f32 0.0, %v2214
          %v2216 = vpop.f32.mrf.mxu0
          %v2217 = vadd.f32 0.0, %v2216
          %2218 = vmatmul.bf16.gmra.mxu0 %v2181
          %v2219 = vpop.f32.mrf.mxu0
          %v2220 = vadd.f32 0.0, %v2219
          %v2221 = vpop.f32.mrf.mxu0
          %v2222 = vadd.f32 0.0, %v2221
          %2223 = vmatmul.bf16.gmra.mxu0 %v2184
          %v2224 = vpop.f32.mrf.mxu0
          %v2225 = vadd.f32 0.0, %v2224
          %v2226 = vpop.f32.mrf.mxu0
          %v2227 = vadd.f32 0.0, %v2226
          %2228 = vmatmul.bf16.gmra.mxu0 %v2187
          %v2229 = vpop.f32.mrf.mxu0
          %v2230 = vadd.f32 0.0, %v2229
          %v2231 = vpop.f32.mrf.mxu0
          %v2232 = vadd.f32 0.0, %v2231
          %2233 = vmatmul.bf16.gmra.mxu0 %v2190
          %v2234 = vpop.f32.mrf.mxu0
          %v2235 = vadd.f32 0.0, %v2234
          %v2236 = vpop.f32.mrf.mxu0
          %v2237 = vadd.f32 0.0, %v2236
          %2238 = vmatmul.bf16.gmra.mxu0 %v2193
          %v2239 = vpop.f32.mrf.mxu0
          %v2240 = vadd.f32 0.0, %v2239
          %v2241 = vpop.f32.mrf.mxu0
          %v2242 = vadd.f32 0.0, %v2241
          %2243 = vdwg.mxu0
          %v2244 = vadd.f32 %v2114, %v2205
          %v2245 = vadd.f32 %v2115, %v2207
          %v2246 = vadd.f32 %v2116, %v2210
          %v2247 = vadd.f32 %v2117, %v2212
          %v2248 = vadd.f32 %v2118, %v2215
          %v2249 = vadd.f32 %v2119, %v2217
          %v2250 = vadd.f32 %v2120, %v2220
          %v2251 = vadd.f32 %v2121, %v2222
          %v2252 = vadd.f32 %v2122, %v2225
          %v2253 = vadd.f32 %v2123, %v2227
          %v2254 = vadd.f32 %v2124, %v2230
          %v2255 = vadd.f32 %v2125, %v2232
          %v2256 = vadd.f32 %v2126, %v2235
          %v2257 = vadd.f32 %v2127, %v2237
          %v2258 = vadd.f32 %v2128, %v2240
          %v2259 = vadd.f32 %v2129, %v2242
          %v2260 = vld [vmem:[%s1626 + $0x2] sm:$0xff]
          %v2261 = vld [vmem:[%s1626 + $0x12] sm:$0xff]
          %v2262 = vld [vmem:[%s1626 + $0x22] sm:$0xff]
          %v2263 = vld [vmem:[%s1626 + $0x32] sm:$0xff]
          %v2264 = vld [vmem:[%s1626 + $0x42] sm:$0xff]
          %v2265 = vld [vmem:[%s1626 + $0x52] sm:$0xff]
          %v2266 = vld [vmem:[%s1626 + $0x62] sm:$0xff]
          %v2267 = vld [vmem:[%s1626 + $0x72] sm:$0xff]
          %v2268 = vld [vmem:[%s1626 + $0xa2] sm:$0xff]
          %v2269 = vld [vmem:[%s1626 + $0xb2] sm:$0xff]
          %v2270 = vld [vmem:[%s1626 + $0xc2] sm:$0xff]
          %v2271 = vld [vmem:[%s1626 + $0xd2] sm:$0xff]
          %v2272 = vld [vmem:[%s1626 + $0xe2] sm:$0xff]
          %v2273 = vld [vmem:[%s1626 + $0xf2] sm:$0xff]
          %v2274 = vld [vmem:[%s1626 + $0x102] sm:$0xff]
          %v2275 = vld [vmem:[%s1626 + $0x112] sm:$0xff]
          %v2276 = vpack.c.bf16 %v2261, %v2260
          %v2277 = vpack.c.bf16 %v2263, %v2262
          %v2278 = vpack.c.bf16 %v2265, %v2264
          %v2279 = vpack.c.bf16 %v2267, %v2266
          %v2280 = vpack.c.bf16 %v2269, %v2268
          %v2281 = vpack.c.bf16 %v2271, %v2270
          %v2282 = vpack.c.bf16 %v2273, %v2272
          %v2283 = vpack.c.bf16 %v2275, %v2274
          %s2284 = scalar_lea.vmem %s3, 80
          %v2285 = vld [vmem:[%s2284] sm:$0xf]
          %v2286 = vld [vmem:[%s2284 + $0x4] sm:$0xf]
          %v2287 = vld [vmem:[%s2284 + $0x8] sm:$0xf]
          %v2288 = vld [vmem:[%s2284 + $0xc] sm:$0xf]
          %v2293 = vunpack.c.l.b16 %v2285
          %v2294 = vunpack.c.l.b16 %v2286
          %v2295 = vunpack.c.l.b16 %v2287
          %v2296 = vunpack.c.l.b16 %v2288
          %v2297 = vpack.c.b16 %v2294, %v2293
          %v2298 = vpack.c.b16 %v2296, %v2295
          %v2302 = vsel %vm1584, %v2276, 0
          %v2305 = vsel %vm1584, %v2277, 0
          %v2308 = vsel %vm1584, %v2278, 0
          %v2311 = vsel %vm1584, %v2279, 0
          %v2314 = vsel %vm1584, %v2280, 0
          %v2317 = vsel %vm1584, %v2281, 0
          %v2320 = vsel %vm1584, %v2282, 0
          %v2323 = vsel %vm1584, %v2283, 0
          %2325 = vmatpush.bf16.msra.mxu0 0
          %2326 = vmatpush.bf16.msra.mxu0 0
          %2327 = vmatpush.bf16.msra.mxu0 0
          %2328 = vmatpush.bf16.msra.mxu0 0
          %2329 = vmatpush.bf16.msra.mxu0 0
          %2330 = vmatpush.bf16.msra.mxu0 0
          %2331 = vmatpush.bf16.msra.mxu0 %v2298
          %2332 = vmatpush.bf16.msra.mxu0 %v2297
          %2333 = vmatmul.bf16.gmra.mxu0 %v2302
          %v2334 = vpop.f32.mrf.mxu0
          %v2335 = vadd.f32 0.0, %v2334
          %v2336 = vpop.f32.mrf.mxu0
          %v2337 = vadd.f32 0.0, %v2336
          %2338 = vmatmul.bf16.gmra.mxu0 %v2305
          %v2339 = vpop.f32.mrf.mxu0
          %v2340 = vadd.f32 0.0, %v2339
          %v2341 = vpop.f32.mrf.mxu0
          %v2342 = vadd.f32 0.0, %v2341
          %2343 = vmatmul.bf16.gmra.mxu0 %v2308
          %v2344 = vpop.f32.mrf.mxu0
          %v2345 = vadd.f32 0.0, %v2344
          %v2346 = vpop.f32.mrf.mxu0
          %v2347 = vadd.f32 0.0, %v2346
          %2348 = vmatmul.bf16.gmra.mxu0 %v2311
          %v2349 = vpop.f32.mrf.mxu0
          %v2350 = vadd.f32 0.0, %v2349
          %v2351 = vpop.f32.mrf.mxu0
          %v2352 = vadd.f32 0.0, %v2351
          %2353 = vmatmul.bf16.gmra.mxu0 %v2314
          %v2354 = vpop.f32.mrf.mxu0
          %v2355 = vadd.f32 0.0, %v2354
          %v2356 = vpop.f32.mrf.mxu0
          %v2357 = vadd.f32 0.0, %v2356
          %2358 = vmatmul.bf16.gmra.mxu0 %v2317
          %v2359 = vpop.f32.mrf.mxu0
          %v2360 = vadd.f32 0.0, %v2359
          %v2361 = vpop.f32.mrf.mxu0
          %v2362 = vadd.f32 0.0, %v2361
          %2363 = vmatmul.bf16.gmra.mxu0 %v2320
          %v2364 = vpop.f32.mrf.mxu0
          %v2365 = vadd.f32 0.0, %v2364
          %v2366 = vpop.f32.mrf.mxu0
          %v2367 = vadd.f32 0.0, %v2366
          %2368 = vmatmul.bf16.gmra.mxu0 %v2323
          %v2369 = vpop.f32.mrf.mxu0
          %v2370 = vadd.f32 0.0, %v2369
          %v2371 = vpop.f32.mrf.mxu0
          %v2372 = vadd.f32 0.0, %v2371
          %2373 = vdwg.mxu0
          %v2374 = vadd.f32 %v2244, %v2335
          %v2375 = vadd.f32 %v2245, %v2337
          %v2376 = vadd.f32 %v2246, %v2340
          %v2377 = vadd.f32 %v2247, %v2342
          %v2378 = vadd.f32 %v2248, %v2345
          %v2379 = vadd.f32 %v2249, %v2347
          %v2380 = vadd.f32 %v2250, %v2350
          %v2381 = vadd.f32 %v2251, %v2352
          %v2382 = vadd.f32 %v2252, %v2355
          %v2383 = vadd.f32 %v2253, %v2357
          %v2384 = vadd.f32 %v2254, %v2360
          %v2385 = vadd.f32 %v2255, %v2362
          %v2386 = vadd.f32 %v2256, %v2365
          %v2387 = vadd.f32 %v2257, %v2367
          %v2388 = vadd.f32 %v2258, %v2370
          %v2389 = vadd.f32 %v2259, %v2372
          %s2390 = scalar_lea.vmem [#allocation2], 32
          %v2391 = vld [vmem:[%s2390] sm:$0xff]
          %v2392 = vld [vmem:[%s2390 + $0x10] sm:$0xff]
          %v2393 = vld [vmem:[%s2390 + $0x20] sm:$0xff]
          %v2394 = vld [vmem:[%s2390 + $0x30] sm:$0xff]
          %v2395 = vld [vmem:[%s2390 + $0x40] sm:$0xff]
          %v2396 = vld [vmem:[%s2390 + $0x50] sm:$0xff]
          %v2397 = vld [vmem:[%s2390 + $0x60] sm:$0xff]
          %v2398 = vld [vmem:[%s2390 + $0x70] sm:$0xff]
          %v2399 = vld [vmem:[%s2390 + $0xa0] sm:$0xff]
          %v2400 = vld [vmem:[%s2390 + $0xb0] sm:$0xff]
          %v2401 = vld [vmem:[%s2390 + $0xc0] sm:$0xff]
          %v2402 = vld [vmem:[%s2390 + $0xd0] sm:$0xff]
          %v2403 = vld [vmem:[%s2390 + $0xe0] sm:$0xff]
          %v2404 = vld [vmem:[%s2390 + $0xf0] sm:$0xff]
          %v2405 = vld [vmem:[%s2390 + $0x100] sm:$0xff]
          %v2406 = vld [vmem:[%s2390 + $0x110] sm:$0xff]
          %v2407 = vpack.c.bf16 %v2392, %v2391
          %v2408 = vpack.c.bf16 %v2394, %v2393
          %v2409 = vpack.c.bf16 %v2396, %v2395
          %v2410 = vpack.c.bf16 %v2398, %v2397
          %v2411 = vpack.c.bf16 %v2400, %v2399
          %v2412 = vpack.c.bf16 %v2402, %v2401
          %v2413 = vpack.c.bf16 %v2404, %v2403
          %v2414 = vpack.c.bf16 %v2406, %v2405
          %s2415 = scalar_lea.vmem %s3, 96
          %v2416 = vld [vmem:[%s2415] sm:$0xf]
          %v2417 = vld [vmem:[%s2415 + $0x4] sm:$0xf]
          %v2418 = vld [vmem:[%s2415 + $0x8] sm:$0xf]
          %v2419 = vld [vmem:[%s2415 + $0xc] sm:$0xf]
          %v2424 = vunpack.c.l.b16 %v2416
          %v2425 = vunpack.c.l.b16 %v2417
          %v2426 = vunpack.c.l.b16 %v2418
          %v2427 = vunpack.c.l.b16 %v2419
          %v2428 = vpack.c.b16 %v2425, %v2424
          %v2429 = vpack.c.b16 %v2427, %v2426
          %v2433 = vsel %vm1584, %v2407, 0
          %v2436 = vsel %vm1584, %v2408, 0
          %v2439 = vsel %vm1584, %v2409, 0
          %v2442 = vsel %vm1584, %v2410, 0
          %v2445 = vsel %vm1584, %v2411, 0
          %v2448 = vsel %vm1584, %v2412, 0
          %v2451 = vsel %vm1584, %v2413, 0
          %v2454 = vsel %vm1584, %v2414, 0
          %2456 = vmatpush.bf16.msra.mxu0 0
          %2457 = vmatpush.bf16.msra.mxu0 0
          %2458 = vmatpush.bf16.msra.mxu0 0
          %2459 = vmatpush.bf16.msra.mxu0 0
          %2460 = vmatpush.bf16.msra.mxu0 0
          %2461 = vmatpush.bf16.msra.mxu0 0
          %2462 = vmatpush.bf16.msra.mxu0 %v2429
          %2463 = vmatpush.bf16.msra.mxu0 %v2428
          %2464 = vmatmul.bf16.gmra.mxu0 %v2433
          %v2465 = vpop.f32.mrf.mxu0
          %v2466 = vadd.f32 0.0, %v2465
          %v2467 = vpop.f32.mrf.mxu0
          %v2468 = vadd.f32 0.0, %v2467
          %2469 = vmatmul.bf16.gmra.mxu0 %v2436
          %v2470 = vpop.f32.mrf.mxu0
          %v2471 = vadd.f32 0.0, %v2470
          %v2472 = vpop.f32.mrf.mxu0
          %v2473 = vadd.f32 0.0, %v2472
          %2474 = vmatmul.bf16.gmra.mxu0 %v2439
          %v2475 = vpop.f32.mrf.mxu0
          %v2476 = vadd.f32 0.0, %v2475
          %v2477 = vpop.f32.mrf.mxu0
          %v2478 = vadd.f32 0.0, %v2477
          %2479 = vmatmul.bf16.gmra.mxu0 %v2442
          %v2480 = vpop.f32.mrf.mxu0
          %v2481 = vadd.f32 0.0, %v2480
          %v2482 = vpop.f32.mrf.mxu0
          %v2483 = vadd.f32 0.0, %v2482
          %2484 = vmatmul.bf16.gmra.mxu0 %v2445
          %v2485 = vpop.f32.mrf.mxu0
          %v2486 = vadd.f32 0.0, %v2485
          %v2487 = vpop.f32.mrf.mxu0
          %v2488 = vadd.f32 0.0, %v2487
          %2489 = vmatmul.bf16.gmra.mxu0 %v2448
          %v2490 = vpop.f32.mrf.mxu0
          %v2491 = vadd.f32 0.0, %v2490
          %v2492 = vpop.f32.mrf.mxu0
          %v2493 = vadd.f32 0.0, %v2492
          %2494 = vmatmul.bf16.gmra.mxu0 %v2451
          %v2495 = vpop.f32.mrf.mxu0
          %v2496 = vadd.f32 0.0, %v2495
          %v2497 = vpop.f32.mrf.mxu0
          %v2498 = vadd.f32 0.0, %v2497
          %2499 = vmatmul.bf16.gmra.mxu0 %v2454
          %v2500 = vpop.f32.mrf.mxu0
          %v2501 = vadd.f32 0.0, %v2500
          %v2502 = vpop.f32.mrf.mxu0
          %v2503 = vadd.f32 0.0, %v2502
          %2504 = vdwg.mxu0
          %v2505 = vadd.f32 %v2374, %v2466
          %v2506 = vadd.f32 %v2375, %v2468
          %v2507 = vadd.f32 %v2376, %v2471
          %v2508 = vadd.f32 %v2377, %v2473
          %v2509 = vadd.f32 %v2378, %v2476
          %v2510 = vadd.f32 %v2379, %v2478
          %v2511 = vadd.f32 %v2380, %v2481
          %v2512 = vadd.f32 %v2381, %v2483
          %v2513 = vadd.f32 %v2382, %v2486
          %v2514 = vadd.f32 %v2383, %v2488
          %v2515 = vadd.f32 %v2384, %v2491
          %v2516 = vadd.f32 %v2385, %v2493
          %v2517 = vadd.f32 %v2386, %v2496
          %v2518 = vadd.f32 %v2387, %v2498
          %v2519 = vadd.f32 %v2388, %v2501
          %v2520 = vadd.f32 %v2389, %v2503
          %v2521 = vld [vmem:[%s2390 + $0x1] sm:$0xff]
          %v2522 = vld [vmem:[%s2390 + $0x11] sm:$0xff]
          %v2523 = vld [vmem:[%s2390 + $0x21] sm:$0xff]
          %v2524 = vld [vmem:[%s2390 + $0x31] sm:$0xff]
          %v2525 = vld [vmem:[%s2390 + $0x41] sm:$0xff]
          %v2526 = vld [vmem:[%s2390 + $0x51] sm:$0xff]
          %v2527 = vld [vmem:[%s2390 + $0x61] sm:$0xff]
          %v2528 = vld [vmem:[%s2390 + $0x71] sm:$0xff]
          %v2529 = vld [vmem:[%s2390 + $0xa1] sm:$0xff]
          %v2530 = vld [vmem:[%s2390 + $0xb1] sm:$0xff]
          %v2531 = vld [vmem:[%s2390 + $0xc1] sm:$0xff]
          %v2532 = vld [vmem:[%s2390 + $0xd1] sm:$0xff]
          %v2533 = vld [vmem:[%s2390 + $0xe1] sm:$0xff]
          %v2534 = vld [vmem:[%s2390 + $0xf1] sm:$0xff]
          %v2535 = vld [vmem:[%s2390 + $0x101] sm:$0xff]
          %v2536 = vld [vmem:[%s2390 + $0x111] sm:$0xff]
          %v2537 = vpack.c.bf16 %v2522, %v2521
          %v2538 = vpack.c.bf16 %v2524, %v2523
          %v2539 = vpack.c.bf16 %v2526, %v2525
          %v2540 = vpack.c.bf16 %v2528, %v2527
          %v2541 = vpack.c.bf16 %v2530, %v2529
          %v2542 = vpack.c.bf16 %v2532, %v2531
          %v2543 = vpack.c.bf16 %v2534, %v2533
          %v2544 = vpack.c.bf16 %v2536, %v2535
          %s2545 = scalar_lea.vmem %s3, 112
          %v2546 = vld [vmem:[%s2545] sm:$0xf]
          %v2547 = vld [vmem:[%s2545 + $0x4] sm:$0xf]
          %v2548 = vld [vmem:[%s2545 + $0x8] sm:$0xf]
          %v2549 = vld [vmem:[%s2545 + $0xc] sm:$0xf]
          %v2554 = vunpack.c.l.b16 %v2546
          %v2555 = vunpack.c.l.b16 %v2547
          %v2556 = vunpack.c.l.b16 %v2548
          %v2557 = vunpack.c.l.b16 %v2549
          %v2558 = vpack.c.b16 %v2555, %v2554
          %v2559 = vpack.c.b16 %v2557, %v2556
          %v2563 = vsel %vm1584, %v2537, 0
          %v2566 = vsel %vm1584, %v2538, 0
          %v2569 = vsel %vm1584, %v2539, 0
          %v2572 = vsel %vm1584, %v2540, 0
          %v2575 = vsel %vm1584, %v2541, 0
          %v2578 = vsel %vm1584, %v2542, 0
          %v2581 = vsel %vm1584, %v2543, 0
          %v2584 = vsel %vm1584, %v2544, 0
          %2586 = vmatpush.bf16.msra.mxu0 0
          %2587 = vmatpush.bf16.msra.mxu0 0
          %2588 = vmatpush.bf16.msra.mxu0 0
          %2589 = vmatpush.bf16.msra.mxu0 0
          %2590 = vmatpush.bf16.msra.mxu0 0
          %2591 = vmatpush.bf16.msra.mxu0 0
          %2592 = vmatpush.bf16.msra.mxu0 %v2559
          %2593 = vmatpush.bf16.msra.mxu0 %v2558
          %2594 = vmatmul.bf16.gmra.mxu0 %v2563
          %v2595 = vpop.f32.mrf.mxu0
          %v2596 = vadd.f32 0.0, %v2595
          %v2597 = vpop.f32.mrf.mxu0
          %v2598 = vadd.f32 0.0, %v2597
          %2599 = vmatmul.bf16.gmra.mxu0 %v2566
          %v2600 = vpop.f32.mrf.mxu0
          %v2601 = vadd.f32 0.0, %v2600
          %v2602 = vpop.f32.mrf.mxu0
          %v2603 = vadd.f32 0.0, %v2602
          %2604 = vmatmul.bf16.gmra.mxu0 %v2569
          %v2605 = vpop.f32.mrf.mxu0
          %v2606 = vadd.f32 0.0, %v2605
          %v2607 = vpop.f32.mrf.mxu0
          %v2608 = vadd.f32 0.0, %v2607
          %2609 = vmatmul.bf16.gmra.mxu0 %v2572
          %v2610 = vpop.f32.mrf.mxu0
          %v2611 = vadd.f32 0.0, %v2610
          %v2612 = vpop.f32.mrf.mxu0
          %v2613 = vadd.f32 0.0, %v2612
          %2614 = vmatmul.bf16.gmra.mxu0 %v2575
          %v2615 = vpop.f32.mrf.mxu0
          %v2616 = vadd.f32 0.0, %v2615
          %v2617 = vpop.f32.mrf.mxu0
          %v2618 = vadd.f32 0.0, %v2617
          %2619 = vmatmul.bf16.gmra.mxu0 %v2578
          %v2620 = vpop.f32.mrf.mxu0
          %v2621 = vadd.f32 0.0, %v2620
          %v2622 = vpop.f32.mrf.mxu0
          %v2623 = vadd.f32 0.0, %v2622
          %2624 = vmatmul.bf16.gmra.mxu0 %v2581
          %v2625 = vpop.f32.mrf.mxu0
          %v2626 = vadd.f32 0.0, %v2625
          %v2627 = vpop.f32.mrf.mxu0
          %v2628 = vadd.f32 0.0, %v2627
          %2629 = vmatmul.bf16.gmra.mxu0 %v2584
          %v2630 = vpop.f32.mrf.mxu0
          %v2631 = vadd.f32 0.0, %v2630
          %v2632 = vpop.f32.mrf.mxu0
          %v2633 = vadd.f32 0.0, %v2632
          %2634 = vdwg.mxu0
          %v2635 = vadd.f32 %v2505, %v2596
          %v2636 = vadd.f32 %v2506, %v2598
          %v2637 = vadd.f32 %v2507, %v2601
          %v2638 = vadd.f32 %v2508, %v2603
          %v2639 = vadd.f32 %v2509, %v2606
          %v2640 = vadd.f32 %v2510, %v2608
          %v2641 = vadd.f32 %v2511, %v2611
          %v2642 = vadd.f32 %v2512, %v2613
          %v2643 = vadd.f32 %v2513, %v2616
          %v2644 = vadd.f32 %v2514, %v2618
          %v2645 = vadd.f32 %v2515, %v2621
          %v2646 = vadd.f32 %v2516, %v2623
          %v2647 = vadd.f32 %v2517, %v2626
          %v2648 = vadd.f32 %v2518, %v2628
          %v2649 = vadd.f32 %v2519, %v2631
          %v2650 = vadd.f32 %v2520, %v2633
          %v2651 = vld [vmem:[%s2390 + $0x2] sm:$0xff]
          %v2652 = vld [vmem:[%s2390 + $0x12] sm:$0xff]
          %v2653 = vld [vmem:[%s2390 + $0x22] sm:$0xff]
          %v2654 = vld [vmem:[%s2390 + $0x32] sm:$0xff]
          %v2655 = vld [vmem:[%s2390 + $0x42] sm:$0xff]
          %v2656 = vld [vmem:[%s2390 + $0x52] sm:$0xff]
          %v2657 = vld [vmem:[%s2390 + $0x62] sm:$0xff]
          %v2658 = vld [vmem:[%s2390 + $0x72] sm:$0xff]
          %v2659 = vld [vmem:[%s2390 + $0xa2] sm:$0xff]
          %v2660 = vld [vmem:[%s2390 + $0xb2] sm:$0xff]
          %v2661 = vld [vmem:[%s2390 + $0xc2] sm:$0xff]
          %v2662 = vld [vmem:[%s2390 + $0xd2] sm:$0xff]
          %v2663 = vld [vmem:[%s2390 + $0xe2] sm:$0xff]
          %v2664 = vld [vmem:[%s2390 + $0xf2] sm:$0xff]
          %v2665 = vld [vmem:[%s2390 + $0x102] sm:$0xff]
          %v2666 = vld [vmem:[%s2390 + $0x112] sm:$0xff]
          %v2667 = vpack.c.bf16 %v2652, %v2651
          %v2668 = vpack.c.bf16 %v2654, %v2653
          %v2669 = vpack.c.bf16 %v2656, %v2655
          %v2670 = vpack.c.bf16 %v2658, %v2657
          %v2671 = vpack.c.bf16 %v2660, %v2659
          %v2672 = vpack.c.bf16 %v2662, %v2661
          %v2673 = vpack.c.bf16 %v2664, %v2663
          %v2674 = vpack.c.bf16 %v2666, %v2665
          %s2675 = scalar_lea.vmem %s3, 128
          %v2676 = vld [vmem:[%s2675] sm:$0xf]
          %v2677 = vld [vmem:[%s2675 + $0x4] sm:$0xf]
          %v2678 = vld [vmem:[%s2675 + $0x8] sm:$0xf]
          %v2679 = vld [vmem:[%s2675 + $0xc] sm:$0xf]
          %v2684 = vunpack.c.l.b16 %v2676
          %v2685 = vunpack.c.l.b16 %v2677
          %v2686 = vunpack.c.l.b16 %v2678
          %v2687 = vunpack.c.l.b16 %v2679
          %v2688 = vpack.c.b16 %v2685, %v2684
          %v2689 = vpack.c.b16 %v2687, %v2686
          %v2693 = vsel %vm1584, %v2667, 0
          %v2696 = vsel %vm1584, %v2668, 0
          %v2699 = vsel %vm1584, %v2669, 0
          %v2702 = vsel %vm1584, %v2670, 0
          %v2705 = vsel %vm1584, %v2671, 0
          %v2708 = vsel %vm1584, %v2672, 0
          %v2711 = vsel %vm1584, %v2673, 0
          %v2714 = vsel %vm1584, %v2674, 0
          %2716 = vmatpush.bf16.msra.mxu0 0
          %2717 = vmatpush.bf16.msra.mxu0 0
          %2718 = vmatpush.bf16.msra.mxu0 0
          %2719 = vmatpush.bf16.msra.mxu0 0
          %2720 = vmatpush.bf16.msra.mxu0 0
          %2721 = vmatpush.bf16.msra.mxu0 0
          %2722 = vmatpush.bf16.msra.mxu0 %v2689
          %2723 = vmatpush.bf16.msra.mxu0 %v2688
          %2724 = vmatmul.bf16.gmra.mxu0 %v2693
          %v2725 = vpop.f32.mrf.mxu0
          %v2726 = vadd.f32 0.0, %v2725
          %v2727 = vpop.f32.mrf.mxu0
          %v2728 = vadd.f32 0.0, %v2727
          %2729 = vmatmul.bf16.gmra.mxu0 %v2696
          %v2730 = vpop.f32.mrf.mxu0
          %v2731 = vadd.f32 0.0, %v2730
          %v2732 = vpop.f32.mrf.mxu0
          %v2733 = vadd.f32 0.0, %v2732
          %2734 = vmatmul.bf16.gmra.mxu0 %v2699
          %v2735 = vpop.f32.mrf.mxu0
          %v2736 = vadd.f32 0.0, %v2735
          %v2737 = vpop.f32.mrf.mxu0
          %v2738 = vadd.f32 0.0, %v2737
          %2739 = vmatmul.bf16.gmra.mxu0 %v2702
          %v2740 = vpop.f32.mrf.mxu0
          %v2741 = vadd.f32 0.0, %v2740
          %v2742 = vpop.f32.mrf.mxu0
          %v2743 = vadd.f32 0.0, %v2742
          %2744 = vmatmul.bf16.gmra.mxu0 %v2705
          %v2745 = vpop.f32.mrf.mxu0
          %v2746 = vadd.f32 0.0, %v2745
          %v2747 = vpop.f32.mrf.mxu0
          %v2748 = vadd.f32 0.0, %v2747
          %2749 = vmatmul.bf16.gmra.mxu0 %v2708
          %v2750 = vpop.f32.mrf.mxu0
          %v2751 = vadd.f32 0.0, %v2750
          %v2752 = vpop.f32.mrf.mxu0
          %v2753 = vadd.f32 0.0, %v2752
          %2754 = vmatmul.bf16.gmra.mxu0 %v2711
          %v2755 = vpop.f32.mrf.mxu0
          %v2756 = vadd.f32 0.0, %v2755
          %v2757 = vpop.f32.mrf.mxu0
          %v2758 = vadd.f32 0.0, %v2757
          %2759 = vmatmul.bf16.gmra.mxu0 %v2714
          %v2760 = vpop.f32.mrf.mxu0
          %v2761 = vadd.f32 0.0, %v2760
          %v2762 = vpop.f32.mrf.mxu0
          %v2763 = vadd.f32 0.0, %v2762
          %2764 = vdwg.mxu0
          %v2765 = vadd.f32 %v2635, %v2726
          %v2766 = vadd.f32 %v2636, %v2728
          %v2767 = vadd.f32 %v2637, %v2731
          %v2768 = vadd.f32 %v2638, %v2733
          %v2769 = vadd.f32 %v2639, %v2736
          %v2770 = vadd.f32 %v2640, %v2738
          %v2771 = vadd.f32 %v2641, %v2741
          %v2772 = vadd.f32 %v2642, %v2743
          %v2773 = vadd.f32 %v2643, %v2746
          %v2774 = vadd.f32 %v2644, %v2748
          %v2775 = vadd.f32 %v2645, %v2751
          %v2776 = vadd.f32 %v2646, %v2753
          %v2777 = vadd.f32 %v2647, %v2756
          %v2778 = vadd.f32 %v2648, %v2758
          %v2779 = vadd.f32 %v2649, %v2761
          %v2780 = vadd.f32 %v2650, %v2763
          %v2781 = vld [vmem:[%s4] sm:$0x1]
          %v2783 = vperm.slane %v2781, 0
          %v2785 = vadd.f32 %v2765, %v2783
          %v2786 = vadd.f32 %v2766, %v2783
          %v2787 = vadd.f32 %v2767, %v2783
          %v2788 = vadd.f32 %v2768, %v2783
          %v2789 = vadd.f32 %v2769, %v2783
          %v2790 = vadd.f32 %v2770, %v2783
          %v2791 = vadd.f32 %v2771, %v2783
          %v2792 = vadd.f32 %v2772, %v2783
          %v2793 = vadd.f32 %v2773, %v2783
          %v2794 = vadd.f32 %v2774, %v2783
          %v2795 = vadd.f32 %v2775, %v2783
          %v2796 = vadd.f32 %v2776, %v2783
          %v2797 = vadd.f32 %v2777, %v2783
          %v2798 = vadd.f32 %v2778, %v2783
          %v2799 = vadd.f32 %v2779, %v2783
          %v2800 = vadd.f32 %v2780, %v2783
          %v2801 = vmax.f32 %v2785, 0.0
          %v2802 = vmax.f32 %v2786, 0.0
          %v2803 = vmax.f32 %v2787, 0.0
          %v2804 = vmax.f32 %v2788, 0.0
          %v2805 = vmax.f32 %v2789, 0.0
          %v2806 = vmax.f32 %v2790, 0.0
          %v2807 = vmax.f32 %v2791, 0.0
          %v2808 = vmax.f32 %v2792, 0.0
          %v2809 = vmax.f32 %v2793, 0.0
          %v2810 = vmax.f32 %v2794, 0.0
          %v2811 = vmax.f32 %v2795, 0.0
          %v2812 = vmax.f32 %v2796, 0.0
          %v2813 = vmax.f32 %v2797, 0.0
          %v2814 = vmax.f32 %v2798, 0.0
          %v2815 = vmax.f32 %v2799, 0.0
          %v2816 = vmax.f32 %v2800, 0.0
          %v2817 = vpack.c.bf16 %v2801, %v2801
          %v2818 = vpack.c.bf16 %v2809, %v2809
          %v2821 = vrot.slane %v2817, 3
          %v2822 = vrot.slane %v2818, 3
          %vm2823 = vcmask 1040384
          %v2826 = vsel %vm2823, %v2817, %v2821
          %v2829 = vsel %vm2823, %v2818, %v2822
          %2830 = vst [vmem:[#allocation1] ss:$4 sm:$0xff] %v2826
          %v2831 = vld [vmem:[#allocation1] sm:$0xff]
          %s2833 = scalar_lea.vmem [#allocation1], 32
          %2834 = vst [vmem:[%s2833] ss:$4 sm:$0xff] %v2829
          %v2835 = vld [vmem:[#allocation1 + $0x20] sm:$0xff]
          %v2837 = vunpack.c.l.b16 %v2831
          %v2838 = vunpack.c.l.b16 %v2835
          %v2839 = vrot.slane %v2838, 7
          %vm2840 = vcmask 1041409
          %v2841 = vsel %vm2840, %v2839, %v2837
          %v2842 = vpack.c.b16 %v2841, %v2841
          %v2843 = vrot.slane %v2842, 3
          %v2846 = vsel %vm2823, %v2842, %v2843
          %vm2848 = vcmask 516096
          %2849 = vst.msk [vmem:[#allocation3] sm:$0x1] %vm2848, %v2846
          %2850 = vst [vmem:[#allocation1] ss:$4 sm:$0xff] %v2826
          %v2851 = vld [vmem:[#allocation1] sm:$0xff]
          %s2853 = scalar_lea.vmem [#allocation1], 32
          %2854 = vst [vmem:[%s2853] ss:$4 sm:$0xff] %v2829
          %v2855 = vld [vmem:[#allocation1 + $0x20] sm:$0xff]
          %v2857 = vunpack.c.l.b16 %v2851
          %v2858 = vunpack.c.l.b16 %v2855
          %v2859 = vrot.slane %v2857, 1
          %v2860 = vsel %vm2840, %v2858, %v2859
          %v2861 = vpack.c.b16 %v2860, %v2860
          %v2862 = vrot.slane %v2861, 3
          %v2865 = vsel %vm2823, %v2861, %v2862
          %2867 = vrot.lane.b32.xlu0 %v2865, 64
          %v2868 = vpop.permute.xlu0 %2867
          %vm2870 = vcmask 1040896
          %2871 = vst.msk [vmem:[#allocation3] sm:$0x1] %vm2870, %v2868
          %2872 = vst [vmem:[#allocation1] sm:$0xff] %v2817
          %s2873 = scalar_lea.vmem [#allocation1], 1
          %v2874 = vld [vmem:[%s2873] ss:$4 sm:$0xff]
          %2875 = vst [vmem:[#allocation1 + $0x20] sm:$0xff] %v2818
          %s2876 = scalar_lea.vmem [#allocation1], 33
          %v2877 = vld [vmem:[%s2876] ss:$4 sm:$0xff]
          %2878 = vst [vmem:[#allocation1] ss:$4 sm:$0xff] %v2874
          %v2879 = vld [vmem:[#allocation1] sm:$0xff]
          %s2881 = scalar_lea.vmem [#allocation1], 32
          %2882 = vst [vmem:[%s2881] ss:$4 sm:$0xff] %v2877
          %v2883 = vld [vmem:[#allocation1 + $0x20] sm:$0xff]
          %v2885 = vunpack.c.l.b16 %v2879
          %v2886 = vunpack.c.l.b16 %v2883
          %v2887 = vrot.slane %v2886, 7
          %v2888 = vsel %vm2840, %v2887, %v2885
          %v2889 = vpack.c.b16 %v2888, %v2888
          %v2890 = vrot.slane %v2889, 3
          %v2893 = vsel %vm2823, %v2889, %v2890
          %2895 = vst.msk [vmem:[#allocation3 + $0x1] sm:$0x1] %vm2848, %v2893
          %2896 = vst [vmem:[#allocation1] sm:$0xff] %v2817
          %s2897 = scalar_lea.vmem [#allocation1], 1
          %v2898 = vld [vmem:[%s2897] ss:$4 sm:$0xff]
          %2899 = vst [vmem:[#allocation1 + $0x20] sm:$0xff] %v2818
          %s2900 = scalar_lea.vmem [#allocation1], 33
          %v2901 = vld [vmem:[%s2900] ss:$4 sm:$0xff]
          %2902 = vst [vmem:[#allocation1] ss:$4 sm:$0xff] %v2898
          %v2903 = vld [vmem:[#allocation1] sm:$0xff]
          %s2905 = scalar_lea.vmem [#allocation1], 32
          %2906 = vst [vmem:[%s2905] ss:$4 sm:$0xff] %v2901
          %v2907 = vld [vmem:[#allocation1 + $0x20] sm:$0xff]
          %v2909 = vunpack.c.l.b16 %v2903
          %v2910 = vunpack.c.l.b16 %v2907
          %v2911 = vrot.slane %v2909, 1
          %v2912 = vsel %vm2840, %v2910, %v2911
          %v2913 = vpack.c.b16 %v2912, %v2912
          %v2914 = vrot.slane %v2913, 3
          %v2917 = vsel %vm2823, %v2913, %v2914
          %2919 = vrot.lane.b32.xlu0 %v2917, 64
          %v2920 = vpop.permute.xlu0 %2919
          %2922 = vst.msk [vmem:[#allocation3 + $0x1] sm:$0x1] %vm2870, %v2920
          %2923 = vst [vmem:[#allocation1] sm:$0xff] %v2817
          %s2924 = scalar_lea.vmem [#allocation1], 2
          %v2925 = vld [vmem:[%s2924] ss:$4 sm:$0xff]
          %2926 = vst [vmem:[#allocation1 + $0x20] sm:$0xff] %v2818
          %s2927 = scalar_lea.vmem [#allocation1], 34
          %v2928 = vld [vmem:[%s2927] ss:$4 sm:$0xff]
          %2929 = vst [vmem:[#allocation1] ss:$4 sm:$0xff] %v2925
          %v2930 = vld [vmem:[#allocation1] sm:$0xff]
          %s2932 = scalar_lea.vmem [#allocation1], 32
          %2933 = vst [vmem:[%s2932] ss:$4 sm:$0xff] %v2928
          %v2934 = vld [vmem:[#allocation1 + $0x20] sm:$0xff]
          %v2936 = vunpack.c.l.b16 %v2930
          %v2937 = vunpack.c.l.b16 %v2934
          %v2938 = vrot.slane %v2937, 7
          %v2939 = vsel %vm2840, %v2938, %v2936
          %v2940 = vpack.c.b16 %v2939, %v2939
          %v2941 = vrot.slane %v2940, 3
          %v2944 = vsel %vm2823, %v2940, %v2941
          %2946 = vst.msk [vmem:[#allocation3 + $0x2] sm:$0x1] %vm2848, %v2944
          %2947 = vst [vmem:[#allocation1] sm:$0xff] %v2817
          %s2948 = scalar_lea.vmem [#allocation1], 2
          %v2949 = vld [vmem:[%s2948] ss:$4 sm:$0xff]
          %2950 = vst [vmem:[#allocation1 + $0x20] sm:$0xff] %v2818
          %s2951 = scalar_lea.vmem [#allocation1], 34
          %v2952 = vld [vmem:[%s2951] ss:$4 sm:$0xff]
          %2953 = vst [vmem:[#allocation1] ss:$4 sm:$0xff] %v2949
          %v2954 = vld [vmem:[#allocation1] sm:$0xff]
          %s2956 = scalar_lea.vmem [#allocation1], 32
          %2957 = vst [vmem:[%s2956] ss:$4 sm:$0xff] %v2952
          %v2958 = vld [vmem:[#allocation1 + $0x20] sm:$0xff]
          %v2960 = vunpack.c.l.b16 %v2954
          %v2961 = vunpack.c.l.b16 %v2958
          %v2962 = vrot.slane %v2960, 1
          %v2963 = vsel %vm2840, %v2961, %v2962
          %v2964 = vpack.c.b16 %v2963, %v2963
          %v2965 = vrot.slane %v2964, 3
          %v2968 = vsel %vm2823, %v2964, %v2965
          %2970 = vrot.lane.b32.xlu0 %v2968, 64
          %v2971 = vpop.permute.xlu0 %2970
          %2973 = vst.msk [vmem:[#allocation3 + $0x2] sm:$0x1] %vm2870, %v2971
          %2974 = vst [vmem:[#allocation1] sm:$0xff] %v2817
          %s2975 = scalar_lea.vmem [#allocation1], 3
          %v2976 = vld [vmem:[%s2975] ss:$4 sm:$0xff]
          %2977 = vst [vmem:[#allocation1 + $0x20] sm:$0xff] %v2818
          %s2978 = scalar_lea.vmem [#allocation1], 35
          %v2979 = vld [vmem:[%s2978] ss:$4 sm:$0xff]
          %2980 = vst [vmem:[#allocation1] ss:$4 sm:$0xff] %v2976
          %v2981 = vld [vmem:[#allocation1] sm:$0xff]
          %s2983 = scalar_lea.vmem [#allocation1], 32
          %2984 = vst [vmem:[%s2983] ss:$4 sm:$0xff] %v2979
          %v2985 = vld [vmem:[#allocation1 + $0x20] sm:$0xff]
          %v2987 = vunpack.c.l.b16 %v2981
          %v2988 = vunpack.c.l.b16 %v2985
          %v2989 = vrot.slane %v2988, 7
          %v2990 = vsel %vm2840, %v2989, %v2987
          %v2991 = vpack.c.b16 %v2990, %v2990
          %v2992 = vrot.slane %v2991, 3
          %v2995 = vsel %vm2823, %v2991, %v2992
          %2997 = vst.msk [vmem:[#allocation3 + $0x3] sm:$0x1] %vm2848, %v2995
          %2998 = vst [vmem:[#allocation1] sm:$0xff] %v2817
          %s2999 = scalar_lea.vmem [#allocation1], 3
          %v3000 = vld [vmem:[%s2999] ss:$4 sm:$0xff]
          %3001 = vst [vmem:[#allocation1 + $0x20] sm:$0xff] %v2818
          %s3002 = scalar_lea.vmem [#allocation1], 35
          %v3003 = vld [vmem:[%s3002] ss:$4 sm:$0xff]
          %3004 = vst [vmem:[#allocation1] ss:$4 sm:$0xff] %v3000
          %v3005 = vld [vmem:[#allocation1] sm:$0xff]
          %s3007 = scalar_lea.vmem [#allocation1], 32
          %3008 = vst [vmem:[%s3007] ss:$4 sm:$0xff] %v3003
          %v3009 = vld [vmem:[#allocation1 + $0x20] sm:$0xff]
          %v3011 = vunpack.c.l.b16 %v3005
          %v3012 = vunpack.c.l.b16 %v3009
          %v3013 = vrot.slane %v3011, 1
          %v3014 = vsel %vm2840, %v3012, %v3013
          %v3015 = vpack.c.b16 %v3014, %v3014
          %v3016 = vrot.slane %v3015, 3
          %v3019 = vsel %vm2823, %v3015, %v3016
          %3021 = vrot.lane.b32.xlu0 %v3019, 64
          %v3022 = vpop.permute.xlu0 %3021
          %3024 = vst.msk [vmem:[#allocation3 + $0x3] sm:$0x1] %vm2870, %v3022
          %v3025 = vpack.c.bf16 %v2802, %v2802
          %v3026 = vpack.c.bf16 %v2810, %v2810
          %v3029 = vrot.slane %v3025, 3
          %v3030 = vrot.slane %v3026, 3
          %v3033 = vsel %vm2823, %v3025, %v3029
          %v3036 = vsel %vm2823, %v3026, %v3030
          %3037 = vst [vmem:[#allocation1] ss:$4 sm:$0xff] %v3033
          %v3038 = vld [vmem:[#allocation1] sm:$0xff]
          %s3040 = scalar_lea.vmem [#allocation1], 32
          %3041 = vst [vmem:[%s3040] ss:$4 sm:$0xff] %v3036
          %v3042 = vld [vmem:[#allocation1 + $0x20] sm:$0xff]
          %v3044 = vunpack.c.l.b16 %v3038
          %v3045 = vunpack.c.l.b16 %v3042
          %v3046 = vrot.slane %v3045, 7
          %v3047 = vsel %vm2840, %v3046, %v3044
          %v3048 = vpack.c.b16 %v3047, %v3047
          %v3049 = vrot.slane %v3048, 3
          %v3052 = vsel %vm2823, %v3048, %v3049
          %3054 = vst.msk [vmem:[#allocation3 + $0x4] sm:$0x1] %vm2848, %v3052
          %3055 = vst [vmem:[#allocation1] ss:$4 sm:$0xff] %v3033
          %v3056 = vld [vmem:[#allocation1] sm:$0xff]
          %s3058 = scalar_lea.vmem [#allocation1], 32
          %3059 = vst [vmem:[%s3058] ss:$4 sm:$0xff] %v3036
          %v3060 = vld [vmem:[#allocation1 + $0x20] sm:$0xff]
          %v3062 = vunpack.c.l.b16 %v3056
          %v3063 = vunpack.c.l.b16 %v3060
          %v3064 = vrot.slane %v3062, 1
          %v3065 = vsel %vm2840, %v3063, %v3064
          %v3066 = vpack.c.b16 %v3065, %v3065
          %v3067 = vrot.slane %v3066, 3
          %v3070 = vsel %vm2823, %v3066, %v3067
          %3072 = vrot.lane.b32.xlu0 %v3070, 64
          %v3073 = vpop.permute.xlu0 %3072
          %3075 = vst.msk [vmem:[#allocation3 + $0x4] sm:$0x1] %vm2870, %v3073
          %3076 = vst [vmem:[#allocation1] sm:$0xff] %v3025
          %s3077 = scalar_lea.vmem [#allocation1], 1
          %v3078 = vld [vmem:[%s3077] ss:$4 sm:$0xff]
          %3079 = vst [vmem:[#allocation1 + $0x20] sm:$0xff] %v3026
          %s3080 = scalar_lea.vmem [#allocation1], 33
          %v3081 = vld [vmem:[%s3080] ss:$4 sm:$0xff]
          %3082 = vst [vmem:[#allocation1] ss:$4 sm:$0xff] %v3078
          %v3083 = vld [vmem:[#allocation1] sm:$0xff]
          %s3085 = scalar_lea.vmem [#allocation1], 32
          %3086 = vst [vmem:[%s3085] ss:$4 sm:$0xff] %v3081
          %v3087 = vld [vmem:[#allocation1 + $0x20] sm:$0xff]
          %v3089 = vunpack.c.l.b16 %v3083
          %v3090 = vunpack.c.l.b16 %v3087
          %v3091 = vrot.slane %v3090, 7
          %v3092 = vsel %vm2840, %v3091, %v3089
          %v3093 = vpack.c.b16 %v3092, %v3092
          %v3094 = vrot.slane %v3093, 3
          %v3097 = vsel %vm2823, %v3093, %v3094
          %3099 = vst.msk [vmem:[#allocation3 + $0x5] sm:$0x1] %vm2848, %v3097
          %3100 = vst [vmem:[#allocation1] sm:$0xff] %v3025
          %s3101 = scalar_lea.vmem [#allocation1], 1
          %v3102 = vld [vmem:[%s3101] ss:$4 sm:$0xff]
          %3103 = vst [vmem:[#allocation1 + $0x20] sm:$0xff] %v3026
          %s3104 = scalar_lea.vmem [#allocation1], 33
          %v3105 = vld [vmem:[%s3104] ss:$4 sm:$0xff]
          %3106 = vst [vmem:[#allocation1] ss:$4 sm:$0xff] %v3102
          %v3107 = vld [vmem:[#allocation1] sm:$0xff]
          %s3109 = scalar_lea.vmem [#allocation1], 32
          %3110 = vst [vmem:[%s3109] ss:$4 sm:$0xff] %v3105
          %v3111 = vld [vmem:[#allocation1 + $0x20] sm:$0xff]
          %v3113 = vunpack.c.l.b16 %v3107
          %v3114 = vunpack.c.l.b16 %v3111
          %v3115 = vrot.slane %v3113, 1
          %v3116 = vsel %vm2840, %v3114, %v3115
          %v3117 = vpack.c.b16 %v3116, %v3116
          %v3118 = vrot.slane %v3117, 3
          %v3121 = vsel %vm2823, %v3117, %v3118
          %3123 = vrot.lane.b32.xlu0 %v3121, 64
          %v3124 = vpop.permute.xlu0 %3123
          %3126 = vst.msk [vmem:[#allocation3 + $0x5] sm:$0x1] %vm2870, %v3124
          %3127 = vst [vmem:[#allocation1] sm:$0xff] %v3025
          %s3128 = scalar_lea.vmem [#allocation1], 2
          %v3129 = vld [vmem:[%s3128] ss:$4 sm:$0xff]
          %3130 = vst [vmem:[#allocation1 + $0x20] sm:$0xff] %v3026
          %s3131 = scalar_lea.vmem [#allocation1], 34
          %v3132 = vld [vmem:[%s3131] ss:$4 sm:$0xff]
          %3133 = vst [vmem:[#allocation1] ss:$4 sm:$0xff] %v3129
          %v3134 = vld [vmem:[#allocation1] sm:$0xff]
          %s3136 = scalar_lea.vmem [#allocation1], 32
          %3137 = vst [vmem:[%s3136] ss:$4 sm:$0xff] %v3132
          %v3138 = vld [vmem:[#allocation1 + $0x20] sm:$0xff]
          %v3140 = vunpack.c.l.b16 %v3134
          %v3141 = vunpack.c.l.b16 %v3138
          %v3142 = vrot.slane %v3141, 7
          %v3143 = vsel %vm2840, %v3142, %v3140
          %v3144 = vpack.c.b16 %v3143, %v3143
          %v3145 = vrot.slane %v3144, 3
          %v3148 = vsel %vm2823, %v3144, %v3145
          %3150 = vst.msk [vmem:[#allocation3 + $0x6] sm:$0x1] %vm2848, %v3148
          %3151 = vst [vmem:[#allocation1] sm:$0xff] %v3025
          %s3152 = scalar_lea.vmem [#allocation1], 2
          %v3153 = vld [vmem:[%s3152] ss:$4 sm:$0xff]
          %3154 = vst [vmem:[#allocation1 + $0x20] sm:$0xff] %v3026
          %s3155 = scalar_lea.vmem [#allocation1], 34
          %v3156 = vld [vmem:[%s3155] ss:$4 sm:$0xff]
          %3157 = vst [vmem:[#allocation1] ss:$4 sm:$0xff] %v3153
          %v3158 = vld [vmem:[#allocation1] sm:$0xff]
          %s3160 = scalar_lea.vmem [#allocation1], 32
          %3161 = vst [vmem:[%s3160] ss:$4 sm:$0xff] %v3156
          %v3162 = vld [vmem:[#allocation1 + $0x20] sm:$0xff]
          %v3164 = vunpack.c.l.b16 %v3158
          %v3165 = vunpack.c.l.b16 %v3162
          %v3166 = vrot.slane %v3164, 1
          %v3167 = vsel %vm2840, %v3165, %v3166
          %v3168 = vpack.c.b16 %v3167, %v3167
          %v3169 = vrot.slane %v3168, 3
          %v3172 = vsel %vm2823, %v3168, %v3169
          %3174 = vrot.lane.b32.xlu0 %v3172, 64
          %v3175 = vpop.permute.xlu0 %3174
          %3177 = vst.msk [vmem:[#allocation3 + $0x6] sm:$0x1] %vm2870, %v3175
          %3178 = vst [vmem:[#allocation1] sm:$0xff] %v3025
          %s3179 = scalar_lea.vmem [#allocation1], 3
          %v3180 = vld [vmem:[%s3179] ss:$4 sm:$0xff]
          %3181 = vst [vmem:[#allocation1 + $0x20] sm:$0xff] %v3026
          %s3182 = scalar_lea.vmem [#allocation1], 35
          %v3183 = vld [vmem:[%s3182] ss:$4 sm:$0xff]
          %3184 = vst [vmem:[#allocation1] ss:$4 sm:$0xff] %v3180
          %v3185 = vld [vmem:[#allocation1] sm:$0xff]
          %s3187 = scalar_lea.vmem [#allocation1], 32
          %3188 = vst [vmem:[%s3187] ss:$4 sm:$0xff] %v3183
          %v3189 = vld [vmem:[#allocation1 + $0x20] sm:$0xff]
          %v3191 = vunpack.c.l.b16 %v3185
          %v3192 = vunpack.c.l.b16 %v3189
          %v3193 = vrot.slane %v3192, 7
          %v3194 = vsel %vm2840, %v3193, %v3191
          %v3195 = vpack.c.b16 %v3194, %v3194
          %v3196 = vrot.slane %v3195, 3
          %v3199 = vsel %vm2823, %v3195, %v3196
          %3201 = vst.msk [vmem:[#allocation3 + $0x7] sm:$0x1] %vm2848, %v3199
          %3202 = vst [vmem:[#allocation1] sm:$0xff] %v3025
          %s3203 = scalar_lea.vmem [#allocation1], 3
          %v3204 = vld [vmem:[%s3203] ss:$4 sm:$0xff]
          %3205 = vst [vmem:[#allocation1 + $0x20] sm:$0xff] %v3026
          %s3206 = scalar_lea.vmem [#allocation1], 35
          %v3207 = vld [vmem:[%s3206] ss:$4 sm:$0xff]
          %3208 = vst [vmem:[#allocation1] ss:$4 sm:$0xff] %v3204
          %v3209 = vld [vmem:[#allocation1] sm:$0xff]
          %s3211 = scalar_lea.vmem [#allocation1], 32
          %3212 = vst [vmem:[%s3211] ss:$4 sm:$0xff] %v3207
          %v3213 = vld [vmem:[#allocation1 + $0x20] sm:$0xff]
          %v3215 = vunpack.c.l.b16 %v3209
          %v3216 = vunpack.c.l.b16 %v3213
          %v3217 = vrot.slane %v3215, 1
          %v3218 = vsel %vm2840, %v3216, %v3217
          %v3219 = vpack.c.b16 %v3218, %v3218
          %v3220 = vrot.slane %v3219, 3
          %v3223 = vsel %vm2823, %v3219, %v3220
          %3225 = vrot.lane.b32.xlu0 %v3223, 64
          %v3226 = vpop.permute.xlu0 %3225
          %3228 = vst.msk [vmem:[#allocation3 + $0x7] sm:$0x1] %vm2870, %v3226
          %v3229 = vpack.c.bf16 %v2803, %v2803
          %v3230 = vpack.c.bf16 %v2811, %v2811
          %v3233 = vrot.slane %v3229, 3
          %v3234 = vrot.slane %v3230, 3
          %v3237 = vsel %vm2823, %v3229, %v3233
          %v3240 = vsel %vm2823, %v3230, %v3234
          %3241 = vst [vmem:[#allocation1] ss:$4 sm:$0xff] %v3237
          %v3242 = vld [vmem:[#allocation1] sm:$0xff]
          %s3244 = scalar_lea.vmem [#allocation1], 32
          %3245 = vst [vmem:[%s3244] ss:$4 sm:$0xff] %v3240
          %v3246 = vld [vmem:[#allocation1 + $0x20] sm:$0xff]
          %v3248 = vunpack.c.l.b16 %v3242
          %v3249 = vunpack.c.l.b16 %v3246
          %v3250 = vrot.slane %v3249, 7
          %v3251 = vsel %vm2840, %v3250, %v3248
          %v3252 = vpack.c.b16 %v3251, %v3251
          %v3253 = vrot.slane %v3252, 3
          %v3256 = vsel %vm2823, %v3252, %v3253
          %3258 = vst.msk [vmem:[#allocation3 + $0x8] sm:$0x1] %vm2848, %v3256
          %3259 = vst [vmem:[#allocation1] ss:$4 sm:$0xff] %v3237
          %v3260 = vld [vmem:[#allocation1] sm:$0xff]
          %s3262 = scalar_lea.vmem [#allocation1], 32
          %3263 = vst [vmem:[%s3262] ss:$4 sm:$0xff] %v3240
          %v3264 = vld [vmem:[#allocation1 + $0x20] sm:$0xff]
          %v3266 = vunpack.c.l.b16 %v3260
          %v3267 = vunpack.c.l.b16 %v3264
          %v3268 = vrot.slane %v3266, 1
          %v3269 = vsel %vm2840, %v3267, %v3268
          %v3270 = vpack.c.b16 %v3269, %v3269
          %v3271 = vrot.slane %v3270, 3
          %v3274 = vsel %vm2823, %v3270, %v3271
          %3276 = vrot.lane.b32.xlu0 %v3274, 64
          %v3277 = vpop.permute.xlu0 %3276
          %3279 = vst.msk [vmem:[#allocation3 + $0x8] sm:$0x1] %vm2870, %v3277
          %3280 = vst [vmem:[#allocation1] sm:$0xff] %v3229
          %s3281 = scalar_lea.vmem [#allocation1], 1
          %v3282 = vld [vmem:[%s3281] ss:$4 sm:$0xff]
          %3283 = vst [vmem:[#allocation1 + $0x20] sm:$0xff] %v3230
          %s3284 = scalar_lea.vmem [#allocation1], 33
          %v3285 = vld [vmem:[%s3284] ss:$4 sm:$0xff]
          %3286 = vst [vmem:[#allocation1] ss:$4 sm:$0xff] %v3282
          %v3287 = vld [vmem:[#allocation1] sm:$0xff]
          %s3289 = scalar_lea.vmem [#allocation1], 32
          %3290 = vst [vmem:[%s3289] ss:$4 sm:$0xff] %v3285
          %v3291 = vld [vmem:[#allocation1 + $0x20] sm:$0xff]
          %v3293 = vunpack.c.l.b16 %v3287
          %v3294 = vunpack.c.l.b16 %v3291
          %v3295 = vrot.slane %v3294, 7
          %v3296 = vsel %vm2840, %v3295, %v3293
          %v3297 = vpack.c.b16 %v3296, %v3296
          %v3298 = vrot.slane %v3297, 3
          %v3301 = vsel %vm2823, %v3297, %v3298
          %3303 = vst.msk [vmem:[#allocation3 + $0x9] sm:$0x1] %vm2848, %v3301
          %3304 = vst [vmem:[#allocation1] sm:$0xff] %v3229
          %s3305 = scalar_lea.vmem [#allocation1], 1
          %v3306 = vld [vmem:[%s3305] ss:$4 sm:$0xff]
          %3307 = vst [vmem:[#allocation1 + $0x20] sm:$0xff] %v3230
          %s3308 = scalar_lea.vmem [#allocation1], 33
          %v3309 = vld [vmem:[%s3308] ss:$4 sm:$0xff]
          %3310 = vst [vmem:[#allocation1] ss:$4 sm:$0xff] %v3306
          %v3311 = vld [vmem:[#allocation1] sm:$0xff]
          %s3313 = scalar_lea.vmem [#allocation1], 32
          %3314 = vst [vmem:[%s3313] ss:$4 sm:$0xff] %v3309
          %v3315 = vld [vmem:[#allocation1 + $0x20] sm:$0xff]
          %v3317 = vunpack.c.l.b16 %v3311
          %v3318 = vunpack.c.l.b16 %v3315
          %v3319 = vrot.slane %v3317, 1
          %v3320 = vsel %vm2840, %v3318, %v3319
          %v3321 = vpack.c.b16 %v3320, %v3320
          %v3322 = vrot.slane %v3321, 3
          %v3325 = vsel %vm2823, %v3321, %v3322
          %3327 = vrot.lane.b32.xlu0 %v3325, 64
          %v3328 = vpop.permute.xlu0 %3327
          %3330 = vst.msk [vmem:[#allocation3 + $0x9] sm:$0x1] %vm2870, %v3328
          %3331 = vst [vmem:[#allocation1] sm:$0xff] %v3229
          %s3332 = scalar_lea.vmem [#allocation1], 2
          %v3333 = vld [vmem:[%s3332] ss:$4 sm:$0xff]
          %3334 = vst [vmem:[#allocation1 + $0x20] sm:$0xff] %v3230
          %s3335 = scalar_lea.vmem [#allocation1], 34
          %v3336 = vld [vmem:[%s3335] ss:$4 sm:$0xff]
          %3337 = vst [vmem:[#allocation1] ss:$4 sm:$0xff] %v3333
          %v3338 = vld [vmem:[#allocation1] sm:$0xff]
          %s3340 = scalar_lea.vmem [#allocation1], 32
          %3341 = vst [vmem:[%s3340] ss:$4 sm:$0xff] %v3336
          %v3342 = vld [vmem:[#allocation1 + $0x20] sm:$0xff]
          %v3344 = vunpack.c.l.b16 %v3338
          %v3345 = vunpack.c.l.b16 %v3342
          %v3346 = vrot.slane %v3345, 7
          %v3347 = vsel %vm2840, %v3346, %v3344
          %v3348 = vpack.c.b16 %v3347, %v3347
          %v3349 = vrot.slane %v3348, 3
          %v3352 = vsel %vm2823, %v3348, %v3349
          %3354 = vst.msk [vmem:[#allocation3 + $0xa] sm:$0x1] %vm2848, %v3352
          %3355 = vst [vmem:[#allocation1] sm:$0xff] %v3229
          %s3356 = scalar_lea.vmem [#allocation1], 2
          %v3357 = vld [vmem:[%s3356] ss:$4 sm:$0xff]
          %3358 = vst [vmem:[#allocation1 + $0x20] sm:$0xff] %v3230
          %s3359 = scalar_lea.vmem [#allocation1], 34
          %v3360 = vld [vmem:[%s3359] ss:$4 sm:$0xff]
          %3361 = vst [vmem:[#allocation1] ss:$4 sm:$0xff] %v3357
          %v3362 = vld [vmem:[#allocation1] sm:$0xff]
          %s3364 = scalar_lea.vmem [#allocation1], 32
          %3365 = vst [vmem:[%s3364] ss:$4 sm:$0xff] %v3360
          %v3366 = vld [vmem:[#allocation1 + $0x20] sm:$0xff]
          %v3368 = vunpack.c.l.b16 %v3362
          %v3369 = vunpack.c.l.b16 %v3366
          %v3370 = vrot.slane %v3368, 1
          %v3371 = vsel %vm2840, %v3369, %v3370
          %v3372 = vpack.c.b16 %v3371, %v3371
          %v3373 = vrot.slane %v3372, 3
          %v3376 = vsel %vm2823, %v3372, %v3373
          %3378 = vrot.lane.b32.xlu0 %v3376, 64
          %v3379 = vpop.permute.xlu0 %3378
          %3381 = vst.msk [vmem:[#allocation3 + $0xa] sm:$0x1] %vm2870, %v3379
          %3382 = vst [vmem:[#allocation1] sm:$0xff] %v3229
          %s3383 = scalar_lea.vmem [#allocation1], 3
          %v3384 = vld [vmem:[%s3383] ss:$4 sm:$0xff]
          %3385 = vst [vmem:[#allocation1 + $0x20] sm:$0xff] %v3230
          %s3386 = scalar_lea.vmem [#allocation1], 35
          %v3387 = vld [vmem:[%s3386] ss:$4 sm:$0xff]
          %3388 = vst [vmem:[#allocation1] ss:$4 sm:$0xff] %v3384
          %v3389 = vld [vmem:[#allocation1] sm:$0xff]
          %s3391 = scalar_lea.vmem [#allocation1], 32
          %3392 = vst [vmem:[%s3391] ss:$4 sm:$0xff] %v3387
          %v3393 = vld [vmem:[#allocation1 + $0x20] sm:$0xff]
          %v3395 = vunpack.c.l.b16 %v3389
          %v3396 = vunpack.c.l.b16 %v3393
          %v3397 = vrot.slane %v3396, 7
          %v3398 = vsel %vm2840, %v3397, %v3395
          %v3399 = vpack.c.b16 %v3398, %v3398
          %v3400 = vrot.slane %v3399, 3
          %v3403 = vsel %vm2823, %v3399, %v3400
          %3405 = vst.msk [vmem:[#allocation3 + $0xb] sm:$0x1] %vm2848, %v3403
          %3406 = vst [vmem:[#allocation1] sm:$0xff] %v3229
          %s3407 = scalar_lea.vmem [#allocation1], 3
          %v3408 = vld [vmem:[%s3407] ss:$4 sm:$0xff]
          %3409 = vst [vmem:[#allocation1 + $0x20] sm:$0xff] %v3230
          %s3410 = scalar_lea.vmem [#allocation1], 35
          %v3411 = vld [vmem:[%s3410] ss:$4 sm:$0xff]
          %3412 = vst [vmem:[#allocation1] ss:$4 sm:$0xff] %v3408
          %v3413 = vld [vmem:[#allocation1] sm:$0xff]
          %s3415 = scalar_lea.vmem [#allocation1], 32
          %3416 = vst [vmem:[%s3415] ss:$4 sm:$0xff] %v3411
          %v3417 = vld [vmem:[#allocation1 + $0x20] sm:$0xff]
          %v3419 = vunpack.c.l.b16 %v3413
          %v3420 = vunpack.c.l.b16 %v3417
          %v3421 = vrot.slane %v3419, 1
          %v3422 = vsel %vm2840, %v3420, %v3421
          %v3423 = vpack.c.b16 %v3422, %v3422
          %v3424 = vrot.slane %v3423, 3
          %v3427 = vsel %vm2823, %v3423, %v3424
          %3429 = vrot.lane.b32.xlu0 %v3427, 64
          %v3430 = vpop.permute.xlu0 %3429
          %3432 = vst.msk [vmem:[#allocation3 + $0xb] sm:$0x1] %vm2870, %v3430
          %v3433 = vpack.c.bf16 %v2804, %v2804
          %v3434 = vpack.c.bf16 %v2812, %v2812
          %v3437 = vrot.slane %v3433, 3
          %v3438 = vrot.slane %v3434, 3
          %v3441 = vsel %vm2823, %v3433, %v3437
          %v3444 = vsel %vm2823, %v3434, %v3438
          %3445 = vst [vmem:[#allocation1] ss:$4 sm:$0xff] %v3441
          %v3446 = vld [vmem:[#allocation1] sm:$0xff]
          %s3448 = scalar_lea.vmem [#allocation1], 32
          %3449 = vst [vmem:[%s3448] ss:$4 sm:$0xff] %v3444
          %v3450 = vld [vmem:[#allocation1 + $0x20] sm:$0xff]
          %v3452 = vunpack.c.l.b16 %v3446
          %v3453 = vunpack.c.l.b16 %v3450
          %v3454 = vrot.slane %v3453, 7
          %v3455 = vsel %vm2840, %v3454, %v3452
          %v3456 = vpack.c.b16 %v3455, %v3455
          %v3457 = vrot.slane %v3456, 3
          %v3460 = vsel %vm2823, %v3456, %v3457
          %3462 = vst.msk [vmem:[#allocation3 + $0xc] sm:$0x1] %vm2848, %v3460
          %3463 = vst [vmem:[#allocation1] ss:$4 sm:$0xff] %v3441
          %v3464 = vld [vmem:[#allocation1] sm:$0xff]
          %s3466 = scalar_lea.vmem [#allocation1], 32
          %3467 = vst [vmem:[%s3466] ss:$4 sm:$0xff] %v3444
          %v3468 = vld [vmem:[#allocation1 + $0x20] sm:$0xff]
          %v3470 = vunpack.c.l.b16 %v3464
          %v3471 = vunpack.c.l.b16 %v3468
          %v3472 = vrot.slane %v3470, 1
          %v3473 = vsel %vm2840, %v3471, %v3472
          %v3474 = vpack.c.b16 %v3473, %v3473
          %v3475 = vrot.slane %v3474, 3
          %v3478 = vsel %vm2823, %v3474, %v3475
          %3480 = vrot.lane.b32.xlu0 %v3478, 64
          %v3481 = vpop.permute.xlu0 %3480
          %3483 = vst.msk [vmem:[#allocation3 + $0xc] sm:$0x1] %vm2870, %v3481
          %3484 = vst [vmem:[#allocation1] sm:$0xff] %v3433
          %s3485 = scalar_lea.vmem [#allocation1], 1
          %v3486 = vld [vmem:[%s3485] ss:$4 sm:$0xff]
          %3487 = vst [vmem:[#allocation1 + $0x20] sm:$0xff] %v3434
          %s3488 = scalar_lea.vmem [#allocation1], 33
          %v3489 = vld [vmem:[%s3488] ss:$4 sm:$0xff]
          %3490 = vst [vmem:[#allocation1] ss:$4 sm:$0xff] %v3486
          %v3491 = vld [vmem:[#allocation1] sm:$0xff]
          %s3493 = scalar_lea.vmem [#allocation1], 32
          %3494 = vst [vmem:[%s3493] ss:$4 sm:$0xff] %v3489
          %v3495 = vld [vmem:[#allocation1 + $0x20] sm:$0xff]
          %v3497 = vunpack.c.l.b16 %v3491
          %v3498 = vunpack.c.l.b16 %v3495
          %v3499 = vrot.slane %v3498, 7
          %v3500 = vsel %vm2840, %v3499, %v3497
          %v3501 = vpack.c.b16 %v3500, %v3500
          %v3502 = vrot.slane %v3501, 3
          %v3505 = vsel %vm2823, %v3501, %v3502
          %3507 = vst.msk [vmem:[#allocation3 + $0xd] sm:$0x1] %vm2848, %v3505
          %3508 = vst [vmem:[#allocation1] sm:$0xff] %v3433
          %s3509 = scalar_lea.vmem [#allocation1], 1
          %v3510 = vld [vmem:[%s3509] ss:$4 sm:$0xff]
          %3511 = vst [vmem:[#allocation1 + $0x20] sm:$0xff] %v3434
          %s3512 = scalar_lea.vmem [#allocation1], 33
          %v3513 = vld [vmem:[%s3512] ss:$4 sm:$0xff]
          %3514 = vst [vmem:[#allocation1] ss:$4 sm:$0xff] %v3510
          %v3515 = vld [vmem:[#allocation1] sm:$0xff]
          %s3517 = scalar_lea.vmem [#allocation1], 32
          %3518 = vst [vmem:[%s3517] ss:$4 sm:$0xff] %v3513
          %v3519 = vld [vmem:[#allocation1 + $0x20] sm:$0xff]
          %v3521 = vunpack.c.l.b16 %v3515
          %v3522 = vunpack.c.l.b16 %v3519
          %v3523 = vrot.slane %v3521, 1
          %v3524 = vsel %vm2840, %v3522, %v3523
          %v3525 = vpack.c.b16 %v3524, %v3524
          %v3526 = vrot.slane %v3525, 3
          %v3529 = vsel %vm2823, %v3525, %v3526
          %3531 = vrot.lane.b32.xlu0 %v3529, 64
          %v3532 = vpop.permute.xlu0 %3531
          %3534 = vst.msk [vmem:[#allocation3 + $0xd] sm:$0x1] %vm2870, %v3532
          %3535 = vst [vmem:[#allocation1] sm:$0xff] %v3433
          %s3536 = scalar_lea.vmem [#allocation1], 2
          %v3537 = vld [vmem:[%s3536] ss:$4 sm:$0xff]
          %3538 = vst [vmem:[#allocation1 + $0x20] sm:$0xff] %v3434
          %s3539 = scalar_lea.vmem [#allocation1], 34
          %v3540 = vld [vmem:[%s3539] ss:$4 sm:$0xff]
          %3541 = vst [vmem:[#allocation1] ss:$4 sm:$0xff] %v3537
          %v3542 = vld [vmem:[#allocation1] sm:$0xff]
          %s3544 = scalar_lea.vmem [#allocation1], 32
          %3545 = vst [vmem:[%s3544] ss:$4 sm:$0xff] %v3540
          %v3546 = vld [vmem:[#allocation1 + $0x20] sm:$0xff]
          %v3548 = vunpack.c.l.b16 %v3542
          %v3549 = vunpack.c.l.b16 %v3546
          %v3550 = vrot.slane %v3549, 7
          %v3551 = vsel %vm2840, %v3550, %v3548
          %v3552 = vpack.c.b16 %v3551, %v3551
          %v3553 = vrot.slane %v3552, 3
          %v3556 = vsel %vm2823, %v3552, %v3553
          %3558 = vst.msk [vmem:[#allocation3 + $0xe] sm:$0x1] %vm2848, %v3556
          %3559 = vst [vmem:[#allocation1] sm:$0xff] %v3433
          %s3560 = scalar_lea.vmem [#allocation1], 2
          %v3561 = vld [vmem:[%s3560] ss:$4 sm:$0xff]
          %3562 = vst [vmem:[#allocation1 + $0x20] sm:$0xff] %v3434
          %s3563 = scalar_lea.vmem [#allocation1], 34
          %v3564 = vld [vmem:[%s3563] ss:$4 sm:$0xff]
          %3565 = vst [vmem:[#allocation1] ss:$4 sm:$0xff] %v3561
          %v3566 = vld [vmem:[#allocation1] sm:$0xff]
          %s3568 = scalar_lea.vmem [#allocation1], 32
          %3569 = vst [vmem:[%s3568] ss:$4 sm:$0xff] %v3564
          %v3570 = vld [vmem:[#allocation1 + $0x20] sm:$0xff]
          %v3572 = vunpack.c.l.b16 %v3566
          %v3573 = vunpack.c.l.b16 %v3570
          %v3574 = vrot.slane %v3572, 1
          %v3575 = vsel %vm2840, %v3573, %v3574
          %v3576 = vpack.c.b16 %v3575, %v3575
          %v3577 = vrot.slane %v3576, 3
          %v3580 = vsel %vm2823, %v3576, %v3577
          %3582 = vrot.lane.b32.xlu0 %v3580, 64
          %v3583 = vpop.permute.xlu0 %3582
          %3585 = vst.msk [vmem:[#allocation3 + $0xe] sm:$0x1] %vm2870, %v3583
          %3586 = vst [vmem:[#allocation1] sm:$0xff] %v3433
          %s3587 = scalar_lea.vmem [#allocation1], 3
          %v3588 = vld [vmem:[%s3587] ss:$4 sm:$0xff]
          %3589 = vst [vmem:[#allocation1 + $0x20] sm:$0xff] %v3434
          %s3590 = scalar_lea.vmem [#allocation1], 35
          %v3591 = vld [vmem:[%s3590] ss:$4 sm:$0xff]
          %3592 = vst [vmem:[#allocation1] ss:$4 sm:$0xff] %v3588
          %v3593 = vld [vmem:[#allocation1] sm:$0xff]
          %s3595 = scalar_lea.vmem [#allocation1], 32
          %3596 = vst [vmem:[%s3595] ss:$4 sm:$0xff] %v3591
          %v3597 = vld [vmem:[#allocation1 + $0x20] sm:$0xff]
          %v3599 = vunpack.c.l.b16 %v3593
          %v3600 = vunpack.c.l.b16 %v3597
          %v3601 = vrot.slane %v3600, 7
          %v3602 = vsel %vm2840, %v3601, %v3599
          %v3603 = vpack.c.b16 %v3602, %v3602
          %v3604 = vrot.slane %v3603, 3
          %v3607 = vsel %vm2823, %v3603, %v3604
          %3609 = vst.msk [vmem:[#allocation3 + $0xf] sm:$0x1] %vm2848, %v3607
          %3610 = vst [vmem:[#allocation1] sm:$0xff] %v3433
          %s3611 = scalar_lea.vmem [#allocation1], 3
          %v3612 = vld [vmem:[%s3611] ss:$4 sm:$0xff]
          %3613 = vst [vmem:[#allocation1 + $0x20] sm:$0xff] %v3434
          %s3614 = scalar_lea.vmem [#allocation1], 35
          %v3615 = vld [vmem:[%s3614] ss:$4 sm:$0xff]
          %3616 = vst [vmem:[#allocation1] ss:$4 sm:$0xff] %v3612
          %v3617 = vld [vmem:[#allocation1] sm:$0xff]
          %s3619 = scalar_lea.vmem [#allocation1], 32
          %3620 = vst [vmem:[%s3619] ss:$4 sm:$0xff] %v3615
          %v3621 = vld [vmem:[#allocation1 + $0x20] sm:$0xff]
          %v3623 = vunpack.c.l.b16 %v3617
          %v3624 = vunpack.c.l.b16 %v3621
          %v3625 = vrot.slane %v3623, 1
          %v3626 = vsel %vm2840, %v3624, %v3625
          %v3627 = vpack.c.b16 %v3626, %v3626
          %v3628 = vrot.slane %v3627, 3
          %v3631 = vsel %vm2823, %v3627, %v3628
          %3633 = vrot.lane.b32.xlu0 %v3631, 64
          %v3634 = vpop.permute.xlu0 %3633
          %3636 = vst.msk [vmem:[#allocation3 + $0xf] sm:$0x1] %vm2870, %v3634
          %v3637 = vpack.c.bf16 %v2805, %v2805
          %v3638 = vpack.c.bf16 %v2813, %v2813
          %v3641 = vrot.slane %v3637, 3
          %v3642 = vrot.slane %v3638, 3
          %v3645 = vsel %vm2823, %v3637, %v3641
          %v3648 = vsel %vm2823, %v3638, %v3642
          %3649 = vst [vmem:[#allocation1] ss:$4 sm:$0xff] %v3645
          %v3650 = vld [vmem:[#allocation1] sm:$0xff]
          %s3652 = scalar_lea.vmem [#allocation1], 32
          %3653 = vst [vmem:[%s3652] ss:$4 sm:$0xff] %v3648
          %v3654 = vld [vmem:[#allocation1 + $0x20] sm:$0xff]
          %v3656 = vunpack.c.l.b16 %v3650
          %v3657 = vunpack.c.l.b16 %v3654
          %v3658 = vrot.slane %v3657, 7
          %v3659 = vsel %vm2840, %v3658, %v3656
          %v3660 = vpack.c.b16 %v3659, %v3659
          %v3661 = vrot.slane %v3660, 3
          %v3664 = vsel %vm2823, %v3660, %v3661
          %s3666 = scalar_lea.vmem [#allocation3], 16
          %3667 = vst.msk [vmem:[%s3666] sm:$0x1] %vm2848, %v3664
          %3668 = vst [vmem:[#allocation1] ss:$4 sm:$0xff] %v3645
          %v3669 = vld [vmem:[#allocation1] sm:$0xff]
          %s3671 = scalar_lea.vmem [#allocation1], 32
          %3672 = vst [vmem:[%s3671] ss:$4 sm:$0xff] %v3648
          %v3673 = vld [vmem:[#allocation1 + $0x20] sm:$0xff]
          %v3675 = vunpack.c.l.b16 %v3669
          %v3676 = vunpack.c.l.b16 %v3673
          %v3677 = vrot.slane %v3675, 1
          %v3678 = vsel %vm2840, %v3676, %v3677
          %v3679 = vpack.c.b16 %v3678, %v3678
          %v3680 = vrot.slane %v3679, 3
          %v3683 = vsel %vm2823, %v3679, %v3680
          %3685 = vrot.lane.b32.xlu0 %v3683, 64
          %v3686 = vpop.permute.xlu0 %3685
          %3688 = vst.msk [vmem:[%s3666] sm:$0x1] %vm2870, %v3686
          %3689 = vst [vmem:[#allocation1] sm:$0xff] %v3637
          %s3690 = scalar_lea.vmem [#allocation1], 1
          %v3691 = vld [vmem:[%s3690] ss:$4 sm:$0xff]
          %3692 = vst [vmem:[#allocation1 + $0x20] sm:$0xff] %v3638
          %s3693 = scalar_lea.vmem [#allocation1], 33
          %v3694 = vld [vmem:[%s3693] ss:$4 sm:$0xff]
          %3695 = vst [vmem:[#allocation1] ss:$4 sm:$0xff] %v3691
          %v3696 = vld [vmem:[#allocation1] sm:$0xff]
          %s3698 = scalar_lea.vmem [#allocation1], 32
          %3699 = vst [vmem:[%s3698] ss:$4 sm:$0xff] %v3694
          %v3700 = vld [vmem:[#allocation1 + $0x20] sm:$0xff]
          %v3702 = vunpack.c.l.b16 %v3696
          %v3703 = vunpack.c.l.b16 %v3700
          %v3704 = vrot.slane %v3703, 7
          %v3705 = vsel %vm2840, %v3704, %v3702
          %v3706 = vpack.c.b16 %v3705, %v3705
          %v3707 = vrot.slane %v3706, 3
          %v3710 = vsel %vm2823, %v3706, %v3707
          %3712 = vst.msk [vmem:[%s3666 + $0x1] sm:$0x1] %vm2848, %v3710
          %3713 = vst [vmem:[#allocation1] sm:$0xff] %v3637
          %s3714 = scalar_lea.vmem [#allocation1], 1
          %v3715 = vld [vmem:[%s3714] ss:$4 sm:$0xff]
          %3716 = vst [vmem:[#allocation1 + $0x20] sm:$0xff] %v3638
          %s3717 = scalar_lea.vmem [#allocation1], 33
          %v3718 = vld [vmem:[%s3717] ss:$4 sm:$0xff]
          %3719 = vst [vmem:[#allocation1] ss:$4 sm:$0xff] %v3715
          %v3720 = vld [vmem:[#allocation1] sm:$0xff]
          %s3722 = scalar_lea.vmem [#allocation1], 32
          %3723 = vst [vmem:[%s3722] ss:$4 sm:$0xff] %v3718
          %v3724 = vld [vmem:[#allocation1 + $0x20] sm:$0xff]
          %v3726 = vunpack.c.l.b16 %v3720
          %v3727 = vunpack.c.l.b16 %v3724
          %v3728 = vrot.slane %v3726, 1
          %v3729 = vsel %vm2840, %v3727, %v3728
          %v3730 = vpack.c.b16 %v3729, %v3729
          %v3731 = vrot.slane %v3730, 3
          %v3734 = vsel %vm2823, %v3730, %v3731
          %3736 = vrot.lane.b32.xlu0 %v3734, 64
          %v3737 = vpop.permute.xlu0 %3736
          %3739 = vst.msk [vmem:[%s3666 + $0x1] sm:$0x1] %vm2870, %v3737
          %3740 = vst [vmem:[#allocation1] sm:$0xff] %v3637
          %s3741 = scalar_lea.vmem [#allocation1], 2
          %v3742 = vld [vmem:[%s3741] ss:$4 sm:$0xff]
          %3743 = vst [vmem:[#allocation1 + $0x20] sm:$0xff] %v3638
          %s3744 = scalar_lea.vmem [#allocation1], 34
          %v3745 = vld [vmem:[%s3744] ss:$4 sm:$0xff]
          %3746 = vst [vmem:[#allocation1] ss:$4 sm:$0xff] %v3742
          %v3747 = vld [vmem:[#allocation1] sm:$0xff]
          %s3749 = scalar_lea.vmem [#allocation1], 32
          %3750 = vst [vmem:[%s3749] ss:$4 sm:$0xff] %v3745
          %v3751 = vld [vmem:[#allocation1 + $0x20] sm:$0xff]
          %v3753 = vunpack.c.l.b16 %v3747
          %v3754 = vunpack.c.l.b16 %v3751
          %v3755 = vrot.slane %v3754, 7
          %v3756 = vsel %vm2840, %v3755, %v3753
          %v3757 = vpack.c.b16 %v3756, %v3756
          %v3758 = vrot.slane %v3757, 3
          %v3761 = vsel %vm2823, %v3757, %v3758
          %3763 = vst.msk [vmem:[%s3666 + $0x2] sm:$0x1] %vm2848, %v3761
          %3764 = vst [vmem:[#allocation1] sm:$0xff] %v3637
          %s3765 = scalar_lea.vmem [#allocation1], 2
          %v3766 = vld [vmem:[%s3765] ss:$4 sm:$0xff]
          %3767 = vst [vmem:[#allocation1 + $0x20] sm:$0xff] %v3638
          %s3768 = scalar_lea.vmem [#allocation1], 34
          %v3769 = vld [vmem:[%s3768] ss:$4 sm:$0xff]
          %3770 = vst [vmem:[#allocation1] ss:$4 sm:$0xff] %v3766
          %v3771 = vld [vmem:[#allocation1] sm:$0xff]
          %s3773 = scalar_lea.vmem [#allocation1], 32
          %3774 = vst [vmem:[%s3773] ss:$4 sm:$0xff] %v3769
          %v3775 = vld [vmem:[#allocation1 + $0x20] sm:$0xff]
          %v3777 = vunpack.c.l.b16 %v3771
          %v3778 = vunpack.c.l.b16 %v3775
          %v3779 = vrot.slane %v3777, 1
          %v3780 = vsel %vm2840, %v3778, %v3779
          %v3781 = vpack.c.b16 %v3780, %v3780
          %v3782 = vrot.slane %v3781, 3
          %v3785 = vsel %vm2823, %v3781, %v3782
          %3787 = vrot.lane.b32.xlu0 %v3785, 64
          %v3788 = vpop.permute.xlu0 %3787
          %3790 = vst.msk [vmem:[%s3666 + $0x2] sm:$0x1] %vm2870, %v3788
          %3791 = vst [vmem:[#allocation1] sm:$0xff] %v3637
          %s3792 = scalar_lea.vmem [#allocation1], 3
          %v3793 = vld [vmem:[%s3792] ss:$4 sm:$0xff]
          %3794 = vst [vmem:[#allocation1 + $0x20] sm:$0xff] %v3638
          %s3795 = scalar_lea.vmem [#allocation1], 35
          %v3796 = vld [vmem:[%s3795] ss:$4 sm:$0xff]
          %3797 = vst [vmem:[#allocation1] ss:$4 sm:$0xff] %v3793
          %v3798 = vld [vmem:[#allocation1] sm:$0xff]
          %s3800 = scalar_lea.vmem [#allocation1], 32
          %3801 = vst [vmem:[%s3800] ss:$4 sm:$0xff] %v3796
          %v3802 = vld [vmem:[#allocation1 + $0x20] sm:$0xff]
          %v3804 = vunpack.c.l.b16 %v3798
          %v3805 = vunpack.c.l.b16 %v3802
          %v3806 = vrot.slane %v3805, 7
          %v3807 = vsel %vm2840, %v3806, %v3804
          %v3808 = vpack.c.b16 %v3807, %v3807
          %v3809 = vrot.slane %v3808, 3
          %v3812 = vsel %vm2823, %v3808, %v3809
          %3814 = vst.msk [vmem:[%s3666 + $0x3] sm:$0x1] %vm2848, %v3812
          %3815 = vst [vmem:[#allocation1] sm:$0xff] %v3637
          %s3816 = scalar_lea.vmem [#allocation1], 3
          %v3817 = vld [vmem:[%s3816] ss:$4 sm:$0xff]
          %3818 = vst [vmem:[#allocation1 + $0x20] sm:$0xff] %v3638
          %s3819 = scalar_lea.vmem [#allocation1], 35
          %v3820 = vld [vmem:[%s3819] ss:$4 sm:$0xff]
          %3821 = vst [vmem:[#allocation1] ss:$4 sm:$0xff] %v3817
          %v3822 = vld [vmem:[#allocation1] sm:$0xff]
          %s3824 = scalar_lea.vmem [#allocation1], 32
          %3825 = vst [vmem:[%s3824] ss:$4 sm:$0xff] %v3820
          %v3826 = vld [vmem:[#allocation1 + $0x20] sm:$0xff]
          %v3828 = vunpack.c.l.b16 %v3822
          %v3829 = vunpack.c.l.b16 %v3826
          %v3830 = vrot.slane %v3828, 1
          %v3831 = vsel %vm2840, %v3829, %v3830
          %v3832 = vpack.c.b16 %v3831, %v3831
          %v3833 = vrot.slane %v3832, 3
          %v3836 = vsel %vm2823, %v3832, %v3833
          %3838 = vrot.lane.b32.xlu0 %v3836, 64
          %v3839 = vpop.permute.xlu0 %3838
          %3841 = vst.msk [vmem:[%s3666 + $0x3] sm:$0x1] %vm2870, %v3839
          %v3842 = vpack.c.bf16 %v2806, %v2806
          %v3843 = vpack.c.bf16 %v2814, %v2814
          %v3846 = vrot.slane %v3842, 3
          %v3847 = vrot.slane %v3843, 3
          %v3850 = vsel %vm2823, %v3842, %v3846
          %v3853 = vsel %vm2823, %v3843, %v3847
          %3854 = vst [vmem:[#allocation1] ss:$4 sm:$0xff] %v3850
          %v3855 = vld [vmem:[#allocation1] sm:$0xff]
          %s3857 = scalar_lea.vmem [#allocation1], 32
          %3858 = vst [vmem:[%s3857] ss:$4 sm:$0xff] %v3853
          %v3859 = vld [vmem:[#allocation1 + $0x20] sm:$0xff]
          %v3861 = vunpack.c.l.b16 %v3855
          %v3862 = vunpack.c.l.b16 %v3859
          %v3863 = vrot.slane %v3862, 7
          %v3864 = vsel %vm2840, %v3863, %v3861
          %v3865 = vpack.c.b16 %v3864, %v3864
          %v3866 = vrot.slane %v3865, 3
          %v3869 = vsel %vm2823, %v3865, %v3866
          %3871 = vst.msk [vmem:[%s3666 + $0x4] sm:$0x1] %vm2848, %v3869
          %3872 = vst [vmem:[#allocation1] ss:$4 sm:$0xff] %v3850
          %v3873 = vld [vmem:[#allocation1] sm:$0xff]
          %s3875 = scalar_lea.vmem [#allocation1], 32
          %3876 = vst [vmem:[%s3875] ss:$4 sm:$0xff] %v3853
          %v3877 = vld [vmem:[#allocation1 + $0x20] sm:$0xff]
          %v3879 = vunpack.c.l.b16 %v3873
          %v3880 = vunpack.c.l.b16 %v3877
          %v3881 = vrot.slane %v3879, 1
          %v3882 = vsel %vm2840, %v3880, %v3881
          %v3883 = vpack.c.b16 %v3882, %v3882
          %v3884 = vrot.slane %v3883, 3
          %v3887 = vsel %vm2823, %v3883, %v3884
          %3889 = vrot.lane.b32.xlu0 %v3887, 64
          %v3890 = vpop.permute.xlu0 %3889
          %3892 = vst.msk [vmem:[%s3666 + $0x4] sm:$0x1] %vm2870, %v3890
          %3893 = vst [vmem:[#allocation1] sm:$0xff] %v3842
          %s3894 = scalar_lea.vmem [#allocation1], 1
          %v3895 = vld [vmem:[%s3894] ss:$4 sm:$0xff]
          %3896 = vst [vmem:[#allocation1 + $0x20] sm:$0xff] %v3843
          %s3897 = scalar_lea.vmem [#allocation1], 33
          %v3898 = vld [vmem:[%s3897] ss:$4 sm:$0xff]
          %3899 = vst [vmem:[#allocation1] ss:$4 sm:$0xff] %v3895
          %v3900 = vld [vmem:[#allocation1] sm:$0xff]
          %s3902 = scalar_lea.vmem [#allocation1], 32
          %3903 = vst [vmem:[%s3902] ss:$4 sm:$0xff] %v3898
          %v3904 = vld [vmem:[#allocation1 + $0x20] sm:$0xff]
          %v3906 = vunpack.c.l.b16 %v3900
          %v3907 = vunpack.c.l.b16 %v3904
          %v3908 = vrot.slane %v3907, 7
          %v3909 = vsel %vm2840, %v3908, %v3906
          %v3910 = vpack.c.b16 %v3909, %v3909
          %v3911 = vrot.slane %v3910, 3
          %v3914 = vsel %vm2823, %v3910, %v3911
          %3916 = vst.msk [vmem:[%s3666 + $0x5] sm:$0x1] %vm2848, %v3914
          %3917 = vst [vmem:[#allocation1] sm:$0xff] %v3842
          %s3918 = scalar_lea.vmem [#allocation1], 1
          %v3919 = vld [vmem:[%s3918] ss:$4 sm:$0xff]
          %3920 = vst [vmem:[#allocation1 + $0x20] sm:$0xff] %v3843
          %s3921 = scalar_lea.vmem [#allocation1], 33
          %v3922 = vld [vmem:[%s3921] ss:$4 sm:$0xff]
          %3923 = vst [vmem:[#allocation1] ss:$4 sm:$0xff] %v3919
          %v3924 = vld [vmem:[#allocation1] sm:$0xff]
          %s3926 = scalar_lea.vmem [#allocation1], 32
          %3927 = vst [vmem:[%s3926] ss:$4 sm:$0xff] %v3922
          %v3928 = vld [vmem:[#allocation1 + $0x20] sm:$0xff]
          %v3930 = vunpack.c.l.b16 %v3924
          %v3931 = vunpack.c.l.b16 %v3928
          %v3932 = vrot.slane %v3930, 1
          %v3933 = vsel %vm2840, %v3931, %v3932
          %v3934 = vpack.c.b16 %v3933, %v3933
          %v3935 = vrot.slane %v3934, 3
          %v3938 = vsel %vm2823, %v3934, %v3935
          %3940 = vrot.lane.b32.xlu0 %v3938, 64
          %v3941 = vpop.permute.xlu0 %3940
          %3943 = vst.msk [vmem:[%s3666 + $0x5] sm:$0x1] %vm2870, %v3941
          %3944 = vst [vmem:[#allocation1] sm:$0xff] %v3842
          %s3945 = scalar_lea.vmem [#allocation1], 2
          %v3946 = vld [vmem:[%s3945] ss:$4 sm:$0xff]
          %3947 = vst [vmem:[#allocation1 + $0x20] sm:$0xff] %v3843
          %s3948 = scalar_lea.vmem [#allocation1], 34
          %v3949 = vld [vmem:[%s3948] ss:$4 sm:$0xff]
          %3950 = vst [vmem:[#allocation1] ss:$4 sm:$0xff] %v3946
          %v3951 = vld [vmem:[#allocation1] sm:$0xff]
          %s3953 = scalar_lea.vmem [#allocation1], 32
          %3954 = vst [vmem:[%s3953] ss:$4 sm:$0xff] %v3949
          %v3955 = vld [vmem:[#allocation1 + $0x20] sm:$0xff]
          %v3957 = vunpack.c.l.b16 %v3951
          %v3958 = vunpack.c.l.b16 %v3955
          %v3959 = vrot.slane %v3958, 7
          %v3960 = vsel %vm2840, %v3959, %v3957
          %v3961 = vpack.c.b16 %v3960, %v3960
          %v3962 = vrot.slane %v3961, 3
          %v3965 = vsel %vm2823, %v3961, %v3962
          %3967 = vst.msk [vmem:[%s3666 + $0x6] sm:$0x1] %vm2848, %v3965
          %3968 = vst [vmem:[#allocation1] sm:$0xff] %v3842
          %s3969 = scalar_lea.vmem [#allocation1], 2
          %v3970 = vld [vmem:[%s3969] ss:$4 sm:$0xff]
          %3971 = vst [vmem:[#allocation1 + $0x20] sm:$0xff] %v3843
          %s3972 = scalar_lea.vmem [#allocation1], 34
          %v3973 = vld [vmem:[%s3972] ss:$4 sm:$0xff]
          %3974 = vst [vmem:[#allocation1] ss:$4 sm:$0xff] %v3970
          %v3975 = vld [vmem:[#allocation1] sm:$0xff]
          %s3977 = scalar_lea.vmem [#allocation1], 32
          %3978 = vst [vmem:[%s3977] ss:$4 sm:$0xff] %v3973
          %v3979 = vld [vmem:[#allocation1 + $0x20] sm:$0xff]
          %v3981 = vunpack.c.l.b16 %v3975
          %v3982 = vunpack.c.l.b16 %v3979
          %v3983 = vrot.slane %v3981, 1
          %v3984 = vsel %vm2840, %v3982, %v3983
          %v3985 = vpack.c.b16 %v3984, %v3984
          %v3986 = vrot.slane %v3985, 3
          %v3989 = vsel %vm2823, %v3985, %v3986
          %3991 = vrot.lane.b32.xlu0 %v3989, 64
          %v3992 = vpop.permute.xlu0 %3991
          %3994 = vst.msk [vmem:[%s3666 + $0x6] sm:$0x1] %vm2870, %v3992
          %3995 = vst [vmem:[#allocation1] sm:$0xff] %v3842
          %s3996 = scalar_lea.vmem [#allocation1], 3
          %v3997 = vld [vmem:[%s3996] ss:$4 sm:$0xff]
          %3998 = vst [vmem:[#allocation1 + $0x20] sm:$0xff] %v3843
          %s3999 = scalar_lea.vmem [#allocation1], 35
          %v4000 = vld [vmem:[%s3999] ss:$4 sm:$0xff]
          %4001 = vst [vmem:[#allocation1] ss:$4 sm:$0xff] %v3997
          %v4002 = vld [vmem:[#allocation1] sm:$0xff]
          %s4004 = scalar_lea.vmem [#allocation1], 32
          %4005 = vst [vmem:[%s4004] ss:$4 sm:$0xff] %v4000
          %v4006 = vld [vmem:[#allocation1 + $0x20] sm:$0xff]
          %v4008 = vunpack.c.l.b16 %v4002
          %v4009 = vunpack.c.l.b16 %v4006
          %v4010 = vrot.slane %v4009, 7
          %v4011 = vsel %vm2840, %v4010, %v4008
          %v4012 = vpack.c.b16 %v4011, %v4011
          %v4013 = vrot.slane %v4012, 3
          %v4016 = vsel %vm2823, %v4012, %v4013
          %4018 = vst.msk [vmem:[%s3666 + $0x7] sm:$0x1] %vm2848, %v4016
          %4019 = vst [vmem:[#allocation1] sm:$0xff] %v3842
          %s4020 = scalar_lea.vmem [#allocation1], 3
          %v4021 = vld [vmem:[%s4020] ss:$4 sm:$0xff]
          %4022 = vst [vmem:[#allocation1 + $0x20] sm:$0xff] %v3843
          %s4023 = scalar_lea.vmem [#allocation1], 35
          %v4024 = vld [vmem:[%s4023] ss:$4 sm:$0xff]
          %4025 = vst [vmem:[#allocation1] ss:$4 sm:$0xff] %v4021
          %v4026 = vld [vmem:[#allocation1] sm:$0xff]
          %s4028 = scalar_lea.vmem [#allocation1], 32
          %4029 = vst [vmem:[%s4028] ss:$4 sm:$0xff] %v4024
          %v4030 = vld [vmem:[#allocation1 + $0x20] sm:$0xff]
          %v4032 = vunpack.c.l.b16 %v4026
          %v4033 = vunpack.c.l.b16 %v4030
          %v4034 = vrot.slane %v4032, 1
          %v4035 = vsel %vm2840, %v4033, %v4034
          %v4036 = vpack.c.b16 %v4035, %v4035
          %v4037 = vrot.slane %v4036, 3
          %v4040 = vsel %vm2823, %v4036, %v4037
          %4042 = vrot.lane.b32.xlu0 %v4040, 64
          %v4043 = vpop.permute.xlu0 %4042
          %4045 = vst.msk [vmem:[%s3666 + $0x7] sm:$0x1] %vm2870, %v4043
          %v4046 = vpack.c.bf16 %v2807, %v2807
          %v4047 = vpack.c.bf16 %v2815, %v2815
          %v4050 = vrot.slane %v4046, 3
          %v4051 = vrot.slane %v4047, 3
          %v4054 = vsel %vm2823, %v4046, %v4050
          %v4057 = vsel %vm2823, %v4047, %v4051
          %4058 = vst [vmem:[#allocation1] ss:$4 sm:$0xff] %v4054
          %v4059 = vld [vmem:[#allocation1] sm:$0xff]
          %s4061 = scalar_lea.vmem [#allocation1], 32
          %4062 = vst [vmem:[%s4061] ss:$4 sm:$0xff] %v4057
          %v4063 = vld [vmem:[#allocation1 + $0x20] sm:$0xff]
          %v4065 = vunpack.c.l.b16 %v4059
          %v4066 = vunpack.c.l.b16 %v4063
          %v4067 = vrot.slane %v4066, 7
          %v4068 = vsel %vm2840, %v4067, %v4065
          %v4069 = vpack.c.b16 %v4068, %v4068
          %v4070 = vrot.slane %v4069, 3
          %v4073 = vsel %vm2823, %v4069, %v4070
          %4075 = vst.msk [vmem:[%s3666 + $0x8] sm:$0x1] %vm2848, %v4073
          %4076 = vst [vmem:[#allocation1] ss:$4 sm:$0xff] %v4054
          %v4077 = vld [vmem:[#allocation1] sm:$0xff]
          %s4079 = scalar_lea.vmem [#allocation1], 32
          %4080 = vst [vmem:[%s4079] ss:$4 sm:$0xff] %v4057
          %v4081 = vld [vmem:[#allocation1 + $0x20] sm:$0xff]
          %v4083 = vunpack.c.l.b16 %v4077
          %v4084 = vunpack.c.l.b16 %v4081
          %v4085 = vrot.slane %v4083, 1
          %v4086 = vsel %vm2840, %v4084, %v4085
          %v4087 = vpack.c.b16 %v4086, %v4086
          %v4088 = vrot.slane %v4087, 3
          %v4091 = vsel %vm2823, %v4087, %v4088
          %4093 = vrot.lane.b32.xlu0 %v4091, 64
          %v4094 = vpop.permute.xlu0 %4093
          %4096 = vst.msk [vmem:[%s3666 + $0x8] sm:$0x1] %vm2870, %v4094
          %4097 = vst [vmem:[#allocation1] sm:$0xff] %v4046
          %s4098 = scalar_lea.vmem [#allocation1], 1
          %v4099 = vld [vmem:[%s4098] ss:$4 sm:$0xff]
          %4100 = vst [vmem:[#allocation1 + $0x20] sm:$0xff] %v4047
          %s4101 = scalar_lea.vmem [#allocation1], 33
          %v4102 = vld [vmem:[%s4101] ss:$4 sm:$0xff]
          %4103 = vst [vmem:[#allocation1] ss:$4 sm:$0xff] %v4099
          %v4104 = vld [vmem:[#allocation1] sm:$0xff]
          %s4106 = scalar_lea.vmem [#allocation1], 32
          %4107 = vst [vmem:[%s4106] ss:$4 sm:$0xff] %v4102
          %v4108 = vld [vmem:[#allocation1 + $0x20] sm:$0xff]
          %v4110 = vunpack.c.l.b16 %v4104
          %v4111 = vunpack.c.l.b16 %v4108
          %v4112 = vrot.slane %v4111, 7
          %v4113 = vsel %vm2840, %v4112, %v4110
          %v4114 = vpack.c.b16 %v4113, %v4113
          %v4115 = vrot.slane %v4114, 3
          %v4118 = vsel %vm2823, %v4114, %v4115
          %4120 = vst.msk [vmem:[%s3666 + $0x9] sm:$0x1] %vm2848, %v4118
          %4121 = vst [vmem:[#allocation1] sm:$0xff] %v4046
          %s4122 = scalar_lea.vmem [#allocation1], 1
          %v4123 = vld [vmem:[%s4122] ss:$4 sm:$0xff]
          %4124 = vst [vmem:[#allocation1 + $0x20] sm:$0xff] %v4047
          %s4125 = scalar_lea.vmem [#allocation1], 33
          %v4126 = vld [vmem:[%s4125] ss:$4 sm:$0xff]
          %4127 = vst [vmem:[#allocation1] ss:$4 sm:$0xff] %v4123
          %v4128 = vld [vmem:[#allocation1] sm:$0xff]
          %s4130 = scalar_lea.vmem [#allocation1], 32
          %4131 = vst [vmem:[%s4130] ss:$4 sm:$0xff] %v4126
          %v4132 = vld [vmem:[#allocation1 + $0x20] sm:$0xff]
          %v4134 = vunpack.c.l.b16 %v4128
          %v4135 = vunpack.c.l.b16 %v4132
          %v4136 = vrot.slane %v4134, 1
          %v4137 = vsel %vm2840, %v4135, %v4136
          %v4138 = vpack.c.b16 %v4137, %v4137
          %v4139 = vrot.slane %v4138, 3
          %v4142 = vsel %vm2823, %v4138, %v4139
          %4144 = vrot.lane.b32.xlu0 %v4142, 64
          %v4145 = vpop.permute.xlu0 %4144
          %4147 = vst.msk [vmem:[%s3666 + $0x9] sm:$0x1] %vm2870, %v4145
          %4148 = vst [vmem:[#allocation1] sm:$0xff] %v4046
          %s4149 = scalar_lea.vmem [#allocation1], 2
          %v4150 = vld [vmem:[%s4149] ss:$4 sm:$0xff]
          %4151 = vst [vmem:[#allocation1 + $0x20] sm:$0xff] %v4047
          %s4152 = scalar_lea.vmem [#allocation1], 34
          %v4153 = vld [vmem:[%s4152] ss:$4 sm:$0xff]
          %4154 = vst [vmem:[#allocation1] ss:$4 sm:$0xff] %v4150
          %v4155 = vld [vmem:[#allocation1] sm:$0xff]
          %s4157 = scalar_lea.vmem [#allocation1], 32
          %4158 = vst [vmem:[%s4157] ss:$4 sm:$0xff] %v4153
          %v4159 = vld [vmem:[#allocation1 + $0x20] sm:$0xff]
          %v4161 = vunpack.c.l.b16 %v4155
          %v4162 = vunpack.c.l.b16 %v4159
          %v4163 = vrot.slane %v4162, 7
          %v4164 = vsel %vm2840, %v4163, %v4161
          %v4165 = vpack.c.b16 %v4164, %v4164
          %v4166 = vrot.slane %v4165, 3
          %v4169 = vsel %vm2823, %v4165, %v4166
          %4171 = vst.msk [vmem:[%s3666 + $0xa] sm:$0x1] %vm2848, %v4169
          %4172 = vst [vmem:[#allocation1] sm:$0xff] %v4046
          %s4173 = scalar_lea.vmem [#allocation1], 2
          %v4174 = vld [vmem:[%s4173] ss:$4 sm:$0xff]
          %4175 = vst [vmem:[#allocation1 + $0x20] sm:$0xff] %v4047
          %s4176 = scalar_lea.vmem [#allocation1], 34
          %v4177 = vld [vmem:[%s4176] ss:$4 sm:$0xff]
          %4178 = vst [vmem:[#allocation1] ss:$4 sm:$0xff] %v4174
          %v4179 = vld [vmem:[#allocation1] sm:$0xff]
          %s4181 = scalar_lea.vmem [#allocation1], 32
          %4182 = vst [vmem:[%s4181] ss:$4 sm:$0xff] %v4177
          %v4183 = vld [vmem:[#allocation1 + $0x20] sm:$0xff]
          %v4185 = vunpack.c.l.b16 %v4179
          %v4186 = vunpack.c.l.b16 %v4183
          %v4187 = vrot.slane %v4185, 1
          %v4188 = vsel %vm2840, %v4186, %v4187
          %v4189 = vpack.c.b16 %v4188, %v4188
          %v4190 = vrot.slane %v4189, 3
          %v4193 = vsel %vm2823, %v4189, %v4190
          %4195 = vrot.lane.b32.xlu0 %v4193, 64
          %v4196 = vpop.permute.xlu0 %4195
          %4198 = vst.msk [vmem:[%s3666 + $0xa] sm:$0x1] %vm2870, %v4196
          %4199 = vst [vmem:[#allocation1] sm:$0xff] %v4046
          %s4200 = scalar_lea.vmem [#allocation1], 3
          %v4201 = vld [vmem:[%s4200] ss:$4 sm:$0xff]
          %4202 = vst [vmem:[#allocation1 + $0x20] sm:$0xff] %v4047
          %s4203 = scalar_lea.vmem [#allocation1], 35
          %v4204 = vld [vmem:[%s4203] ss:$4 sm:$0xff]
          %4205 = vst [vmem:[#allocation1] ss:$4 sm:$0xff] %v4201
          %v4206 = vld [vmem:[#allocation1] sm:$0xff]
          %s4208 = scalar_lea.vmem [#allocation1], 32
          %4209 = vst [vmem:[%s4208] ss:$4 sm:$0xff] %v4204
          %v4210 = vld [vmem:[#allocation1 + $0x20] sm:$0xff]
          %v4212 = vunpack.c.l.b16 %v4206
          %v4213 = vunpack.c.l.b16 %v4210
          %v4214 = vrot.slane %v4213, 7
          %v4215 = vsel %vm2840, %v4214, %v4212
          %v4216 = vpack.c.b16 %v4215, %v4215
          %v4217 = vrot.slane %v4216, 3
          %v4220 = vsel %vm2823, %v4216, %v4217
          %4222 = vst.msk [vmem:[%s3666 + $0xb] sm:$0x1] %vm2848, %v4220
          %4223 = vst [vmem:[#allocation1] sm:$0xff] %v4046
          %s4224 = scalar_lea.vmem [#allocation1], 3
          %v4225 = vld [vmem:[%s4224] ss:$4 sm:$0xff]
          %4226 = vst [vmem:[#allocation1 + $0x20] sm:$0xff] %v4047
          %s4227 = scalar_lea.vmem [#allocation1], 35
          %v4228 = vld [vmem:[%s4227] ss:$4 sm:$0xff]
          %4229 = vst [vmem:[#allocation1] ss:$4 sm:$0xff] %v4225
          %v4230 = vld [vmem:[#allocation1] sm:$0xff]
          %s4232 = scalar_lea.vmem [#allocation1], 32
          %4233 = vst [vmem:[%s4232] ss:$4 sm:$0xff] %v4228
          %v4234 = vld [vmem:[#allocation1 + $0x20] sm:$0xff]
          %v4236 = vunpack.c.l.b16 %v4230
          %v4237 = vunpack.c.l.b16 %v4234
          %v4238 = vrot.slane %v4236, 1
          %v4239 = vsel %vm2840, %v4237, %v4238
          %v4240 = vpack.c.b16 %v4239, %v4239
          %v4241 = vrot.slane %v4240, 3
          %v4244 = vsel %vm2823, %v4240, %v4241
          %4246 = vrot.lane.b32.xlu0 %v4244, 64
          %v4247 = vpop.permute.xlu0 %4246
          %4249 = vst.msk [vmem:[%s3666 + $0xb] sm:$0x1] %vm2870, %v4247
          %v4250 = vpack.c.bf16 %v2808, %v2808
          %v4251 = vpack.c.bf16 %v2816, %v2816
          %v4254 = vrot.slane %v4250, 3
          %v4255 = vrot.slane %v4251, 3
          %v4258 = vsel %vm2823, %v4250, %v4254
          %v4261 = vsel %vm2823, %v4251, %v4255
          %4262 = vst [vmem:[#allocation1] ss:$4 sm:$0xff] %v4258
          %v4263 = vld [vmem:[#allocation1] sm:$0xff]
          %s4265 = scalar_lea.vmem [#allocation1], 32
          %4266 = vst [vmem:[%s4265] ss:$4 sm:$0xff] %v4261
          %v4267 = vld [vmem:[#allocation1 + $0x20] sm:$0xff]
          %v4269 = vunpack.c.l.b16 %v4263
          %v4270 = vunpack.c.l.b16 %v4267
          %v4271 = vrot.slane %v4270, 7
          %v4272 = vsel %vm2840, %v4271, %v4269
          %v4273 = vpack.c.b16 %v4272, %v4272
          %v4274 = vrot.slane %v4273, 3
          %v4277 = vsel %vm2823, %v4273, %v4274
          %4279 = vst.msk [vmem:[%s3666 + $0xc] sm:$0x1] %vm2848, %v4277
          %4280 = vst [vmem:[#allocation1] ss:$4 sm:$0xff] %v4258
          %v4281 = vld [vmem:[#allocation1] sm:$0xff]
          %s4283 = scalar_lea.vmem [#allocation1], 32
          %4284 = vst [vmem:[%s4283] ss:$4 sm:$0xff] %v4261
          %v4285 = vld [vmem:[#allocation1 + $0x20] sm:$0xff]
          %v4287 = vunpack.c.l.b16 %v4281
          %v4288 = vunpack.c.l.b16 %v4285
          %v4289 = vrot.slane %v4287, 1
          %v4290 = vsel %vm2840, %v4288, %v4289
          %v4291 = vpack.c.b16 %v4290, %v4290
          %v4292 = vrot.slane %v4291, 3
          %v4295 = vsel %vm2823, %v4291, %v4292
          %4297 = vrot.lane.b32.xlu0 %v4295, 64
          %v4298 = vpop.permute.xlu0 %4297
          %4300 = vst.msk [vmem:[%s3666 + $0xc] sm:$0x1] %vm2870, %v4298
          %4301 = vst [vmem:[#allocation1] sm:$0xff] %v4250
          %s4302 = scalar_lea.vmem [#allocation1], 1
          %v4303 = vld [vmem:[%s4302] ss:$4 sm:$0xff]
          %4304 = vst [vmem:[#allocation1 + $0x20] sm:$0xff] %v4251
          %s4305 = scalar_lea.vmem [#allocation1], 33
          %v4306 = vld [vmem:[%s4305] ss:$4 sm:$0xff]
          %4307 = vst [vmem:[#allocation1] ss:$4 sm:$0xff] %v4303
          %v4308 = vld [vmem:[#allocation1] sm:$0xff]
          %s4310 = scalar_lea.vmem [#allocation1], 32
          %4311 = vst [vmem:[%s4310] ss:$4 sm:$0xff] %v4306
          %v4312 = vld [vmem:[#allocation1 + $0x20] sm:$0xff]
          %v4314 = vunpack.c.l.b16 %v4308
          %v4315 = vunpack.c.l.b16 %v4312
          %v4316 = vrot.slane %v4315, 7
          %v4317 = vsel %vm2840, %v4316, %v4314
          %v4318 = vpack.c.b16 %v4317, %v4317
          %v4319 = vrot.slane %v4318, 3
          %v4322 = vsel %vm2823, %v4318, %v4319
          %4324 = vst.msk [vmem:[%s3666 + $0xd] sm:$0x1] %vm2848, %v4322
          %4325 = vst [vmem:[#allocation1] sm:$0xff] %v4250
          %s4326 = scalar_lea.vmem [#allocation1], 1
          %v4327 = vld [vmem:[%s4326] ss:$4 sm:$0xff]
          %4328 = vst [vmem:[#allocation1 + $0x20] sm:$0xff] %v4251
          %s4329 = scalar_lea.vmem [#allocation1], 33
          %v4330 = vld [vmem:[%s4329] ss:$4 sm:$0xff]
          %4331 = vst [vmem:[#allocation1] ss:$4 sm:$0xff] %v4327
          %v4332 = vld [vmem:[#allocation1] sm:$0xff]
          %s4334 = scalar_lea.vmem [#allocation1], 32
          %4335 = vst [vmem:[%s4334] ss:$4 sm:$0xff] %v4330
          %v4336 = vld [vmem:[#allocation1 + $0x20] sm:$0xff]
          %v4338 = vunpack.c.l.b16 %v4332
          %v4339 = vunpack.c.l.b16 %v4336
          %v4340 = vrot.slane %v4338, 1
          %v4341 = vsel %vm2840, %v4339, %v4340
          %v4342 = vpack.c.b16 %v4341, %v4341
          %v4343 = vrot.slane %v4342, 3
          %v4346 = vsel %vm2823, %v4342, %v4343
          %4348 = vrot.lane.b32.xlu0 %v4346, 64
          %v4349 = vpop.permute.xlu0 %4348
          %4351 = vst.msk [vmem:[%s3666 + $0xd] sm:$0x1] %vm2870, %v4349
          %4352 = vst [vmem:[#allocation1] sm:$0xff] %v4250
          %s4353 = scalar_lea.vmem [#allocation1], 2
          %v4354 = vld [vmem:[%s4353] ss:$4 sm:$0xff]
          %4355 = vst [vmem:[#allocation1 + $0x20] sm:$0xff] %v4251
          %s4356 = scalar_lea.vmem [#allocation1], 34
          %v4357 = vld [vmem:[%s4356] ss:$4 sm:$0xff]
          %4358 = vst [vmem:[#allocation1] ss:$4 sm:$0xff] %v4354
          %v4359 = vld [vmem:[#allocation1] sm:$0xff]
          %s4361 = scalar_lea.vmem [#allocation1], 32
          %4362 = vst [vmem:[%s4361] ss:$4 sm:$0xff] %v4357
          %v4363 = vld [vmem:[#allocation1 + $0x20] sm:$0xff]
          %v4365 = vunpack.c.l.b16 %v4359
          %v4366 = vunpack.c.l.b16 %v4363
          %v4367 = vrot.slane %v4366, 7
          %v4368 = vsel %vm2840, %v4367, %v4365
          %v4369 = vpack.c.b16 %v4368, %v4368
          %v4370 = vrot.slane %v4369, 3
          %v4373 = vsel %vm2823, %v4369, %v4370
          %4375 = vst.msk [vmem:[%s3666 + $0xe] sm:$0x1] %vm2848, %v4373
          %4376 = vst [vmem:[#allocation1] sm:$0xff] %v4250
          %s4377 = scalar_lea.vmem [#allocation1], 2
          %v4378 = vld [vmem:[%s4377] ss:$4 sm:$0xff]
          %4379 = vst [vmem:[#allocation1 + $0x20] sm:$0xff] %v4251
          %s4380 = scalar_lea.vmem [#allocation1], 34
          %v4381 = vld [vmem:[%s4380] ss:$4 sm:$0xff]
          %4382 = vst [vmem:[#allocation1] ss:$4 sm:$0xff] %v4378
          %v4383 = vld [vmem:[#allocation1] sm:$0xff]
          %s4385 = scalar_lea.vmem [#allocation1], 32
          %4386 = vst [vmem:[%s4385] ss:$4 sm:$0xff] %v4381
          %v4387 = vld [vmem:[#allocation1 + $0x20] sm:$0xff]
          %v4389 = vunpack.c.l.b16 %v4383
          %v4390 = vunpack.c.l.b16 %v4387
          %v4391 = vrot.slane %v4389, 1
          %v4392 = vsel %vm2840, %v4390, %v4391
          %v4393 = vpack.c.b16 %v4392, %v4392
          %v4394 = vrot.slane %v4393, 3
          %v4397 = vsel %vm2823, %v4393, %v4394
          %4399 = vrot.lane.b32.xlu0 %v4397, 64
          %v4400 = vpop.permute.xlu0 %4399
          %4402 = vst.msk [vmem:[%s3666 + $0xe] sm:$0x1] %vm2870, %v4400
          %4403 = vst [vmem:[#allocation1] sm:$0xff] %v4250
          %s4404 = scalar_lea.vmem [#allocation1], 3
          %v4405 = vld [vmem:[%s4404] ss:$4 sm:$0xff]
          %4406 = vst [vmem:[#allocation1 + $0x20] sm:$0xff] %v4251
          %s4407 = scalar_lea.vmem [#allocation1], 35
          %v4408 = vld [vmem:[%s4407] ss:$4 sm:$0xff]
          %4409 = vst [vmem:[#allocation1] ss:$4 sm:$0xff] %v4405
          %v4410 = vld [vmem:[#allocation1] sm:$0xff]
          %s4412 = scalar_lea.vmem [#allocation1], 32
          %4413 = vst [vmem:[%s4412] ss:$4 sm:$0xff] %v4408
          %v4414 = vld [vmem:[#allocation1 + $0x20] sm:$0xff]
          %v4416 = vunpack.c.l.b16 %v4410
          %v4417 = vunpack.c.l.b16 %v4414
          %v4418 = vrot.slane %v4417, 7
          %v4419 = vsel %vm2840, %v4418, %v4416
          %v4420 = vpack.c.b16 %v4419, %v4419
          %v4421 = vrot.slane %v4420, 3
          %v4424 = vsel %vm2823, %v4420, %v4421
          %4426 = vst.msk [vmem:[%s3666 + $0xf] sm:$0x1] %vm2848, %v4424
          %4427 = vst [vmem:[#allocation1] sm:$0xff] %v4250
          %s4428 = scalar_lea.vmem [#allocation1], 3
          %v4429 = vld [vmem:[%s4428] ss:$4 sm:$0xff]
          %4430 = vst [vmem:[#allocation1 + $0x20] sm:$0xff] %v4251
          %s4431 = scalar_lea.vmem [#allocation1], 35
          %v4432 = vld [vmem:[%s4431] ss:$4 sm:$0xff]
          %4433 = vst [vmem:[#allocation1] ss:$4 sm:$0xff] %v4429
          %v4434 = vld [vmem:[#allocation1] sm:$0xff]
          %s4436 = scalar_lea.vmem [#allocation1], 32
          %4437 = vst [vmem:[%s4436] ss:$4 sm:$0xff] %v4432
          %v4438 = vld [vmem:[#allocation1 + $0x20] sm:$0xff]
          %v4440 = vunpack.c.l.b16 %v4434
          %v4441 = vunpack.c.l.b16 %v4438
          %v4442 = vrot.slane %v4440, 1
          %v4443 = vsel %vm2840, %v4441, %v4442
          %v4444 = vpack.c.b16 %v4443, %v4443
          %v4445 = vrot.slane %v4444, 3
          %v4448 = vsel %vm2823, %v4444, %v4445
          %4450 = vrot.lane.b32.xlu0 %v4448, 64
          %v4451 = vpop.permute.xlu0 %4450
          %4453 = vst.msk [vmem:[%s3666 + $0xf] sm:$0x1] %vm2870, %v4451
          %4454 = vst [vmem:[#allocation4] sm:$0xff] 0.0
        $region68: #{dqn_forward.1} parent=63 // pred_fallthru
          _
        %s4455 = smul.u32 %s23, 16
        %s4456 = scalar_lea.vmem [#allocation3], %s4455
        %v4457 = vld [vmem:[%s4456] sm:$0xff]
        %v4458 = vld [vmem:[%s4456 + $0x8] sm:$0xff]
        %v4459 = vld [vmem:[#allocation4] sm:$0xff]
        %v4460 = vld [vmem:[%s376] sm:$0xff]
        %v4461 = vld [vmem:[%s376 + $0x8] sm:$0xff]
        %v4462 = vld [vmem:[%s376 + $0x10] sm:$0xff]
        %v4463 = vld [vmem:[%s376 + $0x18] sm:$0xff]
        %v4464 = vld [vmem:[%s376 + $0x20] sm:$0xff]
        %v4465 = vld [vmem:[%s376 + $0x28] sm:$0xff]
        %v4466 = vld [vmem:[%s376 + $0x30] sm:$0xff]
        %v4467 = vld [vmem:[%s376 + $0x38] sm:$0xff]
        %v4468 = vld [vmem:[%s376 + $0x40] sm:$0xff]
        %v4469 = vld [vmem:[%s376 + $0x48] sm:$0xff]
        %v4470 = vld [vmem:[%s376 + $0x50] sm:$0xff]
        %v4471 = vld [vmem:[%s376 + $0x58] sm:$0xff]
        %v4472 = vld [vmem:[%s376 + $0x60] sm:$0xff]
        %v4473 = vld [vmem:[%s376 + $0x68] sm:$0xff]
        %v4474 = vld [vmem:[%s376 + $0x70] sm:$0xff]
        %v4475 = vld [vmem:[%s376 + $0x78] sm:$0xff]
        %v4476 = vld [vmem:[%s376 + $0x80] sm:$0xff]
        %v4477 = vld [vmem:[%s376 + $0x88] sm:$0xff]
        %v4478 = vld [vmem:[%s376 + $0x90] sm:$0xff]
        %v4479 = vld [vmem:[%s376 + $0x98] sm:$0xff]
        %v4480 = vld [vmem:[%s376 + $0xa0] sm:$0xff]
        %v4481 = vld [vmem:[%s376 + $0xa8] sm:$0xff]
        %v4482 = vld [vmem:[%s376 + $0xb0] sm:$0xff]
        %v4483 = vld [vmem:[%s376 + $0xb8] sm:$0xff]
        %v4484 = vld [vmem:[%s376 + $0xc0] sm:$0xff]
        %v4485 = vld [vmem:[%s376 + $0xc8] sm:$0xff]
        %v4486 = vld [vmem:[%s376 + $0xd0] sm:$0xff]
        %v4487 = vld [vmem:[%s376 + $0xd8] sm:$0xff]
        %v4488 = vld [vmem:[%s376 + $0xe0] sm:$0xff]
        %v4489 = vld [vmem:[%s376 + $0xe8] sm:$0xff]
        %v4490 = vld [vmem:[%s376 + $0xf0] sm:$0xff]
        %v4491 = vld [vmem:[%s376 + $0xf8] sm:$0xff]
        %v4492 = vld [vmem:[%s376 + $0x100] sm:$0xff]
        %v4493 = vld [vmem:[%s376 + $0x108] sm:$0xff]
        %v4494 = vld [vmem:[%s376 + $0x110] sm:$0xff]
        %v4495 = vld [vmem:[%s376 + $0x118] sm:$0xff]
        %v4496 = vld [vmem:[%s376 + $0x120] sm:$0xff]
        %v4497 = vld [vmem:[%s376 + $0x128] sm:$0xff]
        %v4498 = vld [vmem:[%s376 + $0x130] sm:$0xff]
        %v4499 = vld [vmem:[%s376 + $0x138] sm:$0xff]
        %v4500 = vld [vmem:[%s376 + $0x140] sm:$0xff]
        %v4501 = vld [vmem:[%s376 + $0x148] sm:$0xff]
        %v4502 = vld [vmem:[%s376 + $0x150] sm:$0xff]
        %v4503 = vld [vmem:[%s376 + $0x158] sm:$0xff]
        %v4504 = vld [vmem:[%s376 + $0x160] sm:$0xff]
        %v4505 = vld [vmem:[%s376 + $0x168] sm:$0xff]
        %v4506 = vld [vmem:[%s376 + $0x170] sm:$0xff]
        %v4507 = vld [vmem:[%s376 + $0x178] sm:$0xff]
        %v4508 = vld [vmem:[%s376 + $0x180] sm:$0xff]
        %v4509 = vld [vmem:[%s376 + $0x188] sm:$0xff]
        %v4510 = vld [vmem:[%s376 + $0x190] sm:$0xff]
        %v4511 = vld [vmem:[%s376 + $0x198] sm:$0xff]
        %v4512 = vld [vmem:[%s376 + $0x1a0] sm:$0xff]
        %v4513 = vld [vmem:[%s376 + $0x1a8] sm:$0xff]
        %v4514 = vld [vmem:[%s376 + $0x1b0] sm:$0xff]
        %v4515 = vld [vmem:[%s376 + $0x1b8] sm:$0xff]
        %v4516 = vld [vmem:[%s376 + $0x1c0] sm:$0xff]
        %v4517 = vld [vmem:[%s376 + $0x1c8] sm:$0xff]
        %v4518 = vld [vmem:[%s376 + $0x1d0] sm:$0xff]
        %v4519 = vld [vmem:[%s376 + $0x1d8] sm:$0xff]
        %v4520 = vld [vmem:[%s376 + $0x1e0] sm:$0xff]
        %v4521 = vld [vmem:[%s376 + $0x1e8] sm:$0xff]
        %v4522 = vld [vmem:[%s376 + $0x1f0] sm:$0xff]
        %v4523 = vld [vmem:[%s376 + $0x1f8] sm:$0xff]
        %v4524 = vld [vmem:[%s376 + $0x200] sm:$0xff]
        %v4525 = vld [vmem:[%s376 + $0x208] sm:$0xff]
        %v4526 = vld [vmem:[%s376 + $0x210] sm:$0xff]
        %v4527 = vld [vmem:[%s376 + $0x218] sm:$0xff]
        %v4528 = vld [vmem:[%s376 + $0x220] sm:$0xff]
        %v4529 = vld [vmem:[%s376 + $0x228] sm:$0xff]
        %v4530 = vld [vmem:[%s376 + $0x230] sm:$0xff]
        %v4531 = vld [vmem:[%s376 + $0x238] sm:$0xff]
        %v4532 = vld [vmem:[%s376 + $0x240] sm:$0xff]
        %v4533 = vld [vmem:[%s376 + $0x248] sm:$0xff]
        %v4534 = vld [vmem:[%s376 + $0x250] sm:$0xff]
        %v4535 = vld [vmem:[%s376 + $0x258] sm:$0xff]
        %v4536 = vld [vmem:[%s376 + $0x260] sm:$0xff]
        %v4537 = vld [vmem:[%s376 + $0x268] sm:$0xff]
        %v4538 = vld [vmem:[%s376 + $0x270] sm:$0xff]
        %v4539 = vld [vmem:[%s376 + $0x278] sm:$0xff]
        %v4540 = vld [vmem:[%s376 + $0x280] sm:$0xff]
        %v4541 = vld [vmem:[%s376 + $0x288] sm:$0xff]
        %v4542 = vld [vmem:[%s376 + $0x290] sm:$0xff]
        %v4543 = vld [vmem:[%s376 + $0x298] sm:$0xff]
        %v4544 = vld [vmem:[%s376 + $0x2a0] sm:$0xff]
        %v4545 = vld [vmem:[%s376 + $0x2a8] sm:$0xff]
        %v4546 = vld [vmem:[%s376 + $0x2b0] sm:$0xff]
        %v4547 = vld [vmem:[%s376 + $0x2b8] sm:$0xff]
        %v4548 = vld [vmem:[%s376 + $0x2c0] sm:$0xff]
        %v4549 = vld [vmem:[%s376 + $0x2c8] sm:$0xff]
        %v4550 = vld [vmem:[%s376 + $0x2d0] sm:$0xff]
        %v4551 = vld [vmem:[%s376 + $0x2d8] sm:$0xff]
        %v4552 = vld [vmem:[%s376 + $0x2e0] sm:$0xff]
        %v4553 = vld [vmem:[%s376 + $0x2e8] sm:$0xff]
        %v4554 = vld [vmem:[%s376 + $0x2f0] sm:$0xff]
        %v4555 = vld [vmem:[%s376 + $0x2f8] sm:$0xff]
        %v4556 = vld [vmem:[%s376 + $0x300] sm:$0xff]
        %v4557 = vld [vmem:[%s376 + $0x308] sm:$0xff]
        %v4558 = vld [vmem:[%s376 + $0x310] sm:$0xff]
        %v4559 = vld [vmem:[%s376 + $0x318] sm:$0xff]
        %v4560 = vld [vmem:[%s376 + $0x320] sm:$0xff]
        %v4561 = vld [vmem:[%s376 + $0x328] sm:$0xff]
        %v4562 = vld [vmem:[%s376 + $0x330] sm:$0xff]
        %v4563 = vld [vmem:[%s376 + $0x338] sm:$0xff]
        %v4564 = vld [vmem:[%s376 + $0x340] sm:$0xff]
        %v4565 = vld [vmem:[%s376 + $0x348] sm:$0xff]
        %v4566 = vld [vmem:[%s376 + $0x350] sm:$0xff]
        %v4567 = vld [vmem:[%s376 + $0x358] sm:$0xff]
        %v4568 = vld [vmem:[%s376 + $0x360] sm:$0xff]
        %v4569 = vld [vmem:[%s376 + $0x368] sm:$0xff]
        %v4570 = vld [vmem:[%s376 + $0x370] sm:$0xff]
        %v4571 = vld [vmem:[%s376 + $0x378] sm:$0xff]
        %v4572 = vld [vmem:[%s376 + $0x380] sm:$0xff]
        %v4573 = vld [vmem:[%s376 + $0x388] sm:$0xff]
        %v4574 = vld [vmem:[%s376 + $0x390] sm:$0xff]
        %v4575 = vld [vmem:[%s376 + $0x398] sm:$0xff]
        %v4576 = vld [vmem:[%s376 + $0x3a0] sm:$0xff]
        %v4577 = vld [vmem:[%s376 + $0x3a8] sm:$0xff]
        %v4578 = vld [vmem:[%s376 + $0x3b0] sm:$0xff]
        %v4579 = vld [vmem:[%s376 + $0x3b8] sm:$0xff]
        %v4580 = vld [vmem:[%s376 + $0x3c0] sm:$0xff]
        %v4581 = vld [vmem:[%s376 + $0x3c8] sm:$0xff]
        %v4582 = vld [vmem:[%s376 + $0x3d0] sm:$0xff]
        %v4583 = vld [vmem:[%s376 + $0x3d8] sm:$0xff]
        %v4584 = vld [vmem:[%s376 + $0x3e0] sm:$0xff]
        %v4585 = vld [vmem:[%s376 + $0x3e8] sm:$0xff]
        %v4586 = vld [vmem:[%s376 + $0x3f0] sm:$0xff]
        %v4587 = vld [vmem:[%s376 + $0x3f8] sm:$0xff]
        %v4588 = vld [vmem:[%s376 + $0x400] sm:$0xff]
        %v4589 = vld [vmem:[%s376 + $0x408] sm:$0xff]
        %v4590 = vld [vmem:[%s376 + $0x410] sm:$0xff]
        %v4591 = vld [vmem:[%s376 + $0x418] sm:$0xff]
        %v4592 = vld [vmem:[%s376 + $0x420] sm:$0xff]
        %v4593 = vld [vmem:[%s376 + $0x428] sm:$0xff]
        %v4594 = vld [vmem:[%s376 + $0x430] sm:$0xff]
        %v4595 = vld [vmem:[%s376 + $0x438] sm:$0xff]
        %v4596 = vld [vmem:[%s376 + $0x440] sm:$0xff]
        %v4597 = vld [vmem:[%s376 + $0x448] sm:$0xff]
        %v4598 = vld [vmem:[%s376 + $0x450] sm:$0xff]
        %v4599 = vld [vmem:[%s376 + $0x458] sm:$0xff]
        %v4600 = vld [vmem:[%s376 + $0x460] sm:$0xff]
        %v4601 = vld [vmem:[%s376 + $0x468] sm:$0xff]
        %v4602 = vld [vmem:[%s376 + $0x470] sm:$0xff]
        %v4603 = vld [vmem:[%s376 + $0x478] sm:$0xff]
        %v4604 = vld [vmem:[%s376 + $0x480] sm:$0xff]
        %v4605 = vld [vmem:[%s376 + $0x488] sm:$0xff]
        %v4606 = vld [vmem:[%s376 + $0x490] sm:$0xff]
        %v4607 = vld [vmem:[%s376 + $0x498] sm:$0xff]
        %v4608 = vld [vmem:[%s376 + $0x4a0] sm:$0xff]
        %v4609 = vld [vmem:[%s376 + $0x4a8] sm:$0xff]
        %v4610 = vld [vmem:[%s376 + $0x4b0] sm:$0xff]
        %v4611 = vld [vmem:[%s376 + $0x4b8] sm:$0xff]
        %v4612 = vld [vmem:[%s376 + $0x4c0] sm:$0xff]
        %v4613 = vld [vmem:[%s376 + $0x4c8] sm:$0xff]
        %v4614 = vld [vmem:[%s376 + $0x4d0] sm:$0xff]
        %v4615 = vld [vmem:[%s376 + $0x4d8] sm:$0xff]
        %v4616 = vld [vmem:[%s376 + $0x4e0] sm:$0xff]
        %v4617 = vld [vmem:[%s376 + $0x4e8] sm:$0xff]
        %v4618 = vld [vmem:[%s376 + $0x4f0] sm:$0xff]
        %v4619 = vld [vmem:[%s376 + $0x4f8] sm:$0xff]
        %v4620 = vld [vmem:[%s376 + $0x500] sm:$0xff]
        %v4621 = vld [vmem:[%s376 + $0x508] sm:$0xff]
        %v4622 = vld [vmem:[%s376 + $0x510] sm:$0xff]
        %v4623 = vld [vmem:[%s376 + $0x518] sm:$0xff]
        %v4624 = vld [vmem:[%s376 + $0x520] sm:$0xff]
        %v4625 = vld [vmem:[%s376 + $0x528] sm:$0xff]
        %v4626 = vld [vmem:[%s376 + $0x530] sm:$0xff]
        %v4627 = vld [vmem:[%s376 + $0x538] sm:$0xff]
        %v4628 = vld [vmem:[%s376 + $0x540] sm:$0xff]
        %v4629 = vld [vmem:[%s376 + $0x548] sm:$0xff]
        %v4630 = vld [vmem:[%s376 + $0x550] sm:$0xff]
        %v4631 = vld [vmem:[%s376 + $0x558] sm:$0xff]
        %v4632 = vld [vmem:[%s376 + $0x560] sm:$0xff]
        %v4633 = vld [vmem:[%s376 + $0x568] sm:$0xff]
        %v4634 = vld [vmem:[%s376 + $0x570] sm:$0xff]
        %v4635 = vld [vmem:[%s376 + $0x578] sm:$0xff]
        %v4636 = vld [vmem:[%s376 + $0x580] sm:$0xff]
        %v4637 = vld [vmem:[%s376 + $0x588] sm:$0xff]
        %v4638 = vld [vmem:[%s376 + $0x590] sm:$0xff]
        %v4639 = vld [vmem:[%s376 + $0x598] sm:$0xff]
        %v4640 = vld [vmem:[%s376 + $0x5a0] sm:$0xff]
        %v4641 = vld [vmem:[%s376 + $0x5a8] sm:$0xff]
        %v4642 = vld [vmem:[%s376 + $0x5b0] sm:$0xff]
        %v4643 = vld [vmem:[%s376 + $0x5b8] sm:$0xff]
        %v4644 = vld [vmem:[%s376 + $0x5c0] sm:$0xff]
        %v4645 = vld [vmem:[%s376 + $0x5c8] sm:$0xff]
        %v4646 = vld [vmem:[%s376 + $0x5d0] sm:$0xff]
        %v4647 = vld [vmem:[%s376 + $0x5d8] sm:$0xff]
        %v4648 = vld [vmem:[%s376 + $0x5e0] sm:$0xff]
        %v4649 = vld [vmem:[%s376 + $0x5e8] sm:$0xff]
        %v4650 = vld [vmem:[%s376 + $0x5f0] sm:$0xff]
        %v4651 = vld [vmem:[%s376 + $0x5f8] sm:$0xff]
        %v4652 = vld [vmem:[%s376 + $0x600] sm:$0xff]
        %v4653 = vld [vmem:[%s376 + $0x608] sm:$0xff]
        %v4654 = vld [vmem:[%s376 + $0x610] sm:$0xff]
        %v4655 = vld [vmem:[%s376 + $0x618] sm:$0xff]
        %v4656 = vld [vmem:[%s376 + $0x620] sm:$0xff]
        %v4657 = vld [vmem:[%s376 + $0x628] sm:$0xff]
        %v4658 = vld [vmem:[%s376 + $0x630] sm:$0xff]
        %v4659 = vld [vmem:[%s376 + $0x638] sm:$0xff]
        %v4660 = vld [vmem:[%s376 + $0x640] sm:$0xff]
        %v4661 = vld [vmem:[%s376 + $0x648] sm:$0xff]
        %v4662 = vld [vmem:[%s376 + $0x650] sm:$0xff]
        %v4663 = vld [vmem:[%s376 + $0x658] sm:$0xff]
        %v4664 = vld [vmem:[%s376 + $0x660] sm:$0xff]
        %v4665 = vld [vmem:[%s376 + $0x668] sm:$0xff]
        %v4666 = vld [vmem:[%s376 + $0x670] sm:$0xff]
        %v4667 = vld [vmem:[%s376 + $0x678] sm:$0xff]
        %v4668 = vld [vmem:[%s376 + $0x680] sm:$0xff]
        %v4669 = vld [vmem:[%s376 + $0x688] sm:$0xff]
        %v4670 = vld [vmem:[%s376 + $0x690] sm:$0xff]
        %v4671 = vld [vmem:[%s376 + $0x698] sm:$0xff]
        %v4672 = vld [vmem:[%s376 + $0x6a0] sm:$0xff]
        %v4673 = vld [vmem:[%s376 + $0x6a8] sm:$0xff]
        %v4674 = vld [vmem:[%s376 + $0x6b0] sm:$0xff]
        %v4675 = vld [vmem:[%s376 + $0x6b8] sm:$0xff]
        %v4676 = vld [vmem:[%s376 + $0x6c0] sm:$0xff]
        %v4677 = vld [vmem:[%s376 + $0x6c8] sm:$0xff]
        %v4678 = vld [vmem:[%s376 + $0x6d0] sm:$0xff]
        %v4679 = vld [vmem:[%s376 + $0x6d8] sm:$0xff]
        %v4680 = vld [vmem:[%s376 + $0x6e0] sm:$0xff]
        %v4681 = vld [vmem:[%s376 + $0x6e8] sm:$0xff]
        %v4682 = vld [vmem:[%s376 + $0x6f0] sm:$0xff]
        %v4683 = vld [vmem:[%s376 + $0x6f8] sm:$0xff]
        %v4684 = vld [vmem:[%s376 + $0x700] sm:$0xff]
        %v4685 = vld [vmem:[%s376 + $0x708] sm:$0xff]
        %v4686 = vld [vmem:[%s376 + $0x710] sm:$0xff]
        %v4687 = vld [vmem:[%s376 + $0x718] sm:$0xff]
        %v4688 = vld [vmem:[%s376 + $0x720] sm:$0xff]
        %v4689 = vld [vmem:[%s376 + $0x728] sm:$0xff]
        %v4690 = vld [vmem:[%s376 + $0x730] sm:$0xff]
        %v4691 = vld [vmem:[%s376 + $0x738] sm:$0xff]
        %v4692 = vld [vmem:[%s376 + $0x740] sm:$0xff]
        %v4693 = vld [vmem:[%s376 + $0x748] sm:$0xff]
        %v4694 = vld [vmem:[%s376 + $0x750] sm:$0xff]
        %v4695 = vld [vmem:[%s376 + $0x758] sm:$0xff]
        %v4696 = vld [vmem:[%s376 + $0x760] sm:$0xff]
        %v4697 = vld [vmem:[%s376 + $0x768] sm:$0xff]
        %v4698 = vld [vmem:[%s376 + $0x770] sm:$0xff]
        %v4699 = vld [vmem:[%s376 + $0x778] sm:$0xff]
        %v4700 = vld [vmem:[%s376 + $0x780] sm:$0xff]
        %v4701 = vld [vmem:[%s376 + $0x788] sm:$0xff]
        %v4702 = vld [vmem:[%s376 + $0x790] sm:$0xff]
        %v4703 = vld [vmem:[%s376 + $0x798] sm:$0xff]
        %v4704 = vld [vmem:[%s376 + $0x7a0] sm:$0xff]
        %v4705 = vld [vmem:[%s376 + $0x7a8] sm:$0xff]
        %v4706 = vld [vmem:[%s376 + $0x7b0] sm:$0xff]
        %v4707 = vld [vmem:[%s376 + $0x7b8] sm:$0xff]
        %v4708 = vld [vmem:[%s376 + $0x7c0] sm:$0xff]
        %v4709 = vld [vmem:[%s376 + $0x7c8] sm:$0xff]
        %v4710 = vld [vmem:[%s376 + $0x7d0] sm:$0xff]
        %v4711 = vld [vmem:[%s376 + $0x7d8] sm:$0xff]
        %v4712 = vld [vmem:[%s376 + $0x7e0] sm:$0xff]
        %v4713 = vld [vmem:[%s376 + $0x7e8] sm:$0xff]
        %v4714 = vld [vmem:[%s376 + $0x7f0] sm:$0xff]
        %v4715 = vld [vmem:[%s376 + $0x7f8] sm:$0xff]
        %v4716 = vld [vmem:[%s376 + $0x800] sm:$0xff]
        %v4717 = vld [vmem:[%s376 + $0x808] sm:$0xff]
        %v4718 = vld [vmem:[%s376 + $0x810] sm:$0xff]
        %v4719 = vld [vmem:[%s376 + $0x818] sm:$0xff]
        %v4720 = vld [vmem:[%s376 + $0x820] sm:$0xff]
        %v4721 = vld [vmem:[%s376 + $0x828] sm:$0xff]
        %v4722 = vld [vmem:[%s376 + $0x830] sm:$0xff]
        %v4723 = vld [vmem:[%s376 + $0x838] sm:$0xff]
        %v4724 = vld [vmem:[%s376 + $0x840] sm:$0xff]
        %v4725 = vld [vmem:[%s376 + $0x848] sm:$0xff]
        %v4726 = vld [vmem:[%s376 + $0x850] sm:$0xff]
        %v4727 = vld [vmem:[%s376 + $0x858] sm:$0xff]
        %v4728 = vld [vmem:[%s376 + $0x860] sm:$0xff]
        %v4729 = vld [vmem:[%s376 + $0x868] sm:$0xff]
        %v4730 = vld [vmem:[%s376 + $0x870] sm:$0xff]
        %v4731 = vld [vmem:[%s376 + $0x878] sm:$0xff]
        %v4732 = vld [vmem:[%s376 + $0x880] sm:$0xff]
        %v4733 = vld [vmem:[%s376 + $0x888] sm:$0xff]
        %v4734 = vld [vmem:[%s376 + $0x890] sm:$0xff]
        %v4735 = vld [vmem:[%s376 + $0x898] sm:$0xff]
        %v4736 = vld [vmem:[%s376 + $0x8a0] sm:$0xff]
        %v4737 = vld [vmem:[%s376 + $0x8a8] sm:$0xff]
        %v4738 = vld [vmem:[%s376 + $0x8b0] sm:$0xff]
        %v4739 = vld [vmem:[%s376 + $0x8b8] sm:$0xff]
        %v4740 = vld [vmem:[%s376 + $0x8c0] sm:$0xff]
        %v4741 = vld [vmem:[%s376 + $0x8c8] sm:$0xff]
        %v4742 = vld [vmem:[%s376 + $0x8d0] sm:$0xff]
        %v4743 = vld [vmem:[%s376 + $0x8d8] sm:$0xff]
        %v4744 = vld [vmem:[%s376 + $0x8e0] sm:$0xff]
        %v4745 = vld [vmem:[%s376 + $0x8e8] sm:$0xff]
        %v4746 = vld [vmem:[%s376 + $0x8f0] sm:$0xff]
        %v4747 = vld [vmem:[%s376 + $0x8f8] sm:$0xff]
        %v4748 = vld [vmem:[%s376 + $0x900] sm:$0xff]
        %v4749 = vld [vmem:[%s376 + $0x908] sm:$0xff]
        %v4750 = vld [vmem:[%s376 + $0x910] sm:$0xff]
        %v4751 = vld [vmem:[%s376 + $0x918] sm:$0xff]
        %v4752 = vld [vmem:[%s376 + $0x920] sm:$0xff]
        %v4753 = vld [vmem:[%s376 + $0x928] sm:$0xff]
        %v4754 = vld [vmem:[%s376 + $0x930] sm:$0xff]
        %v4755 = vld [vmem:[%s376 + $0x938] sm:$0xff]
        %v4756 = vld [vmem:[%s376 + $0x940] sm:$0xff]
        %v4757 = vld [vmem:[%s376 + $0x948] sm:$0xff]
        %v4758 = vld [vmem:[%s376 + $0x950] sm:$0xff]
        %v4759 = vld [vmem:[%s376 + $0x958] sm:$0xff]
        %v4760 = vld [vmem:[%s376 + $0x960] sm:$0xff]
        %v4761 = vld [vmem:[%s376 + $0x968] sm:$0xff]
        %v4762 = vld [vmem:[%s376 + $0x970] sm:$0xff]
        %v4763 = vld [vmem:[%s376 + $0x978] sm:$0xff]
        %v4764 = vld [vmem:[%s376 + $0x980] sm:$0xff]
        %v4765 = vld [vmem:[%s376 + $0x988] sm:$0xff]
        %v4766 = vld [vmem:[%s376 + $0x990] sm:$0xff]
        %v4767 = vld [vmem:[%s376 + $0x998] sm:$0xff]
        %v4768 = vld [vmem:[%s376 + $0x9a0] sm:$0xff]
        %v4769 = vld [vmem:[%s376 + $0x9a8] sm:$0xff]
        %v4770 = vld [vmem:[%s376 + $0x9b0] sm:$0xff]
        %v4771 = vld [vmem:[%s376 + $0x9b8] sm:$0xff]
        %v4772 = vld [vmem:[%s376 + $0x9c0] sm:$0xff]
        %v4773 = vld [vmem:[%s376 + $0x9c8] sm:$0xff]
        %v4774 = vld [vmem:[%s376 + $0x9d0] sm:$0xff]
        %v4775 = vld [vmem:[%s376 + $0x9d8] sm:$0xff]
        %v4776 = vld [vmem:[%s376 + $0x9e0] sm:$0xff]
        %v4777 = vld [vmem:[%s376 + $0x9e8] sm:$0xff]
        %v4778 = vld [vmem:[%s376 + $0x9f0] sm:$0xff]
        %v4779 = vld [vmem:[%s376 + $0x9f8] sm:$0xff]
        %v4780 = vld [vmem:[%s376 + $0xa00] sm:$0xff]
        %v4781 = vld [vmem:[%s376 + $0xa08] sm:$0xff]
        %v4782 = vld [vmem:[%s376 + $0xa10] sm:$0xff]
        %v4783 = vld [vmem:[%s376 + $0xa18] sm:$0xff]
        %v4784 = vld [vmem:[%s376 + $0xa20] sm:$0xff]
        %v4785 = vld [vmem:[%s376 + $0xa28] sm:$0xff]
        %v4786 = vld [vmem:[%s376 + $0xa30] sm:$0xff]
        %v4787 = vld [vmem:[%s376 + $0xa38] sm:$0xff]
        %v4788 = vld [vmem:[%s376 + $0xa40] sm:$0xff]
        %v4789 = vld [vmem:[%s376 + $0xa48] sm:$0xff]
        %v4790 = vld [vmem:[%s376 + $0xa50] sm:$0xff]
        %v4791 = vld [vmem:[%s376 + $0xa58] sm:$0xff]
        %v4792 = vld [vmem:[%s376 + $0xa60] sm:$0xff]
        %v4793 = vld [vmem:[%s376 + $0xa68] sm:$0xff]
        %v4794 = vld [vmem:[%s376 + $0xa70] sm:$0xff]
        %v4795 = vld [vmem:[%s376 + $0xa78] sm:$0xff]
        %v4796 = vld [vmem:[%s376 + $0xa80] sm:$0xff]
        %v4797 = vld [vmem:[%s376 + $0xa88] sm:$0xff]
        %v4798 = vld [vmem:[%s376 + $0xa90] sm:$0xff]
        %v4799 = vld [vmem:[%s376 + $0xa98] sm:$0xff]
        %v4800 = vld [vmem:[%s376 + $0xaa0] sm:$0xff]
        %v4801 = vld [vmem:[%s376 + $0xaa8] sm:$0xff]
        %v4802 = vld [vmem:[%s376 + $0xab0] sm:$0xff]
        %v4803 = vld [vmem:[%s376 + $0xab8] sm:$0xff]
        %v4804 = vld [vmem:[%s376 + $0xac0] sm:$0xff]
        %v4805 = vld [vmem:[%s376 + $0xac8] sm:$0xff]
        %v4806 = vld [vmem:[%s376 + $0xad0] sm:$0xff]
        %v4807 = vld [vmem:[%s376 + $0xad8] sm:$0xff]
        %v4808 = vld [vmem:[%s376 + $0xae0] sm:$0xff]
        %v4809 = vld [vmem:[%s376 + $0xae8] sm:$0xff]
        %v4810 = vld [vmem:[%s376 + $0xaf0] sm:$0xff]
        %v4811 = vld [vmem:[%s376 + $0xaf8] sm:$0xff]
        %v4812 = vld [vmem:[%s376 + $0xb00] sm:$0xff]
        %v4813 = vld [vmem:[%s376 + $0xb08] sm:$0xff]
        %v4814 = vld [vmem:[%s376 + $0xb10] sm:$0xff]
        %v4815 = vld [vmem:[%s376 + $0xb18] sm:$0xff]
        %v4816 = vld [vmem:[%s376 + $0xb20] sm:$0xff]
        %v4817 = vld [vmem:[%s376 + $0xb28] sm:$0xff]
        %v4818 = vld [vmem:[%s376 + $0xb30] sm:$0xff]
        %v4819 = vld [vmem:[%s376 + $0xb38] sm:$0xff]
        %v4820 = vld [vmem:[%s376 + $0xb40] sm:$0xff]
        %v4821 = vld [vmem:[%s376 + $0xb48] sm:$0xff]
        %v4822 = vld [vmem:[%s376 + $0xb50] sm:$0xff]
        %v4823 = vld [vmem:[%s376 + $0xb58] sm:$0xff]
        %v4824 = vld [vmem:[%s376 + $0xb60] sm:$0xff]
        %v4825 = vld [vmem:[%s376 + $0xb68] sm:$0xff]
        %v4826 = vld [vmem:[%s376 + $0xb70] sm:$0xff]
        %v4827 = vld [vmem:[%s376 + $0xb78] sm:$0xff]
        %v4828 = vld [vmem:[%s376 + $0xb80] sm:$0xff]
        %v4829 = vld [vmem:[%s376 + $0xb88] sm:$0xff]
        %v4830 = vld [vmem:[%s376 + $0xb90] sm:$0xff]
        %v4831 = vld [vmem:[%s376 + $0xb98] sm:$0xff]
        %v4832 = vld [vmem:[%s376 + $0xba0] sm:$0xff]
        %v4833 = vld [vmem:[%s376 + $0xba8] sm:$0xff]
        %v4834 = vld [vmem:[%s376 + $0xbb0] sm:$0xff]
        %v4835 = vld [vmem:[%s376 + $0xbb8] sm:$0xff]
        %v4836 = vld [vmem:[%s376 + $0xbc0] sm:$0xff]
        %v4837 = vld [vmem:[%s376 + $0xbc8] sm:$0xff]
        %v4838 = vld [vmem:[%s376 + $0xbd0] sm:$0xff]
        %v4839 = vld [vmem:[%s376 + $0xbd8] sm:$0xff]
        %v4840 = vld [vmem:[%s376 + $0xbe0] sm:$0xff]
        %v4841 = vld [vmem:[%s376 + $0xbe8] sm:$0xff]
        %v4842 = vld [vmem:[%s376 + $0xbf0] sm:$0xff]
        %v4843 = vld [vmem:[%s376 + $0xbf8] sm:$0xff]
        %v4844 = vld [vmem:[%s376 + $0xc00] sm:$0xff]
        %v4845 = vld [vmem:[%s376 + $0xc08] sm:$0xff]
        %v4846 = vld [vmem:[%s376 + $0xc10] sm:$0xff]
        %v4847 = vld [vmem:[%s376 + $0xc18] sm:$0xff]
        %v4848 = vld [vmem:[%s376 + $0xc20] sm:$0xff]
        %v4849 = vld [vmem:[%s376 + $0xc28] sm:$0xff]
        %v4850 = vld [vmem:[%s376 + $0xc30] sm:$0xff]
        %v4851 = vld [vmem:[%s376 + $0xc38] sm:$0xff]
        %v4852 = vld [vmem:[%s376 + $0xc40] sm:$0xff]
        %v4853 = vld [vmem:[%s376 + $0xc48] sm:$0xff]
        %v4854 = vld [vmem:[%s376 + $0xc50] sm:$0xff]
        %v4855 = vld [vmem:[%s376 + $0xc58] sm:$0xff]
        %v4856 = vld [vmem:[%s376 + $0xc60] sm:$0xff]
        %v4857 = vld [vmem:[%s376 + $0xc68] sm:$0xff]
        %v4858 = vld [vmem:[%s376 + $0xc70] sm:$0xff]
        %v4859 = vld [vmem:[%s376 + $0xc78] sm:$0xff]
        %v4860 = vld [vmem:[%s376 + $0xc80] sm:$0xff]
        %v4861 = vld [vmem:[%s376 + $0xc88] sm:$0xff]
        %v4862 = vld [vmem:[%s376 + $0xc90] sm:$0xff]
        %v4863 = vld [vmem:[%s376 + $0xc98] sm:$0xff]
        %v4864 = vld [vmem:[%s376 + $0xca0] sm:$0xff]
        %v4865 = vld [vmem:[%s376 + $0xca8] sm:$0xff]
        %v4866 = vld [vmem:[%s376 + $0xcb0] sm:$0xff]
        %v4867 = vld [vmem:[%s376 + $0xcb8] sm:$0xff]
        %v4868 = vld [vmem:[%s376 + $0xcc0] sm:$0xff]
        %v4869 = vld [vmem:[%s376 + $0xcc8] sm:$0xff]
        %v4870 = vld [vmem:[%s376 + $0xcd0] sm:$0xff]
        %v4871 = vld [vmem:[%s376 + $0xcd8] sm:$0xff]
        %v4872 = vld [vmem:[%s376 + $0xce0] sm:$0xff]
        %v4873 = vld [vmem:[%s376 + $0xce8] sm:$0xff]
        %v4874 = vld [vmem:[%s376 + $0xcf0] sm:$0xff]
        %v4875 = vld [vmem:[%s376 + $0xcf8] sm:$0xff]
        %v4876 = vld [vmem:[%s376 + $0xd00] sm:$0xff]
        %v4877 = vld [vmem:[%s376 + $0xd08] sm:$0xff]
        %v4878 = vld [vmem:[%s376 + $0xd10] sm:$0xff]
        %v4879 = vld [vmem:[%s376 + $0xd18] sm:$0xff]
        %v4880 = vld [vmem:[%s376 + $0xd20] sm:$0xff]
        %v4881 = vld [vmem:[%s376 + $0xd28] sm:$0xff]
        %v4882 = vld [vmem:[%s376 + $0xd30] sm:$0xff]
        %v4883 = vld [vmem:[%s376 + $0xd38] sm:$0xff]
        %v4884 = vld [vmem:[%s376 + $0xd40] sm:$0xff]
        %v4885 = vld [vmem:[%s376 + $0xd48] sm:$0xff]
        %v4886 = vld [vmem:[%s376 + $0xd50] sm:$0xff]
        %v4887 = vld [vmem:[%s376 + $0xd58] sm:$0xff]
        %v4888 = vld [vmem:[%s376 + $0xd60] sm:$0xff]
        %v4889 = vld [vmem:[%s376 + $0xd68] sm:$0xff]
        %v4890 = vld [vmem:[%s376 + $0xd70] sm:$0xff]
        %v4891 = vld [vmem:[%s376 + $0xd78] sm:$0xff]
        %v4892 = vld [vmem:[%s376 + $0xd80] sm:$0xff]
        %v4893 = vld [vmem:[%s376 + $0xd88] sm:$0xff]
        %v4894 = vld [vmem:[%s376 + $0xd90] sm:$0xff]
        %v4895 = vld [vmem:[%s376 + $0xd98] sm:$0xff]
        %v4896 = vld [vmem:[%s376 + $0xda0] sm:$0xff]
        %v4897 = vld [vmem:[%s376 + $0xda8] sm:$0xff]
        %v4898 = vld [vmem:[%s376 + $0xdb0] sm:$0xff]
        %v4899 = vld [vmem:[%s376 + $0xdb8] sm:$0xff]
        %v4900 = vld [vmem:[%s376 + $0xdc0] sm:$0xff]
        %v4901 = vld [vmem:[%s376 + $0xdc8] sm:$0xff]
        %v4902 = vld [vmem:[%s376 + $0xdd0] sm:$0xff]
        %v4903 = vld [vmem:[%s376 + $0xdd8] sm:$0xff]
        %v4904 = vld [vmem:[%s376 + $0xde0] sm:$0xff]
        %v4905 = vld [vmem:[%s376 + $0xde8] sm:$0xff]
        %v4906 = vld [vmem:[%s376 + $0xdf0] sm:$0xff]
        %v4907 = vld [vmem:[%s376 + $0xdf8] sm:$0xff]
        %v4908 = vld [vmem:[%s376 + $0xe00] sm:$0xff]
        %v4909 = vld [vmem:[%s376 + $0xe08] sm:$0xff]
        %v4910 = vld [vmem:[%s376 + $0xe10] sm:$0xff]
        %v4911 = vld [vmem:[%s376 + $0xe18] sm:$0xff]
        %v4912 = vld [vmem:[%s376 + $0xe20] sm:$0xff]
        %v4913 = vld [vmem:[%s376 + $0xe28] sm:$0xff]
        %v4914 = vld [vmem:[%s376 + $0xe30] sm:$0xff]
        %v4915 = vld [vmem:[%s376 + $0xe38] sm:$0xff]
        %v4916 = vld [vmem:[%s376 + $0xe40] sm:$0xff]
        %v4917 = vld [vmem:[%s376 + $0xe48] sm:$0xff]
        %v4918 = vld [vmem:[%s376 + $0xe50] sm:$0xff]
        %v4919 = vld [vmem:[%s376 + $0xe58] sm:$0xff]
        %v4920 = vld [vmem:[%s376 + $0xe60] sm:$0xff]
        %v4921 = vld [vmem:[%s376 + $0xe68] sm:$0xff]
        %v4922 = vld [vmem:[%s376 + $0xe70] sm:$0xff]
        %v4923 = vld [vmem:[%s376 + $0xe78] sm:$0xff]
        %v4924 = vld [vmem:[%s376 + $0xe80] sm:$0xff]
        %v4925 = vld [vmem:[%s376 + $0xe88] sm:$0xff]
        %v4926 = vld [vmem:[%s376 + $0xe90] sm:$0xff]
        %v4927 = vld [vmem:[%s376 + $0xe98] sm:$0xff]
        %v4928 = vld [vmem:[%s376 + $0xea0] sm:$0xff]
        %v4929 = vld [vmem:[%s376 + $0xea8] sm:$0xff]
        %v4930 = vld [vmem:[%s376 + $0xeb0] sm:$0xff]
        %v4931 = vld [vmem:[%s376 + $0xeb8] sm:$0xff]
        %v4932 = vld [vmem:[%s376 + $0xec0] sm:$0xff]
        %v4933 = vld [vmem:[%s376 + $0xec8] sm:$0xff]
        %v4934 = vld [vmem:[%s376 + $0xed0] sm:$0xff]
        %v4935 = vld [vmem:[%s376 + $0xed8] sm:$0xff]
        %v4936 = vld [vmem:[%s376 + $0xee0] sm:$0xff]
        %v4937 = vld [vmem:[%s376 + $0xee8] sm:$0xff]
        %v4938 = vld [vmem:[%s376 + $0xef0] sm:$0xff]
        %v4939 = vld [vmem:[%s376 + $0xef8] sm:$0xff]
        %v4940 = vld [vmem:[%s376 + $0xf00] sm:$0xff]
        %v4941 = vld [vmem:[%s376 + $0xf08] sm:$0xff]
        %v4942 = vld [vmem:[%s376 + $0xf10] sm:$0xff]
        %v4943 = vld [vmem:[%s376 + $0xf18] sm:$0xff]
        %v4944 = vld [vmem:[%s376 + $0xf20] sm:$0xff]
        %v4945 = vld [vmem:[%s376 + $0xf28] sm:$0xff]
        %v4946 = vld [vmem:[%s376 + $0xf30] sm:$0xff]
        %v4947 = vld [vmem:[%s376 + $0xf38] sm:$0xff]
        %v4948 = vld [vmem:[%s376 + $0xf40] sm:$0xff]
        %v4949 = vld [vmem:[%s376 + $0xf48] sm:$0xff]
        %v4950 = vld [vmem:[%s376 + $0xf50] sm:$0xff]
        %v4951 = vld [vmem:[%s376 + $0xf58] sm:$0xff]
        %v4952 = vld [vmem:[%s376 + $0xf60] sm:$0xff]
        %v4953 = vld [vmem:[%s376 + $0xf68] sm:$0xff]
        %v4954 = vld [vmem:[%s376 + $0xf70] sm:$0xff]
        %v4955 = vld [vmem:[%s376 + $0xf78] sm:$0xff]
        %v4956 = vld [vmem:[%s376 + $0xf80] sm:$0xff]
        %v4957 = vld [vmem:[%s376 + $0xf88] sm:$0xff]
        %v4958 = vld [vmem:[%s376 + $0xf90] sm:$0xff]
        %v4959 = vld [vmem:[%s376 + $0xf98] sm:$0xff]
        %v4960 = vld [vmem:[%s376 + $0xfa0] sm:$0xff]
        %v4961 = vld [vmem:[%s376 + $0xfa8] sm:$0xff]
        %v4962 = vld [vmem:[%s376 + $0xfb0] sm:$0xff]
        %v4963 = vld [vmem:[%s376 + $0xfb8] sm:$0xff]
        %v4964 = vld [vmem:[%s376 + $0xfc0] sm:$0xff]
        %v4965 = vld [vmem:[%s376 + $0xfc8] sm:$0xff]
        %v4966 = vld [vmem:[%s376 + $0xfd0] sm:$0xff]
        %v4967 = vld [vmem:[%s376 + $0xfd8] sm:$0xff]
        %v4968 = vld [vmem:[%s376 + $0xfe0] sm:$0xff]
        %v4969 = vld [vmem:[%s376 + $0xfe8] sm:$0xff]
        %v4970 = vld [vmem:[%s376 + $0xff0] sm:$0xff]
        %v4971 = vld [vmem:[%s376 + $0xff8] sm:$0xff]
        %4973 = vst [vmem:[#allocation1] ss:$9 sm:$0xff] %v4457
        %v4974 = vld [vmem:[#allocation1] sm:$0xff]
        %v4975 = vld [vmem:[#allocation1 + $0x9] sm:$0xff]
        %v4976 = vld [vmem:[#allocation1 + $0x12] sm:$0xff]
        %v4977 = vld [vmem:[#allocation1 + $0x1b] sm:$0xff]
        %v4978 = vld [vmem:[#allocation1 + $0x24] sm:$0xff]
        %v4979 = vld [vmem:[#allocation1 + $0x2d] sm:$0xff]
        %v4980 = vld [vmem:[#allocation1 + $0x36] sm:$0xff]
        %v4981 = vld [vmem:[#allocation1 + $0x3f] sm:$0xff]
        %4983 = vst [vmem:[#allocation1] ss:$9 sm:$0xff] %v4458
        %v4984 = vld [vmem:[#allocation1] sm:$0xff]
        %v4985 = vld [vmem:[#allocation1 + $0x9] sm:$0xff]
        %v4986 = vld [vmem:[#allocation1 + $0x12] sm:$0xff]
        %v4987 = vld [vmem:[#allocation1 + $0x1b] sm:$0xff]
        %v4988 = vld [vmem:[#allocation1 + $0x24] sm:$0xff]
        %v4989 = vld [vmem:[#allocation1 + $0x2d] sm:$0xff]
        %v4990 = vld [vmem:[#allocation1 + $0x36] sm:$0xff]
        %v4991 = vld [vmem:[#allocation1 + $0x3f] sm:$0xff]
        %v5520 = vunpack.c.l.b16 %v4460
        %v5521 = vunpack.c.h.b16 %v4460
        %v5522 = vunpack.c.l.b16 %v4461
        %v5523 = vunpack.c.h.b16 %v4461
        %v5524 = vunpack.c.l.b16 %v4462
        %v5525 = vunpack.c.h.b16 %v4462
        %v5526 = vunpack.c.l.b16 %v4463
        %v5527 = vunpack.c.h.b16 %v4463
        %v5528 = vunpack.c.l.b16 %v4464
        %v5529 = vunpack.c.h.b16 %v4464
        %v5530 = vunpack.c.l.b16 %v4465
        %v5531 = vunpack.c.h.b16 %v4465
        %v5532 = vunpack.c.l.b16 %v4466
        %v5533 = vunpack.c.h.b16 %v4466
        %v5534 = vunpack.c.l.b16 %v4467
        %v5535 = vunpack.c.h.b16 %v4467
        %v5536 = vunpack.c.l.b16 %v4468
        %v5537 = vunpack.c.h.b16 %v4468
        %v5538 = vunpack.c.l.b16 %v4469
        %v5539 = vunpack.c.h.b16 %v4469
        %v5540 = vunpack.c.l.b16 %v4470
        %v5541 = vunpack.c.h.b16 %v4470
        %v5542 = vunpack.c.l.b16 %v4471
        %v5543 = vunpack.c.h.b16 %v4471
        %v5544 = vunpack.c.l.b16 %v4472
        %v5545 = vunpack.c.h.b16 %v4472
        %v5546 = vunpack.c.l.b16 %v4473
        %v5547 = vunpack.c.h.b16 %v4473
        %v5548 = vunpack.c.l.b16 %v4474
        %v5549 = vunpack.c.h.b16 %v4474
        %v5550 = vunpack.c.l.b16 %v4475
        %v5551 = vunpack.c.h.b16 %v4475
        %v5552 = vunpack.c.l.b16 %v4476
        %v5553 = vunpack.c.h.b16 %v4476
        %v5554 = vunpack.c.l.b16 %v4477
        %v5555 = vunpack.c.h.b16 %v4477
        %v5556 = vunpack.c.l.b16 %v4478
        %v5557 = vunpack.c.h.b16 %v4478
        %v5558 = vunpack.c.l.b16 %v4479
        %v5559 = vunpack.c.h.b16 %v4479
        %v5560 = vunpack.c.l.b16 %v4480
        %v5561 = vunpack.c.h.b16 %v4480
        %v5562 = vunpack.c.l.b16 %v4481
        %v5563 = vunpack.c.h.b16 %v4481
        %v5564 = vunpack.c.l.b16 %v4482
        %v5565 = vunpack.c.h.b16 %v4482
        %v5566 = vunpack.c.l.b16 %v4483
        %v5567 = vunpack.c.h.b16 %v4483
        %v5568 = vunpack.c.l.b16 %v4484
        %v5569 = vunpack.c.h.b16 %v4484
        %v5570 = vunpack.c.l.b16 %v4485
        %v5571 = vunpack.c.h.b16 %v4485
        %v5572 = vunpack.c.l.b16 %v4486
        %v5573 = vunpack.c.h.b16 %v4486
        %v5574 = vunpack.c.l.b16 %v4487
        %v5575 = vunpack.c.h.b16 %v4487
        %v5576 = vunpack.c.l.b16 %v4488
        %v5577 = vunpack.c.h.b16 %v4488
        %v5578 = vunpack.c.l.b16 %v4489
        %v5579 = vunpack.c.h.b16 %v4489
        %v5580 = vunpack.c.l.b16 %v4490
        %v5581 = vunpack.c.h.b16 %v4490
        %v5582 = vunpack.c.l.b16 %v4491
        %v5583 = vunpack.c.h.b16 %v4491
        %v5584 = vunpack.c.l.b16 %v4492
        %v5585 = vunpack.c.h.b16 %v4492
        %v5586 = vunpack.c.l.b16 %v4493
        %v5587 = vunpack.c.h.b16 %v4493
        %v5588 = vunpack.c.l.b16 %v4494
        %v5589 = vunpack.c.h.b16 %v4494
        %v5590 = vunpack.c.l.b16 %v4495
        %v5591 = vunpack.c.h.b16 %v4495
        %v5592 = vunpack.c.l.b16 %v4496
        %v5593 = vunpack.c.h.b16 %v4496
        %v5594 = vunpack.c.l.b16 %v4497
        %v5595 = vunpack.c.h.b16 %v4497
        %v5596 = vunpack.c.l.b16 %v4498
        %v5597 = vunpack.c.h.b16 %v4498
        %v5598 = vunpack.c.l.b16 %v4499
        %v5599 = vunpack.c.h.b16 %v4499
        %v5600 = vunpack.c.l.b16 %v4500
        %v5601 = vunpack.c.h.b16 %v4500
        %v5602 = vunpack.c.l.b16 %v4501
        %v5603 = vunpack.c.h.b16 %v4501
        %v5604 = vunpack.c.l.b16 %v4502
        %v5605 = vunpack.c.h.b16 %v4502
        %v5606 = vunpack.c.l.b16 %v4503
        %v5607 = vunpack.c.h.b16 %v4503
        %v5608 = vunpack.c.l.b16 %v4504
        %v5609 = vunpack.c.h.b16 %v4504
        %v5610 = vunpack.c.l.b16 %v4505
        %v5611 = vunpack.c.h.b16 %v4505
        %v5612 = vunpack.c.l.b16 %v4506
        %v5613 = vunpack.c.h.b16 %v4506
        %v5614 = vunpack.c.l.b16 %v4507
        %v5615 = vunpack.c.h.b16 %v4507
        %v5616 = vunpack.c.l.b16 %v4508
        %v5617 = vunpack.c.h.b16 %v4508
        %v5618 = vunpack.c.l.b16 %v4509
        %v5619 = vunpack.c.h.b16 %v4509
        %v5620 = vunpack.c.l.b16 %v4510
        %v5621 = vunpack.c.h.b16 %v4510
        %v5622 = vunpack.c.l.b16 %v4511
        %v5623 = vunpack.c.h.b16 %v4511
        %v5624 = vunpack.c.l.b16 %v4512
        %v5625 = vunpack.c.h.b16 %v4512
        %v5626 = vunpack.c.l.b16 %v4513
        %v5627 = vunpack.c.h.b16 %v4513
        %v5628 = vunpack.c.l.b16 %v4514
        %v5629 = vunpack.c.h.b16 %v4514
        %v5630 = vunpack.c.l.b16 %v4515
        %v5631 = vunpack.c.h.b16 %v4515
        %v5632 = vunpack.c.l.b16 %v4516
        %v5633 = vunpack.c.h.b16 %v4516
        %v5634 = vunpack.c.l.b16 %v4517
        %v5635 = vunpack.c.h.b16 %v4517
        %v5636 = vunpack.c.l.b16 %v4518
        %v5637 = vunpack.c.h.b16 %v4518
        %v5638 = vunpack.c.l.b16 %v4519
        %v5639 = vunpack.c.h.b16 %v4519
        %v5640 = vunpack.c.l.b16 %v4520
        %v5641 = vunpack.c.h.b16 %v4520
        %v5642 = vunpack.c.l.b16 %v4521
        %v5643 = vunpack.c.h.b16 %v4521
        %v5644 = vunpack.c.l.b16 %v4522
        %v5645 = vunpack.c.h.b16 %v4522
        %v5646 = vunpack.c.l.b16 %v4523
        %v5647 = vunpack.c.h.b16 %v4523
        %v5648 = vunpack.c.l.b16 %v4524
        %v5649 = vunpack.c.h.b16 %v4524
        %v5650 = vunpack.c.l.b16 %v4525
        %v5651 = vunpack.c.h.b16 %v4525
        %v5652 = vunpack.c.l.b16 %v4526
        %v5653 = vunpack.c.h.b16 %v4526
        %v5654 = vunpack.c.l.b16 %v4527
        %v5655 = vunpack.c.h.b16 %v4527
        %v5656 = vunpack.c.l.b16 %v4528
        %v5657 = vunpack.c.h.b16 %v4528
        %v5658 = vunpack.c.l.b16 %v4529
        %v5659 = vunpack.c.h.b16 %v4529
        %v5660 = vunpack.c.l.b16 %v4530
        %v5661 = vunpack.c.h.b16 %v4530
        %v5662 = vunpack.c.l.b16 %v4531
        %v5663 = vunpack.c.h.b16 %v4531
        %v5664 = vunpack.c.l.b16 %v4532
        %v5665 = vunpack.c.h.b16 %v4532
        %v5666 = vunpack.c.l.b16 %v4533
        %v5667 = vunpack.c.h.b16 %v4533
        %v5668 = vunpack.c.l.b16 %v4534
        %v5669 = vunpack.c.h.b16 %v4534
        %v5670 = vunpack.c.l.b16 %v4535
        %v5671 = vunpack.c.h.b16 %v4535
        %v5672 = vunpack.c.l.b16 %v4536
        %v5673 = vunpack.c.h.b16 %v4536
        %v5674 = vunpack.c.l.b16 %v4537
        %v5675 = vunpack.c.h.b16 %v4537
        %v5676 = vunpack.c.l.b16 %v4538
        %v5677 = vunpack.c.h.b16 %v4538
        %v5678 = vunpack.c.l.b16 %v4539
        %v5679 = vunpack.c.h.b16 %v4539
        %v5680 = vunpack.c.l.b16 %v4540
        %v5681 = vunpack.c.h.b16 %v4540
        %v5682 = vunpack.c.l.b16 %v4541
        %v5683 = vunpack.c.h.b16 %v4541
        %v5684 = vunpack.c.l.b16 %v4542
        %v5685 = vunpack.c.h.b16 %v4542
        %v5686 = vunpack.c.l.b16 %v4543
        %v5687 = vunpack.c.h.b16 %v4543
        %v5688 = vunpack.c.l.b16 %v4544
        %v5689 = vunpack.c.h.b16 %v4544
        %v5690 = vunpack.c.l.b16 %v4545
        %v5691 = vunpack.c.h.b16 %v4545
        %v5692 = vunpack.c.l.b16 %v4546
        %v5693 = vunpack.c.h.b16 %v4546
        %v5694 = vunpack.c.l.b16 %v4547
        %v5695 = vunpack.c.h.b16 %v4547
        %v5696 = vunpack.c.l.b16 %v4548
        %v5697 = vunpack.c.h.b16 %v4548
        %v5698 = vunpack.c.l.b16 %v4549
        %v5699 = vunpack.c.h.b16 %v4549
        %v5700 = vunpack.c.l.b16 %v4550
        %v5701 = vunpack.c.h.b16 %v4550
        %v5702 = vunpack.c.l.b16 %v4551
        %v5703 = vunpack.c.h.b16 %v4551
        %v5704 = vunpack.c.l.b16 %v4552
        %v5705 = vunpack.c.h.b16 %v4552
        %v5706 = vunpack.c.l.b16 %v4553
        %v5707 = vunpack.c.h.b16 %v4553
        %v5708 = vunpack.c.l.b16 %v4554
        %v5709 = vunpack.c.h.b16 %v4554
        %v5710 = vunpack.c.l.b16 %v4555
        %v5711 = vunpack.c.h.b16 %v4555
        %v5712 = vunpack.c.l.b16 %v4556
        %v5713 = vunpack.c.h.b16 %v4556
        %v5714 = vunpack.c.l.b16 %v4557
        %v5715 = vunpack.c.h.b16 %v4557
        %v5716 = vunpack.c.l.b16 %v4558
        %v5717 = vunpack.c.h.b16 %v4558
        %v5718 = vunpack.c.l.b16 %v4559
        %v5719 = vunpack.c.h.b16 %v4559
        %v5720 = vunpack.c.l.b16 %v4560
        %v5721 = vunpack.c.h.b16 %v4560
        %v5722 = vunpack.c.l.b16 %v4561
        %v5723 = vunpack.c.h.b16 %v4561
        %v5724 = vunpack.c.l.b16 %v4562
        %v5725 = vunpack.c.h.b16 %v4562
        %v5726 = vunpack.c.l.b16 %v4563
        %v5727 = vunpack.c.h.b16 %v4563
        %v5728 = vunpack.c.l.b16 %v4564
        %v5729 = vunpack.c.h.b16 %v4564
        %v5730 = vunpack.c.l.b16 %v4565
        %v5731 = vunpack.c.h.b16 %v4565
        %v5732 = vunpack.c.l.b16 %v4566
        %v5733 = vunpack.c.h.b16 %v4566
        %v5734 = vunpack.c.l.b16 %v4567
        %v5735 = vunpack.c.h.b16 %v4567
        %v5736 = vunpack.c.l.b16 %v4568
        %v5737 = vunpack.c.h.b16 %v4568
        %v5738 = vunpack.c.l.b16 %v4569
        %v5739 = vunpack.c.h.b16 %v4569
        %v5740 = vunpack.c.l.b16 %v4570
        %v5741 = vunpack.c.h.b16 %v4570
        %v5742 = vunpack.c.l.b16 %v4571
        %v5743 = vunpack.c.h.b16 %v4571
        %v5744 = vunpack.c.l.b16 %v4572
        %v5745 = vunpack.c.h.b16 %v4572
        %v5746 = vunpack.c.l.b16 %v4573
        %v5747 = vunpack.c.h.b16 %v4573
        %v5748 = vunpack.c.l.b16 %v4574
        %v5749 = vunpack.c.h.b16 %v4574
        %v5750 = vunpack.c.l.b16 %v4575
        %v5751 = vunpack.c.h.b16 %v4575
        %v5752 = vunpack.c.l.b16 %v4576
        %v5753 = vunpack.c.h.b16 %v4576
        %v5754 = vunpack.c.l.b16 %v4577
        %v5755 = vunpack.c.h.b16 %v4577
        %v5756 = vunpack.c.l.b16 %v4578
        %v5757 = vunpack.c.h.b16 %v4578
        %v5758 = vunpack.c.l.b16 %v4579
        %v5759 = vunpack.c.h.b16 %v4579
        %v5760 = vunpack.c.l.b16 %v4580
        %v5761 = vunpack.c.h.b16 %v4580
        %v5762 = vunpack.c.l.b16 %v4581
        %v5763 = vunpack.c.h.b16 %v4581
        %v5764 = vunpack.c.l.b16 %v4582
        %v5765 = vunpack.c.h.b16 %v4582
        %v5766 = vunpack.c.l.b16 %v4583
        %v5767 = vunpack.c.h.b16 %v4583
        %v5768 = vunpack.c.l.b16 %v4584
        %v5769 = vunpack.c.h.b16 %v4584
        %v5770 = vunpack.c.l.b16 %v4585
        %v5771 = vunpack.c.h.b16 %v4585
        %v5772 = vunpack.c.l.b16 %v4586
        %v5773 = vunpack.c.h.b16 %v4586
        %v5774 = vunpack.c.l.b16 %v4587
        %v5775 = vunpack.c.h.b16 %v4587
        %v5776 = vunpack.c.l.b16 %v4588
        %v5777 = vunpack.c.h.b16 %v4588
        %v5778 = vunpack.c.l.b16 %v4589
        %v5779 = vunpack.c.h.b16 %v4589
        %v5780 = vunpack.c.l.b16 %v4590
        %v5781 = vunpack.c.h.b16 %v4590
        %v5782 = vunpack.c.l.b16 %v4591
        %v5783 = vunpack.c.h.b16 %v4591
        %v5784 = vunpack.c.l.b16 %v4592
        %v5785 = vunpack.c.h.b16 %v4592
        %v5786 = vunpack.c.l.b16 %v4593
        %v5787 = vunpack.c.h.b16 %v4593
        %v5788 = vunpack.c.l.b16 %v4594
        %v5789 = vunpack.c.h.b16 %v4594
        %v5790 = vunpack.c.l.b16 %v4595
        %v5791 = vunpack.c.h.b16 %v4595
        %v5792 = vunpack.c.l.b16 %v4596
        %v5793 = vunpack.c.h.b16 %v4596
        %v5794 = vunpack.c.l.b16 %v4597
        %v5795 = vunpack.c.h.b16 %v4597
        %v5796 = vunpack.c.l.b16 %v4598
        %v5797 = vunpack.c.h.b16 %v4598
        %v5798 = vunpack.c.l.b16 %v4599
        %v5799 = vunpack.c.h.b16 %v4599
        %v5800 = vunpack.c.l.b16 %v4600
        %v5801 = vunpack.c.h.b16 %v4600
        %v5802 = vunpack.c.l.b16 %v4601
        %v5803 = vunpack.c.h.b16 %v4601
        %v5804 = vunpack.c.l.b16 %v4602
        %v5805 = vunpack.c.h.b16 %v4602
        %v5806 = vunpack.c.l.b16 %v4603
        %v5807 = vunpack.c.h.b16 %v4603
        %v5808 = vunpack.c.l.b16 %v4604
        %v5809 = vunpack.c.h.b16 %v4604
        %v5810 = vunpack.c.l.b16 %v4605
        %v5811 = vunpack.c.h.b16 %v4605
        %v5812 = vunpack.c.l.b16 %v4606
        %v5813 = vunpack.c.h.b16 %v4606
        %v5814 = vunpack.c.l.b16 %v4607
        %v5815 = vunpack.c.h.b16 %v4607
        %v5816 = vunpack.c.l.b16 %v4608
        %v5817 = vunpack.c.h.b16 %v4608
        %v5818 = vunpack.c.l.b16 %v4609
        %v5819 = vunpack.c.h.b16 %v4609
        %v5820 = vunpack.c.l.b16 %v4610
        %v5821 = vunpack.c.h.b16 %v4610
        %v5822 = vunpack.c.l.b16 %v4611
        %v5823 = vunpack.c.h.b16 %v4611
        %v5824 = vunpack.c.l.b16 %v4612
        %v5825 = vunpack.c.h.b16 %v4612
        %v5826 = vunpack.c.l.b16 %v4613
        %v5827 = vunpack.c.h.b16 %v4613
        %v5828 = vunpack.c.l.b16 %v4614
        %v5829 = vunpack.c.h.b16 %v4614
        %v5830 = vunpack.c.l.b16 %v4615
        %v5831 = vunpack.c.h.b16 %v4615
        %v5832 = vunpack.c.l.b16 %v4616
        %v5833 = vunpack.c.h.b16 %v4616
        %v5834 = vunpack.c.l.b16 %v4617
        %v5835 = vunpack.c.h.b16 %v4617
        %v5836 = vunpack.c.l.b16 %v4618
        %v5837 = vunpack.c.h.b16 %v4618
        %v5838 = vunpack.c.l.b16 %v4619
        %v5839 = vunpack.c.h.b16 %v4619
        %v5840 = vunpack.c.l.b16 %v4620
        %v5841 = vunpack.c.h.b16 %v4620
        %v5842 = vunpack.c.l.b16 %v4621
        %v5843 = vunpack.c.h.b16 %v4621
        %v5844 = vunpack.c.l.b16 %v4622
        %v5845 = vunpack.c.h.b16 %v4622
        %v5846 = vunpack.c.l.b16 %v4623
        %v5847 = vunpack.c.h.b16 %v4623
        %v5848 = vunpack.c.l.b16 %v4624
        %v5849 = vunpack.c.h.b16 %v4624
        %v5850 = vunpack.c.l.b16 %v4625
        %v5851 = vunpack.c.h.b16 %v4625
        %v5852 = vunpack.c.l.b16 %v4626
        %v5853 = vunpack.c.h.b16 %v4626
        %v5854 = vunpack.c.l.b16 %v4627
        %v5855 = vunpack.c.h.b16 %v4627
        %v5856 = vunpack.c.l.b16 %v4628
        %v5857 = vunpack.c.h.b16 %v4628
        %v5858 = vunpack.c.l.b16 %v4629
        %v5859 = vunpack.c.h.b16 %v4629
        %v5860 = vunpack.c.l.b16 %v4630
        %v5861 = vunpack.c.h.b16 %v4630
        %v5862 = vunpack.c.l.b16 %v4631
        %v5863 = vunpack.c.h.b16 %v4631
        %v5864 = vunpack.c.l.b16 %v4632
        %v5865 = vunpack.c.h.b16 %v4632
        %v5866 = vunpack.c.l.b16 %v4633
        %v5867 = vunpack.c.h.b16 %v4633
        %v5868 = vunpack.c.l.b16 %v4634
        %v5869 = vunpack.c.h.b16 %v4634
        %v5870 = vunpack.c.l.b16 %v4635
        %v5871 = vunpack.c.h.b16 %v4635
        %v5872 = vunpack.c.l.b16 %v4636
        %v5873 = vunpack.c.h.b16 %v4636
        %v5874 = vunpack.c.l.b16 %v4637
        %v5875 = vunpack.c.h.b16 %v4637
        %v5876 = vunpack.c.l.b16 %v4638
        %v5877 = vunpack.c.h.b16 %v4638
        %v5878 = vunpack.c.l.b16 %v4639
        %v5879 = vunpack.c.h.b16 %v4639
        %v5880 = vunpack.c.l.b16 %v4640
        %v5881 = vunpack.c.h.b16 %v4640
        %v5882 = vunpack.c.l.b16 %v4641
        %v5883 = vunpack.c.h.b16 %v4641
        %v5884 = vunpack.c.l.b16 %v4642
        %v5885 = vunpack.c.h.b16 %v4642
        %v5886 = vunpack.c.l.b16 %v4643
        %v5887 = vunpack.c.h.b16 %v4643
        %v5888 = vunpack.c.l.b16 %v4644
        %v5889 = vunpack.c.h.b16 %v4644
        %v5890 = vunpack.c.l.b16 %v4645
        %v5891 = vunpack.c.h.b16 %v4645
        %v5892 = vunpack.c.l.b16 %v4646
        %v5893 = vunpack.c.h.b16 %v4646
        %v5894 = vunpack.c.l.b16 %v4647
        %v5895 = vunpack.c.h.b16 %v4647
        %v5896 = vunpack.c.l.b16 %v4648
        %v5897 = vunpack.c.h.b16 %v4648
        %v5898 = vunpack.c.l.b16 %v4649
        %v5899 = vunpack.c.h.b16 %v4649
        %v5900 = vunpack.c.l.b16 %v4650
        %v5901 = vunpack.c.h.b16 %v4650
        %v5902 = vunpack.c.l.b16 %v4651
        %v5903 = vunpack.c.h.b16 %v4651
        %v5904 = vunpack.c.l.b16 %v4652
        %v5905 = vunpack.c.h.b16 %v4652
        %v5906 = vunpack.c.l.b16 %v4653
        %v5907 = vunpack.c.h.b16 %v4653
        %v5908 = vunpack.c.l.b16 %v4654
        %v5909 = vunpack.c.h.b16 %v4654
        %v5910 = vunpack.c.l.b16 %v4655
        %v5911 = vunpack.c.h.b16 %v4655
        %v5912 = vunpack.c.l.b16 %v4656
        %v5913 = vunpack.c.h.b16 %v4656
        %v5914 = vunpack.c.l.b16 %v4657
        %v5915 = vunpack.c.h.b16 %v4657
        %v5916 = vunpack.c.l.b16 %v4658
        %v5917 = vunpack.c.h.b16 %v4658
        %v5918 = vunpack.c.l.b16 %v4659
        %v5919 = vunpack.c.h.b16 %v4659
        %v5920 = vunpack.c.l.b16 %v4660
        %v5921 = vunpack.c.h.b16 %v4660
        %v5922 = vunpack.c.l.b16 %v4661
        %v5923 = vunpack.c.h.b16 %v4661
        %v5924 = vunpack.c.l.b16 %v4662
        %v5925 = vunpack.c.h.b16 %v4662
        %v5926 = vunpack.c.l.b16 %v4663
        %v5927 = vunpack.c.h.b16 %v4663
        %v5928 = vunpack.c.l.b16 %v4664
        %v5929 = vunpack.c.h.b16 %v4664
        %v5930 = vunpack.c.l.b16 %v4665
        %v5931 = vunpack.c.h.b16 %v4665
        %v5932 = vunpack.c.l.b16 %v4666
        %v5933 = vunpack.c.h.b16 %v4666
        %v5934 = vunpack.c.l.b16 %v4667
        %v5935 = vunpack.c.h.b16 %v4667
        %v5936 = vunpack.c.l.b16 %v4668
        %v5937 = vunpack.c.h.b16 %v4668
        %v5938 = vunpack.c.l.b16 %v4669
        %v5939 = vunpack.c.h.b16 %v4669
        %v5940 = vunpack.c.l.b16 %v4670
        %v5941 = vunpack.c.h.b16 %v4670
        %v5942 = vunpack.c.l.b16 %v4671
        %v5943 = vunpack.c.h.b16 %v4671
        %v5944 = vunpack.c.l.b16 %v4672
        %v5945 = vunpack.c.h.b16 %v4672
        %v5946 = vunpack.c.l.b16 %v4673
        %v5947 = vunpack.c.h.b16 %v4673
        %v5948 = vunpack.c.l.b16 %v4674
        %v5949 = vunpack.c.h.b16 %v4674
        %v5950 = vunpack.c.l.b16 %v4675
        %v5951 = vunpack.c.h.b16 %v4675
        %v5952 = vunpack.c.l.b16 %v4676
        %v5953 = vunpack.c.h.b16 %v4676
        %v5954 = vunpack.c.l.b16 %v4677
        %v5955 = vunpack.c.h.b16 %v4677
        %v5956 = vunpack.c.l.b16 %v4678
        %v5957 = vunpack.c.h.b16 %v4678
        %v5958 = vunpack.c.l.b16 %v4679
        %v5959 = vunpack.c.h.b16 %v4679
        %v5960 = vunpack.c.l.b16 %v4680
        %v5961 = vunpack.c.h.b16 %v4680
        %v5962 = vunpack.c.l.b16 %v4681
        %v5963 = vunpack.c.h.b16 %v4681
        %v5964 = vunpack.c.l.b16 %v4682
        %v5965 = vunpack.c.h.b16 %v4682
        %v5966 = vunpack.c.l.b16 %v4683
        %v5967 = vunpack.c.h.b16 %v4683
        %v5968 = vunpack.c.l.b16 %v4684
        %v5969 = vunpack.c.h.b16 %v4684
        %v5970 = vunpack.c.l.b16 %v4685
        %v5971 = vunpack.c.h.b16 %v4685
        %v5972 = vunpack.c.l.b16 %v4686
        %v5973 = vunpack.c.h.b16 %v4686
        %v5974 = vunpack.c.l.b16 %v4687
        %v5975 = vunpack.c.h.b16 %v4687
        %v5976 = vunpack.c.l.b16 %v4688
        %v5977 = vunpack.c.h.b16 %v4688
        %v5978 = vunpack.c.l.b16 %v4689
        %v5979 = vunpack.c.h.b16 %v4689
        %v5980 = vunpack.c.l.b16 %v4690
        %v5981 = vunpack.c.h.b16 %v4690
        %v5982 = vunpack.c.l.b16 %v4691
        %v5983 = vunpack.c.h.b16 %v4691
        %v5984 = vunpack.c.l.b16 %v4692
        %v5985 = vunpack.c.h.b16 %v4692
        %v5986 = vunpack.c.l.b16 %v4693
        %v5987 = vunpack.c.h.b16 %v4693
        %v5988 = vunpack.c.l.b16 %v4694
        %v5989 = vunpack.c.h.b16 %v4694
        %v5990 = vunpack.c.l.b16 %v4695
        %v5991 = vunpack.c.h.b16 %v4695
        %v5992 = vunpack.c.l.b16 %v4696
        %v5993 = vunpack.c.h.b16 %v4696
        %v5994 = vunpack.c.l.b16 %v4697
        %v5995 = vunpack.c.h.b16 %v4697
        %v5996 = vunpack.c.l.b16 %v4698
        %v5997 = vunpack.c.h.b16 %v4698
        %v5998 = vunpack.c.l.b16 %v4699
        %v5999 = vunpack.c.h.b16 %v4699
        %v6000 = vunpack.c.l.b16 %v4700
        %v6001 = vunpack.c.h.b16 %v4700
        %v6002 = vunpack.c.l.b16 %v4701
        %v6003 = vunpack.c.h.b16 %v4701
        %v6004 = vunpack.c.l.b16 %v4702
        %v6005 = vunpack.c.h.b16 %v4702
        %v6006 = vunpack.c.l.b16 %v4703
        %v6007 = vunpack.c.h.b16 %v4703
        %v6008 = vunpack.c.l.b16 %v4704
        %v6009 = vunpack.c.h.b16 %v4704
        %v6010 = vunpack.c.l.b16 %v4705
        %v6011 = vunpack.c.h.b16 %v4705
        %v6012 = vunpack.c.l.b16 %v4706
        %v6013 = vunpack.c.h.b16 %v4706
        %v6014 = vunpack.c.l.b16 %v4707
        %v6015 = vunpack.c.h.b16 %v4707
        %v6016 = vunpack.c.l.b16 %v4708
        %v6017 = vunpack.c.h.b16 %v4708
        %v6018 = vunpack.c.l.b16 %v4709
        %v6019 = vunpack.c.h.b16 %v4709
        %v6020 = vunpack.c.l.b16 %v4710
        %v6021 = vunpack.c.h.b16 %v4710
        %v6022 = vunpack.c.l.b16 %v4711
        %v6023 = vunpack.c.h.b16 %v4711
        %v6024 = vunpack.c.l.b16 %v4712
        %v6025 = vunpack.c.h.b16 %v4712
        %v6026 = vunpack.c.l.b16 %v4713
        %v6027 = vunpack.c.h.b16 %v4713
        %v6028 = vunpack.c.l.b16 %v4714
        %v6029 = vunpack.c.h.b16 %v4714
        %v6030 = vunpack.c.l.b16 %v4715
        %v6031 = vunpack.c.h.b16 %v4715
        %v6032 = vunpack.c.l.b16 %v4716
        %v6033 = vunpack.c.h.b16 %v4716
        %v6034 = vunpack.c.l.b16 %v4717
        %v6035 = vunpack.c.h.b16 %v4717
        %v6036 = vunpack.c.l.b16 %v4718
        %v6037 = vunpack.c.h.b16 %v4718
        %v6038 = vunpack.c.l.b16 %v4719
        %v6039 = vunpack.c.h.b16 %v4719
        %v6040 = vunpack.c.l.b16 %v4720
        %v6041 = vunpack.c.h.b16 %v4720
        %v6042 = vunpack.c.l.b16 %v4721
        %v6043 = vunpack.c.h.b16 %v4721
        %v6044 = vunpack.c.l.b16 %v4722
        %v6045 = vunpack.c.h.b16 %v4722
        %v6046 = vunpack.c.l.b16 %v4723
        %v6047 = vunpack.c.h.b16 %v4723
        %v6048 = vunpack.c.l.b16 %v4724
        %v6049 = vunpack.c.h.b16 %v4724
        %v6050 = vunpack.c.l.b16 %v4725
        %v6051 = vunpack.c.h.b16 %v4725
        %v6052 = vunpack.c.l.b16 %v4726
        %v6053 = vunpack.c.h.b16 %v4726
        %v6054 = vunpack.c.l.b16 %v4727
        %v6055 = vunpack.c.h.b16 %v4727
        %v6056 = vunpack.c.l.b16 %v4728
        %v6057 = vunpack.c.h.b16 %v4728
        %v6058 = vunpack.c.l.b16 %v4729
        %v6059 = vunpack.c.h.b16 %v4729
        %v6060 = vunpack.c.l.b16 %v4730
        %v6061 = vunpack.c.h.b16 %v4730
        %v6062 = vunpack.c.l.b16 %v4731
        %v6063 = vunpack.c.h.b16 %v4731
        %v6064 = vunpack.c.l.b16 %v4732
        %v6065 = vunpack.c.h.b16 %v4732
        %v6066 = vunpack.c.l.b16 %v4733
        %v6067 = vunpack.c.h.b16 %v4733
        %v6068 = vunpack.c.l.b16 %v4734
        %v6069 = vunpack.c.h.b16 %v4734
        %v6070 = vunpack.c.l.b16 %v4735
        %v6071 = vunpack.c.h.b16 %v4735
        %v6072 = vunpack.c.l.b16 %v4736
        %v6073 = vunpack.c.h.b16 %v4736
        %v6074 = vunpack.c.l.b16 %v4737
        %v6075 = vunpack.c.h.b16 %v4737
        %v6076 = vunpack.c.l.b16 %v4738
        %v6077 = vunpack.c.h.b16 %v4738
        %v6078 = vunpack.c.l.b16 %v4739
        %v6079 = vunpack.c.h.b16 %v4739
        %v6080 = vunpack.c.l.b16 %v4740
        %v6081 = vunpack.c.h.b16 %v4740
        %v6082 = vunpack.c.l.b16 %v4741
        %v6083 = vunpack.c.h.b16 %v4741
        %v6084 = vunpack.c.l.b16 %v4742
        %v6085 = vunpack.c.h.b16 %v4742
        %v6086 = vunpack.c.l.b16 %v4743
        %v6087 = vunpack.c.h.b16 %v4743
        %v6088 = vunpack.c.l.b16 %v4744
        %v6089 = vunpack.c.h.b16 %v4744
        %v6090 = vunpack.c.l.b16 %v4745
        %v6091 = vunpack.c.h.b16 %v4745
        %v6092 = vunpack.c.l.b16 %v4746
        %v6093 = vunpack.c.h.b16 %v4746
        %v6094 = vunpack.c.l.b16 %v4747
        %v6095 = vunpack.c.h.b16 %v4747
        %v6096 = vunpack.c.l.b16 %v4748
        %v6097 = vunpack.c.h.b16 %v4748
        %v6098 = vunpack.c.l.b16 %v4749
        %v6099 = vunpack.c.h.b16 %v4749
        %v6100 = vunpack.c.l.b16 %v4750
        %v6101 = vunpack.c.h.b16 %v4750
        %v6102 = vunpack.c.l.b16 %v4751
        %v6103 = vunpack.c.h.b16 %v4751
        %v6104 = vunpack.c.l.b16 %v4752
        %v6105 = vunpack.c.h.b16 %v4752
        %v6106 = vunpack.c.l.b16 %v4753
        %v6107 = vunpack.c.h.b16 %v4753
        %v6108 = vunpack.c.l.b16 %v4754
        %v6109 = vunpack.c.h.b16 %v4754
        %v6110 = vunpack.c.l.b16 %v4755
        %v6111 = vunpack.c.h.b16 %v4755
        %v6112 = vunpack.c.l.b16 %v4756
        %v6113 = vunpack.c.h.b16 %v4756
        %v6114 = vunpack.c.l.b16 %v4757
        %v6115 = vunpack.c.h.b16 %v4757
        %v6116 = vunpack.c.l.b16 %v4758
        %v6117 = vunpack.c.h.b16 %v4758
        %v6118 = vunpack.c.l.b16 %v4759
        %v6119 = vunpack.c.h.b16 %v4759
        %v6120 = vunpack.c.l.b16 %v4760
        %v6121 = vunpack.c.h.b16 %v4760
        %v6122 = vunpack.c.l.b16 %v4761
        %v6123 = vunpack.c.h.b16 %v4761
        %v6124 = vunpack.c.l.b16 %v4762
        %v6125 = vunpack.c.h.b16 %v4762
        %v6126 = vunpack.c.l.b16 %v4763
        %v6127 = vunpack.c.h.b16 %v4763
        %v6128 = vunpack.c.l.b16 %v4764
        %v6129 = vunpack.c.h.b16 %v4764
        %v6130 = vunpack.c.l.b16 %v4765
        %v6131 = vunpack.c.h.b16 %v4765
        %v6132 = vunpack.c.l.b16 %v4766
        %v6133 = vunpack.c.h.b16 %v4766
        %v6134 = vunpack.c.l.b16 %v4767
        %v6135 = vunpack.c.h.b16 %v4767
        %v6136 = vunpack.c.l.b16 %v4768
        %v6137 = vunpack.c.h.b16 %v4768
        %v6138 = vunpack.c.l.b16 %v4769
        %v6139 = vunpack.c.h.b16 %v4769
        %v6140 = vunpack.c.l.b16 %v4770
        %v6141 = vunpack.c.h.b16 %v4770
        %v6142 = vunpack.c.l.b16 %v4771
        %v6143 = vunpack.c.h.b16 %v4771
        %v6144 = vunpack.c.l.b16 %v4772
        %v6145 = vunpack.c.h.b16 %v4772
        %v6146 = vunpack.c.l.b16 %v4773
        %v6147 = vunpack.c.h.b16 %v4773
        %v6148 = vunpack.c.l.b16 %v4774
        %v6149 = vunpack.c.h.b16 %v4774
        %v6150 = vunpack.c.l.b16 %v4775
        %v6151 = vunpack.c.h.b16 %v4775
        %v6152 = vunpack.c.l.b16 %v4776
        %v6153 = vunpack.c.h.b16 %v4776
        %v6154 = vunpack.c.l.b16 %v4777
        %v6155 = vunpack.c.h.b16 %v4777
        %v6156 = vunpack.c.l.b16 %v4778
        %v6157 = vunpack.c.h.b16 %v4778
        %v6158 = vunpack.c.l.b16 %v4779
        %v6159 = vunpack.c.h.b16 %v4779
        %v6160 = vunpack.c.l.b16 %v4780
        %v6161 = vunpack.c.h.b16 %v4780
        %v6162 = vunpack.c.l.b16 %v4781
        %v6163 = vunpack.c.h.b16 %v4781
        %v6164 = vunpack.c.l.b16 %v4782
        %v6165 = vunpack.c.h.b16 %v4782
        %v6166 = vunpack.c.l.b16 %v4783
        %v6167 = vunpack.c.h.b16 %v4783
        %v6168 = vunpack.c.l.b16 %v4784
        %v6169 = vunpack.c.h.b16 %v4784
        %v6170 = vunpack.c.l.b16 %v4785
        %v6171 = vunpack.c.h.b16 %v4785
        %v6172 = vunpack.c.l.b16 %v4786
        %v6173 = vunpack.c.h.b16 %v4786
        %v6174 = vunpack.c.l.b16 %v4787
        %v6175 = vunpack.c.h.b16 %v4787
        %v6176 = vunpack.c.l.b16 %v4788
        %v6177 = vunpack.c.h.b16 %v4788
        %v6178 = vunpack.c.l.b16 %v4789
        %v6179 = vunpack.c.h.b16 %v4789
        %v6180 = vunpack.c.l.b16 %v4790
        %v6181 = vunpack.c.h.b16 %v4790
        %v6182 = vunpack.c.l.b16 %v4791
        %v6183 = vunpack.c.h.b16 %v4791
        %v6184 = vunpack.c.l.b16 %v4792
        %v6185 = vunpack.c.h.b16 %v4792
        %v6186 = vunpack.c.l.b16 %v4793
        %v6187 = vunpack.c.h.b16 %v4793
        %v6188 = vunpack.c.l.b16 %v4794
        %v6189 = vunpack.c.h.b16 %v4794
        %v6190 = vunpack.c.l.b16 %v4795
        %v6191 = vunpack.c.h.b16 %v4795
        %v6192 = vunpack.c.l.b16 %v4796
        %v6193 = vunpack.c.h.b16 %v4796
        %v6194 = vunpack.c.l.b16 %v4797
        %v6195 = vunpack.c.h.b16 %v4797
        %v6196 = vunpack.c.l.b16 %v4798
        %v6197 = vunpack.c.h.b16 %v4798
        %v6198 = vunpack.c.l.b16 %v4799
        %v6199 = vunpack.c.h.b16 %v4799
        %v6200 = vunpack.c.l.b16 %v4800
        %v6201 = vunpack.c.h.b16 %v4800
        %v6202 = vunpack.c.l.b16 %v4801
        %v6203 = vunpack.c.h.b16 %v4801
        %v6204 = vunpack.c.l.b16 %v4802
        %v6205 = vunpack.c.h.b16 %v4802
        %v6206 = vunpack.c.l.b16 %v4803
        %v6207 = vunpack.c.h.b16 %v4803
        %v6208 = vunpack.c.l.b16 %v4804
        %v6209 = vunpack.c.h.b16 %v4804
        %v6210 = vunpack.c.l.b16 %v4805
        %v6211 = vunpack.c.h.b16 %v4805
        %v6212 = vunpack.c.l.b16 %v4806
        %v6213 = vunpack.c.h.b16 %v4806
        %v6214 = vunpack.c.l.b16 %v4807
        %v6215 = vunpack.c.h.b16 %v4807
        %v6216 = vunpack.c.l.b16 %v4808
        %v6217 = vunpack.c.h.b16 %v4808
        %v6218 = vunpack.c.l.b16 %v4809
        %v6219 = vunpack.c.h.b16 %v4809
        %v6220 = vunpack.c.l.b16 %v4810
        %v6221 = vunpack.c.h.b16 %v4810
        %v6222 = vunpack.c.l.b16 %v4811
        %v6223 = vunpack.c.h.b16 %v4811
        %v6224 = vunpack.c.l.b16 %v4812
        %v6225 = vunpack.c.h.b16 %v4812
        %v6226 = vunpack.c.l.b16 %v4813
        %v6227 = vunpack.c.h.b16 %v4813
        %v6228 = vunpack.c.l.b16 %v4814
        %v6229 = vunpack.c.h.b16 %v4814
        %v6230 = vunpack.c.l.b16 %v4815
        %v6231 = vunpack.c.h.b16 %v4815
        %v6232 = vunpack.c.l.b16 %v4816
        %v6233 = vunpack.c.h.b16 %v4816
        %v6234 = vunpack.c.l.b16 %v4817
        %v6235 = vunpack.c.h.b16 %v4817
        %v6236 = vunpack.c.l.b16 %v4818
        %v6237 = vunpack.c.h.b16 %v4818
        %v6238 = vunpack.c.l.b16 %v4819
        %v6239 = vunpack.c.h.b16 %v4819
        %v6240 = vunpack.c.l.b16 %v4820
        %v6241 = vunpack.c.h.b16 %v4820
        %v6242 = vunpack.c.l.b16 %v4821
        %v6243 = vunpack.c.h.b16 %v4821
        %v6244 = vunpack.c.l.b16 %v4822
        %v6245 = vunpack.c.h.b16 %v4822
        %v6246 = vunpack.c.l.b16 %v4823
        %v6247 = vunpack.c.h.b16 %v4823
        %v6248 = vunpack.c.l.b16 %v4824
        %v6249 = vunpack.c.h.b16 %v4824
        %v6250 = vunpack.c.l.b16 %v4825
        %v6251 = vunpack.c.h.b16 %v4825
        %v6252 = vunpack.c.l.b16 %v4826
        %v6253 = vunpack.c.h.b16 %v4826
        %v6254 = vunpack.c.l.b16 %v4827
        %v6255 = vunpack.c.h.b16 %v4827
        %v6256 = vunpack.c.l.b16 %v4828
        %v6257 = vunpack.c.h.b16 %v4828
        %v6258 = vunpack.c.l.b16 %v4829
        %v6259 = vunpack.c.h.b16 %v4829
        %v6260 = vunpack.c.l.b16 %v4830
        %v6261 = vunpack.c.h.b16 %v4830
        %v6262 = vunpack.c.l.b16 %v4831
        %v6263 = vunpack.c.h.b16 %v4831
        %v6264 = vunpack.c.l.b16 %v4832
        %v6265 = vunpack.c.h.b16 %v4832
        %v6266 = vunpack.c.l.b16 %v4833
        %v6267 = vunpack.c.h.b16 %v4833
        %v6268 = vunpack.c.l.b16 %v4834
        %v6269 = vunpack.c.h.b16 %v4834
        %v6270 = vunpack.c.l.b16 %v4835
        %v6271 = vunpack.c.h.b16 %v4835
        %v6272 = vunpack.c.l.b16 %v4836
        %v6273 = vunpack.c.h.b16 %v4836
        %v6274 = vunpack.c.l.b16 %v4837
        %v6275 = vunpack.c.h.b16 %v4837
        %v6276 = vunpack.c.l.b16 %v4838
        %v6277 = vunpack.c.h.b16 %v4838
        %v6278 = vunpack.c.l.b16 %v4839
        %v6279 = vunpack.c.h.b16 %v4839
        %v6280 = vunpack.c.l.b16 %v4840
        %v6281 = vunpack.c.h.b16 %v4840
        %v6282 = vunpack.c.l.b16 %v4841
        %v6283 = vunpack.c.h.b16 %v4841
        %v6284 = vunpack.c.l.b16 %v4842
        %v6285 = vunpack.c.h.b16 %v4842
        %v6286 = vunpack.c.l.b16 %v4843
        %v6287 = vunpack.c.h.b16 %v4843
        %v6288 = vunpack.c.l.b16 %v4844
        %v6289 = vunpack.c.h.b16 %v4844
        %v6290 = vunpack.c.l.b16 %v4845
        %v6291 = vunpack.c.h.b16 %v4845
        %v6292 = vunpack.c.l.b16 %v4846
        %v6293 = vunpack.c.h.b16 %v4846
        %v6294 = vunpack.c.l.b16 %v4847
        %v6295 = vunpack.c.h.b16 %v4847
        %v6296 = vunpack.c.l.b16 %v4848
        %v6297 = vunpack.c.h.b16 %v4848
        %v6298 = vunpack.c.l.b16 %v4849
        %v6299 = vunpack.c.h.b16 %v4849
        %v6300 = vunpack.c.l.b16 %v4850
        %v6301 = vunpack.c.h.b16 %v4850
        %v6302 = vunpack.c.l.b16 %v4851
        %v6303 = vunpack.c.h.b16 %v4851
        %v6304 = vunpack.c.l.b16 %v4852
        %v6305 = vunpack.c.h.b16 %v4852
        %v6306 = vunpack.c.l.b16 %v4853
        %v6307 = vunpack.c.h.b16 %v4853
        %v6308 = vunpack.c.l.b16 %v4854
        %v6309 = vunpack.c.h.b16 %v4854
        %v6310 = vunpack.c.l.b16 %v4855
        %v6311 = vunpack.c.h.b16 %v4855
        %v6312 = vunpack.c.l.b16 %v4856
        %v6313 = vunpack.c.h.b16 %v4856
        %v6314 = vunpack.c.l.b16 %v4857
        %v6315 = vunpack.c.h.b16 %v4857
        %v6316 = vunpack.c.l.b16 %v4858
        %v6317 = vunpack.c.h.b16 %v4858
        %v6318 = vunpack.c.l.b16 %v4859
        %v6319 = vunpack.c.h.b16 %v4859
        %v6320 = vunpack.c.l.b16 %v4860
        %v6321 = vunpack.c.h.b16 %v4860
        %v6322 = vunpack.c.l.b16 %v4861
        %v6323 = vunpack.c.h.b16 %v4861
        %v6324 = vunpack.c.l.b16 %v4862
        %v6325 = vunpack.c.h.b16 %v4862
        %v6326 = vunpack.c.l.b16 %v4863
        %v6327 = vunpack.c.h.b16 %v4863
        %v6328 = vunpack.c.l.b16 %v4864
        %v6329 = vunpack.c.h.b16 %v4864
        %v6330 = vunpack.c.l.b16 %v4865
        %v6331 = vunpack.c.h.b16 %v4865
        %v6332 = vunpack.c.l.b16 %v4866
        %v6333 = vunpack.c.h.b16 %v4866
        %v6334 = vunpack.c.l.b16 %v4867
        %v6335 = vunpack.c.h.b16 %v4867
        %v6336 = vunpack.c.l.b16 %v4868
        %v6337 = vunpack.c.h.b16 %v4868
        %v6338 = vunpack.c.l.b16 %v4869
        %v6339 = vunpack.c.h.b16 %v4869
        %v6340 = vunpack.c.l.b16 %v4870
        %v6341 = vunpack.c.h.b16 %v4870
        %v6342 = vunpack.c.l.b16 %v4871
        %v6343 = vunpack.c.h.b16 %v4871
        %v6344 = vunpack.c.l.b16 %v4872
        %v6345 = vunpack.c.h.b16 %v4872
        %v6346 = vunpack.c.l.b16 %v4873
        %v6347 = vunpack.c.h.b16 %v4873
        %v6348 = vunpack.c.l.b16 %v4874
        %v6349 = vunpack.c.h.b16 %v4874
        %v6350 = vunpack.c.l.b16 %v4875
        %v6351 = vunpack.c.h.b16 %v4875
        %v6352 = vunpack.c.l.b16 %v4876
        %v6353 = vunpack.c.h.b16 %v4876
        %v6354 = vunpack.c.l.b16 %v4877
        %v6355 = vunpack.c.h.b16 %v4877
        %v6356 = vunpack.c.l.b16 %v4878
        %v6357 = vunpack.c.h.b16 %v4878
        %v6358 = vunpack.c.l.b16 %v4879
        %v6359 = vunpack.c.h.b16 %v4879
        %v6360 = vunpack.c.l.b16 %v4880
        %v6361 = vunpack.c.h.b16 %v4880
        %v6362 = vunpack.c.l.b16 %v4881
        %v6363 = vunpack.c.h.b16 %v4881
        %v6364 = vunpack.c.l.b16 %v4882
        %v6365 = vunpack.c.h.b16 %v4882
        %v6366 = vunpack.c.l.b16 %v4883
        %v6367 = vunpack.c.h.b16 %v4883
        %v6368 = vunpack.c.l.b16 %v4884
        %v6369 = vunpack.c.h.b16 %v4884
        %v6370 = vunpack.c.l.b16 %v4885
        %v6371 = vunpack.c.h.b16 %v4885
        %v6372 = vunpack.c.l.b16 %v4886
        %v6373 = vunpack.c.h.b16 %v4886
        %v6374 = vunpack.c.l.b16 %v4887
        %v6375 = vunpack.c.h.b16 %v4887
        %v6376 = vunpack.c.l.b16 %v4888
        %v6377 = vunpack.c.h.b16 %v4888
        %v6378 = vunpack.c.l.b16 %v4889
        %v6379 = vunpack.c.h.b16 %v4889
        %v6380 = vunpack.c.l.b16 %v4890
        %v6381 = vunpack.c.h.b16 %v4890
        %v6382 = vunpack.c.l.b16 %v4891
        %v6383 = vunpack.c.h.b16 %v4891
        %v6384 = vunpack.c.l.b16 %v4892
        %v6385 = vunpack.c.h.b16 %v4892
        %v6386 = vunpack.c.l.b16 %v4893
        %v6387 = vunpack.c.h.b16 %v4893
        %v6388 = vunpack.c.l.b16 %v4894
        %v6389 = vunpack.c.h.b16 %v4894
        %v6390 = vunpack.c.l.b16 %v4895
        %v6391 = vunpack.c.h.b16 %v4895
        %v6392 = vunpack.c.l.b16 %v4896
        %v6393 = vunpack.c.h.b16 %v4896
        %v6394 = vunpack.c.l.b16 %v4897
        %v6395 = vunpack.c.h.b16 %v4897
        %v6396 = vunpack.c.l.b16 %v4898
        %v6397 = vunpack.c.h.b16 %v4898
        %v6398 = vunpack.c.l.b16 %v4899
        %v6399 = vunpack.c.h.b16 %v4899
        %v6400 = vunpack.c.l.b16 %v4900
        %v6401 = vunpack.c.h.b16 %v4900
        %v6402 = vunpack.c.l.b16 %v4901
        %v6403 = vunpack.c.h.b16 %v4901
        %v6404 = vunpack.c.l.b16 %v4902
        %v6405 = vunpack.c.h.b16 %v4902
        %v6406 = vunpack.c.l.b16 %v4903
        %v6407 = vunpack.c.h.b16 %v4903
        %v6408 = vunpack.c.l.b16 %v4904
        %v6409 = vunpack.c.h.b16 %v4904
        %v6410 = vunpack.c.l.b16 %v4905
        %v6411 = vunpack.c.h.b16 %v4905
        %v6412 = vunpack.c.l.b16 %v4906
        %v6413 = vunpack.c.h.b16 %v4906
        %v6414 = vunpack.c.l.b16 %v4907
        %v6415 = vunpack.c.h.b16 %v4907
        %v6416 = vunpack.c.l.b16 %v4908
        %v6417 = vunpack.c.h.b16 %v4908
        %v6418 = vunpack.c.l.b16 %v4909
        %v6419 = vunpack.c.h.b16 %v4909
        %v6420 = vunpack.c.l.b16 %v4910
        %v6421 = vunpack.c.h.b16 %v4910
        %v6422 = vunpack.c.l.b16 %v4911
        %v6423 = vunpack.c.h.b16 %v4911
        %v6424 = vunpack.c.l.b16 %v4912
        %v6425 = vunpack.c.h.b16 %v4912
        %v6426 = vunpack.c.l.b16 %v4913
        %v6427 = vunpack.c.h.b16 %v4913
        %v6428 = vunpack.c.l.b16 %v4914
        %v6429 = vunpack.c.h.b16 %v4914
        %v6430 = vunpack.c.l.b16 %v4915
        %v6431 = vunpack.c.h.b16 %v4915
        %v6432 = vunpack.c.l.b16 %v4916
        %v6433 = vunpack.c.h.b16 %v4916
        %v6434 = vunpack.c.l.b16 %v4917
        %v6435 = vunpack.c.h.b16 %v4917
        %v6436 = vunpack.c.l.b16 %v4918
        %v6437 = vunpack.c.h.b16 %v4918
        %v6438 = vunpack.c.l.b16 %v4919
        %v6439 = vunpack.c.h.b16 %v4919
        %v6440 = vunpack.c.l.b16 %v4920
        %v6441 = vunpack.c.h.b16 %v4920
        %v6442 = vunpack.c.l.b16 %v4921
        %v6443 = vunpack.c.h.b16 %v4921
        %v6444 = vunpack.c.l.b16 %v4922
        %v6445 = vunpack.c.h.b16 %v4922
        %v6446 = vunpack.c.l.b16 %v4923
        %v6447 = vunpack.c.h.b16 %v4923
        %v6448 = vunpack.c.l.b16 %v4924
        %v6449 = vunpack.c.h.b16 %v4924
        %v6450 = vunpack.c.l.b16 %v4925
        %v6451 = vunpack.c.h.b16 %v4925
        %v6452 = vunpack.c.l.b16 %v4926
        %v6453 = vunpack.c.h.b16 %v4926
        %v6454 = vunpack.c.l.b16 %v4927
        %v6455 = vunpack.c.h.b16 %v4927
        %v6456 = vunpack.c.l.b16 %v4928
        %v6457 = vunpack.c.h.b16 %v4928
        %v6458 = vunpack.c.l.b16 %v4929
        %v6459 = vunpack.c.h.b16 %v4929
        %v6460 = vunpack.c.l.b16 %v4930
        %v6461 = vunpack.c.h.b16 %v4930
        %v6462 = vunpack.c.l.b16 %v4931
        %v6463 = vunpack.c.h.b16 %v4931
        %v6464 = vunpack.c.l.b16 %v4932
        %v6465 = vunpack.c.h.b16 %v4932
        %v6466 = vunpack.c.l.b16 %v4933
        %v6467 = vunpack.c.h.b16 %v4933
        %v6468 = vunpack.c.l.b16 %v4934
        %v6469 = vunpack.c.h.b16 %v4934
        %v6470 = vunpack.c.l.b16 %v4935
        %v6471 = vunpack.c.h.b16 %v4935
        %v6472 = vunpack.c.l.b16 %v4936
        %v6473 = vunpack.c.h.b16 %v4936
        %v6474 = vunpack.c.l.b16 %v4937
        %v6475 = vunpack.c.h.b16 %v4937
        %v6476 = vunpack.c.l.b16 %v4938
        %v6477 = vunpack.c.h.b16 %v4938
        %v6478 = vunpack.c.l.b16 %v4939
        %v6479 = vunpack.c.h.b16 %v4939
        %v6480 = vunpack.c.l.b16 %v4940
        %v6481 = vunpack.c.h.b16 %v4940
        %v6482 = vunpack.c.l.b16 %v4941
        %v6483 = vunpack.c.h.b16 %v4941
        %v6484 = vunpack.c.l.b16 %v4942
        %v6485 = vunpack.c.h.b16 %v4942
        %v6486 = vunpack.c.l.b16 %v4943
        %v6487 = vunpack.c.h.b16 %v4943
        %v6488 = vunpack.c.l.b16 %v4944
        %v6489 = vunpack.c.h.b16 %v4944
        %v6490 = vunpack.c.l.b16 %v4945
        %v6491 = vunpack.c.h.b16 %v4945
        %v6492 = vunpack.c.l.b16 %v4946
        %v6493 = vunpack.c.h.b16 %v4946
        %v6494 = vunpack.c.l.b16 %v4947
        %v6495 = vunpack.c.h.b16 %v4947
        %v6496 = vunpack.c.l.b16 %v4948
        %v6497 = vunpack.c.h.b16 %v4948
        %v6498 = vunpack.c.l.b16 %v4949
        %v6499 = vunpack.c.h.b16 %v4949
        %v6500 = vunpack.c.l.b16 %v4950
        %v6501 = vunpack.c.h.b16 %v4950
        %v6502 = vunpack.c.l.b16 %v4951
        %v6503 = vunpack.c.h.b16 %v4951
        %v6504 = vunpack.c.l.b16 %v4952
        %v6505 = vunpack.c.h.b16 %v4952
        %v6506 = vunpack.c.l.b16 %v4953
        %v6507 = vunpack.c.h.b16 %v4953
        %v6508 = vunpack.c.l.b16 %v4954
        %v6509 = vunpack.c.h.b16 %v4954
        %v6510 = vunpack.c.l.b16 %v4955
        %v6511 = vunpack.c.h.b16 %v4955
        %v6512 = vunpack.c.l.b16 %v4956
        %v6513 = vunpack.c.h.b16 %v4956
        %v6514 = vunpack.c.l.b16 %v4957
        %v6515 = vunpack.c.h.b16 %v4957
        %v6516 = vunpack.c.l.b16 %v4958
        %v6517 = vunpack.c.h.b16 %v4958
        %v6518 = vunpack.c.l.b16 %v4959
        %v6519 = vunpack.c.h.b16 %v4959
        %v6520 = vunpack.c.l.b16 %v4960
        %v6521 = vunpack.c.h.b16 %v4960
        %v6522 = vunpack.c.l.b16 %v4961
        %v6523 = vunpack.c.h.b16 %v4961
        %v6524 = vunpack.c.l.b16 %v4962
        %v6525 = vunpack.c.h.b16 %v4962
        %v6526 = vunpack.c.l.b16 %v4963
        %v6527 = vunpack.c.h.b16 %v4963
        %v6528 = vunpack.c.l.b16 %v4964
        %v6529 = vunpack.c.h.b16 %v4964
        %v6530 = vunpack.c.l.b16 %v4965
        %v6531 = vunpack.c.h.b16 %v4965
        %v6532 = vunpack.c.l.b16 %v4966
        %v6533 = vunpack.c.h.b16 %v4966
        %v6534 = vunpack.c.l.b16 %v4967
        %v6535 = vunpack.c.h.b16 %v4967
        %v6536 = vunpack.c.l.b16 %v4968
        %v6537 = vunpack.c.h.b16 %v4968
        %v6538 = vunpack.c.l.b16 %v4969
        %v6539 = vunpack.c.h.b16 %v4969
        %v6540 = vunpack.c.l.b16 %v4970
        %v6541 = vunpack.c.h.b16 %v4970
        %v6542 = vunpack.c.l.b16 %v4971
        %v6543 = vunpack.c.h.b16 %v4971
        %v6544 = vpack.c.b16 %v5524, %v5520
        %v6545 = vpack.c.b16 %v5525, %v5521
        %v6546 = vpack.c.b16 %v5526, %v5522
        %v6547 = vpack.c.b16 %v5527, %v5523
        %v6548 = vpack.c.b16 %v5532, %v5528
        %v6549 = vpack.c.b16 %v5533, %v5529
        %v6550 = vpack.c.b16 %v5534, %v5530
        %v6551 = vpack.c.b16 %v5535, %v5531
        %v6552 = vpack.c.b16 %v5540, %v5536
        %v6553 = vpack.c.b16 %v5541, %v5537
        %v6554 = vpack.c.b16 %v5542, %v5538
        %v6555 = vpack.c.b16 %v5543, %v5539
        %v6556 = vpack.c.b16 %v5548, %v5544
        %v6557 = vpack.c.b16 %v5549, %v5545
        %v6558 = vpack.c.b16 %v5550, %v5546
        %v6559 = vpack.c.b16 %v5551, %v5547
        %v6560 = vpack.c.b16 %v5556, %v5552
        %v6561 = vpack.c.b16 %v5557, %v5553
        %v6562 = vpack.c.b16 %v5558, %v5554
        %v6563 = vpack.c.b16 %v5559, %v5555
        %v6564 = vpack.c.b16 %v5564, %v5560
        %v6565 = vpack.c.b16 %v5565, %v5561
        %v6566 = vpack.c.b16 %v5566, %v5562
        %v6567 = vpack.c.b16 %v5567, %v5563
        %v6568 = vpack.c.b16 %v5572, %v5568
        %v6569 = vpack.c.b16 %v5573, %v5569
        %v6570 = vpack.c.b16 %v5574, %v5570
        %v6571 = vpack.c.b16 %v5575, %v5571
        %v6572 = vpack.c.b16 %v5580, %v5576
        %v6573 = vpack.c.b16 %v5581, %v5577
        %v6574 = vpack.c.b16 %v5582, %v5578
        %v6575 = vpack.c.b16 %v5583, %v5579
        %v6576 = vpack.c.b16 %v5588, %v5584
        %v6577 = vpack.c.b16 %v5589, %v5585
        %v6578 = vpack.c.b16 %v5590, %v5586
        %v6579 = vpack.c.b16 %v5591, %v5587
        %v6580 = vpack.c.b16 %v5596, %v5592
        %v6581 = vpack.c.b16 %v5597, %v5593
        %v6582 = vpack.c.b16 %v5598, %v5594
        %v6583 = vpack.c.b16 %v5599, %v5595
        %v6584 = vpack.c.b16 %v5604, %v5600
        %v6585 = vpack.c.b16 %v5605, %v5601
        %v6586 = vpack.c.b16 %v5606, %v5602
        %v6587 = vpack.c.b16 %v5607, %v5603
        %v6588 = vpack.c.b16 %v5612, %v5608
        %v6589 = vpack.c.b16 %v5613, %v5609
        %v6590 = vpack.c.b16 %v5614, %v5610
        %v6591 = vpack.c.b16 %v5615, %v5611
        %v6592 = vpack.c.b16 %v5620, %v5616
        %v6593 = vpack.c.b16 %v5621, %v5617
        %v6594 = vpack.c.b16 %v5622, %v5618
        %v6595 = vpack.c.b16 %v5623, %v5619
        %v6596 = vpack.c.b16 %v5628, %v5624
        %v6597 = vpack.c.b16 %v5629, %v5625
        %v6598 = vpack.c.b16 %v5630, %v5626
        %v6599 = vpack.c.b16 %v5631, %v5627
        %v6600 = vpack.c.b16 %v5636, %v5632
        %v6601 = vpack.c.b16 %v5637, %v5633
        %v6602 = vpack.c.b16 %v5638, %v5634
        %v6603 = vpack.c.b16 %v5639, %v5635
        %v6604 = vpack.c.b16 %v5644, %v5640
        %v6605 = vpack.c.b16 %v5645, %v5641
        %v6606 = vpack.c.b16 %v5646, %v5642
        %v6607 = vpack.c.b16 %v5647, %v5643
        %v6608 = vpack.c.b16 %v5652, %v5648
        %v6609 = vpack.c.b16 %v5653, %v5649
        %v6610 = vpack.c.b16 %v5654, %v5650
        %v6611 = vpack.c.b16 %v5655, %v5651
        %v6612 = vpack.c.b16 %v5660, %v5656
        %v6613 = vpack.c.b16 %v5661, %v5657
        %v6614 = vpack.c.b16 %v5662, %v5658
        %v6615 = vpack.c.b16 %v5663, %v5659
        %v6616 = vpack.c.b16 %v5668, %v5664
        %v6617 = vpack.c.b16 %v5669, %v5665
        %v6618 = vpack.c.b16 %v5670, %v5666
        %v6619 = vpack.c.b16 %v5671, %v5667
        %v6620 = vpack.c.b16 %v5676, %v5672
        %v6621 = vpack.c.b16 %v5677, %v5673
        %v6622 = vpack.c.b16 %v5678, %v5674
        %v6623 = vpack.c.b16 %v5679, %v5675
        %v6624 = vpack.c.b16 %v5684, %v5680
        %v6625 = vpack.c.b16 %v5685, %v5681
        %v6626 = vpack.c.b16 %v5686, %v5682
        %v6627 = vpack.c.b16 %v5687, %v5683
        %v6628 = vpack.c.b16 %v5692, %v5688
        %v6629 = vpack.c.b16 %v5693, %v5689
        %v6630 = vpack.c.b16 %v5694, %v5690
        %v6631 = vpack.c.b16 %v5695, %v5691
        %v6632 = vpack.c.b16 %v5700, %v5696
        %v6633 = vpack.c.b16 %v5701, %v5697
        %v6634 = vpack.c.b16 %v5702, %v5698
        %v6635 = vpack.c.b16 %v5703, %v5699
        %v6636 = vpack.c.b16 %v5708, %v5704
        %v6637 = vpack.c.b16 %v5709, %v5705
        %v6638 = vpack.c.b16 %v5710, %v5706
        %v6639 = vpack.c.b16 %v5711, %v5707
        %v6640 = vpack.c.b16 %v5716, %v5712
        %v6641 = vpack.c.b16 %v5717, %v5713
        %v6642 = vpack.c.b16 %v5718, %v5714
        %v6643 = vpack.c.b16 %v5719, %v5715
        %v6644 = vpack.c.b16 %v5724, %v5720
        %v6645 = vpack.c.b16 %v5725, %v5721
        %v6646 = vpack.c.b16 %v5726, %v5722
        %v6647 = vpack.c.b16 %v5727, %v5723
        %v6648 = vpack.c.b16 %v5732, %v5728
        %v6649 = vpack.c.b16 %v5733, %v5729
        %v6650 = vpack.c.b16 %v5734, %v5730
        %v6651 = vpack.c.b16 %v5735, %v5731
        %v6652 = vpack.c.b16 %v5740, %v5736
        %v6653 = vpack.c.b16 %v5741, %v5737
        %v6654 = vpack.c.b16 %v5742, %v5738
        %v6655 = vpack.c.b16 %v5743, %v5739
        %v6656 = vpack.c.b16 %v5748, %v5744
        %v6657 = vpack.c.b16 %v5749, %v5745
        %v6658 = vpack.c.b16 %v5750, %v5746
        %v6659 = vpack.c.b16 %v5751, %v5747
        %v6660 = vpack.c.b16 %v5756, %v5752
        %v6661 = vpack.c.b16 %v5757, %v5753
        %v6662 = vpack.c.b16 %v5758, %v5754
        %v6663 = vpack.c.b16 %v5759, %v5755
        %v6664 = vpack.c.b16 %v5764, %v5760
        %v6665 = vpack.c.b16 %v5765, %v5761
        %v6666 = vpack.c.b16 %v5766, %v5762
        %v6667 = vpack.c.b16 %v5767, %v5763
        %v6668 = vpack.c.b16 %v5772, %v5768
        %v6669 = vpack.c.b16 %v5773, %v5769
        %v6670 = vpack.c.b16 %v5774, %v5770
        %v6671 = vpack.c.b16 %v5775, %v5771
        %v6672 = vpack.c.b16 %v5780, %v5776
        %v6673 = vpack.c.b16 %v5781, %v5777
        %v6674 = vpack.c.b16 %v5782, %v5778
        %v6675 = vpack.c.b16 %v5783, %v5779
        %v6676 = vpack.c.b16 %v5788, %v5784
        %v6677 = vpack.c.b16 %v5789, %v5785
        %v6678 = vpack.c.b16 %v5790, %v5786
        %v6679 = vpack.c.b16 %v5791, %v5787
        %v6680 = vpack.c.b16 %v5796, %v5792
        %v6681 = vpack.c.b16 %v5797, %v5793
        %v6682 = vpack.c.b16 %v5798, %v5794
        %v6683 = vpack.c.b16 %v5799, %v5795
        %v6684 = vpack.c.b16 %v5804, %v5800
        %v6685 = vpack.c.b16 %v5805, %v5801
        %v6686 = vpack.c.b16 %v5806, %v5802
        %v6687 = vpack.c.b16 %v5807, %v5803
        %v6688 = vpack.c.b16 %v5812, %v5808
        %v6689 = vpack.c.b16 %v5813, %v5809
        %v6690 = vpack.c.b16 %v5814, %v5810
        %v6691 = vpack.c.b16 %v5815, %v5811
        %v6692 = vpack.c.b16 %v5820, %v5816
        %v6693 = vpack.c.b16 %v5821, %v5817
        %v6694 = vpack.c.b16 %v5822, %v5818
        %v6695 = vpack.c.b16 %v5823, %v5819
        %v6696 = vpack.c.b16 %v5828, %v5824
        %v6697 = vpack.c.b16 %v5829, %v5825
        %v6698 = vpack.c.b16 %v5830, %v5826
        %v6699 = vpack.c.b16 %v5831, %v5827
        %v6700 = vpack.c.b16 %v5836, %v5832
        %v6701 = vpack.c.b16 %v5837, %v5833
        %v6702 = vpack.c.b16 %v5838, %v5834
        %v6703 = vpack.c.b16 %v5839, %v5835
        %v6704 = vpack.c.b16 %v5844, %v5840
        %v6705 = vpack.c.b16 %v5845, %v5841
        %v6706 = vpack.c.b16 %v5846, %v5842
        %v6707 = vpack.c.b16 %v5847, %v5843
        %v6708 = vpack.c.b16 %v5852, %v5848
        %v6709 = vpack.c.b16 %v5853, %v5849
        %v6710 = vpack.c.b16 %v5854, %v5850
        %v6711 = vpack.c.b16 %v5855, %v5851
        %v6712 = vpack.c.b16 %v5860, %v5856
        %v6713 = vpack.c.b16 %v5861, %v5857
        %v6714 = vpack.c.b16 %v5862, %v5858
        %v6715 = vpack.c.b16 %v5863, %v5859
        %v6716 = vpack.c.b16 %v5868, %v5864
        %v6717 = vpack.c.b16 %v5869, %v5865
        %v6718 = vpack.c.b16 %v5870, %v5866
        %v6719 = vpack.c.b16 %v5871, %v5867
        %v6720 = vpack.c.b16 %v5876, %v5872
        %v6721 = vpack.c.b16 %v5877, %v5873
        %v6722 = vpack.c.b16 %v5878, %v5874
        %v6723 = vpack.c.b16 %v5879, %v5875
        %v6724 = vpack.c.b16 %v5884, %v5880
        %v6725 = vpack.c.b16 %v5885, %v5881
        %v6726 = vpack.c.b16 %v5886, %v5882
        %v6727 = vpack.c.b16 %v5887, %v5883
        %v6728 = vpack.c.b16 %v5892, %v5888
        %v6729 = vpack.c.b16 %v5893, %v5889
        %v6730 = vpack.c.b16 %v5894, %v5890
        %v6731 = vpack.c.b16 %v5895, %v5891
        %v6732 = vpack.c.b16 %v5900, %v5896
        %v6733 = vpack.c.b16 %v5901, %v5897
        %v6734 = vpack.c.b16 %v5902, %v5898
        %v6735 = vpack.c.b16 %v5903, %v5899
        %v6736 = vpack.c.b16 %v5908, %v5904
        %v6737 = vpack.c.b16 %v5909, %v5905
        %v6738 = vpack.c.b16 %v5910, %v5906
        %v6739 = vpack.c.b16 %v5911, %v5907
        %v6740 = vpack.c.b16 %v5916, %v5912
        %v6741 = vpack.c.b16 %v5917, %v5913
        %v6742 = vpack.c.b16 %v5918, %v5914
        %v6743 = vpack.c.b16 %v5919, %v5915
        %v6744 = vpack.c.b16 %v5924, %v5920
        %v6745 = vpack.c.b16 %v5925, %v5921
        %v6746 = vpack.c.b16 %v5926, %v5922
        %v6747 = vpack.c.b16 %v5927, %v5923
        %v6748 = vpack.c.b16 %v5932, %v5928
        %v6749 = vpack.c.b16 %v5933, %v5929
        %v6750 = vpack.c.b16 %v5934, %v5930
        %v6751 = vpack.c.b16 %v5935, %v5931
        %v6752 = vpack.c.b16 %v5940, %v5936
        %v6753 = vpack.c.b16 %v5941, %v5937
        %v6754 = vpack.c.b16 %v5942, %v5938
        %v6755 = vpack.c.b16 %v5943, %v5939
        %v6756 = vpack.c.b16 %v5948, %v5944
        %v6757 = vpack.c.b16 %v5949, %v5945
        %v6758 = vpack.c.b16 %v5950, %v5946
        %v6759 = vpack.c.b16 %v5951, %v5947
        %v6760 = vpack.c.b16 %v5956, %v5952
        %v6761 = vpack.c.b16 %v5957, %v5953
        %v6762 = vpack.c.b16 %v5958, %v5954
        %v6763 = vpack.c.b16 %v5959, %v5955
        %v6764 = vpack.c.b16 %v5964, %v5960
        %v6765 = vpack.c.b16 %v5965, %v5961
        %v6766 = vpack.c.b16 %v5966, %v5962
        %v6767 = vpack.c.b16 %v5967, %v5963
        %v6768 = vpack.c.b16 %v5972, %v5968
        %v6769 = vpack.c.b16 %v5973, %v5969
        %v6770 = vpack.c.b16 %v5974, %v5970
        %v6771 = vpack.c.b16 %v5975, %v5971
        %v6772 = vpack.c.b16 %v5980, %v5976
        %v6773 = vpack.c.b16 %v5981, %v5977
        %v6774 = vpack.c.b16 %v5982, %v5978
        %v6775 = vpack.c.b16 %v5983, %v5979
        %v6776 = vpack.c.b16 %v5988, %v5984
        %v6777 = vpack.c.b16 %v5989, %v5985
        %v6778 = vpack.c.b16 %v5990, %v5986
        %v6779 = vpack.c.b16 %v5991, %v5987
        %v6780 = vpack.c.b16 %v5996, %v5992
        %v6781 = vpack.c.b16 %v5997, %v5993
        %v6782 = vpack.c.b16 %v5998, %v5994
        %v6783 = vpack.c.b16 %v5999, %v5995
        %v6784 = vpack.c.b16 %v6004, %v6000
        %v6785 = vpack.c.b16 %v6005, %v6001
        %v6786 = vpack.c.b16 %v6006, %v6002
        %v6787 = vpack.c.b16 %v6007, %v6003
        %v6788 = vpack.c.b16 %v6012, %v6008
        %v6789 = vpack.c.b16 %v6013, %v6009
        %v6790 = vpack.c.b16 %v6014, %v6010
        %v6791 = vpack.c.b16 %v6015, %v6011
        %v6792 = vpack.c.b16 %v6020, %v6016
        %v6793 = vpack.c.b16 %v6021, %v6017
        %v6794 = vpack.c.b16 %v6022, %v6018
        %v6795 = vpack.c.b16 %v6023, %v6019
        %v6796 = vpack.c.b16 %v6028, %v6024
        %v6797 = vpack.c.b16 %v6029, %v6025
        %v6798 = vpack.c.b16 %v6030, %v6026
        %v6799 = vpack.c.b16 %v6031, %v6027
        %v6800 = vpack.c.b16 %v6036, %v6032
        %v6801 = vpack.c.b16 %v6037, %v6033
        %v6802 = vpack.c.b16 %v6038, %v6034
        %v6803 = vpack.c.b16 %v6039, %v6035
        %v6804 = vpack.c.b16 %v6044, %v6040
        %v6805 = vpack.c.b16 %v6045, %v6041
        %v6806 = vpack.c.b16 %v6046, %v6042
        %v6807 = vpack.c.b16 %v6047, %v6043
        %v6808 = vpack.c.b16 %v6052, %v6048
        %v6809 = vpack.c.b16 %v6053, %v6049
        %v6810 = vpack.c.b16 %v6054, %v6050
        %v6811 = vpack.c.b16 %v6055, %v6051
        %v6812 = vpack.c.b16 %v6060, %v6056
        %v6813 = vpack.c.b16 %v6061, %v6057
        %v6814 = vpack.c.b16 %v6062, %v6058
        %v6815 = vpack.c.b16 %v6063, %v6059
        %v6816 = vpack.c.b16 %v6068, %v6064
        %v6817 = vpack.c.b16 %v6069, %v6065
        %v6818 = vpack.c.b16 %v6070, %v6066
        %v6819 = vpack.c.b16 %v6071, %v6067
        %v6820 = vpack.c.b16 %v6076, %v6072
        %v6821 = vpack.c.b16 %v6077, %v6073
        %v6822 = vpack.c.b16 %v6078, %v6074
        %v6823 = vpack.c.b16 %v6079, %v6075
        %v6824 = vpack.c.b16 %v6084, %v6080
        %v6825 = vpack.c.b16 %v6085, %v6081
        %v6826 = vpack.c.b16 %v6086, %v6082
        %v6827 = vpack.c.b16 %v6087, %v6083
        %v6828 = vpack.c.b16 %v6092, %v6088
        %v6829 = vpack.c.b16 %v6093, %v6089
        %v6830 = vpack.c.b16 %v6094, %v6090
        %v6831 = vpack.c.b16 %v6095, %v6091
        %v6832 = vpack.c.b16 %v6100, %v6096
        %v6833 = vpack.c.b16 %v6101, %v6097
        %v6834 = vpack.c.b16 %v6102, %v6098
        %v6835 = vpack.c.b16 %v6103, %v6099
        %v6836 = vpack.c.b16 %v6108, %v6104
        %v6837 = vpack.c.b16 %v6109, %v6105
        %v6838 = vpack.c.b16 %v6110, %v6106
        %v6839 = vpack.c.b16 %v6111, %v6107
        %v6840 = vpack.c.b16 %v6116, %v6112
        %v6841 = vpack.c.b16 %v6117, %v6113
        %v6842 = vpack.c.b16 %v6118, %v6114
        %v6843 = vpack.c.b16 %v6119, %v6115
        %v6844 = vpack.c.b16 %v6124, %v6120
        %v6845 = vpack.c.b16 %v6125, %v6121
        %v6846 = vpack.c.b16 %v6126, %v6122
        %v6847 = vpack.c.b16 %v6127, %v6123
        %v6848 = vpack.c.b16 %v6132, %v6128
        %v6849 = vpack.c.b16 %v6133, %v6129
        %v6850 = vpack.c.b16 %v6134, %v6130
        %v6851 = vpack.c.b16 %v6135, %v6131
        %v6852 = vpack.c.b16 %v6140, %v6136
        %v6853 = vpack.c.b16 %v6141, %v6137
        %v6854 = vpack.c.b16 %v6142, %v6138
        %v6855 = vpack.c.b16 %v6143, %v6139
        %v6856 = vpack.c.b16 %v6148, %v6144
        %v6857 = vpack.c.b16 %v6149, %v6145
        %v6858 = vpack.c.b16 %v6150, %v6146
        %v6859 = vpack.c.b16 %v6151, %v6147
        %v6860 = vpack.c.b16 %v6156, %v6152
        %v6861 = vpack.c.b16 %v6157, %v6153
        %v6862 = vpack.c.b16 %v6158, %v6154
        %v6863 = vpack.c.b16 %v6159, %v6155
        %v6864 = vpack.c.b16 %v6164, %v6160
        %v6865 = vpack.c.b16 %v6165, %v6161
        %v6866 = vpack.c.b16 %v6166, %v6162
        %v6867 = vpack.c.b16 %v6167, %v6163
        %v6868 = vpack.c.b16 %v6172, %v6168
        %v6869 = vpack.c.b16 %v6173, %v6169
        %v6870 = vpack.c.b16 %v6174, %v6170
        %v6871 = vpack.c.b16 %v6175, %v6171
        %v6872 = vpack.c.b16 %v6180, %v6176
        %v6873 = vpack.c.b16 %v6181, %v6177
        %v6874 = vpack.c.b16 %v6182, %v6178
        %v6875 = vpack.c.b16 %v6183, %v6179
        %v6876 = vpack.c.b16 %v6188, %v6184
        %v6877 = vpack.c.b16 %v6189, %v6185
        %v6878 = vpack.c.b16 %v6190, %v6186
        %v6879 = vpack.c.b16 %v6191, %v6187
        %v6880 = vpack.c.b16 %v6196, %v6192
        %v6881 = vpack.c.b16 %v6197, %v6193
        %v6882 = vpack.c.b16 %v6198, %v6194
        %v6883 = vpack.c.b16 %v6199, %v6195
        %v6884 = vpack.c.b16 %v6204, %v6200
        %v6885 = vpack.c.b16 %v6205, %v6201
        %v6886 = vpack.c.b16 %v6206, %v6202
        %v6887 = vpack.c.b16 %v6207, %v6203
        %v6888 = vpack.c.b16 %v6212, %v6208
        %v6889 = vpack.c.b16 %v6213, %v6209
        %v6890 = vpack.c.b16 %v6214, %v6210
        %v6891 = vpack.c.b16 %v6215, %v6211
        %v6892 = vpack.c.b16 %v6220, %v6216
        %v6893 = vpack.c.b16 %v6221, %v6217
        %v6894 = vpack.c.b16 %v6222, %v6218
        %v6895 = vpack.c.b16 %v6223, %v6219
        %v6896 = vpack.c.b16 %v6228, %v6224
        %v6897 = vpack.c.b16 %v6229, %v6225
        %v6898 = vpack.c.b16 %v6230, %v6226
        %v6899 = vpack.c.b16 %v6231, %v6227
        %v6900 = vpack.c.b16 %v6236, %v6232
        %v6901 = vpack.c.b16 %v6237, %v6233
        %v6902 = vpack.c.b16 %v6238, %v6234
        %v6903 = vpack.c.b16 %v6239, %v6235
        %v6904 = vpack.c.b16 %v6244, %v6240
        %v6905 = vpack.c.b16 %v6245, %v6241
        %v6906 = vpack.c.b16 %v6246, %v6242
        %v6907 = vpack.c.b16 %v6247, %v6243
        %v6908 = vpack.c.b16 %v6252, %v6248
        %v6909 = vpack.c.b16 %v6253, %v6249
        %v6910 = vpack.c.b16 %v6254, %v6250
        %v6911 = vpack.c.b16 %v6255, %v6251
        %v6912 = vpack.c.b16 %v6260, %v6256
        %v6913 = vpack.c.b16 %v6261, %v6257
        %v6914 = vpack.c.b16 %v6262, %v6258
        %v6915 = vpack.c.b16 %v6263, %v6259
        %v6916 = vpack.c.b16 %v6268, %v6264
        %v6917 = vpack.c.b16 %v6269, %v6265
        %v6918 = vpack.c.b16 %v6270, %v6266
        %v6919 = vpack.c.b16 %v6271, %v6267
        %v6920 = vpack.c.b16 %v6276, %v6272
        %v6921 = vpack.c.b16 %v6277, %v6273
        %v6922 = vpack.c.b16 %v6278, %v6274
        %v6923 = vpack.c.b16 %v6279, %v6275
        %v6924 = vpack.c.b16 %v6284, %v6280
        %v6925 = vpack.c.b16 %v6285, %v6281
        %v6926 = vpack.c.b16 %v6286, %v6282
        %v6927 = vpack.c.b16 %v6287, %v6283
        %v6928 = vpack.c.b16 %v6292, %v6288
        %v6929 = vpack.c.b16 %v6293, %v6289
        %v6930 = vpack.c.b16 %v6294, %v6290
        %v6931 = vpack.c.b16 %v6295, %v6291
        %v6932 = vpack.c.b16 %v6300, %v6296
        %v6933 = vpack.c.b16 %v6301, %v6297
        %v6934 = vpack.c.b16 %v6302, %v6298
        %v6935 = vpack.c.b16 %v6303, %v6299
        %v6936 = vpack.c.b16 %v6308, %v6304
        %v6937 = vpack.c.b16 %v6309, %v6305
        %v6938 = vpack.c.b16 %v6310, %v6306
        %v6939 = vpack.c.b16 %v6311, %v6307
        %v6940 = vpack.c.b16 %v6316, %v6312
        %v6941 = vpack.c.b16 %v6317, %v6313
        %v6942 = vpack.c.b16 %v6318, %v6314
        %v6943 = vpack.c.b16 %v6319, %v6315
        %v6944 = vpack.c.b16 %v6324, %v6320
        %v6945 = vpack.c.b16 %v6325, %v6321
        %v6946 = vpack.c.b16 %v6326, %v6322
        %v6947 = vpack.c.b16 %v6327, %v6323
        %v6948 = vpack.c.b16 %v6332, %v6328
        %v6949 = vpack.c.b16 %v6333, %v6329
        %v6950 = vpack.c.b16 %v6334, %v6330
        %v6951 = vpack.c.b16 %v6335, %v6331
        %v6952 = vpack.c.b16 %v6340, %v6336
        %v6953 = vpack.c.b16 %v6341, %v6337
        %v6954 = vpack.c.b16 %v6342, %v6338
        %v6955 = vpack.c.b16 %v6343, %v6339
        %v6956 = vpack.c.b16 %v6348, %v6344
        %v6957 = vpack.c.b16 %v6349, %v6345
        %v6958 = vpack.c.b16 %v6350, %v6346
        %v6959 = vpack.c.b16 %v6351, %v6347
        %v6960 = vpack.c.b16 %v6356, %v6352
        %v6961 = vpack.c.b16 %v6357, %v6353
        %v6962 = vpack.c.b16 %v6358, %v6354
        %v6963 = vpack.c.b16 %v6359, %v6355
        %v6964 = vpack.c.b16 %v6364, %v6360
        %v6965 = vpack.c.b16 %v6365, %v6361
        %v6966 = vpack.c.b16 %v6366, %v6362
        %v6967 = vpack.c.b16 %v6367, %v6363
        %v6968 = vpack.c.b16 %v6372, %v6368
        %v6969 = vpack.c.b16 %v6373, %v6369
        %v6970 = vpack.c.b16 %v6374, %v6370
        %v6971 = vpack.c.b16 %v6375, %v6371
        %v6972 = vpack.c.b16 %v6380, %v6376
        %v6973 = vpack.c.b16 %v6381, %v6377
        %v6974 = vpack.c.b16 %v6382, %v6378
        %v6975 = vpack.c.b16 %v6383, %v6379
        %v6976 = vpack.c.b16 %v6388, %v6384
        %v6977 = vpack.c.b16 %v6389, %v6385
        %v6978 = vpack.c.b16 %v6390, %v6386
        %v6979 = vpack.c.b16 %v6391, %v6387
        %v6980 = vpack.c.b16 %v6396, %v6392
        %v6981 = vpack.c.b16 %v6397, %v6393
        %v6982 = vpack.c.b16 %v6398, %v6394
        %v6983 = vpack.c.b16 %v6399, %v6395
        %v6984 = vpack.c.b16 %v6404, %v6400
        %v6985 = vpack.c.b16 %v6405, %v6401
        %v6986 = vpack.c.b16 %v6406, %v6402
        %v6987 = vpack.c.b16 %v6407, %v6403
        %v6988 = vpack.c.b16 %v6412, %v6408
        %v6989 = vpack.c.b16 %v6413, %v6409
        %v6990 = vpack.c.b16 %v6414, %v6410
        %v6991 = vpack.c.b16 %v6415, %v6411
        %v6992 = vpack.c.b16 %v6420, %v6416
        %v6993 = vpack.c.b16 %v6421, %v6417
        %v6994 = vpack.c.b16 %v6422, %v6418
        %v6995 = vpack.c.b16 %v6423, %v6419
        %v6996 = vpack.c.b16 %v6428, %v6424
        %v6997 = vpack.c.b16 %v6429, %v6425
        %v6998 = vpack.c.b16 %v6430, %v6426
        %v6999 = vpack.c.b16 %v6431, %v6427
        %v7000 = vpack.c.b16 %v6436, %v6432
        %v7001 = vpack.c.b16 %v6437, %v6433
        %v7002 = vpack.c.b16 %v6438, %v6434
        %v7003 = vpack.c.b16 %v6439, %v6435
        %v7004 = vpack.c.b16 %v6444, %v6440
        %v7005 = vpack.c.b16 %v6445, %v6441
        %v7006 = vpack.c.b16 %v6446, %v6442
        %v7007 = vpack.c.b16 %v6447, %v6443
        %v7008 = vpack.c.b16 %v6452, %v6448
        %v7009 = vpack.c.b16 %v6453, %v6449
        %v7010 = vpack.c.b16 %v6454, %v6450
        %v7011 = vpack.c.b16 %v6455, %v6451
        %v7012 = vpack.c.b16 %v6460, %v6456
        %v7013 = vpack.c.b16 %v6461, %v6457
        %v7014 = vpack.c.b16 %v6462, %v6458
        %v7015 = vpack.c.b16 %v6463, %v6459
        %v7016 = vpack.c.b16 %v6468, %v6464
        %v7017 = vpack.c.b16 %v6469, %v6465
        %v7018 = vpack.c.b16 %v6470, %v6466
        %v7019 = vpack.c.b16 %v6471, %v6467
        %v7020 = vpack.c.b16 %v6476, %v6472
        %v7021 = vpack.c.b16 %v6477, %v6473
        %v7022 = vpack.c.b16 %v6478, %v6474
        %v7023 = vpack.c.b16 %v6479, %v6475
        %v7024 = vpack.c.b16 %v6484, %v6480
        %v7025 = vpack.c.b16 %v6485, %v6481
        %v7026 = vpack.c.b16 %v6486, %v6482
        %v7027 = vpack.c.b16 %v6487, %v6483
        %v7028 = vpack.c.b16 %v6492, %v6488
        %v7029 = vpack.c.b16 %v6493, %v6489
        %v7030 = vpack.c.b16 %v6494, %v6490
        %v7031 = vpack.c.b16 %v6495, %v6491
        %v7032 = vpack.c.b16 %v6500, %v6496
        %v7033 = vpack.c.b16 %v6501, %v6497
        %v7034 = vpack.c.b16 %v6502, %v6498
        %v7035 = vpack.c.b16 %v6503, %v6499
        %v7036 = vpack.c.b16 %v6508, %v6504
        %v7037 = vpack.c.b16 %v6509, %v6505
        %v7038 = vpack.c.b16 %v6510, %v6506
        %v7039 = vpack.c.b16 %v6511, %v6507
        %v7040 = vpack.c.b16 %v6516, %v6512
        %v7041 = vpack.c.b16 %v6517, %v6513
        %v7042 = vpack.c.b16 %v6518, %v6514
        %v7043 = vpack.c.b16 %v6519, %v6515
        %v7044 = vpack.c.b16 %v6524, %v6520
        %v7045 = vpack.c.b16 %v6525, %v6521
        %v7046 = vpack.c.b16 %v6526, %v6522
        %v7047 = vpack.c.b16 %v6527, %v6523
        %v7048 = vpack.c.b16 %v6532, %v6528
        %v7049 = vpack.c.b16 %v6533, %v6529
        %v7050 = vpack.c.b16 %v6534, %v6530
        %v7051 = vpack.c.b16 %v6535, %v6531
        %v7052 = vpack.c.b16 %v6540, %v6536
        %v7053 = vpack.c.b16 %v6541, %v6537
        %v7054 = vpack.c.b16 %v6542, %v6538
        %v7055 = vpack.c.b16 %v6543, %v6539
        %7568 = vmatpush.bf16.msra.mxu0 %v6572
        %7569 = vmatpush.bf16.msra.mxu0 %v6568
        %7570 = vmatpush.bf16.msra.mxu0 %v6564
        %7571 = vmatpush.bf16.msra.mxu0 %v6560
        %7572 = vmatpush.bf16.msra.mxu0 %v6556
        %7573 = vmatpush.bf16.msra.mxu0 %v6552
        %7574 = vmatpush.bf16.msra.mxu0 %v6548
        %7575 = vmatpush.bf16.msra.mxu0 %v6544
        %7576 = vmatmul.bf16.gmra.mxu0 %v4974
        %v7577 = vpop.f32.mrf.mxu0
        %v7578 = vadd.f32 0.0, %v7577
        %v7579 = vpop.f32.mrf.mxu0
        %7580 = vdwg.mxu0
        %7581 = vmatpush.bf16.msra.mxu0 %v6604
        %7582 = vmatpush.bf16.msra.mxu0 %v6600
        %7583 = vmatpush.bf16.msra.mxu0 %v6596
        %7584 = vmatpush.bf16.msra.mxu0 %v6592
        %7585 = vmatpush.bf16.msra.mxu0 %v6588
        %7586 = vmatpush.bf16.msra.mxu0 %v6584
        %7587 = vmatpush.bf16.msra.mxu0 %v6580
        %7588 = vmatpush.bf16.msra.mxu0 %v6576
        %7589 = vmatmul.bf16.gmra.mxu0 %v4975
        %v7590 = vpop.f32.mrf.mxu0
        %v7591 = vadd.f32 %v7578, %v7590
        %v7592 = vpop.f32.mrf.mxu0
        %7593 = vdwg.mxu0
        %7594 = vmatpush.bf16.msra.mxu0 %v6636
        %7595 = vmatpush.bf16.msra.mxu0 %v6632
        %7596 = vmatpush.bf16.msra.mxu0 %v6628
        %7597 = vmatpush.bf16.msra.mxu0 %v6624
        %7598 = vmatpush.bf16.msra.mxu0 %v6620
        %7599 = vmatpush.bf16.msra.mxu0 %v6616
        %7600 = vmatpush.bf16.msra.mxu0 %v6612
        %7601 = vmatpush.bf16.msra.mxu0 %v6608
        %7602 = vmatmul.bf16.gmra.mxu0 %v4976
        %v7603 = vpop.f32.mrf.mxu0
        %v7604 = vadd.f32 %v7591, %v7603
        %v7605 = vpop.f32.mrf.mxu0
        %7606 = vdwg.mxu0
        %7607 = vmatpush.bf16.msra.mxu0 %v6668
        %7608 = vmatpush.bf16.msra.mxu0 %v6664
        %7609 = vmatpush.bf16.msra.mxu0 %v6660
        %7610 = vmatpush.bf16.msra.mxu0 %v6656
        %7611 = vmatpush.bf16.msra.mxu0 %v6652
        %7612 = vmatpush.bf16.msra.mxu0 %v6648
        %7613 = vmatpush.bf16.msra.mxu0 %v6644
        %7614 = vmatpush.bf16.msra.mxu0 %v6640
        %7615 = vmatmul.bf16.gmra.mxu0 %v4977
        %v7616 = vpop.f32.mrf.mxu0
        %v7617 = vadd.f32 %v7604, %v7616
        %v7618 = vpop.f32.mrf.mxu0
        %7619 = vdwg.mxu0
        %7620 = vmatpush.bf16.msra.mxu0 %v6700
        %7621 = vmatpush.bf16.msra.mxu0 %v6696
        %7622 = vmatpush.bf16.msra.mxu0 %v6692
        %7623 = vmatpush.bf16.msra.mxu0 %v6688
        %7624 = vmatpush.bf16.msra.mxu0 %v6684
        %7625 = vmatpush.bf16.msra.mxu0 %v6680
        %7626 = vmatpush.bf16.msra.mxu0 %v6676
        %7627 = vmatpush.bf16.msra.mxu0 %v6672
        %7628 = vmatmul.bf16.gmra.mxu0 %v4978
        %v7629 = vpop.f32.mrf.mxu0
        %v7630 = vadd.f32 %v7617, %v7629
        %v7631 = vpop.f32.mrf.mxu0
        %7632 = vdwg.mxu0
        %7633 = vmatpush.bf16.msra.mxu0 %v6732
        %7634 = vmatpush.bf16.msra.mxu0 %v6728
        %7635 = vmatpush.bf16.msra.mxu0 %v6724
        %7636 = vmatpush.bf16.msra.mxu0 %v6720
        %7637 = vmatpush.bf16.msra.mxu0 %v6716
        %7638 = vmatpush.bf16.msra.mxu0 %v6712
        %7639 = vmatpush.bf16.msra.mxu0 %v6708
        %7640 = vmatpush.bf16.msra.mxu0 %v6704
        %7641 = vmatmul.bf16.gmra.mxu0 %v4979
        %v7642 = vpop.f32.mrf.mxu0
        %v7643 = vadd.f32 %v7630, %v7642
        %v7644 = vpop.f32.mrf.mxu0
        %7645 = vdwg.mxu0
        %7646 = vmatpush.bf16.msra.mxu0 %v6764
        %7647 = vmatpush.bf16.msra.mxu0 %v6760
        %7648 = vmatpush.bf16.msra.mxu0 %v6756
        %7649 = vmatpush.bf16.msra.mxu0 %v6752
        %7650 = vmatpush.bf16.msra.mxu0 %v6748
        %7651 = vmatpush.bf16.msra.mxu0 %v6744
        %7652 = vmatpush.bf16.msra.mxu0 %v6740
        %7653 = vmatpush.bf16.msra.mxu0 %v6736
        %7654 = vmatmul.bf16.gmra.mxu0 %v4980
        %v7655 = vpop.f32.mrf.mxu0
        %v7656 = vadd.f32 %v7643, %v7655
        %v7657 = vpop.f32.mrf.mxu0
        %7658 = vdwg.mxu0
        %7659 = vmatpush.bf16.msra.mxu0 %v6796
        %7660 = vmatpush.bf16.msra.mxu0 %v6792
        %7661 = vmatpush.bf16.msra.mxu0 %v6788
        %7662 = vmatpush.bf16.msra.mxu0 %v6784
        %7663 = vmatpush.bf16.msra.mxu0 %v6780
        %7664 = vmatpush.bf16.msra.mxu0 %v6776
        %7665 = vmatpush.bf16.msra.mxu0 %v6772
        %7666 = vmatpush.bf16.msra.mxu0 %v6768
        %7667 = vmatmul.bf16.gmra.mxu0 %v4981
        %v7668 = vpop.f32.mrf.mxu0
        %v7669 = vadd.f32 %v7656, %v7668
        %v7670 = vpop.f32.mrf.mxu0
        %7671 = vdwg.mxu0
        %7672 = vmatpush.bf16.msra.mxu0 %v6828
        %7673 = vmatpush.bf16.msra.mxu0 %v6824
        %7674 = vmatpush.bf16.msra.mxu0 %v6820
        %7675 = vmatpush.bf16.msra.mxu0 %v6816
        %7676 = vmatpush.bf16.msra.mxu0 %v6812
        %7677 = vmatpush.bf16.msra.mxu0 %v6808
        %7678 = vmatpush.bf16.msra.mxu0 %v6804
        %7679 = vmatpush.bf16.msra.mxu0 %v6800
        %7680 = vmatmul.bf16.gmra.mxu0 %v4984
        %v7681 = vpop.f32.mrf.mxu0
        %v7682 = vadd.f32 %v7669, %v7681
        %v7683 = vpop.f32.mrf.mxu0
        %7684 = vdwg.mxu0
        %7685 = vmatpush.bf16.msra.mxu0 %v6860
        %7686 = vmatpush.bf16.msra.mxu0 %v6856
        %7687 = vmatpush.bf16.msra.mxu0 %v6852
        %7688 = vmatpush.bf16.msra.mxu0 %v6848
        %7689 = vmatpush.bf16.msra.mxu0 %v6844
        %7690 = vmatpush.bf16.msra.mxu0 %v6840
        %7691 = vmatpush.bf16.msra.mxu0 %v6836
        %7692 = vmatpush.bf16.msra.mxu0 %v6832
        %7693 = vmatmul.bf16.gmra.mxu0 %v4985
        %v7694 = vpop.f32.mrf.mxu0
        %v7695 = vadd.f32 %v7682, %v7694
        %v7696 = vpop.f32.mrf.mxu0
        %7697 = vdwg.mxu0
        %7698 = vmatpush.bf16.msra.mxu0 %v6892
        %7699 = vmatpush.bf16.msra.mxu0 %v6888
        %7700 = vmatpush.bf16.msra.mxu0 %v6884
        %7701 = vmatpush.bf16.msra.mxu0 %v6880
        %7702 = vmatpush.bf16.msra.mxu0 %v6876
        %7703 = vmatpush.bf16.msra.mxu0 %v6872
        %7704 = vmatpush.bf16.msra.mxu0 %v6868
        %7705 = vmatpush.bf16.msra.mxu0 %v6864
        %7706 = vmatmul.bf16.gmra.mxu0 %v4986
        %v7707 = vpop.f32.mrf.mxu0
        %v7708 = vadd.f32 %v7695, %v7707
        %v7709 = vpop.f32.mrf.mxu0
        %7710 = vdwg.mxu0
        %7711 = vmatpush.bf16.msra.mxu0 %v6924
        %7712 = vmatpush.bf16.msra.mxu0 %v6920
        %7713 = vmatpush.bf16.msra.mxu0 %v6916
        %7714 = vmatpush.bf16.msra.mxu0 %v6912
        %7715 = vmatpush.bf16.msra.mxu0 %v6908
        %7716 = vmatpush.bf16.msra.mxu0 %v6904
        %7717 = vmatpush.bf16.msra.mxu0 %v6900
        %7718 = vmatpush.bf16.msra.mxu0 %v6896
        %7719 = vmatmul.bf16.gmra.mxu0 %v4987
        %v7720 = vpop.f32.mrf.mxu0
        %v7721 = vadd.f32 %v7708, %v7720
        %v7722 = vpop.f32.mrf.mxu0
        %7723 = vdwg.mxu0
        %7724 = vmatpush.bf16.msra.mxu0 %v6956
        %7725 = vmatpush.bf16.msra.mxu0 %v6952
        %7726 = vmatpush.bf16.msra.mxu0 %v6948
        %7727 = vmatpush.bf16.msra.mxu0 %v6944
        %7728 = vmatpush.bf16.msra.mxu0 %v6940
        %7729 = vmatpush.bf16.msra.mxu0 %v6936
        %7730 = vmatpush.bf16.msra.mxu0 %v6932
        %7731 = vmatpush.bf16.msra.mxu0 %v6928
        %7732 = vmatmul.bf16.gmra.mxu0 %v4988
        %v7733 = vpop.f32.mrf.mxu0
        %v7734 = vadd.f32 %v7721, %v7733
        %v7735 = vpop.f32.mrf.mxu0
        %7736 = vdwg.mxu0
        %7737 = vmatpush.bf16.msra.mxu0 %v6988
        %7738 = vmatpush.bf16.msra.mxu0 %v6984
        %7739 = vmatpush.bf16.msra.mxu0 %v6980
        %7740 = vmatpush.bf16.msra.mxu0 %v6976
        %7741 = vmatpush.bf16.msra.mxu0 %v6972
        %7742 = vmatpush.bf16.msra.mxu0 %v6968
        %7743 = vmatpush.bf16.msra.mxu0 %v6964
        %7744 = vmatpush.bf16.msra.mxu0 %v6960
        %7745 = vmatmul.bf16.gmra.mxu0 %v4989
        %v7746 = vpop.f32.mrf.mxu0
        %v7747 = vadd.f32 %v7734, %v7746
        %v7748 = vpop.f32.mrf.mxu0
        %7749 = vdwg.mxu0
        %7750 = vmatpush.bf16.msra.mxu0 %v7020
        %7751 = vmatpush.bf16.msra.mxu0 %v7016
        %7752 = vmatpush.bf16.msra.mxu0 %v7012
        %7753 = vmatpush.bf16.msra.mxu0 %v7008
        %7754 = vmatpush.bf16.msra.mxu0 %v7004
        %7755 = vmatpush.bf16.msra.mxu0 %v7000
        %7756 = vmatpush.bf16.msra.mxu0 %v6996
        %7757 = vmatpush.bf16.msra.mxu0 %v6992
        %7758 = vmatmul.bf16.gmra.mxu0 %v4990
        %v7759 = vpop.f32.mrf.mxu0
        %v7760 = vadd.f32 %v7747, %v7759
        %v7761 = vpop.f32.mrf.mxu0
        %7762 = vdwg.mxu0
        %7763 = vmatpush.bf16.msra.mxu0 %v7052
        %7764 = vmatpush.bf16.msra.mxu0 %v7048
        %7765 = vmatpush.bf16.msra.mxu0 %v7044
        %7766 = vmatpush.bf16.msra.mxu0 %v7040
        %7767 = vmatpush.bf16.msra.mxu0 %v7036
        %7768 = vmatpush.bf16.msra.mxu0 %v7032
        %7769 = vmatpush.bf16.msra.mxu0 %v7028
        %7770 = vmatpush.bf16.msra.mxu0 %v7024
        %7771 = vmatmul.bf16.gmra.mxu0 %v4991
        %v7772 = vpop.f32.mrf.mxu0
        %v7773 = vadd.f32 %v7760, %v7772
        %v7774 = vpop.f32.mrf.mxu0
        %7775 = vdwg.mxu0
        %7776 = vmatpush.bf16.msra.mxu0 %v6573
        %7777 = vmatpush.bf16.msra.mxu0 %v6569
        %7778 = vmatpush.bf16.msra.mxu0 %v6565
        %7779 = vmatpush.bf16.msra.mxu0 %v6561
        %7780 = vmatpush.bf16.msra.mxu0 %v6557
        %7781 = vmatpush.bf16.msra.mxu0 %v6553
        %7782 = vmatpush.bf16.msra.mxu0 %v6549
        %7783 = vmatpush.bf16.msra.mxu0 %v6545
        %7784 = vmatmul.bf16.gmra.mxu0 %v4974
        %v7785 = vpop.f32.mrf.mxu0
        %v7786 = vadd.f32 0.0, %v7785
        %v7787 = vpop.f32.mrf.mxu0
        %7788 = vdwg.mxu0
        %7789 = vmatpush.bf16.msra.mxu0 %v6605
        %7790 = vmatpush.bf16.msra.mxu0 %v6601
        %7791 = vmatpush.bf16.msra.mxu0 %v6597
        %7792 = vmatpush.bf16.msra.mxu0 %v6593
        %7793 = vmatpush.bf16.msra.mxu0 %v6589
        %7794 = vmatpush.bf16.msra.mxu0 %v6585
        %7795 = vmatpush.bf16.msra.mxu0 %v6581
        %7796 = vmatpush.bf16.msra.mxu0 %v6577
        %7797 = vmatmul.bf16.gmra.mxu0 %v4975
        %v7798 = vpop.f32.mrf.mxu0
        %v7799 = vadd.f32 %v7786, %v7798
        %v7800 = vpop.f32.mrf.mxu0
        %7801 = vdwg.mxu0
        %7802 = vmatpush.bf16.msra.mxu0 %v6637
        %7803 = vmatpush.bf16.msra.mxu0 %v6633
        %7804 = vmatpush.bf16.msra.mxu0 %v6629
        %7805 = vmatpush.bf16.msra.mxu0 %v6625
        %7806 = vmatpush.bf16.msra.mxu0 %v6621
        %7807 = vmatpush.bf16.msra.mxu0 %v6617
        %7808 = vmatpush.bf16.msra.mxu0 %v6613
        %7809 = vmatpush.bf16.msra.mxu0 %v6609
        %7810 = vmatmul.bf16.gmra.mxu0 %v4976
        %v7811 = vpop.f32.mrf.mxu0
        %v7812 = vadd.f32 %v7799, %v7811
        %v7813 = vpop.f32.mrf.mxu0
        %7814 = vdwg.mxu0
        %7815 = vmatpush.bf16.msra.mxu0 %v6669
        %7816 = vmatpush.bf16.msra.mxu0 %v6665
        %7817 = vmatpush.bf16.msra.mxu0 %v6661
        %7818 = vmatpush.bf16.msra.mxu0 %v6657
        %7819 = vmatpush.bf16.msra.mxu0 %v6653
        %7820 = vmatpush.bf16.msra.mxu0 %v6649
        %7821 = vmatpush.bf16.msra.mxu0 %v6645
        %7822 = vmatpush.bf16.msra.mxu0 %v6641
        %7823 = vmatmul.bf16.gmra.mxu0 %v4977
        %v7824 = vpop.f32.mrf.mxu0
        %v7825 = vadd.f32 %v7812, %v7824
        %v7826 = vpop.f32.mrf.mxu0
        %7827 = vdwg.mxu0
        %7828 = vmatpush.bf16.msra.mxu0 %v6701
        %7829 = vmatpush.bf16.msra.mxu0 %v6697
        %7830 = vmatpush.bf16.msra.mxu0 %v6693
        %7831 = vmatpush.bf16.msra.mxu0 %v6689
        %7832 = vmatpush.bf16.msra.mxu0 %v6685
        %7833 = vmatpush.bf16.msra.mxu0 %v6681
        %7834 = vmatpush.bf16.msra.mxu0 %v6677
        %7835 = vmatpush.bf16.msra.mxu0 %v6673
        %7836 = vmatmul.bf16.gmra.mxu0 %v4978
        %v7837 = vpop.f32.mrf.mxu0
        %v7838 = vadd.f32 %v7825, %v7837
        %v7839 = vpop.f32.mrf.mxu0
        %7840 = vdwg.mxu0
        %7841 = vmatpush.bf16.msra.mxu0 %v6733
        %7842 = vmatpush.bf16.msra.mxu0 %v6729
        %7843 = vmatpush.bf16.msra.mxu0 %v6725
        %7844 = vmatpush.bf16.msra.mxu0 %v6721
        %7845 = vmatpush.bf16.msra.mxu0 %v6717
        %7846 = vmatpush.bf16.msra.mxu0 %v6713
        %7847 = vmatpush.bf16.msra.mxu0 %v6709
        %7848 = vmatpush.bf16.msra.mxu0 %v6705
        %7849 = vmatmul.bf16.gmra.mxu0 %v4979
        %v7850 = vpop.f32.mrf.mxu0
        %v7851 = vadd.f32 %v7838, %v7850
        %v7852 = vpop.f32.mrf.mxu0
        %7853 = vdwg.mxu0
        %7854 = vmatpush.bf16.msra.mxu0 %v6765
        %7855 = vmatpush.bf16.msra.mxu0 %v6761
        %7856 = vmatpush.bf16.msra.mxu0 %v6757
        %7857 = vmatpush.bf16.msra.mxu0 %v6753
        %7858 = vmatpush.bf16.msra.mxu0 %v6749
        %7859 = vmatpush.bf16.msra.mxu0 %v6745
        %7860 = vmatpush.bf16.msra.mxu0 %v6741
        %7861 = vmatpush.bf16.msra.mxu0 %v6737
        %7862 = vmatmul.bf16.gmra.mxu0 %v4980
        %v7863 = vpop.f32.mrf.mxu0
        %v7864 = vadd.f32 %v7851, %v7863
        %v7865 = vpop.f32.mrf.mxu0
        %7866 = vdwg.mxu0
        %7867 = vmatpush.bf16.msra.mxu0 %v6797
        %7868 = vmatpush.bf16.msra.mxu0 %v6793
        %7869 = vmatpush.bf16.msra.mxu0 %v6789
        %7870 = vmatpush.bf16.msra.mxu0 %v6785
        %7871 = vmatpush.bf16.msra.mxu0 %v6781
        %7872 = vmatpush.bf16.msra.mxu0 %v6777
        %7873 = vmatpush.bf16.msra.mxu0 %v6773
        %7874 = vmatpush.bf16.msra.mxu0 %v6769
        %7875 = vmatmul.bf16.gmra.mxu0 %v4981
        %v7876 = vpop.f32.mrf.mxu0
        %v7877 = vadd.f32 %v7864, %v7876
        %v7878 = vpop.f32.mrf.mxu0
        %7879 = vdwg.mxu0
        %7880 = vmatpush.bf16.msra.mxu0 %v6829
        %7881 = vmatpush.bf16.msra.mxu0 %v6825
        %7882 = vmatpush.bf16.msra.mxu0 %v6821
        %7883 = vmatpush.bf16.msra.mxu0 %v6817
        %7884 = vmatpush.bf16.msra.mxu0 %v6813
        %7885 = vmatpush.bf16.msra.mxu0 %v6809
        %7886 = vmatpush.bf16.msra.mxu0 %v6805
        %7887 = vmatpush.bf16.msra.mxu0 %v6801
        %7888 = vmatmul.bf16.gmra.mxu0 %v4984
        %v7889 = vpop.f32.mrf.mxu0
        %v7890 = vadd.f32 %v7877, %v7889
        %v7891 = vpop.f32.mrf.mxu0
        %7892 = vdwg.mxu0
        %7893 = vmatpush.bf16.msra.mxu0 %v6861
        %7894 = vmatpush.bf16.msra.mxu0 %v6857
        %7895 = vmatpush.bf16.msra.mxu0 %v6853
        %7896 = vmatpush.bf16.msra.mxu0 %v6849
        %7897 = vmatpush.bf16.msra.mxu0 %v6845
        %7898 = vmatpush.bf16.msra.mxu0 %v6841
        %7899 = vmatpush.bf16.msra.mxu0 %v6837
        %7900 = vmatpush.bf16.msra.mxu0 %v6833
        %7901 = vmatmul.bf16.gmra.mxu0 %v4985
        %v7902 = vpop.f32.mrf.mxu0
        %v7903 = vadd.f32 %v7890, %v7902
        %v7904 = vpop.f32.mrf.mxu0
        %7905 = vdwg.mxu0
        %7906 = vmatpush.bf16.msra.mxu0 %v6893
        %7907 = vmatpush.bf16.msra.mxu0 %v6889
        %7908 = vmatpush.bf16.msra.mxu0 %v6885
        %7909 = vmatpush.bf16.msra.mxu0 %v6881
        %7910 = vmatpush.bf16.msra.mxu0 %v6877
        %7911 = vmatpush.bf16.msra.mxu0 %v6873
        %7912 = vmatpush.bf16.msra.mxu0 %v6869
        %7913 = vmatpush.bf16.msra.mxu0 %v6865
        %7914 = vmatmul.bf16.gmra.mxu0 %v4986
        %v7915 = vpop.f32.mrf.mxu0
        %v7916 = vadd.f32 %v7903, %v7915
        %v7917 = vpop.f32.mrf.mxu0
        %7918 = vdwg.mxu0
        %7919 = vmatpush.bf16.msra.mxu0 %v6925
        %7920 = vmatpush.bf16.msra.mxu0 %v6921
        %7921 = vmatpush.bf16.msra.mxu0 %v6917
        %7922 = vmatpush.bf16.msra.mxu0 %v6913
        %7923 = vmatpush.bf16.msra.mxu0 %v6909
        %7924 = vmatpush.bf16.msra.mxu0 %v6905
        %7925 = vmatpush.bf16.msra.mxu0 %v6901
        %7926 = vmatpush.bf16.msra.mxu0 %v6897
        %7927 = vmatmul.bf16.gmra.mxu0 %v4987
        %v7928 = vpop.f32.mrf.mxu0
        %v7929 = vadd.f32 %v7916, %v7928
        %v7930 = vpop.f32.mrf.mxu0
        %7931 = vdwg.mxu0
        %7932 = vmatpush.bf16.msra.mxu0 %v6957
        %7933 = vmatpush.bf16.msra.mxu0 %v6953
        %7934 = vmatpush.bf16.msra.mxu0 %v6949
        %7935 = vmatpush.bf16.msra.mxu0 %v6945
        %7936 = vmatpush.bf16.msra.mxu0 %v6941
        %7937 = vmatpush.bf16.msra.mxu0 %v6937
        %7938 = vmatpush.bf16.msra.mxu0 %v6933
        %7939 = vmatpush.bf16.msra.mxu0 %v6929
        %7940 = vmatmul.bf16.gmra.mxu0 %v4988
        %v7941 = vpop.f32.mrf.mxu0
        %v7942 = vadd.f32 %v7929, %v7941
        %v7943 = vpop.f32.mrf.mxu0
        %7944 = vdwg.mxu0
        %7945 = vmatpush.bf16.msra.mxu0 %v6989
        %7946 = vmatpush.bf16.msra.mxu0 %v6985
        %7947 = vmatpush.bf16.msra.mxu0 %v6981
        %7948 = vmatpush.bf16.msra.mxu0 %v6977
        %7949 = vmatpush.bf16.msra.mxu0 %v6973
        %7950 = vmatpush.bf16.msra.mxu0 %v6969
        %7951 = vmatpush.bf16.msra.mxu0 %v6965
        %7952 = vmatpush.bf16.msra.mxu0 %v6961
        %7953 = vmatmul.bf16.gmra.mxu0 %v4989
        %v7954 = vpop.f32.mrf.mxu0
        %v7955 = vadd.f32 %v7942, %v7954
        %v7956 = vpop.f32.mrf.mxu0
        %7957 = vdwg.mxu0
        %7958 = vmatpush.bf16.msra.mxu0 %v7021
        %7959 = vmatpush.bf16.msra.mxu0 %v7017
        %7960 = vmatpush.bf16.msra.mxu0 %v7013
        %7961 = vmatpush.bf16.msra.mxu0 %v7009
        %7962 = vmatpush.bf16.msra.mxu0 %v7005
        %7963 = vmatpush.bf16.msra.mxu0 %v7001
        %7964 = vmatpush.bf16.msra.mxu0 %v6997
        %7965 = vmatpush.bf16.msra.mxu0 %v6993
        %7966 = vmatmul.bf16.gmra.mxu0 %v4990
        %v7967 = vpop.f32.mrf.mxu0
        %v7968 = vadd.f32 %v7955, %v7967
        %v7969 = vpop.f32.mrf.mxu0
        %7970 = vdwg.mxu0
        %7971 = vmatpush.bf16.msra.mxu0 %v7053
        %7972 = vmatpush.bf16.msra.mxu0 %v7049
        %7973 = vmatpush.bf16.msra.mxu0 %v7045
        %7974 = vmatpush.bf16.msra.mxu0 %v7041
        %7975 = vmatpush.bf16.msra.mxu0 %v7037
        %7976 = vmatpush.bf16.msra.mxu0 %v7033
        %7977 = vmatpush.bf16.msra.mxu0 %v7029
        %7978 = vmatpush.bf16.msra.mxu0 %v7025
        %7979 = vmatmul.bf16.gmra.mxu0 %v4991
        %v7980 = vpop.f32.mrf.mxu0
        %v7981 = vadd.f32 %v7968, %v7980
        %v7982 = vpop.f32.mrf.mxu0
        %7983 = vdwg.mxu0
        %7984 = vmatpush.bf16.msra.mxu0 %v6574
        %7985 = vmatpush.bf16.msra.mxu0 %v6570
        %7986 = vmatpush.bf16.msra.mxu0 %v6566
        %7987 = vmatpush.bf16.msra.mxu0 %v6562
        %7988 = vmatpush.bf16.msra.mxu0 %v6558
        %7989 = vmatpush.bf16.msra.mxu0 %v6554
        %7990 = vmatpush.bf16.msra.mxu0 %v6550
        %7991 = vmatpush.bf16.msra.mxu0 %v6546
        %7992 = vmatmul.bf16.gmra.mxu0 %v4974
        %v7993 = vpop.f32.mrf.mxu0
        %v7994 = vadd.f32 0.0, %v7993
        %v7995 = vpop.f32.mrf.mxu0
        %7996 = vdwg.mxu0
        %7997 = vmatpush.bf16.msra.mxu0 %v6606
        %7998 = vmatpush.bf16.msra.mxu0 %v6602
        %7999 = vmatpush.bf16.msra.mxu0 %v6598
        %8000 = vmatpush.bf16.msra.mxu0 %v6594
        %8001 = vmatpush.bf16.msra.mxu0 %v6590
        %8002 = vmatpush.bf16.msra.mxu0 %v6586
        %8003 = vmatpush.bf16.msra.mxu0 %v6582
        %8004 = vmatpush.bf16.msra.mxu0 %v6578
        %8005 = vmatmul.bf16.gmra.mxu0 %v4975
        %v8006 = vpop.f32.mrf.mxu0
        %v8007 = vadd.f32 %v7994, %v8006
        %v8008 = vpop.f32.mrf.mxu0
        %8009 = vdwg.mxu0
        %8010 = vmatpush.bf16.msra.mxu0 %v6638
        %8011 = vmatpush.bf16.msra.mxu0 %v6634
        %8012 = vmatpush.bf16.msra.mxu0 %v6630
        %8013 = vmatpush.bf16.msra.mxu0 %v6626
        %8014 = vmatpush.bf16.msra.mxu0 %v6622
        %8015 = vmatpush.bf16.msra.mxu0 %v6618
        %8016 = vmatpush.bf16.msra.mxu0 %v6614
        %8017 = vmatpush.bf16.msra.mxu0 %v6610
        %8018 = vmatmul.bf16.gmra.mxu0 %v4976
        %v8019 = vpop.f32.mrf.mxu0
        %v8020 = vadd.f32 %v8007, %v8019
        %v8021 = vpop.f32.mrf.mxu0
        %8022 = vdwg.mxu0
        %8023 = vmatpush.bf16.msra.mxu0 %v6670
        %8024 = vmatpush.bf16.msra.mxu0 %v6666
        %8025 = vmatpush.bf16.msra.mxu0 %v6662
        %8026 = vmatpush.bf16.msra.mxu0 %v6658
        %8027 = vmatpush.bf16.msra.mxu0 %v6654
        %8028 = vmatpush.bf16.msra.mxu0 %v6650
        %8029 = vmatpush.bf16.msra.mxu0 %v6646
        %8030 = vmatpush.bf16.msra.mxu0 %v6642
        %8031 = vmatmul.bf16.gmra.mxu0 %v4977
        %v8032 = vpop.f32.mrf.mxu0
        %v8033 = vadd.f32 %v8020, %v8032
        %v8034 = vpop.f32.mrf.mxu0
        %8035 = vdwg.mxu0
        %8036 = vmatpush.bf16.msra.mxu0 %v6702
        %8037 = vmatpush.bf16.msra.mxu0 %v6698
        %8038 = vmatpush.bf16.msra.mxu0 %v6694
        %8039 = vmatpush.bf16.msra.mxu0 %v6690
        %8040 = vmatpush.bf16.msra.mxu0 %v6686
        %8041 = vmatpush.bf16.msra.mxu0 %v6682
        %8042 = vmatpush.bf16.msra.mxu0 %v6678
        %8043 = vmatpush.bf16.msra.mxu0 %v6674
        %8044 = vmatmul.bf16.gmra.mxu0 %v4978
        %v8045 = vpop.f32.mrf.mxu0
        %v8046 = vadd.f32 %v8033, %v8045
        %v8047 = vpop.f32.mrf.mxu0
        %8048 = vdwg.mxu0
        %8049 = vmatpush.bf16.msra.mxu0 %v6734
        %8050 = vmatpush.bf16.msra.mxu0 %v6730
        %8051 = vmatpush.bf16.msra.mxu0 %v6726
        %8052 = vmatpush.bf16.msra.mxu0 %v6722
        %8053 = vmatpush.bf16.msra.mxu0 %v6718
        %8054 = vmatpush.bf16.msra.mxu0 %v6714
        %8055 = vmatpush.bf16.msra.mxu0 %v6710
        %8056 = vmatpush.bf16.msra.mxu0 %v6706
        %8057 = vmatmul.bf16.gmra.mxu0 %v4979
        %v8058 = vpop.f32.mrf.mxu0
        %v8059 = vadd.f32 %v8046, %v8058
        %v8060 = vpop.f32.mrf.mxu0
        %8061 = vdwg.mxu0
        %8062 = vmatpush.bf16.msra.mxu0 %v6766
        %8063 = vmatpush.bf16.msra.mxu0 %v6762
        %8064 = vmatpush.bf16.msra.mxu0 %v6758
        %8065 = vmatpush.bf16.msra.mxu0 %v6754
        %8066 = vmatpush.bf16.msra.mxu0 %v6750
        %8067 = vmatpush.bf16.msra.mxu0 %v6746
        %8068 = vmatpush.bf16.msra.mxu0 %v6742
        %8069 = vmatpush.bf16.msra.mxu0 %v6738
        %8070 = vmatmul.bf16.gmra.mxu0 %v4980
        %v8071 = vpop.f32.mrf.mxu0
        %v8072 = vadd.f32 %v8059, %v8071
        %v8073 = vpop.f32.mrf.mxu0
        %8074 = vdwg.mxu0
        %8075 = vmatpush.bf16.msra.mxu0 %v6798
        %8076 = vmatpush.bf16.msra.mxu0 %v6794
        %8077 = vmatpush.bf16.msra.mxu0 %v6790
        %8078 = vmatpush.bf16.msra.mxu0 %v6786
        %8079 = vmatpush.bf16.msra.mxu0 %v6782
        %8080 = vmatpush.bf16.msra.mxu0 %v6778
        %8081 = vmatpush.bf16.msra.mxu0 %v6774
        %8082 = vmatpush.bf16.msra.mxu0 %v6770
        %8083 = vmatmul.bf16.gmra.mxu0 %v4981
        %v8084 = vpop.f32.mrf.mxu0
        %v8085 = vadd.f32 %v8072, %v8084
        %v8086 = vpop.f32.mrf.mxu0
        %8087 = vdwg.mxu0
        %8088 = vmatpush.bf16.msra.mxu0 %v6830
        %8089 = vmatpush.bf16.msra.mxu0 %v6826
        %8090 = vmatpush.bf16.msra.mxu0 %v6822
        %8091 = vmatpush.bf16.msra.mxu0 %v6818
        %8092 = vmatpush.bf16.msra.mxu0 %v6814
        %8093 = vmatpush.bf16.msra.mxu0 %v6810
        %8094 = vmatpush.bf16.msra.mxu0 %v6806
        %8095 = vmatpush.bf16.msra.mxu0 %v6802
        %8096 = vmatmul.bf16.gmra.mxu0 %v4984
        %v8097 = vpop.f32.mrf.mxu0
        %v8098 = vadd.f32 %v8085, %v8097
        %v8099 = vpop.f32.mrf.mxu0
        %8100 = vdwg.mxu0
        %8101 = vmatpush.bf16.msra.mxu0 %v6862
        %8102 = vmatpush.bf16.msra.mxu0 %v6858
        %8103 = vmatpush.bf16.msra.mxu0 %v6854
        %8104 = vmatpush.bf16.msra.mxu0 %v6850
        %8105 = vmatpush.bf16.msra.mxu0 %v6846
        %8106 = vmatpush.bf16.msra.mxu0 %v6842
        %8107 = vmatpush.bf16.msra.mxu0 %v6838
        %8108 = vmatpush.bf16.msra.mxu0 %v6834
        %8109 = vmatmul.bf16.gmra.mxu0 %v4985
        %v8110 = vpop.f32.mrf.mxu0
        %v8111 = vadd.f32 %v8098, %v8110
        %v8112 = vpop.f32.mrf.mxu0
        %8113 = vdwg.mxu0
        %8114 = vmatpush.bf16.msra.mxu0 %v6894
        %8115 = vmatpush.bf16.msra.mxu0 %v6890
        %8116 = vmatpush.bf16.msra.mxu0 %v6886
        %8117 = vmatpush.bf16.msra.mxu0 %v6882
        %8118 = vmatpush.bf16.msra.mxu0 %v6878
        %8119 = vmatpush.bf16.msra.mxu0 %v6874
        %8120 = vmatpush.bf16.msra.mxu0 %v6870
        %8121 = vmatpush.bf16.msra.mxu0 %v6866
        %8122 = vmatmul.bf16.gmra.mxu0 %v4986
        %v8123 = vpop.f32.mrf.mxu0
        %v8124 = vadd.f32 %v8111, %v8123
        %v8125 = vpop.f32.mrf.mxu0
        %8126 = vdwg.mxu0
        %8127 = vmatpush.bf16.msra.mxu0 %v6926
        %8128 = vmatpush.bf16.msra.mxu0 %v6922
        %8129 = vmatpush.bf16.msra.mxu0 %v6918
        %8130 = vmatpush.bf16.msra.mxu0 %v6914
        %8131 = vmatpush.bf16.msra.mxu0 %v6910
        %8132 = vmatpush.bf16.msra.mxu0 %v6906
        %8133 = vmatpush.bf16.msra.mxu0 %v6902
        %8134 = vmatpush.bf16.msra.mxu0 %v6898
        %8135 = vmatmul.bf16.gmra.mxu0 %v4987
        %v8136 = vpop.f32.mrf.mxu0
        %v8137 = vadd.f32 %v8124, %v8136
        %v8138 = vpop.f32.mrf.mxu0
        %8139 = vdwg.mxu0
        %8140 = vmatpush.bf16.msra.mxu0 %v6958
        %8141 = vmatpush.bf16.msra.mxu0 %v6954
        %8142 = vmatpush.bf16.msra.mxu0 %v6950
        %8143 = vmatpush.bf16.msra.mxu0 %v6946
        %8144 = vmatpush.bf16.msra.mxu0 %v6942
        %8145 = vmatpush.bf16.msra.mxu0 %v6938
        %8146 = vmatpush.bf16.msra.mxu0 %v6934
        %8147 = vmatpush.bf16.msra.mxu0 %v6930
        %8148 = vmatmul.bf16.gmra.mxu0 %v4988
        %v8149 = vpop.f32.mrf.mxu0
        %v8150 = vadd.f32 %v8137, %v8149
        %v8151 = vpop.f32.mrf.mxu0
        %8152 = vdwg.mxu0
        %8153 = vmatpush.bf16.msra.mxu0 %v6990
        %8154 = vmatpush.bf16.msra.mxu0 %v6986
        %8155 = vmatpush.bf16.msra.mxu0 %v6982
        %8156 = vmatpush.bf16.msra.mxu0 %v6978
        %8157 = vmatpush.bf16.msra.mxu0 %v6974
        %8158 = vmatpush.bf16.msra.mxu0 %v6970
        %8159 = vmatpush.bf16.msra.mxu0 %v6966
        %8160 = vmatpush.bf16.msra.mxu0 %v6962
        %8161 = vmatmul.bf16.gmra.mxu0 %v4989
        %v8162 = vpop.f32.mrf.mxu0
        %v8163 = vadd.f32 %v8150, %v8162
        %v8164 = vpop.f32.mrf.mxu0
        %8165 = vdwg.mxu0
        %8166 = vmatpush.bf16.msra.mxu0 %v7022
        %8167 = vmatpush.bf16.msra.mxu0 %v7018
        %8168 = vmatpush.bf16.msra.mxu0 %v7014
        %8169 = vmatpush.bf16.msra.mxu0 %v7010
        %8170 = vmatpush.bf16.msra.mxu0 %v7006
        %8171 = vmatpush.bf16.msra.mxu0 %v7002
        %8172 = vmatpush.bf16.msra.mxu0 %v6998
        %8173 = vmatpush.bf16.msra.mxu0 %v6994
        %8174 = vmatmul.bf16.gmra.mxu0 %v4990
        %v8175 = vpop.f32.mrf.mxu0
        %v8176 = vadd.f32 %v8163, %v8175
        %v8177 = vpop.f32.mrf.mxu0
        %8178 = vdwg.mxu0
        %8179 = vmatpush.bf16.msra.mxu0 %v7054
        %8180 = vmatpush.bf16.msra.mxu0 %v7050
        %8181 = vmatpush.bf16.msra.mxu0 %v7046
        %8182 = vmatpush.bf16.msra.mxu0 %v7042
        %8183 = vmatpush.bf16.msra.mxu0 %v7038
        %8184 = vmatpush.bf16.msra.mxu0 %v7034
        %8185 = vmatpush.bf16.msra.mxu0 %v7030
        %8186 = vmatpush.bf16.msra.mxu0 %v7026
        %8187 = vmatmul.bf16.gmra.mxu0 %v4991
        %v8188 = vpop.f32.mrf.mxu0
        %v8189 = vadd.f32 %v8176, %v8188
        %v8190 = vpop.f32.mrf.mxu0
        %8191 = vdwg.mxu0
        %8192 = vmatpush.bf16.msra.mxu0 %v6575
        %8193 = vmatpush.bf16.msra.mxu0 %v6571
        %8194 = vmatpush.bf16.msra.mxu0 %v6567
        %8195 = vmatpush.bf16.msra.mxu0 %v6563
        %8196 = vmatpush.bf16.msra.mxu0 %v6559
        %8197 = vmatpush.bf16.msra.mxu0 %v6555
        %8198 = vmatpush.bf16.msra.mxu0 %v6551
        %8199 = vmatpush.bf16.msra.mxu0 %v6547
        %8200 = vmatmul.bf16.gmra.mxu0 %v4974
        %v8201 = vpop.f32.mrf.mxu0
        %v8202 = vadd.f32 0.0, %v8201
        %v8203 = vpop.f32.mrf.mxu0
        %8204 = vdwg.mxu0
        %8205 = vmatpush.bf16.msra.mxu0 %v6607
        %8206 = vmatpush.bf16.msra.mxu0 %v6603
        %8207 = vmatpush.bf16.msra.mxu0 %v6599
        %8208 = vmatpush.bf16.msra.mxu0 %v6595
        %8209 = vmatpush.bf16.msra.mxu0 %v6591
        %8210 = vmatpush.bf16.msra.mxu0 %v6587
        %8211 = vmatpush.bf16.msra.mxu0 %v6583
        %8212 = vmatpush.bf16.msra.mxu0 %v6579
        %8213 = vmatmul.bf16.gmra.mxu0 %v4975
        %v8214 = vpop.f32.mrf.mxu0
        %v8215 = vadd.f32 %v8202, %v8214
        %v8216 = vpop.f32.mrf.mxu0
        %8217 = vdwg.mxu0
        %8218 = vmatpush.bf16.msra.mxu0 %v6639
        %8219 = vmatpush.bf16.msra.mxu0 %v6635
        %8220 = vmatpush.bf16.msra.mxu0 %v6631
        %8221 = vmatpush.bf16.msra.mxu0 %v6627
        %8222 = vmatpush.bf16.msra.mxu0 %v6623
        %8223 = vmatpush.bf16.msra.mxu0 %v6619
        %8224 = vmatpush.bf16.msra.mxu0 %v6615
        %8225 = vmatpush.bf16.msra.mxu0 %v6611
        %8226 = vmatmul.bf16.gmra.mxu0 %v4976
        %v8227 = vpop.f32.mrf.mxu0
        %v8228 = vadd.f32 %v8215, %v8227
        %v8229 = vpop.f32.mrf.mxu0
        %8230 = vdwg.mxu0
        %8231 = vmatpush.bf16.msra.mxu0 %v6671
        %8232 = vmatpush.bf16.msra.mxu0 %v6667
        %8233 = vmatpush.bf16.msra.mxu0 %v6663
        %8234 = vmatpush.bf16.msra.mxu0 %v6659
        %8235 = vmatpush.bf16.msra.mxu0 %v6655
        %8236 = vmatpush.bf16.msra.mxu0 %v6651
        %8237 = vmatpush.bf16.msra.mxu0 %v6647
        %8238 = vmatpush.bf16.msra.mxu0 %v6643
        %8239 = vmatmul.bf16.gmra.mxu0 %v4977
        %v8240 = vpop.f32.mrf.mxu0
        %v8241 = vadd.f32 %v8228, %v8240
        %v8242 = vpop.f32.mrf.mxu0
        %8243 = vdwg.mxu0
        %8244 = vmatpush.bf16.msra.mxu0 %v6703
        %8245 = vmatpush.bf16.msra.mxu0 %v6699
        %8246 = vmatpush.bf16.msra.mxu0 %v6695
        %8247 = vmatpush.bf16.msra.mxu0 %v6691
        %8248 = vmatpush.bf16.msra.mxu0 %v6687
        %8249 = vmatpush.bf16.msra.mxu0 %v6683
        %8250 = vmatpush.bf16.msra.mxu0 %v6679
        %8251 = vmatpush.bf16.msra.mxu0 %v6675
        %8252 = vmatmul.bf16.gmra.mxu0 %v4978
        %v8253 = vpop.f32.mrf.mxu0
        %v8254 = vadd.f32 %v8241, %v8253
        %v8255 = vpop.f32.mrf.mxu0
        %8256 = vdwg.mxu0
        %8257 = vmatpush.bf16.msra.mxu0 %v6735
        %8258 = vmatpush.bf16.msra.mxu0 %v6731
        %8259 = vmatpush.bf16.msra.mxu0 %v6727
        %8260 = vmatpush.bf16.msra.mxu0 %v6723
        %8261 = vmatpush.bf16.msra.mxu0 %v6719
        %8262 = vmatpush.bf16.msra.mxu0 %v6715
        %8263 = vmatpush.bf16.msra.mxu0 %v6711
        %8264 = vmatpush.bf16.msra.mxu0 %v6707
        %8265 = vmatmul.bf16.gmra.mxu0 %v4979
        %v8266 = vpop.f32.mrf.mxu0
        %v8267 = vadd.f32 %v8254, %v8266
        %v8268 = vpop.f32.mrf.mxu0
        %8269 = vdwg.mxu0
        %8270 = vmatpush.bf16.msra.mxu0 %v6767
        %8271 = vmatpush.bf16.msra.mxu0 %v6763
        %8272 = vmatpush.bf16.msra.mxu0 %v6759
        %8273 = vmatpush.bf16.msra.mxu0 %v6755
        %8274 = vmatpush.bf16.msra.mxu0 %v6751
        %8275 = vmatpush.bf16.msra.mxu0 %v6747
        %8276 = vmatpush.bf16.msra.mxu0 %v6743
        %8277 = vmatpush.bf16.msra.mxu0 %v6739
        %8278 = vmatmul.bf16.gmra.mxu0 %v4980
        %v8279 = vpop.f32.mrf.mxu0
        %v8280 = vadd.f32 %v8267, %v8279
        %v8281 = vpop.f32.mrf.mxu0
        %8282 = vdwg.mxu0
        %8283 = vmatpush.bf16.msra.mxu0 %v6799
        %8284 = vmatpush.bf16.msra.mxu0 %v6795
        %8285 = vmatpush.bf16.msra.mxu0 %v6791
        %8286 = vmatpush.bf16.msra.mxu0 %v6787
        %8287 = vmatpush.bf16.msra.mxu0 %v6783
        %8288 = vmatpush.bf16.msra.mxu0 %v6779
        %8289 = vmatpush.bf16.msra.mxu0 %v6775
        %8290 = vmatpush.bf16.msra.mxu0 %v6771
        %8291 = vmatmul.bf16.gmra.mxu0 %v4981
        %v8292 = vpop.f32.mrf.mxu0
        %v8293 = vadd.f32 %v8280, %v8292
        %v8294 = vpop.f32.mrf.mxu0
        %8295 = vdwg.mxu0
        %8296 = vmatpush.bf16.msra.mxu0 %v6831
        %8297 = vmatpush.bf16.msra.mxu0 %v6827
        %8298 = vmatpush.bf16.msra.mxu0 %v6823
        %8299 = vmatpush.bf16.msra.mxu0 %v6819
        %8300 = vmatpush.bf16.msra.mxu0 %v6815
        %8301 = vmatpush.bf16.msra.mxu0 %v6811
        %8302 = vmatpush.bf16.msra.mxu0 %v6807
        %8303 = vmatpush.bf16.msra.mxu0 %v6803
        %8304 = vmatmul.bf16.gmra.mxu0 %v4984
        %v8305 = vpop.f32.mrf.mxu0
        %v8306 = vadd.f32 %v8293, %v8305
        %v8307 = vpop.f32.mrf.mxu0
        %8308 = vdwg.mxu0
        %8309 = vmatpush.bf16.msra.mxu0 %v6863
        %8310 = vmatpush.bf16.msra.mxu0 %v6859
        %8311 = vmatpush.bf16.msra.mxu0 %v6855
        %8312 = vmatpush.bf16.msra.mxu0 %v6851
        %8313 = vmatpush.bf16.msra.mxu0 %v6847
        %8314 = vmatpush.bf16.msra.mxu0 %v6843
        %8315 = vmatpush.bf16.msra.mxu0 %v6839
        %8316 = vmatpush.bf16.msra.mxu0 %v6835
        %8317 = vmatmul.bf16.gmra.mxu0 %v4985
        %v8318 = vpop.f32.mrf.mxu0
        %v8319 = vadd.f32 %v8306, %v8318
        %v8320 = vpop.f32.mrf.mxu0
        %8321 = vdwg.mxu0
        %8322 = vmatpush.bf16.msra.mxu0 %v6895
        %8323 = vmatpush.bf16.msra.mxu0 %v6891
        %8324 = vmatpush.bf16.msra.mxu0 %v6887
        %8325 = vmatpush.bf16.msra.mxu0 %v6883
        %8326 = vmatpush.bf16.msra.mxu0 %v6879
        %8327 = vmatpush.bf16.msra.mxu0 %v6875
        %8328 = vmatpush.bf16.msra.mxu0 %v6871
        %8329 = vmatpush.bf16.msra.mxu0 %v6867
        %8330 = vmatmul.bf16.gmra.mxu0 %v4986
        %v8331 = vpop.f32.mrf.mxu0
        %v8332 = vadd.f32 %v8319, %v8331
        %v8333 = vpop.f32.mrf.mxu0
        %8334 = vdwg.mxu0
        %8335 = vmatpush.bf16.msra.mxu0 %v6927
        %8336 = vmatpush.bf16.msra.mxu0 %v6923
        %8337 = vmatpush.bf16.msra.mxu0 %v6919
        %8338 = vmatpush.bf16.msra.mxu0 %v6915
        %8339 = vmatpush.bf16.msra.mxu0 %v6911
        %8340 = vmatpush.bf16.msra.mxu0 %v6907
        %8341 = vmatpush.bf16.msra.mxu0 %v6903
        %8342 = vmatpush.bf16.msra.mxu0 %v6899
        %8343 = vmatmul.bf16.gmra.mxu0 %v4987
        %v8344 = vpop.f32.mrf.mxu0
        %v8345 = vadd.f32 %v8332, %v8344
        %v8346 = vpop.f32.mrf.mxu0
        %8347 = vdwg.mxu0
        %8348 = vmatpush.bf16.msra.mxu0 %v6959
        %8349 = vmatpush.bf16.msra.mxu0 %v6955
        %8350 = vmatpush.bf16.msra.mxu0 %v6951
        %8351 = vmatpush.bf16.msra.mxu0 %v6947
        %8352 = vmatpush.bf16.msra.mxu0 %v6943
        %8353 = vmatpush.bf16.msra.mxu0 %v6939
        %8354 = vmatpush.bf16.msra.mxu0 %v6935
        %8355 = vmatpush.bf16.msra.mxu0 %v6931
        %8356 = vmatmul.bf16.gmra.mxu0 %v4988
        %v8357 = vpop.f32.mrf.mxu0
        %v8358 = vadd.f32 %v8345, %v8357
        %v8359 = vpop.f32.mrf.mxu0
        %8360 = vdwg.mxu0
        %8361 = vmatpush.bf16.msra.mxu0 %v6991
        %8362 = vmatpush.bf16.msra.mxu0 %v6987
        %8363 = vmatpush.bf16.msra.mxu0 %v6983
        %8364 = vmatpush.bf16.msra.mxu0 %v6979
        %8365 = vmatpush.bf16.msra.mxu0 %v6975
        %8366 = vmatpush.bf16.msra.mxu0 %v6971
        %8367 = vmatpush.bf16.msra.mxu0 %v6967
        %8368 = vmatpush.bf16.msra.mxu0 %v6963
        %8369 = vmatmul.bf16.gmra.mxu0 %v4989
        %v8370 = vpop.f32.mrf.mxu0
        %v8371 = vadd.f32 %v8358, %v8370
        %v8372 = vpop.f32.mrf.mxu0
        %8373 = vdwg.mxu0
        %8374 = vmatpush.bf16.msra.mxu0 %v7023
        %8375 = vmatpush.bf16.msra.mxu0 %v7019
        %8376 = vmatpush.bf16.msra.mxu0 %v7015
        %8377 = vmatpush.bf16.msra.mxu0 %v7011
        %8378 = vmatpush.bf16.msra.mxu0 %v7007
        %8379 = vmatpush.bf16.msra.mxu0 %v7003
        %8380 = vmatpush.bf16.msra.mxu0 %v6999
        %8381 = vmatpush.bf16.msra.mxu0 %v6995
        %8382 = vmatmul.bf16.gmra.mxu0 %v4990
        %v8383 = vpop.f32.mrf.mxu0
        %v8384 = vadd.f32 %v8371, %v8383
        %v8385 = vpop.f32.mrf.mxu0
        %8386 = vdwg.mxu0
        %8387 = vmatpush.bf16.msra.mxu0 %v7055
        %8388 = vmatpush.bf16.msra.mxu0 %v7051
        %8389 = vmatpush.bf16.msra.mxu0 %v7047
        %8390 = vmatpush.bf16.msra.mxu0 %v7043
        %8391 = vmatpush.bf16.msra.mxu0 %v7039
        %8392 = vmatpush.bf16.msra.mxu0 %v7035
        %8393 = vmatpush.bf16.msra.mxu0 %v7031
        %8394 = vmatpush.bf16.msra.mxu0 %v7027
        %8395 = vmatmul.bf16.gmra.mxu0 %v4991
        %v8396 = vpop.f32.mrf.mxu0
        %v8397 = vadd.f32 %v8384, %v8396
        %v8398 = vpop.f32.mrf.mxu0
        %8399 = vdwg.mxu0
        %v8404 = vrot.slane %v7981, 6
        %v8405 = vrot.slane %v8189, 4
        %v8406 = vrot.slane %v8397, 2
        %vm8407 = vcmask 1041408
        %v8408 = vsel %vm8407, %v7773, %v8404
        %vm8409 = vcmask 1045508
        %v8410 = vsel %vm8409, %v8405, %v8406
        %vm8411 = vcmask 1043456
        %v8412 = vsel %vm8411, %v8408, %v8410
        %v8414 = vadd.f32 %v4459, %v8412
        %8415 = vst [vmem:[#allocation4] sm:$0xff] %v8414
        %p8416 = scmp.eq.s32.totalorder %s23, 1
        // Predicated region
        $region69: #{dqn_forward.1} parent=63 // pred_check
          %p8417 = pneg %p8416
        $region70: #{dqn_forward.1} parent=63 // pred_check_branch
          %8419 = sbr.rel (%p8417) target = $region72
        $region71: #{dqn_forward.1} parent=63 // pred_region
          %v8420 = vld [vmem:[#allocation4] sm:$0xff]
          %v8421 = vld [vmem:[%s6] sm:$0xf]
          %v8423 = vperm.slane %v8421, 0
          %v8424 = vperm.slane %v8421, 1
          %v8425 = vperm.slane %v8421, 2
          %v8426 = vperm.slane %v8421, 3
          %v8427 = vrot.slane %v8424, 6
          %v8428 = vrot.slane %v8425, 4
          %v8429 = vrot.slane %v8426, 2
          %v8430 = vsel %vm8407, %v8423, %v8427
          %v8431 = vsel %vm8409, %v8428, %v8429
          %v8432 = vsel %vm8411, %v8430, %v8431
          %v8434 = vadd.f32 %v8420, %v8432
          %v8435 = vmax.f32 %v8434, 0.0
          %8437 = vst [vmem:[#allocation1] ss:$4 sm:$0xff] %v8435
          %v8438 = vld.sshfl [vmem:[#allocation1] sm:$0xff pattern:$0x73625140]
          %v8439 = vld.sshfl [vmem:[#allocation1 + $0x8] sm:$0xff pattern:$0x73625140]
          %v8440 = vld.sshfl [vmem:[#allocation1 + $0x10] sm:$0xff pattern:$0x73625140]
          %v8441 = vld.sshfl [vmem:[#allocation1 + $0x18] sm:$0xff pattern:$0x73625140]
          %v8446 = vpack.c.bf16 %v8438, %v8438
          %v8447 = vpack.c.bf16 %v8439, %v8439
          %v8448 = vpack.c.bf16 %v8440, %v8440
          %v8449 = vpack.c.bf16 %v8441, %v8441
          %v8450 = vld [vmem:[%s7] sm:$0xff]
          %v8451 = vld [vmem:[%s7 + $0x8] sm:$0xff]
          %v8452 = vld [vmem:[%s7 + $0x10] sm:$0xff]
          %v8453 = vld [vmem:[%s7 + $0x18] sm:$0xff]
          %v8454 = vld [vmem:[%s7 + $0x20] sm:$0xff]
          %v8455 = vld [vmem:[%s7 + $0x28] sm:$0xff]
          %v8456 = vld [vmem:[%s7 + $0x30] sm:$0xff]
          %v8457 = vld [vmem:[%s7 + $0x38] sm:$0xff]
          %v8458 = vld [vmem:[%s7 + $0x40] sm:$0xff]
          %v8459 = vld [vmem:[%s7 + $0x48] sm:$0xff]
          %v8460 = vld [vmem:[%s7 + $0x50] sm:$0xff]
          %v8461 = vld [vmem:[%s7 + $0x58] sm:$0xff]
          %v8462 = vld [vmem:[%s7 + $0x60] sm:$0xff]
          %v8463 = vld [vmem:[%s7 + $0x68] sm:$0xff]
          %v8464 = vld [vmem:[%s7 + $0x70] sm:$0xff]
          %v8465 = vld [vmem:[%s7 + $0x78] sm:$0xff]
          %v8466 = vld [vmem:[%s7 + $0x80] sm:$0xff]
          %v8467 = vld [vmem:[%s7 + $0x88] sm:$0xff]
          %v8468 = vld [vmem:[%s7 + $0x90] sm:$0xff]
          %v8469 = vld [vmem:[%s7 + $0x98] sm:$0xff]
          %v8470 = vld [vmem:[%s7 + $0xa0] sm:$0xff]
          %v8471 = vld [vmem:[%s7 + $0xa8] sm:$0xff]
          %v8472 = vld [vmem:[%s7 + $0xb0] sm:$0xff]
          %v8473 = vld [vmem:[%s7 + $0xb8] sm:$0xff]
          %v8474 = vld [vmem:[%s7 + $0xc0] sm:$0xff]
          %v8475 = vld [vmem:[%s7 + $0xc8] sm:$0xff]
          %v8476 = vld [vmem:[%s7 + $0xd0] sm:$0xff]
          %v8477 = vld [vmem:[%s7 + $0xd8] sm:$0xff]
          %v8478 = vld [vmem:[%s7 + $0xe0] sm:$0xff]
          %v8479 = vld [vmem:[%s7 + $0xe8] sm:$0xff]
          %v8480 = vld [vmem:[%s7 + $0xf0] sm:$0xff]
          %v8481 = vld [vmem:[%s7 + $0xf8] sm:$0xff]
          %v8482 = vld [vmem:[%s7 + $0x100] sm:$0xff]
          %v8483 = vld [vmem:[%s7 + $0x108] sm:$0xff]
          %v8484 = vld [vmem:[%s7 + $0x110] sm:$0xff]
          %v8485 = vld [vmem:[%s7 + $0x118] sm:$0xff]
          %v8486 = vld [vmem:[%s7 + $0x120] sm:$0xff]
          %v8487 = vld [vmem:[%s7 + $0x128] sm:$0xff]
          %v8488 = vld [vmem:[%s7 + $0x130] sm:$0xff]
          %v8489 = vld [vmem:[%s7 + $0x138] sm:$0xff]
          %v8490 = vld [vmem:[%s7 + $0x140] sm:$0xff]
          %v8491 = vld [vmem:[%s7 + $0x148] sm:$0xff]
          %v8492 = vld [vmem:[%s7 + $0x150] sm:$0xff]
          %v8493 = vld [vmem:[%s7 + $0x158] sm:$0xff]
          %v8494 = vld [vmem:[%s7 + $0x160] sm:$0xff]
          %v8495 = vld [vmem:[%s7 + $0x168] sm:$0xff]
          %v8496 = vld [vmem:[%s7 + $0x170] sm:$0xff]
          %v8497 = vld [vmem:[%s7 + $0x178] sm:$0xff]
          %v8498 = vld [vmem:[%s7 + $0x180] sm:$0xff]
          %v8499 = vld [vmem:[%s7 + $0x188] sm:$0xff]
          %v8500 = vld [vmem:[%s7 + $0x190] sm:$0xff]
          %v8501 = vld [vmem:[%s7 + $0x198] sm:$0xff]
          %v8502 = vld [vmem:[%s7 + $0x1a0] sm:$0xff]
          %v8503 = vld [vmem:[%s7 + $0x1a8] sm:$0xff]
          %v8504 = vld [vmem:[%s7 + $0x1b0] sm:$0xff]
          %v8505 = vld [vmem:[%s7 + $0x1b8] sm:$0xff]
          %v8506 = vld [vmem:[%s7 + $0x1c0] sm:$0xff]
          %v8507 = vld [vmem:[%s7 + $0x1c8] sm:$0xff]
          %v8508 = vld [vmem:[%s7 + $0x1d0] sm:$0xff]
          %v8509 = vld [vmem:[%s7 + $0x1d8] sm:$0xff]
          %v8510 = vld [vmem:[%s7 + $0x1e0] sm:$0xff]
          %v8511 = vld [vmem:[%s7 + $0x1e8] sm:$0xff]
          %v8512 = vld [vmem:[%s7 + $0x1f0] sm:$0xff]
          %v8513 = vld [vmem:[%s7 + $0x1f8] sm:$0xff]
          %v8514 = vld [vmem:[%s7 + $0x200] sm:$0xff]
          %v8515 = vld [vmem:[%s7 + $0x208] sm:$0xff]
          %v8516 = vld [vmem:[%s7 + $0x210] sm:$0xff]
          %v8517 = vld [vmem:[%s7 + $0x218] sm:$0xff]
          %v8518 = vld [vmem:[%s7 + $0x220] sm:$0xff]
          %v8519 = vld [vmem:[%s7 + $0x228] sm:$0xff]
          %v8520 = vld [vmem:[%s7 + $0x230] sm:$0xff]
          %v8521 = vld [vmem:[%s7 + $0x238] sm:$0xff]
          %v8522 = vld [vmem:[%s7 + $0x240] sm:$0xff]
          %v8523 = vld [vmem:[%s7 + $0x248] sm:$0xff]
          %v8524 = vld [vmem:[%s7 + $0x250] sm:$0xff]
          %v8525 = vld [vmem:[%s7 + $0x258] sm:$0xff]
          %v8526 = vld [vmem:[%s7 + $0x260] sm:$0xff]
          %v8527 = vld [vmem:[%s7 + $0x268] sm:$0xff]
          %v8528 = vld [vmem:[%s7 + $0x270] sm:$0xff]
          %v8529 = vld [vmem:[%s7 + $0x278] sm:$0xff]
          %v8530 = vld [vmem:[%s7 + $0x280] sm:$0xff]
          %v8531 = vld [vmem:[%s7 + $0x288] sm:$0xff]
          %v8532 = vld [vmem:[%s7 + $0x290] sm:$0xff]
          %v8533 = vld [vmem:[%s7 + $0x298] sm:$0xff]
          %v8534 = vld [vmem:[%s7 + $0x2a0] sm:$0xff]
          %v8535 = vld [vmem:[%s7 + $0x2a8] sm:$0xff]
          %v8536 = vld [vmem:[%s7 + $0x2b0] sm:$0xff]
          %v8537 = vld [vmem:[%s7 + $0x2b8] sm:$0xff]
          %v8538 = vld [vmem:[%s7 + $0x2c0] sm:$0xff]
          %v8539 = vld [vmem:[%s7 + $0x2c8] sm:$0xff]
          %v8540 = vld [vmem:[%s7 + $0x2d0] sm:$0xff]
          %v8541 = vld [vmem:[%s7 + $0x2d8] sm:$0xff]
          %v8542 = vld [vmem:[%s7 + $0x2e0] sm:$0xff]
          %v8543 = vld [vmem:[%s7 + $0x2e8] sm:$0xff]
          %v8544 = vld [vmem:[%s7 + $0x2f0] sm:$0xff]
          %v8545 = vld [vmem:[%s7 + $0x2f8] sm:$0xff]
          %v8546 = vld [vmem:[%s7 + $0x300] sm:$0xff]
          %v8547 = vld [vmem:[%s7 + $0x308] sm:$0xff]
          %v8548 = vld [vmem:[%s7 + $0x310] sm:$0xff]
          %v8549 = vld [vmem:[%s7 + $0x318] sm:$0xff]
          %v8550 = vld [vmem:[%s7 + $0x320] sm:$0xff]
          %v8551 = vld [vmem:[%s7 + $0x328] sm:$0xff]
          %v8552 = vld [vmem:[%s7 + $0x330] sm:$0xff]
          %v8553 = vld [vmem:[%s7 + $0x338] sm:$0xff]
          %v8554 = vld [vmem:[%s7 + $0x340] sm:$0xff]
          %v8555 = vld [vmem:[%s7 + $0x348] sm:$0xff]
          %v8556 = vld [vmem:[%s7 + $0x350] sm:$0xff]
          %v8557 = vld [vmem:[%s7 + $0x358] sm:$0xff]
          %v8558 = vld [vmem:[%s7 + $0x360] sm:$0xff]
          %v8559 = vld [vmem:[%s7 + $0x368] sm:$0xff]
          %v8560 = vld [vmem:[%s7 + $0x370] sm:$0xff]
          %v8561 = vld [vmem:[%s7 + $0x378] sm:$0xff]
          %v8562 = vld [vmem:[%s7 + $0x380] sm:$0xff]
          %v8563 = vld [vmem:[%s7 + $0x388] sm:$0xff]
          %v8564 = vld [vmem:[%s7 + $0x390] sm:$0xff]
          %v8565 = vld [vmem:[%s7 + $0x398] sm:$0xff]
          %v8566 = vld [vmem:[%s7 + $0x3a0] sm:$0xff]
          %v8567 = vld [vmem:[%s7 + $0x3a8] sm:$0xff]
          %v8568 = vld [vmem:[%s7 + $0x3b0] sm:$0xff]
          %v8569 = vld [vmem:[%s7 + $0x3b8] sm:$0xff]
          %v8570 = vld [vmem:[%s7 + $0x3c0] sm:$0xff]
          %v8571 = vld [vmem:[%s7 + $0x3c8] sm:$0xff]
          %v8572 = vld [vmem:[%s7 + $0x3d0] sm:$0xff]
          %v8573 = vld [vmem:[%s7 + $0x3d8] sm:$0xff]
          %v8574 = vld [vmem:[%s7 + $0x3e0] sm:$0xff]
          %v8575 = vld [vmem:[%s7 + $0x3e8] sm:$0xff]
          %v8576 = vld [vmem:[%s7 + $0x3f0] sm:$0xff]
          %v8577 = vld [vmem:[%s7 + $0x3f8] sm:$0xff]
          %v8578 = vld [vmem:[%s7 + $0x400] sm:$0xff]
          %v8579 = vld [vmem:[%s7 + $0x408] sm:$0xff]
          %v8580 = vld [vmem:[%s7 + $0x410] sm:$0xff]
          %v8581 = vld [vmem:[%s7 + $0x418] sm:$0xff]
          %v8582 = vld [vmem:[%s7 + $0x420] sm:$0xff]
          %v8583 = vld [vmem:[%s7 + $0x428] sm:$0xff]
          %v8584 = vld [vmem:[%s7 + $0x430] sm:$0xff]
          %v8585 = vld [vmem:[%s7 + $0x438] sm:$0xff]
          %v8586 = vld [vmem:[%s7 + $0x440] sm:$0xff]
          %v8587 = vld [vmem:[%s7 + $0x448] sm:$0xff]
          %v8588 = vld [vmem:[%s7 + $0x450] sm:$0xff]
          %v8589 = vld [vmem:[%s7 + $0x458] sm:$0xff]
          %v8590 = vld [vmem:[%s7 + $0x460] sm:$0xff]
          %v8591 = vld [vmem:[%s7 + $0x468] sm:$0xff]
          %v8592 = vld [vmem:[%s7 + $0x470] sm:$0xff]
          %v8593 = vld [vmem:[%s7 + $0x478] sm:$0xff]
          %v8594 = vld [vmem:[%s7 + $0x480] sm:$0xff]
          %v8595 = vld [vmem:[%s7 + $0x488] sm:$0xff]
          %v8596 = vld [vmem:[%s7 + $0x490] sm:$0xff]
          %v8597 = vld [vmem:[%s7 + $0x498] sm:$0xff]
          %v8598 = vld [vmem:[%s7 + $0x4a0] sm:$0xff]
          %v8599 = vld [vmem:[%s7 + $0x4a8] sm:$0xff]
          %v8600 = vld [vmem:[%s7 + $0x4b0] sm:$0xff]
          %v8601 = vld [vmem:[%s7 + $0x4b8] sm:$0xff]
          %v8602 = vld [vmem:[%s7 + $0x4c0] sm:$0xff]
          %v8603 = vld [vmem:[%s7 + $0x4c8] sm:$0xff]
          %v8604 = vld [vmem:[%s7 + $0x4d0] sm:$0xff]
          %v8605 = vld [vmem:[%s7 + $0x4d8] sm:$0xff]
          %v8606 = vld [vmem:[%s7 + $0x4e0] sm:$0xff]
          %v8607 = vld [vmem:[%s7 + $0x4e8] sm:$0xff]
          %v8608 = vld [vmem:[%s7 + $0x4f0] sm:$0xff]
          %v8609 = vld [vmem:[%s7 + $0x4f8] sm:$0xff]
          %v8610 = vld [vmem:[%s7 + $0x500] sm:$0xff]
          %v8611 = vld [vmem:[%s7 + $0x508] sm:$0xff]
          %v8612 = vld [vmem:[%s7 + $0x510] sm:$0xff]
          %v8613 = vld [vmem:[%s7 + $0x518] sm:$0xff]
          %v8614 = vld [vmem:[%s7 + $0x520] sm:$0xff]
          %v8615 = vld [vmem:[%s7 + $0x528] sm:$0xff]
          %v8616 = vld [vmem:[%s7 + $0x530] sm:$0xff]
          %v8617 = vld [vmem:[%s7 + $0x538] sm:$0xff]
          %v8618 = vld [vmem:[%s7 + $0x540] sm:$0xff]
          %v8619 = vld [vmem:[%s7 + $0x548] sm:$0xff]
          %v8620 = vld [vmem:[%s7 + $0x550] sm:$0xff]
          %v8621 = vld [vmem:[%s7 + $0x558] sm:$0xff]
          %v8622 = vld [vmem:[%s7 + $0x560] sm:$0xff]
          %v8623 = vld [vmem:[%s7 + $0x568] sm:$0xff]
          %v8624 = vld [vmem:[%s7 + $0x570] sm:$0xff]
          %v8625 = vld [vmem:[%s7 + $0x578] sm:$0xff]
          %v8626 = vld [vmem:[%s7 + $0x580] sm:$0xff]
          %v8627 = vld [vmem:[%s7 + $0x588] sm:$0xff]
          %v8628 = vld [vmem:[%s7 + $0x590] sm:$0xff]
          %v8629 = vld [vmem:[%s7 + $0x598] sm:$0xff]
          %v8630 = vld [vmem:[%s7 + $0x5a0] sm:$0xff]
          %v8631 = vld [vmem:[%s7 + $0x5a8] sm:$0xff]
          %v8632 = vld [vmem:[%s7 + $0x5b0] sm:$0xff]
          %v8633 = vld [vmem:[%s7 + $0x5b8] sm:$0xff]
          %v8634 = vld [vmem:[%s7 + $0x5c0] sm:$0xff]
          %v8635 = vld [vmem:[%s7 + $0x5c8] sm:$0xff]
          %v8636 = vld [vmem:[%s7 + $0x5d0] sm:$0xff]
          %v8637 = vld [vmem:[%s7 + $0x5d8] sm:$0xff]
          %v8638 = vld [vmem:[%s7 + $0x5e0] sm:$0xff]
          %v8639 = vld [vmem:[%s7 + $0x5e8] sm:$0xff]
          %v8640 = vld [vmem:[%s7 + $0x5f0] sm:$0xff]
          %v8641 = vld [vmem:[%s7 + $0x5f8] sm:$0xff]
          %v8642 = vld [vmem:[%s7 + $0x600] sm:$0xff]
          %v8643 = vld [vmem:[%s7 + $0x608] sm:$0xff]
          %v8644 = vld [vmem:[%s7 + $0x610] sm:$0xff]
          %v8645 = vld [vmem:[%s7 + $0x618] sm:$0xff]
          %v8646 = vld [vmem:[%s7 + $0x620] sm:$0xff]
          %v8647 = vld [vmem:[%s7 + $0x628] sm:$0xff]
          %v8648 = vld [vmem:[%s7 + $0x630] sm:$0xff]
          %v8649 = vld [vmem:[%s7 + $0x638] sm:$0xff]
          %v8650 = vld [vmem:[%s7 + $0x640] sm:$0xff]
          %v8651 = vld [vmem:[%s7 + $0x648] sm:$0xff]
          %v8652 = vld [vmem:[%s7 + $0x650] sm:$0xff]
          %v8653 = vld [vmem:[%s7 + $0x658] sm:$0xff]
          %v8654 = vld [vmem:[%s7 + $0x660] sm:$0xff]
          %v8655 = vld [vmem:[%s7 + $0x668] sm:$0xff]
          %v8656 = vld [vmem:[%s7 + $0x670] sm:$0xff]
          %v8657 = vld [vmem:[%s7 + $0x678] sm:$0xff]
          %v8658 = vld [vmem:[%s7 + $0x680] sm:$0xff]
          %v8659 = vld [vmem:[%s7 + $0x688] sm:$0xff]
          %v8660 = vld [vmem:[%s7 + $0x690] sm:$0xff]
          %v8661 = vld [vmem:[%s7 + $0x698] sm:$0xff]
          %v8662 = vld [vmem:[%s7 + $0x6a0] sm:$0xff]
          %v8663 = vld [vmem:[%s7 + $0x6a8] sm:$0xff]
          %v8664 = vld [vmem:[%s7 + $0x6b0] sm:$0xff]
          %v8665 = vld [vmem:[%s7 + $0x6b8] sm:$0xff]
          %v8666 = vld [vmem:[%s7 + $0x6c0] sm:$0xff]
          %v8667 = vld [vmem:[%s7 + $0x6c8] sm:$0xff]
          %v8668 = vld [vmem:[%s7 + $0x6d0] sm:$0xff]
          %v8669 = vld [vmem:[%s7 + $0x6d8] sm:$0xff]
          %v8670 = vld [vmem:[%s7 + $0x6e0] sm:$0xff]
          %v8671 = vld [vmem:[%s7 + $0x6e8] sm:$0xff]
          %v8672 = vld [vmem:[%s7 + $0x6f0] sm:$0xff]
          %v8673 = vld [vmem:[%s7 + $0x6f8] sm:$0xff]
          %v8674 = vld [vmem:[%s7 + $0x700] sm:$0xff]
          %v8675 = vld [vmem:[%s7 + $0x708] sm:$0xff]
          %v8676 = vld [vmem:[%s7 + $0x710] sm:$0xff]
          %v8677 = vld [vmem:[%s7 + $0x718] sm:$0xff]
          %v8678 = vld [vmem:[%s7 + $0x720] sm:$0xff]
          %v8679 = vld [vmem:[%s7 + $0x728] sm:$0xff]
          %v8680 = vld [vmem:[%s7 + $0x730] sm:$0xff]
          %v8681 = vld [vmem:[%s7 + $0x738] sm:$0xff]
          %v8682 = vld [vmem:[%s7 + $0x740] sm:$0xff]
          %v8683 = vld [vmem:[%s7 + $0x748] sm:$0xff]
          %v8684 = vld [vmem:[%s7 + $0x750] sm:$0xff]
          %v8685 = vld [vmem:[%s7 + $0x758] sm:$0xff]
          %v8686 = vld [vmem:[%s7 + $0x760] sm:$0xff]
          %v8687 = vld [vmem:[%s7 + $0x768] sm:$0xff]
          %v8688 = vld [vmem:[%s7 + $0x770] sm:$0xff]
          %v8689 = vld [vmem:[%s7 + $0x778] sm:$0xff]
          %v8690 = vld [vmem:[%s7 + $0x780] sm:$0xff]
          %v8691 = vld [vmem:[%s7 + $0x788] sm:$0xff]
          %v8692 = vld [vmem:[%s7 + $0x790] sm:$0xff]
          %v8693 = vld [vmem:[%s7 + $0x798] sm:$0xff]
          %v8694 = vld [vmem:[%s7 + $0x7a0] sm:$0xff]
          %v8695 = vld [vmem:[%s7 + $0x7a8] sm:$0xff]
          %v8696 = vld [vmem:[%s7 + $0x7b0] sm:$0xff]
          %v8697 = vld [vmem:[%s7 + $0x7b8] sm:$0xff]
          %v8698 = vld [vmem:[%s7 + $0x7c0] sm:$0xff]
          %v8699 = vld [vmem:[%s7 + $0x7c8] sm:$0xff]
          %v8700 = vld [vmem:[%s7 + $0x7d0] sm:$0xff]
          %v8701 = vld [vmem:[%s7 + $0x7d8] sm:$0xff]
          %v8702 = vld [vmem:[%s7 + $0x7e0] sm:$0xff]
          %v8703 = vld [vmem:[%s7 + $0x7e8] sm:$0xff]
          %v8704 = vld [vmem:[%s7 + $0x7f0] sm:$0xff]
          %v8705 = vld [vmem:[%s7 + $0x7f8] sm:$0xff]
          %v8706 = vld [vmem:[%s8] sm:$0xff]
          %v8708 = vperm.slane %v8706, 0
          %v8709 = vperm.slane %v8706, 1
          %v8710 = vperm.slane %v8706, 2
          %v8711 = vperm.slane %v8706, 3
          %v8712 = vperm.slane %v8706, 4
          %v8713 = vperm.slane %v8706, 5
          %v8714 = vperm.slane %v8706, 6
          %v8715 = vperm.slane %v8706, 7
          %v8980 = vunpack.c.l.b16 %v8450
          %v8981 = vunpack.c.h.b16 %v8450
          %v8982 = vunpack.c.l.b16 %v8451
          %v8983 = vunpack.c.h.b16 %v8451
          %v8984 = vunpack.c.l.b16 %v8452
          %v8985 = vunpack.c.h.b16 %v8452
          %v8986 = vunpack.c.l.b16 %v8453
          %v8987 = vunpack.c.h.b16 %v8453
          %v8988 = vunpack.c.l.b16 %v8454
          %v8989 = vunpack.c.h.b16 %v8454
          %v8990 = vunpack.c.l.b16 %v8455
          %v8991 = vunpack.c.h.b16 %v8455
          %v8992 = vunpack.c.l.b16 %v8456
          %v8993 = vunpack.c.h.b16 %v8456
          %v8994 = vunpack.c.l.b16 %v8457
          %v8995 = vunpack.c.h.b16 %v8457
          %v8996 = vunpack.c.l.b16 %v8458
          %v8997 = vunpack.c.h.b16 %v8458
          %v8998 = vunpack.c.l.b16 %v8459
          %v8999 = vunpack.c.h.b16 %v8459
          %v9000 = vunpack.c.l.b16 %v8460
          %v9001 = vunpack.c.h.b16 %v8460
          %v9002 = vunpack.c.l.b16 %v8461
          %v9003 = vunpack.c.h.b16 %v8461
          %v9004 = vunpack.c.l.b16 %v8462
          %v9005 = vunpack.c.h.b16 %v8462
          %v9006 = vunpack.c.l.b16 %v8463
          %v9007 = vunpack.c.h.b16 %v8463
          %v9008 = vunpack.c.l.b16 %v8464
          %v9009 = vunpack.c.h.b16 %v8464
          %v9010 = vunpack.c.l.b16 %v8465
          %v9011 = vunpack.c.h.b16 %v8465
          %v9012 = vunpack.c.l.b16 %v8466
          %v9013 = vunpack.c.h.b16 %v8466
          %v9014 = vunpack.c.l.b16 %v8467
          %v9015 = vunpack.c.h.b16 %v8467
          %v9016 = vunpack.c.l.b16 %v8468
          %v9017 = vunpack.c.h.b16 %v8468
          %v9018 = vunpack.c.l.b16 %v8469
          %v9019 = vunpack.c.h.b16 %v8469
          %v9020 = vunpack.c.l.b16 %v8470
          %v9021 = vunpack.c.h.b16 %v8470
          %v9022 = vunpack.c.l.b16 %v8471
          %v9023 = vunpack.c.h.b16 %v8471
          %v9024 = vunpack.c.l.b16 %v8472
          %v9025 = vunpack.c.h.b16 %v8472
          %v9026 = vunpack.c.l.b16 %v8473
          %v9027 = vunpack.c.h.b16 %v8473
          %v9028 = vunpack.c.l.b16 %v8474
          %v9029 = vunpack.c.h.b16 %v8474
          %v9030 = vunpack.c.l.b16 %v8475
          %v9031 = vunpack.c.h.b16 %v8475
          %v9032 = vunpack.c.l.b16 %v8476
          %v9033 = vunpack.c.h.b16 %v8476
          %v9034 = vunpack.c.l.b16 %v8477
          %v9035 = vunpack.c.h.b16 %v8477
          %v9036 = vunpack.c.l.b16 %v8478
          %v9037 = vunpack.c.h.b16 %v8478
          %v9038 = vunpack.c.l.b16 %v8479
          %v9039 = vunpack.c.h.b16 %v8479
          %v9040 = vunpack.c.l.b16 %v8480
          %v9041 = vunpack.c.h.b16 %v8480
          %v9042 = vunpack.c.l.b16 %v8481
          %v9043 = vunpack.c.h.b16 %v8481
          %v9044 = vunpack.c.l.b16 %v8482
          %v9045 = vunpack.c.h.b16 %v8482
          %v9046 = vunpack.c.l.b16 %v8483
          %v9047 = vunpack.c.h.b16 %v8483
          %v9048 = vunpack.c.l.b16 %v8484
          %v9049 = vunpack.c.h.b16 %v8484
          %v9050 = vunpack.c.l.b16 %v8485
          %v9051 = vunpack.c.h.b16 %v8485
          %v9052 = vunpack.c.l.b16 %v8486
          %v9053 = vunpack.c.h.b16 %v8486
          %v9054 = vunpack.c.l.b16 %v8487
          %v9055 = vunpack.c.h.b16 %v8487
          %v9056 = vunpack.c.l.b16 %v8488
          %v9057 = vunpack.c.h.b16 %v8488
          %v9058 = vunpack.c.l.b16 %v8489
          %v9059 = vunpack.c.h.b16 %v8489
          %v9060 = vunpack.c.l.b16 %v8490
          %v9061 = vunpack.c.h.b16 %v8490
          %v9062 = vunpack.c.l.b16 %v8491
          %v9063 = vunpack.c.h.b16 %v8491
          %v9064 = vunpack.c.l.b16 %v8492
          %v9065 = vunpack.c.h.b16 %v8492
          %v9066 = vunpack.c.l.b16 %v8493
          %v9067 = vunpack.c.h.b16 %v8493
          %v9068 = vunpack.c.l.b16 %v8494
          %v9069 = vunpack.c.h.b16 %v8494
          %v9070 = vunpack.c.l.b16 %v8495
          %v9071 = vunpack.c.h.b16 %v8495
          %v9072 = vunpack.c.l.b16 %v8496
          %v9073 = vunpack.c.h.b16 %v8496
          %v9074 = vunpack.c.l.b16 %v8497
          %v9075 = vunpack.c.h.b16 %v8497
          %v9076 = vunpack.c.l.b16 %v8498
          %v9077 = vunpack.c.h.b16 %v8498
          %v9078 = vunpack.c.l.b16 %v8499
          %v9079 = vunpack.c.h.b16 %v8499
          %v9080 = vunpack.c.l.b16 %v8500
          %v9081 = vunpack.c.h.b16 %v8500
          %v9082 = vunpack.c.l.b16 %v8501
          %v9083 = vunpack.c.h.b16 %v8501
          %v9084 = vunpack.c.l.b16 %v8502
          %v9085 = vunpack.c.h.b16 %v8502
          %v9086 = vunpack.c.l.b16 %v8503
          %v9087 = vunpack.c.h.b16 %v8503
          %v9088 = vunpack.c.l.b16 %v8504
          %v9089 = vunpack.c.h.b16 %v8504
          %v9090 = vunpack.c.l.b16 %v8505
          %v9091 = vunpack.c.h.b16 %v8505
          %v9092 = vunpack.c.l.b16 %v8506
          %v9093 = vunpack.c.h.b16 %v8506
          %v9094 = vunpack.c.l.b16 %v8507
          %v9095 = vunpack.c.h.b16 %v8507
          %v9096 = vunpack.c.l.b16 %v8508
          %v9097 = vunpack.c.h.b16 %v8508
          %v9098 = vunpack.c.l.b16 %v8509
          %v9099 = vunpack.c.h.b16 %v8509
          %v9100 = vunpack.c.l.b16 %v8510
          %v9101 = vunpack.c.h.b16 %v8510
          %v9102 = vunpack.c.l.b16 %v8511
          %v9103 = vunpack.c.h.b16 %v8511
          %v9104 = vunpack.c.l.b16 %v8512
          %v9105 = vunpack.c.h.b16 %v8512
          %v9106 = vunpack.c.l.b16 %v8513
          %v9107 = vunpack.c.h.b16 %v8513
          %v9108 = vunpack.c.l.b16 %v8514
          %v9109 = vunpack.c.h.b16 %v8514
          %v9110 = vunpack.c.l.b16 %v8515
          %v9111 = vunpack.c.h.b16 %v8515
          %v9112 = vunpack.c.l.b16 %v8516
          %v9113 = vunpack.c.h.b16 %v8516
          %v9114 = vunpack.c.l.b16 %v8517
          %v9115 = vunpack.c.h.b16 %v8517
          %v9116 = vunpack.c.l.b16 %v8518
          %v9117 = vunpack.c.h.b16 %v8518
          %v9118 = vunpack.c.l.b16 %v8519
          %v9119 = vunpack.c.h.b16 %v8519
          %v9120 = vunpack.c.l.b16 %v8520
          %v9121 = vunpack.c.h.b16 %v8520
          %v9122 = vunpack.c.l.b16 %v8521
          %v9123 = vunpack.c.h.b16 %v8521
          %v9124 = vunpack.c.l.b16 %v8522
          %v9125 = vunpack.c.h.b16 %v8522
          %v9126 = vunpack.c.l.b16 %v8523
          %v9127 = vunpack.c.h.b16 %v8523
          %v9128 = vunpack.c.l.b16 %v8524
          %v9129 = vunpack.c.h.b16 %v8524
          %v9130 = vunpack.c.l.b16 %v8525
          %v9131 = vunpack.c.h.b16 %v8525
          %v9132 = vunpack.c.l.b16 %v8526
          %v9133 = vunpack.c.h.b16 %v8526
          %v9134 = vunpack.c.l.b16 %v8527
          %v9135 = vunpack.c.h.b16 %v8527
          %v9136 = vunpack.c.l.b16 %v8528
          %v9137 = vunpack.c.h.b16 %v8528
          %v9138 = vunpack.c.l.b16 %v8529
          %v9139 = vunpack.c.h.b16 %v8529
          %v9140 = vunpack.c.l.b16 %v8530
          %v9141 = vunpack.c.h.b16 %v8530
          %v9142 = vunpack.c.l.b16 %v8531
          %v9143 = vunpack.c.h.b16 %v8531
          %v9144 = vunpack.c.l.b16 %v8532
          %v9145 = vunpack.c.h.b16 %v8532
          %v9146 = vunpack.c.l.b16 %v8533
          %v9147 = vunpack.c.h.b16 %v8533
          %v9148 = vunpack.c.l.b16 %v8534
          %v9149 = vunpack.c.h.b16 %v8534
          %v9150 = vunpack.c.l.b16 %v8535
          %v9151 = vunpack.c.h.b16 %v8535
          %v9152 = vunpack.c.l.b16 %v8536
          %v9153 = vunpack.c.h.b16 %v8536
          %v9154 = vunpack.c.l.b16 %v8537
          %v9155 = vunpack.c.h.b16 %v8537
          %v9156 = vunpack.c.l.b16 %v8538
          %v9157 = vunpack.c.h.b16 %v8538
          %v9158 = vunpack.c.l.b16 %v8539
          %v9159 = vunpack.c.h.b16 %v8539
          %v9160 = vunpack.c.l.b16 %v8540
          %v9161 = vunpack.c.h.b16 %v8540
          %v9162 = vunpack.c.l.b16 %v8541
          %v9163 = vunpack.c.h.b16 %v8541
          %v9164 = vunpack.c.l.b16 %v8542
          %v9165 = vunpack.c.h.b16 %v8542
          %v9166 = vunpack.c.l.b16 %v8543
          %v9167 = vunpack.c.h.b16 %v8543
          %v9168 = vunpack.c.l.b16 %v8544
          %v9169 = vunpack.c.h.b16 %v8544
          %v9170 = vunpack.c.l.b16 %v8545
          %v9171 = vunpack.c.h.b16 %v8545
          %v9172 = vunpack.c.l.b16 %v8546
          %v9173 = vunpack.c.h.b16 %v8546
          %v9174 = vunpack.c.l.b16 %v8547
          %v9175 = vunpack.c.h.b16 %v8547
          %v9176 = vunpack.c.l.b16 %v8548
          %v9177 = vunpack.c.h.b16 %v8548
          %v9178 = vunpack.c.l.b16 %v8549
          %v9179 = vunpack.c.h.b16 %v8549
          %v9180 = vunpack.c.l.b16 %v8550
          %v9181 = vunpack.c.h.b16 %v8550
          %v9182 = vunpack.c.l.b16 %v8551
          %v9183 = vunpack.c.h.b16 %v8551
          %v9184 = vunpack.c.l.b16 %v8552
          %v9185 = vunpack.c.h.b16 %v8552
          %v9186 = vunpack.c.l.b16 %v8553
          %v9187 = vunpack.c.h.b16 %v8553
          %v9188 = vunpack.c.l.b16 %v8554
          %v9189 = vunpack.c.h.b16 %v8554
          %v9190 = vunpack.c.l.b16 %v8555
          %v9191 = vunpack.c.h.b16 %v8555
          %v9192 = vunpack.c.l.b16 %v8556
          %v9193 = vunpack.c.h.b16 %v8556
          %v9194 = vunpack.c.l.b16 %v8557
          %v9195 = vunpack.c.h.b16 %v8557
          %v9196 = vunpack.c.l.b16 %v8558
          %v9197 = vunpack.c.h.b16 %v8558
          %v9198 = vunpack.c.l.b16 %v8559
          %v9199 = vunpack.c.h.b16 %v8559
          %v9200 = vunpack.c.l.b16 %v8560
          %v9201 = vunpack.c.h.b16 %v8560
          %v9202 = vunpack.c.l.b16 %v8561
          %v9203 = vunpack.c.h.b16 %v8561
          %v9204 = vunpack.c.l.b16 %v8562
          %v9205 = vunpack.c.h.b16 %v8562
          %v9206 = vunpack.c.l.b16 %v8563
          %v9207 = vunpack.c.h.b16 %v8563
          %v9208 = vunpack.c.l.b16 %v8564
          %v9209 = vunpack.c.h.b16 %v8564
          %v9210 = vunpack.c.l.b16 %v8565
          %v9211 = vunpack.c.h.b16 %v8565
          %v9212 = vunpack.c.l.b16 %v8566
          %v9213 = vunpack.c.h.b16 %v8566
          %v9214 = vunpack.c.l.b16 %v8567
          %v9215 = vunpack.c.h.b16 %v8567
          %v9216 = vunpack.c.l.b16 %v8568
          %v9217 = vunpack.c.h.b16 %v8568
          %v9218 = vunpack.c.l.b16 %v8569
          %v9219 = vunpack.c.h.b16 %v8569
          %v9220 = vunpack.c.l.b16 %v8570
          %v9221 = vunpack.c.h.b16 %v8570
          %v9222 = vunpack.c.l.b16 %v8571
          %v9223 = vunpack.c.h.b16 %v8571
          %v9224 = vunpack.c.l.b16 %v8572
          %v9225 = vunpack.c.h.b16 %v8572
          %v9226 = vunpack.c.l.b16 %v8573
          %v9227 = vunpack.c.h.b16 %v8573
          %v9228 = vunpack.c.l.b16 %v8574
          %v9229 = vunpack.c.h.b16 %v8574
          %v9230 = vunpack.c.l.b16 %v8575
          %v9231 = vunpack.c.h.b16 %v8575
          %v9232 = vunpack.c.l.b16 %v8576
          %v9233 = vunpack.c.h.b16 %v8576
          %v9234 = vunpack.c.l.b16 %v8577
          %v9235 = vunpack.c.h.b16 %v8577
          %v9236 = vunpack.c.l.b16 %v8578
          %v9237 = vunpack.c.h.b16 %v8578
          %v9238 = vunpack.c.l.b16 %v8579
          %v9239 = vunpack.c.h.b16 %v8579
          %v9240 = vunpack.c.l.b16 %v8580
          %v9241 = vunpack.c.h.b16 %v8580
          %v9242 = vunpack.c.l.b16 %v8581
          %v9243 = vunpack.c.h.b16 %v8581
          %v9244 = vunpack.c.l.b16 %v8582
          %v9245 = vunpack.c.h.b16 %v8582
          %v9246 = vunpack.c.l.b16 %v8583
          %v9247 = vunpack.c.h.b16 %v8583
          %v9248 = vunpack.c.l.b16 %v8584
          %v9249 = vunpack.c.h.b16 %v8584
          %v9250 = vunpack.c.l.b16 %v8585
          %v9251 = vunpack.c.h.b16 %v8585
          %v9252 = vunpack.c.l.b16 %v8586
          %v9253 = vunpack.c.h.b16 %v8586
          %v9254 = vunpack.c.l.b16 %v8587
          %v9255 = vunpack.c.h.b16 %v8587
          %v9256 = vunpack.c.l.b16 %v8588
          %v9257 = vunpack.c.h.b16 %v8588
          %v9258 = vunpack.c.l.b16 %v8589
          %v9259 = vunpack.c.h.b16 %v8589
          %v9260 = vunpack.c.l.b16 %v8590
          %v9261 = vunpack.c.h.b16 %v8590
          %v9262 = vunpack.c.l.b16 %v8591
          %v9263 = vunpack.c.h.b16 %v8591
          %v9264 = vunpack.c.l.b16 %v8592
          %v9265 = vunpack.c.h.b16 %v8592
          %v9266 = vunpack.c.l.b16 %v8593
          %v9267 = vunpack.c.h.b16 %v8593
          %v9268 = vunpack.c.l.b16 %v8594
          %v9269 = vunpack.c.h.b16 %v8594
          %v9270 = vunpack.c.l.b16 %v8595
          %v9271 = vunpack.c.h.b16 %v8595
          %v9272 = vunpack.c.l.b16 %v8596
          %v9273 = vunpack.c.h.b16 %v8596
          %v9274 = vunpack.c.l.b16 %v8597
          %v9275 = vunpack.c.h.b16 %v8597
          %v9276 = vunpack.c.l.b16 %v8598
          %v9277 = vunpack.c.h.b16 %v8598
          %v9278 = vunpack.c.l.b16 %v8599
          %v9279 = vunpack.c.h.b16 %v8599
          %v9280 = vunpack.c.l.b16 %v8600
          %v9281 = vunpack.c.h.b16 %v8600
          %v9282 = vunpack.c.l.b16 %v8601
          %v9283 = vunpack.c.h.b16 %v8601
          %v9284 = vunpack.c.l.b16 %v8602
          %v9285 = vunpack.c.h.b16 %v8602
          %v9286 = vunpack.c.l.b16 %v8603
          %v9287 = vunpack.c.h.b16 %v8603
          %v9288 = vunpack.c.l.b16 %v8604
          %v9289 = vunpack.c.h.b16 %v8604
          %v9290 = vunpack.c.l.b16 %v8605
          %v9291 = vunpack.c.h.b16 %v8605
          %v9292 = vunpack.c.l.b16 %v8606
          %v9293 = vunpack.c.h.b16 %v8606
          %v9294 = vunpack.c.l.b16 %v8607
          %v9295 = vunpack.c.h.b16 %v8607
          %v9296 = vunpack.c.l.b16 %v8608
          %v9297 = vunpack.c.h.b16 %v8608
          %v9298 = vunpack.c.l.b16 %v8609
          %v9299 = vunpack.c.h.b16 %v8609
          %v9300 = vunpack.c.l.b16 %v8610
          %v9301 = vunpack.c.h.b16 %v8610
          %v9302 = vunpack.c.l.b16 %v8611
          %v9303 = vunpack.c.h.b16 %v8611
          %v9304 = vunpack.c.l.b16 %v8612
          %v9305 = vunpack.c.h.b16 %v8612
          %v9306 = vunpack.c.l.b16 %v8613
          %v9307 = vunpack.c.h.b16 %v8613
          %v9308 = vunpack.c.l.b16 %v8614
          %v9309 = vunpack.c.h.b16 %v8614
          %v9310 = vunpack.c.l.b16 %v8615
          %v9311 = vunpack.c.h.b16 %v8615
          %v9312 = vunpack.c.l.b16 %v8616
          %v9313 = vunpack.c.h.b16 %v8616
          %v9314 = vunpack.c.l.b16 %v8617
          %v9315 = vunpack.c.h.b16 %v8617
          %v9316 = vunpack.c.l.b16 %v8618
          %v9317 = vunpack.c.h.b16 %v8618
          %v9318 = vunpack.c.l.b16 %v8619
          %v9319 = vunpack.c.h.b16 %v8619
          %v9320 = vunpack.c.l.b16 %v8620
          %v9321 = vunpack.c.h.b16 %v8620
          %v9322 = vunpack.c.l.b16 %v8621
          %v9323 = vunpack.c.h.b16 %v8621
          %v9324 = vunpack.c.l.b16 %v8622
          %v9325 = vunpack.c.h.b16 %v8622
          %v9326 = vunpack.c.l.b16 %v8623
          %v9327 = vunpack.c.h.b16 %v8623
          %v9328 = vunpack.c.l.b16 %v8624
          %v9329 = vunpack.c.h.b16 %v8624
          %v9330 = vunpack.c.l.b16 %v8625
          %v9331 = vunpack.c.h.b16 %v8625
          %v9332 = vunpack.c.l.b16 %v8626
          %v9333 = vunpack.c.h.b16 %v8626
          %v9334 = vunpack.c.l.b16 %v8627
          %v9335 = vunpack.c.h.b16 %v8627
          %v9336 = vunpack.c.l.b16 %v8628
          %v9337 = vunpack.c.h.b16 %v8628
          %v9338 = vunpack.c.l.b16 %v8629
          %v9339 = vunpack.c.h.b16 %v8629
          %v9340 = vunpack.c.l.b16 %v8630
          %v9341 = vunpack.c.h.b16 %v8630
          %v9342 = vunpack.c.l.b16 %v8631
          %v9343 = vunpack.c.h.b16 %v8631
          %v9344 = vunpack.c.l.b16 %v8632
          %v9345 = vunpack.c.h.b16 %v8632
          %v9346 = vunpack.c.l.b16 %v8633
          %v9347 = vunpack.c.h.b16 %v8633
          %v9348 = vunpack.c.l.b16 %v8634
          %v9349 = vunpack.c.h.b16 %v8634
          %v9350 = vunpack.c.l.b16 %v8635
          %v9351 = vunpack.c.h.b16 %v8635
          %v9352 = vunpack.c.l.b16 %v8636
          %v9353 = vunpack.c.h.b16 %v8636
          %v9354 = vunpack.c.l.b16 %v8637
          %v9355 = vunpack.c.h.b16 %v8637
          %v9356 = vunpack.c.l.b16 %v8638
          %v9357 = vunpack.c.h.b16 %v8638
          %v9358 = vunpack.c.l.b16 %v8639
          %v9359 = vunpack.c.h.b16 %v8639
          %v9360 = vunpack.c.l.b16 %v8640
          %v9361 = vunpack.c.h.b16 %v8640
          %v9362 = vunpack.c.l.b16 %v8641
          %v9363 = vunpack.c.h.b16 %v8641
          %v9364 = vunpack.c.l.b16 %v8642
          %v9365 = vunpack.c.h.b16 %v8642
          %v9366 = vunpack.c.l.b16 %v8643
          %v9367 = vunpack.c.h.b16 %v8643
          %v9368 = vunpack.c.l.b16 %v8644
          %v9369 = vunpack.c.h.b16 %v8644
          %v9370 = vunpack.c.l.b16 %v8645
          %v9371 = vunpack.c.h.b16 %v8645
          %v9372 = vunpack.c.l.b16 %v8646
          %v9373 = vunpack.c.h.b16 %v8646
          %v9374 = vunpack.c.l.b16 %v8647
          %v9375 = vunpack.c.h.b16 %v8647
          %v9376 = vunpack.c.l.b16 %v8648
          %v9377 = vunpack.c.h.b16 %v8648
          %v9378 = vunpack.c.l.b16 %v8649
          %v9379 = vunpack.c.h.b16 %v8649
          %v9380 = vunpack.c.l.b16 %v8650
          %v9381 = vunpack.c.h.b16 %v8650
          %v9382 = vunpack.c.l.b16 %v8651
          %v9383 = vunpack.c.h.b16 %v8651
          %v9384 = vunpack.c.l.b16 %v8652
          %v9385 = vunpack.c.h.b16 %v8652
          %v9386 = vunpack.c.l.b16 %v8653
          %v9387 = vunpack.c.h.b16 %v8653
          %v9388 = vunpack.c.l.b16 %v8654
          %v9389 = vunpack.c.h.b16 %v8654
          %v9390 = vunpack.c.l.b16 %v8655
          %v9391 = vunpack.c.h.b16 %v8655
          %v9392 = vunpack.c.l.b16 %v8656
          %v9393 = vunpack.c.h.b16 %v8656
          %v9394 = vunpack.c.l.b16 %v8657
          %v9395 = vunpack.c.h.b16 %v8657
          %v9396 = vunpack.c.l.b16 %v8658
          %v9397 = vunpack.c.h.b16 %v8658
          %v9398 = vunpack.c.l.b16 %v8659
          %v9399 = vunpack.c.h.b16 %v8659
          %v9400 = vunpack.c.l.b16 %v8660
          %v9401 = vunpack.c.h.b16 %v8660
          %v9402 = vunpack.c.l.b16 %v8661
          %v9403 = vunpack.c.h.b16 %v8661
          %v9404 = vunpack.c.l.b16 %v8662
          %v9405 = vunpack.c.h.b16 %v8662
          %v9406 = vunpack.c.l.b16 %v8663
          %v9407 = vunpack.c.h.b16 %v8663
          %v9408 = vunpack.c.l.b16 %v8664
          %v9409 = vunpack.c.h.b16 %v8664
          %v9410 = vunpack.c.l.b16 %v8665
          %v9411 = vunpack.c.h.b16 %v8665
          %v9412 = vunpack.c.l.b16 %v8666
          %v9413 = vunpack.c.h.b16 %v8666
          %v9414 = vunpack.c.l.b16 %v8667
          %v9415 = vunpack.c.h.b16 %v8667
          %v9416 = vunpack.c.l.b16 %v8668
          %v9417 = vunpack.c.h.b16 %v8668
          %v9418 = vunpack.c.l.b16 %v8669
          %v9419 = vunpack.c.h.b16 %v8669
          %v9420 = vunpack.c.l.b16 %v8670
          %v9421 = vunpack.c.h.b16 %v8670
          %v9422 = vunpack.c.l.b16 %v8671
          %v9423 = vunpack.c.h.b16 %v8671
          %v9424 = vunpack.c.l.b16 %v8672
          %v9425 = vunpack.c.h.b16 %v8672
          %v9426 = vunpack.c.l.b16 %v8673
          %v9427 = vunpack.c.h.b16 %v8673
          %v9428 = vunpack.c.l.b16 %v8674
          %v9429 = vunpack.c.h.b16 %v8674
          %v9430 = vunpack.c.l.b16 %v8675
          %v9431 = vunpack.c.h.b16 %v8675
          %v9432 = vunpack.c.l.b16 %v8676
          %v9433 = vunpack.c.h.b16 %v8676
          %v9434 = vunpack.c.l.b16 %v8677
          %v9435 = vunpack.c.h.b16 %v8677
          %v9436 = vunpack.c.l.b16 %v8678
          %v9437 = vunpack.c.h.b16 %v8678
          %v9438 = vunpack.c.l.b16 %v8679
          %v9439 = vunpack.c.h.b16 %v8679
          %v9440 = vunpack.c.l.b16 %v8680
          %v9441 = vunpack.c.h.b16 %v8680
          %v9442 = vunpack.c.l.b16 %v8681
          %v9443 = vunpack.c.h.b16 %v8681
          %v9444 = vunpack.c.l.b16 %v8682
          %v9445 = vunpack.c.h.b16 %v8682
          %v9446 = vunpack.c.l.b16 %v8683
          %v9447 = vunpack.c.h.b16 %v8683
          %v9448 = vunpack.c.l.b16 %v8684
          %v9449 = vunpack.c.h.b16 %v8684
          %v9450 = vunpack.c.l.b16 %v8685
          %v9451 = vunpack.c.h.b16 %v8685
          %v9452 = vunpack.c.l.b16 %v8686
          %v9453 = vunpack.c.h.b16 %v8686
          %v9454 = vunpack.c.l.b16 %v8687
          %v9455 = vunpack.c.h.b16 %v8687
          %v9456 = vunpack.c.l.b16 %v8688
          %v9457 = vunpack.c.h.b16 %v8688
          %v9458 = vunpack.c.l.b16 %v8689
          %v9459 = vunpack.c.h.b16 %v8689
          %v9460 = vunpack.c.l.b16 %v8690
          %v9461 = vunpack.c.h.b16 %v8690
          %v9462 = vunpack.c.l.b16 %v8691
          %v9463 = vunpack.c.h.b16 %v8691
          %v9464 = vunpack.c.l.b16 %v8692
          %v9465 = vunpack.c.h.b16 %v8692
          %v9466 = vunpack.c.l.b16 %v8693
          %v9467 = vunpack.c.h.b16 %v8693
          %v9468 = vunpack.c.l.b16 %v8694
          %v9469 = vunpack.c.h.b16 %v8694
          %v9470 = vunpack.c.l.b16 %v8695
          %v9471 = vunpack.c.h.b16 %v8695
          %v9472 = vunpack.c.l.b16 %v8696
          %v9473 = vunpack.c.h.b16 %v8696
          %v9474 = vunpack.c.l.b16 %v8697
          %v9475 = vunpack.c.h.b16 %v8697
          %v9476 = vunpack.c.l.b16 %v8698
          %v9477 = vunpack.c.h.b16 %v8698
          %v9478 = vunpack.c.l.b16 %v8699
          %v9479 = vunpack.c.h.b16 %v8699
          %v9480 = vunpack.c.l.b16 %v8700
          %v9481 = vunpack.c.h.b16 %v8700
          %v9482 = vunpack.c.l.b16 %v8701
          %v9483 = vunpack.c.h.b16 %v8701
          %v9484 = vunpack.c.l.b16 %v8702
          %v9485 = vunpack.c.h.b16 %v8702
          %v9486 = vunpack.c.l.b16 %v8703
          %v9487 = vunpack.c.h.b16 %v8703
          %v9488 = vunpack.c.l.b16 %v8704
          %v9489 = vunpack.c.h.b16 %v8704
          %v9490 = vunpack.c.l.b16 %v8705
          %v9491 = vunpack.c.h.b16 %v8705
          %v9492 = vpack.c.b16 %v8988, %v8980
          %v9493 = vpack.c.b16 %v8989, %v8981
          %v9494 = vpack.c.b16 %v8990, %v8982
          %v9495 = vpack.c.b16 %v8991, %v8983
          %v9496 = vpack.c.b16 %v8992, %v8984
          %v9497 = vpack.c.b16 %v8993, %v8985
          %v9498 = vpack.c.b16 %v8994, %v8986
          %v9499 = vpack.c.b16 %v8995, %v8987
          %v9500 = vpack.c.b16 %v9004, %v8996
          %v9501 = vpack.c.b16 %v9005, %v8997
          %v9502 = vpack.c.b16 %v9006, %v8998
          %v9503 = vpack.c.b16 %v9007, %v8999
          %v9504 = vpack.c.b16 %v9008, %v9000
          %v9505 = vpack.c.b16 %v9009, %v9001
          %v9506 = vpack.c.b16 %v9010, %v9002
          %v9507 = vpack.c.b16 %v9011, %v9003
          %v9508 = vpack.c.b16 %v9020, %v9012
          %v9509 = vpack.c.b16 %v9021, %v9013
          %v9510 = vpack.c.b16 %v9022, %v9014
          %v9511 = vpack.c.b16 %v9023, %v9015
          %v9512 = vpack.c.b16 %v9024, %v9016
          %v9513 = vpack.c.b16 %v9025, %v9017
          %v9514 = vpack.c.b16 %v9026, %v9018
          %v9515 = vpack.c.b16 %v9027, %v9019
          %v9516 = vpack.c.b16 %v9036, %v9028
          %v9517 = vpack.c.b16 %v9037, %v9029
          %v9518 = vpack.c.b16 %v9038, %v9030
          %v9519 = vpack.c.b16 %v9039, %v9031
          %v9520 = vpack.c.b16 %v9040, %v9032
          %v9521 = vpack.c.b16 %v9041, %v9033
          %v9522 = vpack.c.b16 %v9042, %v9034
          %v9523 = vpack.c.b16 %v9043, %v9035
          %v9524 = vpack.c.b16 %v9052, %v9044
          %v9525 = vpack.c.b16 %v9053, %v9045
          %v9526 = vpack.c.b16 %v9054, %v9046
          %v9527 = vpack.c.b16 %v9055, %v9047
          %v9528 = vpack.c.b16 %v9056, %v9048
          %v9529 = vpack.c.b16 %v9057, %v9049
          %v9530 = vpack.c.b16 %v9058, %v9050
          %v9531 = vpack.c.b16 %v9059, %v9051
          %v9532 = vpack.c.b16 %v9068, %v9060
          %v9533 = vpack.c.b16 %v9069, %v9061
          %v9534 = vpack.c.b16 %v9070, %v9062
          %v9535 = vpack.c.b16 %v9071, %v9063
          %v9536 = vpack.c.b16 %v9072, %v9064
          %v9537 = vpack.c.b16 %v9073, %v9065
          %v9538 = vpack.c.b16 %v9074, %v9066
          %v9539 = vpack.c.b16 %v9075, %v9067
          %v9540 = vpack.c.b16 %v9084, %v9076
          %v9541 = vpack.c.b16 %v9085, %v9077
          %v9542 = vpack.c.b16 %v9086, %v9078
          %v9543 = vpack.c.b16 %v9087, %v9079
          %v9544 = vpack.c.b16 %v9088, %v9080
          %v9545 = vpack.c.b16 %v9089, %v9081
          %v9546 = vpack.c.b16 %v9090, %v9082
          %v9547 = vpack.c.b16 %v9091, %v9083
          %v9548 = vpack.c.b16 %v9100, %v9092
          %v9549 = vpack.c.b16 %v9101, %v9093
          %v9550 = vpack.c.b16 %v9102, %v9094
          %v9551 = vpack.c.b16 %v9103, %v9095
          %v9552 = vpack.c.b16 %v9104, %v9096
          %v9553 = vpack.c.b16 %v9105, %v9097
          %v9554 = vpack.c.b16 %v9106, %v9098
          %v9555 = vpack.c.b16 %v9107, %v9099
          %v9556 = vpack.c.b16 %v9116, %v9108
          %v9557 = vpack.c.b16 %v9117, %v9109
          %v9558 = vpack.c.b16 %v9118, %v9110
          %v9559 = vpack.c.b16 %v9119, %v9111
          %v9560 = vpack.c.b16 %v9120, %v9112
          %v9561 = vpack.c.b16 %v9121, %v9113
          %v9562 = vpack.c.b16 %v9122, %v9114
          %v9563 = vpack.c.b16 %v9123, %v9115
          %v9564 = vpack.c.b16 %v9132, %v9124
          %v9565 = vpack.c.b16 %v9133, %v9125
          %v9566 = vpack.c.b16 %v9134, %v9126
          %v9567 = vpack.c.b16 %v9135, %v9127
          %v9568 = vpack.c.b16 %v9136, %v9128
          %v9569 = vpack.c.b16 %v9137, %v9129
          %v9570 = vpack.c.b16 %v9138, %v9130
          %v9571 = vpack.c.b16 %v9139, %v9131
          %v9572 = vpack.c.b16 %v9148, %v9140
          %v9573 = vpack.c.b16 %v9149, %v9141
          %v9574 = vpack.c.b16 %v9150, %v9142
          %v9575 = vpack.c.b16 %v9151, %v9143
          %v9576 = vpack.c.b16 %v9152, %v9144
          %v9577 = vpack.c.b16 %v9153, %v9145
          %v9578 = vpack.c.b16 %v9154, %v9146
          %v9579 = vpack.c.b16 %v9155, %v9147
          %v9580 = vpack.c.b16 %v9164, %v9156
          %v9581 = vpack.c.b16 %v9165, %v9157
          %v9582 = vpack.c.b16 %v9166, %v9158
          %v9583 = vpack.c.b16 %v9167, %v9159
          %v9584 = vpack.c.b16 %v9168, %v9160
          %v9585 = vpack.c.b16 %v9169, %v9161
          %v9586 = vpack.c.b16 %v9170, %v9162
          %v9587 = vpack.c.b16 %v9171, %v9163
          %v9588 = vpack.c.b16 %v9180, %v9172
          %v9589 = vpack.c.b16 %v9181, %v9173
          %v9590 = vpack.c.b16 %v9182, %v9174
          %v9591 = vpack.c.b16 %v9183, %v9175
          %v9592 = vpack.c.b16 %v9184, %v9176
          %v9593 = vpack.c.b16 %v9185, %v9177
          %v9594 = vpack.c.b16 %v9186, %v9178
          %v9595 = vpack.c.b16 %v9187, %v9179
          %v9596 = vpack.c.b16 %v9196, %v9188
          %v9597 = vpack.c.b16 %v9197, %v9189
          %v9598 = vpack.c.b16 %v9198, %v9190
          %v9599 = vpack.c.b16 %v9199, %v9191
          %v9600 = vpack.c.b16 %v9200, %v9192
          %v9601 = vpack.c.b16 %v9201, %v9193
          %v9602 = vpack.c.b16 %v9202, %v9194
          %v9603 = vpack.c.b16 %v9203, %v9195
          %v9604 = vpack.c.b16 %v9212, %v9204
          %v9605 = vpack.c.b16 %v9213, %v9205
          %v9606 = vpack.c.b16 %v9214, %v9206
          %v9607 = vpack.c.b16 %v9215, %v9207
          %v9608 = vpack.c.b16 %v9216, %v9208
          %v9609 = vpack.c.b16 %v9217, %v9209
          %v9610 = vpack.c.b16 %v9218, %v9210
          %v9611 = vpack.c.b16 %v9219, %v9211
          %v9612 = vpack.c.b16 %v9228, %v9220
          %v9613 = vpack.c.b16 %v9229, %v9221
          %v9614 = vpack.c.b16 %v9230, %v9222
          %v9615 = vpack.c.b16 %v9231, %v9223
          %v9616 = vpack.c.b16 %v9232, %v9224
          %v9617 = vpack.c.b16 %v9233, %v9225
          %v9618 = vpack.c.b16 %v9234, %v9226
          %v9619 = vpack.c.b16 %v9235, %v9227
          %v9620 = vpack.c.b16 %v9244, %v9236
          %v9621 = vpack.c.b16 %v9245, %v9237
          %v9622 = vpack.c.b16 %v9246, %v9238
          %v9623 = vpack.c.b16 %v9247, %v9239
          %v9624 = vpack.c.b16 %v9248, %v9240
          %v9625 = vpack.c.b16 %v9249, %v9241
          %v9626 = vpack.c.b16 %v9250, %v9242
          %v9627 = vpack.c.b16 %v9251, %v9243
          %v9628 = vpack.c.b16 %v9260, %v9252
          %v9629 = vpack.c.b16 %v9261, %v9253
          %v9630 = vpack.c.b16 %v9262, %v9254
          %v9631 = vpack.c.b16 %v9263, %v9255
          %v9632 = vpack.c.b16 %v9264, %v9256
          %v9633 = vpack.c.b16 %v9265, %v9257
          %v9634 = vpack.c.b16 %v9266, %v9258
          %v9635 = vpack.c.b16 %v9267, %v9259
          %v9636 = vpack.c.b16 %v9276, %v9268
          %v9637 = vpack.c.b16 %v9277, %v9269
          %v9638 = vpack.c.b16 %v9278, %v9270
          %v9639 = vpack.c.b16 %v9279, %v9271
          %v9640 = vpack.c.b16 %v9280, %v9272
          %v9641 = vpack.c.b16 %v9281, %v9273
          %v9642 = vpack.c.b16 %v9282, %v9274
          %v9643 = vpack.c.b16 %v9283, %v9275
          %v9644 = vpack.c.b16 %v9292, %v9284
          %v9645 = vpack.c.b16 %v9293, %v9285
          %v9646 = vpack.c.b16 %v9294, %v9286
          %v9647 = vpack.c.b16 %v9295, %v9287
          %v9648 = vpack.c.b16 %v9296, %v9288
          %v9649 = vpack.c.b16 %v9297, %v9289
          %v9650 = vpack.c.b16 %v9298, %v9290
          %v9651 = vpack.c.b16 %v9299, %v9291
          %v9652 = vpack.c.b16 %v9308, %v9300
          %v9653 = vpack.c.b16 %v9309, %v9301
          %v9654 = vpack.c.b16 %v9310, %v9302
          %v9655 = vpack.c.b16 %v9311, %v9303
          %v9656 = vpack.c.b16 %v9312, %v9304
          %v9657 = vpack.c.b16 %v9313, %v9305
          %v9658 = vpack.c.b16 %v9314, %v9306
          %v9659 = vpack.c.b16 %v9315, %v9307
          %v9660 = vpack.c.b16 %v9324, %v9316
          %v9661 = vpack.c.b16 %v9325, %v9317
          %v9662 = vpack.c.b16 %v9326, %v9318
          %v9663 = vpack.c.b16 %v9327, %v9319
          %v9664 = vpack.c.b16 %v9328, %v9320
          %v9665 = vpack.c.b16 %v9329, %v9321
          %v9666 = vpack.c.b16 %v9330, %v9322
          %v9667 = vpack.c.b16 %v9331, %v9323
          %v9668 = vpack.c.b16 %v9340, %v9332
          %v9669 = vpack.c.b16 %v9341, %v9333
          %v9670 = vpack.c.b16 %v9342, %v9334
          %v9671 = vpack.c.b16 %v9343, %v9335
          %v9672 = vpack.c.b16 %v9344, %v9336
          %v9673 = vpack.c.b16 %v9345, %v9337
          %v9674 = vpack.c.b16 %v9346, %v9338
          %v9675 = vpack.c.b16 %v9347, %v9339
          %v9676 = vpack.c.b16 %v9356, %v9348
          %v9677 = vpack.c.b16 %v9357, %v9349
          %v9678 = vpack.c.b16 %v9358, %v9350
          %v9679 = vpack.c.b16 %v9359, %v9351
          %v9680 = vpack.c.b16 %v9360, %v9352
          %v9681 = vpack.c.b16 %v9361, %v9353
          %v9682 = vpack.c.b16 %v9362, %v9354
          %v9683 = vpack.c.b16 %v9363, %v9355
          %v9684 = vpack.c.b16 %v9372, %v9364
          %v9685 = vpack.c.b16 %v9373, %v9365
          %v9686 = vpack.c.b16 %v9374, %v9366
          %v9687 = vpack.c.b16 %v9375, %v9367
          %v9688 = vpack.c.b16 %v9376, %v9368
          %v9689 = vpack.c.b16 %v9377, %v9369
          %v9690 = vpack.c.b16 %v9378, %v9370
          %v9691 = vpack.c.b16 %v9379, %v9371
          %v9692 = vpack.c.b16 %v9388, %v9380
          %v9693 = vpack.c.b16 %v9389, %v9381
          %v9694 = vpack.c.b16 %v9390, %v9382
          %v9695 = vpack.c.b16 %v9391, %v9383
          %v9696 = vpack.c.b16 %v9392, %v9384
          %v9697 = vpack.c.b16 %v9393, %v9385
          %v9698 = vpack.c.b16 %v9394, %v9386
          %v9699 = vpack.c.b16 %v9395, %v9387
          %v9700 = vpack.c.b16 %v9404, %v9396
          %v9701 = vpack.c.b16 %v9405, %v9397
          %v9702 = vpack.c.b16 %v9406, %v9398
          %v9703 = vpack.c.b16 %v9407, %v9399
          %v9704 = vpack.c.b16 %v9408, %v9400
          %v9705 = vpack.c.b16 %v9409, %v9401
          %v9706 = vpack.c.b16 %v9410, %v9402
          %v9707 = vpack.c.b16 %v9411, %v9403
          %v9708 = vpack.c.b16 %v9420, %v9412
          %v9709 = vpack.c.b16 %v9421, %v9413
          %v9710 = vpack.c.b16 %v9422, %v9414
          %v9711 = vpack.c.b16 %v9423, %v9415
          %v9712 = vpack.c.b16 %v9424, %v9416
          %v9713 = vpack.c.b16 %v9425, %v9417
          %v9714 = vpack.c.b16 %v9426, %v9418
          %v9715 = vpack.c.b16 %v9427, %v9419
          %v9716 = vpack.c.b16 %v9436, %v9428
          %v9717 = vpack.c.b16 %v9437, %v9429
          %v9718 = vpack.c.b16 %v9438, %v9430
          %v9719 = vpack.c.b16 %v9439, %v9431
          %v9720 = vpack.c.b16 %v9440, %v9432
          %v9721 = vpack.c.b16 %v9441, %v9433
          %v9722 = vpack.c.b16 %v9442, %v9434
          %v9723 = vpack.c.b16 %v9443, %v9435
          %v9724 = vpack.c.b16 %v9452, %v9444
          %v9725 = vpack.c.b16 %v9453, %v9445
          %v9726 = vpack.c.b16 %v9454, %v9446
          %v9727 = vpack.c.b16 %v9455, %v9447
          %v9728 = vpack.c.b16 %v9456, %v9448
          %v9729 = vpack.c.b16 %v9457, %v9449
          %v9730 = vpack.c.b16 %v9458, %v9450
          %v9731 = vpack.c.b16 %v9459, %v9451
          %v9732 = vpack.c.b16 %v9468, %v9460
          %v9733 = vpack.c.b16 %v9469, %v9461
          %v9734 = vpack.c.b16 %v9470, %v9462
          %v9735 = vpack.c.b16 %v9471, %v9463
          %v9736 = vpack.c.b16 %v9472, %v9464
          %v9737 = vpack.c.b16 %v9473, %v9465
          %v9738 = vpack.c.b16 %v9474, %v9466
          %v9739 = vpack.c.b16 %v9475, %v9467
          %v9740 = vpack.c.b16 %v9484, %v9476
          %v9741 = vpack.c.b16 %v9485, %v9477
          %v9742 = vpack.c.b16 %v9486, %v9478
          %v9743 = vpack.c.b16 %v9487, %v9479
          %v9744 = vpack.c.b16 %v9488, %v9480
          %v9745 = vpack.c.b16 %v9489, %v9481
          %v9746 = vpack.c.b16 %v9490, %v9482
          %v9747 = vpack.c.b16 %v9491, %v9483
          %10004 = vmatpush.bf16.msra.mxu0 %v9548
          %10005 = vmatpush.bf16.msra.mxu0 %v9540
          %10006 = vmatpush.bf16.msra.mxu0 %v9532
          %10007 = vmatpush.bf16.msra.mxu0 %v9524
          %10008 = vmatpush.bf16.msra.mxu0 %v9516
          %10009 = vmatpush.bf16.msra.mxu0 %v9508
          %10010 = vmatpush.bf16.msra.mxu0 %v9500
          %10011 = vmatpush.bf16.msra.mxu0 %v9492
          %10012 = vmatmul.bf16.gmra.mxu0 %v8446
          %v10013 = vpop.f32.mrf.mxu0
          %v10014 = vadd.f32 %v8708, %v10013
          %v10015 = vpop.f32.mrf.mxu0
          %10016 = vdwg.mxu0
          %10017 = vmatpush.bf16.msra.mxu0 %v9612
          %10018 = vmatpush.bf16.msra.mxu0 %v9604
          %10019 = vmatpush.bf16.msra.mxu0 %v9596
          %10020 = vmatpush.bf16.msra.mxu0 %v9588
          %10021 = vmatpush.bf16.msra.mxu0 %v9580
          %10022 = vmatpush.bf16.msra.mxu0 %v9572
          %10023 = vmatpush.bf16.msra.mxu0 %v9564
          %10024 = vmatpush.bf16.msra.mxu0 %v9556
          %10025 = vmatmul.bf16.gmra.mxu0 %v8447
          %v10026 = vpop.f32.mrf.mxu0
          %v10027 = vadd.f32 %v10014, %v10026
          %v10028 = vpop.f32.mrf.mxu0
          %10029 = vdwg.mxu0
          %10030 = vmatpush.bf16.msra.mxu0 %v9676
          %10031 = vmatpush.bf16.msra.mxu0 %v9668
          %10032 = vmatpush.bf16.msra.mxu0 %v9660
          %10033 = vmatpush.bf16.msra.mxu0 %v9652
          %10034 = vmatpush.bf16.msra.mxu0 %v9644
          %10035 = vmatpush.bf16.msra.mxu0 %v9636
          %10036 = vmatpush.bf16.msra.mxu0 %v9628
          %10037 = vmatpush.bf16.msra.mxu0 %v9620
          %10038 = vmatmul.bf16.gmra.mxu0 %v8448
          %v10039 = vpop.f32.mrf.mxu0
          %v10040 = vadd.f32 %v10027, %v10039
          %v10041 = vpop.f32.mrf.mxu0
          %10042 = vdwg.mxu0
          %10043 = vmatpush.bf16.msra.mxu0 %v9740
          %10044 = vmatpush.bf16.msra.mxu0 %v9732
          %10045 = vmatpush.bf16.msra.mxu0 %v9724
          %10046 = vmatpush.bf16.msra.mxu0 %v9716
          %10047 = vmatpush.bf16.msra.mxu0 %v9708
          %10048 = vmatpush.bf16.msra.mxu0 %v9700
          %10049 = vmatpush.bf16.msra.mxu0 %v9692
          %10050 = vmatpush.bf16.msra.mxu0 %v9684
          %10051 = vmatmul.bf16.gmra.mxu0 %v8449
          %v10052 = vpop.f32.mrf.mxu0
          %v10053 = vadd.f32 %v10040, %v10052
          %v10054 = vpop.f32.mrf.mxu0
          %10055 = vdwg.mxu0
          %10056 = vmatpush.bf16.msra.mxu0 %v9549
          %10057 = vmatpush.bf16.msra.mxu0 %v9541
          %10058 = vmatpush.bf16.msra.mxu0 %v9533
          %10059 = vmatpush.bf16.msra.mxu0 %v9525
          %10060 = vmatpush.bf16.msra.mxu0 %v9517
          %10061 = vmatpush.bf16.msra.mxu0 %v9509
          %10062 = vmatpush.bf16.msra.mxu0 %v9501
          %10063 = vmatpush.bf16.msra.mxu0 %v9493
          %10064 = vmatmul.bf16.gmra.mxu0 %v8446
          %v10065 = vpop.f32.mrf.mxu0
          %v10066 = vadd.f32 %v8709, %v10065
          %v10067 = vpop.f32.mrf.mxu0
          %10068 = vdwg.mxu0
          %10069 = vmatpush.bf16.msra.mxu0 %v9613
          %10070 = vmatpush.bf16.msra.mxu0 %v9605
          %10071 = vmatpush.bf16.msra.mxu0 %v9597
          %10072 = vmatpush.bf16.msra.mxu0 %v9589
          %10073 = vmatpush.bf16.msra.mxu0 %v9581
          %10074 = vmatpush.bf16.msra.mxu0 %v9573
          %10075 = vmatpush.bf16.msra.mxu0 %v9565
          %10076 = vmatpush.bf16.msra.mxu0 %v9557
          %10077 = vmatmul.bf16.gmra.mxu0 %v8447
          %v10078 = vpop.f32.mrf.mxu0
          %v10079 = vadd.f32 %v10066, %v10078
          %v10080 = vpop.f32.mrf.mxu0
          %10081 = vdwg.mxu0
          %10082 = vmatpush.bf16.msra.mxu0 %v9677
          %10083 = vmatpush.bf16.msra.mxu0 %v9669
          %10084 = vmatpush.bf16.msra.mxu0 %v9661
          %10085 = vmatpush.bf16.msra.mxu0 %v9653
          %10086 = vmatpush.bf16.msra.mxu0 %v9645
          %10087 = vmatpush.bf16.msra.mxu0 %v9637
          %10088 = vmatpush.bf16.msra.mxu0 %v9629
          %10089 = vmatpush.bf16.msra.mxu0 %v9621
          %10090 = vmatmul.bf16.gmra.mxu0 %v8448
          %v10091 = vpop.f32.mrf.mxu0
          %v10092 = vadd.f32 %v10079, %v10091
          %v10093 = vpop.f32.mrf.mxu0
          %10094 = vdwg.mxu0
          %10095 = vmatpush.bf16.msra.mxu0 %v9741
          %10096 = vmatpush.bf16.msra.mxu0 %v9733
          %10097 = vmatpush.bf16.msra.mxu0 %v9725
          %10098 = vmatpush.bf16.msra.mxu0 %v9717
          %10099 = vmatpush.bf16.msra.mxu0 %v9709
          %10100 = vmatpush.bf16.msra.mxu0 %v9701
          %10101 = vmatpush.bf16.msra.mxu0 %v9693
          %10102 = vmatpush.bf16.msra.mxu0 %v9685
          %10103 = vmatmul.bf16.gmra.mxu0 %v8449
          %v10104 = vpop.f32.mrf.mxu0
          %v10105 = vadd.f32 %v10092, %v10104
          %v10106 = vpop.f32.mrf.mxu0
          %10107 = vdwg.mxu0
          %10108 = vmatpush.bf16.msra.mxu0 %v9550
          %10109 = vmatpush.bf16.msra.mxu0 %v9542
          %10110 = vmatpush.bf16.msra.mxu0 %v9534
          %10111 = vmatpush.bf16.msra.mxu0 %v9526
          %10112 = vmatpush.bf16.msra.mxu0 %v9518
          %10113 = vmatpush.bf16.msra.mxu0 %v9510
          %10114 = vmatpush.bf16.msra.mxu0 %v9502
          %10115 = vmatpush.bf16.msra.mxu0 %v9494
          %10116 = vmatmul.bf16.gmra.mxu0 %v8446
          %v10117 = vpop.f32.mrf.mxu0
          %v10118 = vadd.f32 %v8710, %v10117
          %v10119 = vpop.f32.mrf.mxu0
          %10120 = vdwg.mxu0
          %10121 = vmatpush.bf16.msra.mxu0 %v9614
          %10122 = vmatpush.bf16.msra.mxu0 %v9606
          %10123 = vmatpush.bf16.msra.mxu0 %v9598
          %10124 = vmatpush.bf16.msra.mxu0 %v9590
          %10125 = vmatpush.bf16.msra.mxu0 %v9582
          %10126 = vmatpush.bf16.msra.mxu0 %v9574
          %10127 = vmatpush.bf16.msra.mxu0 %v9566
          %10128 = vmatpush.bf16.msra.mxu0 %v9558
          %10129 = vmatmul.bf16.gmra.mxu0 %v8447
          %v10130 = vpop.f32.mrf.mxu0
          %v10131 = vadd.f32 %v10118, %v10130
          %v10132 = vpop.f32.mrf.mxu0
          %10133 = vdwg.mxu0
          %10134 = vmatpush.bf16.msra.mxu0 %v9678
          %10135 = vmatpush.bf16.msra.mxu0 %v9670
          %10136 = vmatpush.bf16.msra.mxu0 %v9662
          %10137 = vmatpush.bf16.msra.mxu0 %v9654
          %10138 = vmatpush.bf16.msra.mxu0 %v9646
          %10139 = vmatpush.bf16.msra.mxu0 %v9638
          %10140 = vmatpush.bf16.msra.mxu0 %v9630
          %10141 = vmatpush.bf16.msra.mxu0 %v9622
          %10142 = vmatmul.bf16.gmra.mxu0 %v8448
          %v10143 = vpop.f32.mrf.mxu0
          %v10144 = vadd.f32 %v10131, %v10143
          %v10145 = vpop.f32.mrf.mxu0
          %10146 = vdwg.mxu0
          %10147 = vmatpush.bf16.msra.mxu0 %v9742
          %10148 = vmatpush.bf16.msra.mxu0 %v9734
          %10149 = vmatpush.bf16.msra.mxu0 %v9726
          %10150 = vmatpush.bf16.msra.mxu0 %v9718
          %10151 = vmatpush.bf16.msra.mxu0 %v9710
          %10152 = vmatpush.bf16.msra.mxu0 %v9702
          %10153 = vmatpush.bf16.msra.mxu0 %v9694
          %10154 = vmatpush.bf16.msra.mxu0 %v9686
          %10155 = vmatmul.bf16.gmra.mxu0 %v8449
          %v10156 = vpop.f32.mrf.mxu0
          %v10157 = vadd.f32 %v10144, %v10156
          %v10158 = vpop.f32.mrf.mxu0
          %10159 = vdwg.mxu0
          %10160 = vmatpush.bf16.msra.mxu0 %v9551
          %10161 = vmatpush.bf16.msra.mxu0 %v9543
          %10162 = vmatpush.bf16.msra.mxu0 %v9535
          %10163 = vmatpush.bf16.msra.mxu0 %v9527
          %10164 = vmatpush.bf16.msra.mxu0 %v9519
          %10165 = vmatpush.bf16.msra.mxu0 %v9511
          %10166 = vmatpush.bf16.msra.mxu0 %v9503
          %10167 = vmatpush.bf16.msra.mxu0 %v9495
          %10168 = vmatmul.bf16.gmra.mxu0 %v8446
          %v10169 = vpop.f32.mrf.mxu0
          %v10170 = vadd.f32 %v8711, %v10169
          %v10171 = vpop.f32.mrf.mxu0
          %10172 = vdwg.mxu0
          %10173 = vmatpush.bf16.msra.mxu0 %v9615
          %10174 = vmatpush.bf16.msra.mxu0 %v9607
          %10175 = vmatpush.bf16.msra.mxu0 %v9599
          %10176 = vmatpush.bf16.msra.mxu0 %v9591
          %10177 = vmatpush.bf16.msra.mxu0 %v9583
          %10178 = vmatpush.bf16.msra.mxu0 %v9575
          %10179 = vmatpush.bf16.msra.mxu0 %v9567
          %10180 = vmatpush.bf16.msra.mxu0 %v9559
          %10181 = vmatmul.bf16.gmra.mxu0 %v8447
          %v10182 = vpop.f32.mrf.mxu0
          %v10183 = vadd.f32 %v10170, %v10182
          %v10184 = vpop.f32.mrf.mxu0
          %10185 = vdwg.mxu0
          %10186 = vmatpush.bf16.msra.mxu0 %v9679
          %10187 = vmatpush.bf16.msra.mxu0 %v9671
          %10188 = vmatpush.bf16.msra.mxu0 %v9663
          %10189 = vmatpush.bf16.msra.mxu0 %v9655
          %10190 = vmatpush.bf16.msra.mxu0 %v9647
          %10191 = vmatpush.bf16.msra.mxu0 %v9639
          %10192 = vmatpush.bf16.msra.mxu0 %v9631
          %10193 = vmatpush.bf16.msra.mxu0 %v9623
          %10194 = vmatmul.bf16.gmra.mxu0 %v8448
          %v10195 = vpop.f32.mrf.mxu0
          %v10196 = vadd.f32 %v10183, %v10195
          %v10197 = vpop.f32.mrf.mxu0
          %10198 = vdwg.mxu0
          %10199 = vmatpush.bf16.msra.mxu0 %v9743
          %10200 = vmatpush.bf16.msra.mxu0 %v9735
          %10201 = vmatpush.bf16.msra.mxu0 %v9727
          %10202 = vmatpush.bf16.msra.mxu0 %v9719
          %10203 = vmatpush.bf16.msra.mxu0 %v9711
          %10204 = vmatpush.bf16.msra.mxu0 %v9703
          %10205 = vmatpush.bf16.msra.mxu0 %v9695
          %10206 = vmatpush.bf16.msra.mxu0 %v9687
          %10207 = vmatmul.bf16.gmra.mxu0 %v8449
          %v10208 = vpop.f32.mrf.mxu0
          %v10209 = vadd.f32 %v10196, %v10208
          %v10210 = vpop.f32.mrf.mxu0
          %10211 = vdwg.mxu0
          %10212 = vmatpush.bf16.msra.mxu0 %v9552
          %10213 = vmatpush.bf16.msra.mxu0 %v9544
          %10214 = vmatpush.bf16.msra.mxu0 %v9536
          %10215 = vmatpush.bf16.msra.mxu0 %v9528
          %10216 = vmatpush.bf16.msra.mxu0 %v9520
          %10217 = vmatpush.bf16.msra.mxu0 %v9512
          %10218 = vmatpush.bf16.msra.mxu0 %v9504
          %10219 = vmatpush.bf16.msra.mxu0 %v9496
          %10220 = vmatmul.bf16.gmra.mxu0 %v8446
          %v10221 = vpop.f32.mrf.mxu0
          %v10222 = vadd.f32 %v8712, %v10221
          %v10223 = vpop.f32.mrf.mxu0
          %10224 = vdwg.mxu0
          %10225 = vmatpush.bf16.msra.mxu0 %v9616
          %10226 = vmatpush.bf16.msra.mxu0 %v9608
          %10227 = vmatpush.bf16.msra.mxu0 %v9600
          %10228 = vmatpush.bf16.msra.mxu0 %v9592
          %10229 = vmatpush.bf16.msra.mxu0 %v9584
          %10230 = vmatpush.bf16.msra.mxu0 %v9576
          %10231 = vmatpush.bf16.msra.mxu0 %v9568
          %10232 = vmatpush.bf16.msra.mxu0 %v9560
          %10233 = vmatmul.bf16.gmra.mxu0 %v8447
          %v10234 = vpop.f32.mrf.mxu0
          %v10235 = vadd.f32 %v10222, %v10234
          %v10236 = vpop.f32.mrf.mxu0
          %10237 = vdwg.mxu0
          %10238 = vmatpush.bf16.msra.mxu0 %v9680
          %10239 = vmatpush.bf16.msra.mxu0 %v9672
          %10240 = vmatpush.bf16.msra.mxu0 %v9664
          %10241 = vmatpush.bf16.msra.mxu0 %v9656
          %10242 = vmatpush.bf16.msra.mxu0 %v9648
          %10243 = vmatpush.bf16.msra.mxu0 %v9640
          %10244 = vmatpush.bf16.msra.mxu0 %v9632
          %10245 = vmatpush.bf16.msra.mxu0 %v9624
          %10246 = vmatmul.bf16.gmra.mxu0 %v8448
          %v10247 = vpop.f32.mrf.mxu0
          %v10248 = vadd.f32 %v10235, %v10247
          %v10249 = vpop.f32.mrf.mxu0
          %10250 = vdwg.mxu0
          %10251 = vmatpush.bf16.msra.mxu0 %v9744
          %10252 = vmatpush.bf16.msra.mxu0 %v9736
          %10253 = vmatpush.bf16.msra.mxu0 %v9728
          %10254 = vmatpush.bf16.msra.mxu0 %v9720
          %10255 = vmatpush.bf16.msra.mxu0 %v9712
          %10256 = vmatpush.bf16.msra.mxu0 %v9704
          %10257 = vmatpush.bf16.msra.mxu0 %v9696
          %10258 = vmatpush.bf16.msra.mxu0 %v9688
          %10259 = vmatmul.bf16.gmra.mxu0 %v8449
          %v10260 = vpop.f32.mrf.mxu0
          %v10261 = vadd.f32 %v10248, %v10260
          %v10262 = vpop.f32.mrf.mxu0
          %10263 = vdwg.mxu0
          %10264 = vmatpush.bf16.msra.mxu0 %v9553
          %10265 = vmatpush.bf16.msra.mxu0 %v9545
          %10266 = vmatpush.bf16.msra.mxu0 %v9537
          %10267 = vmatpush.bf16.msra.mxu0 %v9529
          %10268 = vmatpush.bf16.msra.mxu0 %v9521
          %10269 = vmatpush.bf16.msra.mxu0 %v9513
          %10270 = vmatpush.bf16.msra.mxu0 %v9505
          %10271 = vmatpush.bf16.msra.mxu0 %v9497
          %10272 = vmatmul.bf16.gmra.mxu0 %v8446
          %v10273 = vpop.f32.mrf.mxu0
          %v10274 = vadd.f32 %v8713, %v10273
          %v10275 = vpop.f32.mrf.mxu0
          %10276 = vdwg.mxu0
          %10277 = vmatpush.bf16.msra.mxu0 %v9617
          %10278 = vmatpush.bf16.msra.mxu0 %v9609
          %10279 = vmatpush.bf16.msra.mxu0 %v9601
          %10280 = vmatpush.bf16.msra.mxu0 %v9593
          %10281 = vmatpush.bf16.msra.mxu0 %v9585
          %10282 = vmatpush.bf16.msra.mxu0 %v9577
          %10283 = vmatpush.bf16.msra.mxu0 %v9569
          %10284 = vmatpush.bf16.msra.mxu0 %v9561
          %10285 = vmatmul.bf16.gmra.mxu0 %v8447
          %v10286 = vpop.f32.mrf.mxu0
          %v10287 = vadd.f32 %v10274, %v10286
          %v10288 = vpop.f32.mrf.mxu0
          %10289 = vdwg.mxu0
          %10290 = vmatpush.bf16.msra.mxu0 %v9681
          %10291 = vmatpush.bf16.msra.mxu0 %v9673
          %10292 = vmatpush.bf16.msra.mxu0 %v9665
          %10293 = vmatpush.bf16.msra.mxu0 %v9657
          %10294 = vmatpush.bf16.msra.mxu0 %v9649
          %10295 = vmatpush.bf16.msra.mxu0 %v9641
          %10296 = vmatpush.bf16.msra.mxu0 %v9633
          %10297 = vmatpush.bf16.msra.mxu0 %v9625
          %10298 = vmatmul.bf16.gmra.mxu0 %v8448
          %v10299 = vpop.f32.mrf.mxu0
          %v10300 = vadd.f32 %v10287, %v10299
          %v10301 = vpop.f32.mrf.mxu0
          %10302 = vdwg.mxu0
          %10303 = vmatpush.bf16.msra.mxu0 %v9745
          %10304 = vmatpush.bf16.msra.mxu0 %v9737
          %10305 = vmatpush.bf16.msra.mxu0 %v9729
          %10306 = vmatpush.bf16.msra.mxu0 %v9721
          %10307 = vmatpush.bf16.msra.mxu0 %v9713
          %10308 = vmatpush.bf16.msra.mxu0 %v9705
          %10309 = vmatpush.bf16.msra.mxu0 %v9697
          %10310 = vmatpush.bf16.msra.mxu0 %v9689
          %10311 = vmatmul.bf16.gmra.mxu0 %v8449
          %v10312 = vpop.f32.mrf.mxu0
          %v10313 = vadd.f32 %v10300, %v10312
          %v10314 = vpop.f32.mrf.mxu0
          %10315 = vdwg.mxu0
          %10316 = vmatpush.bf16.msra.mxu0 %v9554
          %10317 = vmatpush.bf16.msra.mxu0 %v9546
          %10318 = vmatpush.bf16.msra.mxu0 %v9538
          %10319 = vmatpush.bf16.msra.mxu0 %v9530
          %10320 = vmatpush.bf16.msra.mxu0 %v9522
          %10321 = vmatpush.bf16.msra.mxu0 %v9514
          %10322 = vmatpush.bf16.msra.mxu0 %v9506
          %10323 = vmatpush.bf16.msra.mxu0 %v9498
          %10324 = vmatmul.bf16.gmra.mxu0 %v8446
          %v10325 = vpop.f32.mrf.mxu0
          %v10326 = vadd.f32 %v8714, %v10325
          %v10327 = vpop.f32.mrf.mxu0
          %10328 = vdwg.mxu0
          %10329 = vmatpush.bf16.msra.mxu0 %v9618
          %10330 = vmatpush.bf16.msra.mxu0 %v9610
          %10331 = vmatpush.bf16.msra.mxu0 %v9602
          %10332 = vmatpush.bf16.msra.mxu0 %v9594
          %10333 = vmatpush.bf16.msra.mxu0 %v9586
          %10334 = vmatpush.bf16.msra.mxu0 %v9578
          %10335 = vmatpush.bf16.msra.mxu0 %v9570
          %10336 = vmatpush.bf16.msra.mxu0 %v9562
          %10337 = vmatmul.bf16.gmra.mxu0 %v8447
          %v10338 = vpop.f32.mrf.mxu0
          %v10339 = vadd.f32 %v10326, %v10338
          %v10340 = vpop.f32.mrf.mxu0
          %10341 = vdwg.mxu0
          %10342 = vmatpush.bf16.msra.mxu0 %v9682
          %10343 = vmatpush.bf16.msra.mxu0 %v9674
          %10344 = vmatpush.bf16.msra.mxu0 %v9666
          %10345 = vmatpush.bf16.msra.mxu0 %v9658
          %10346 = vmatpush.bf16.msra.mxu0 %v9650
          %10347 = vmatpush.bf16.msra.mxu0 %v9642
          %10348 = vmatpush.bf16.msra.mxu0 %v9634
          %10349 = vmatpush.bf16.msra.mxu0 %v9626
          %10350 = vmatmul.bf16.gmra.mxu0 %v8448
          %v10351 = vpop.f32.mrf.mxu0
          %v10352 = vadd.f32 %v10339, %v10351
          %v10353 = vpop.f32.mrf.mxu0
          %10354 = vdwg.mxu0
          %10355 = vmatpush.bf16.msra.mxu0 %v9746
          %10356 = vmatpush.bf16.msra.mxu0 %v9738
          %10357 = vmatpush.bf16.msra.mxu0 %v9730
          %10358 = vmatpush.bf16.msra.mxu0 %v9722
          %10359 = vmatpush.bf16.msra.mxu0 %v9714
          %10360 = vmatpush.bf16.msra.mxu0 %v9706
          %10361 = vmatpush.bf16.msra.mxu0 %v9698
          %10362 = vmatpush.bf16.msra.mxu0 %v9690
          %10363 = vmatmul.bf16.gmra.mxu0 %v8449
          %v10364 = vpop.f32.mrf.mxu0
          %v10365 = vadd.f32 %v10352, %v10364
          %v10366 = vpop.f32.mrf.mxu0
          %10367 = vdwg.mxu0
          %10368 = vmatpush.bf16.msra.mxu0 %v9555
          %10369 = vmatpush.bf16.msra.mxu0 %v9547
          %10370 = vmatpush.bf16.msra.mxu0 %v9539
          %10371 = vmatpush.bf16.msra.mxu0 %v9531
          %10372 = vmatpush.bf16.msra.mxu0 %v9523
          %10373 = vmatpush.bf16.msra.mxu0 %v9515
          %10374 = vmatpush.bf16.msra.mxu0 %v9507
          %10375 = vmatpush.bf16.msra.mxu0 %v9499
          %10376 = vmatmul.bf16.gmra.mxu0 %v8446
          %v10377 = vpop.f32.mrf.mxu0
          %v10378 = vadd.f32 %v8715, %v10377
          %v10379 = vpop.f32.mrf.mxu0
          %10380 = vdwg.mxu0
          %10381 = vmatpush.bf16.msra.mxu0 %v9619
          %10382 = vmatpush.bf16.msra.mxu0 %v9611
          %10383 = vmatpush.bf16.msra.mxu0 %v9603
          %10384 = vmatpush.bf16.msra.mxu0 %v9595
          %10385 = vmatpush.bf16.msra.mxu0 %v9587
          %10386 = vmatpush.bf16.msra.mxu0 %v9579
          %10387 = vmatpush.bf16.msra.mxu0 %v9571
          %10388 = vmatpush.bf16.msra.mxu0 %v9563
          %10389 = vmatmul.bf16.gmra.mxu0 %v8447
          %v10390 = vpop.f32.mrf.mxu0
          %v10391 = vadd.f32 %v10378, %v10390
          %v10392 = vpop.f32.mrf.mxu0
          %10393 = vdwg.mxu0
          %10394 = vmatpush.bf16.msra.mxu0 %v9683
          %10395 = vmatpush.bf16.msra.mxu0 %v9675
          %10396 = vmatpush.bf16.msra.mxu0 %v9667
          %10397 = vmatpush.bf16.msra.mxu0 %v9659
          %10398 = vmatpush.bf16.msra.mxu0 %v9651
          %10399 = vmatpush.bf16.msra.mxu0 %v9643
          %10400 = vmatpush.bf16.msra.mxu0 %v9635
          %10401 = vmatpush.bf16.msra.mxu0 %v9627
          %10402 = vmatmul.bf16.gmra.mxu0 %v8448
          %v10403 = vpop.f32.mrf.mxu0
          %v10404 = vadd.f32 %v10391, %v10403
          %v10405 = vpop.f32.mrf.mxu0
          %10406 = vdwg.mxu0
          %10407 = vmatpush.bf16.msra.mxu0 %v9747
          %10408 = vmatpush.bf16.msra.mxu0 %v9739
          %10409 = vmatpush.bf16.msra.mxu0 %v9731
          %10410 = vmatpush.bf16.msra.mxu0 %v9723
          %10411 = vmatpush.bf16.msra.mxu0 %v9715
          %10412 = vmatpush.bf16.msra.mxu0 %v9707
          %10413 = vmatpush.bf16.msra.mxu0 %v9699
          %10414 = vmatpush.bf16.msra.mxu0 %v9691
          %10415 = vmatmul.bf16.gmra.mxu0 %v8449
          %v10416 = vpop.f32.mrf.mxu0
          %v10417 = vadd.f32 %v10404, %v10416
          %v10418 = vpop.f32.mrf.mxu0
          %10419 = vdwg.mxu0
          %v10420 = vmax.f32 %v10053, 0.0
          %v10421 = vmax.f32 %v10105, 0.0
          %v10422 = vmax.f32 %v10157, 0.0
          %v10423 = vmax.f32 %v10209, 0.0
          %v10424 = vmax.f32 %v10261, 0.0
          %v10425 = vmax.f32 %v10313, 0.0
          %v10426 = vmax.f32 %v10365, 0.0
          %v10427 = vmax.f32 %v10417, 0.0
          %v10428 = vpack.c.bf16 %v10420, %v10420
          %v10429 = vpack.c.bf16 %v10421, %v10421
          %v10430 = vpack.c.bf16 %v10422, %v10422
          %v10431 = vpack.c.bf16 %v10423, %v10423
          %v10432 = vpack.c.bf16 %v10424, %v10424
          %v10433 = vpack.c.bf16 %v10425, %v10425
          %v10434 = vpack.c.bf16 %v10426, %v10426
          %v10435 = vpack.c.bf16 %v10427, %v10427
          %v10436 = vld [vmem:[%s9] sm:$0xf]
          %v10437 = vld [vmem:[%s9 + $0x4] sm:$0xf]
          %v10438 = vld [vmem:[%s9 + $0x8] sm:$0xf]
          %v10439 = vld [vmem:[%s9 + $0xc] sm:$0xf]
          %v10440 = vld [vmem:[%s9 + $0x10] sm:$0xf]
          %v10441 = vld [vmem:[%s9 + $0x14] sm:$0xf]
          %v10442 = vld [vmem:[%s9 + $0x18] sm:$0xf]
          %v10443 = vld [vmem:[%s9 + $0x1c] sm:$0xf]
          %v10444 = vld [vmem:[%s9 + $0x20] sm:$0xf]
          %v10445 = vld [vmem:[%s9 + $0x24] sm:$0xf]
          %v10446 = vld [vmem:[%s9 + $0x28] sm:$0xf]
          %v10447 = vld [vmem:[%s9 + $0x2c] sm:$0xf]
          %v10448 = vld [vmem:[%s9 + $0x30] sm:$0xf]
          %v10449 = vld [vmem:[%s9 + $0x34] sm:$0xf]
          %v10450 = vld [vmem:[%s9 + $0x38] sm:$0xf]
          %v10451 = vld [vmem:[%s9 + $0x3c] sm:$0xf]
          %v10452 = vld [vmem:[%s9 + $0x40] sm:$0xf]
          %v10453 = vld [vmem:[%s9 + $0x44] sm:$0xf]
          %v10454 = vld [vmem:[%s9 + $0x48] sm:$0xf]
          %v10455 = vld [vmem:[%s9 + $0x4c] sm:$0xf]
          %v10456 = vld [vmem:[%s9 + $0x50] sm:$0xf]
          %v10457 = vld [vmem:[%s9 + $0x54] sm:$0xf]
          %v10458 = vld [vmem:[%s9 + $0x58] sm:$0xf]
          %v10459 = vld [vmem:[%s9 + $0x5c] sm:$0xf]
          %v10460 = vld [vmem:[%s9 + $0x60] sm:$0xf]
          %v10461 = vld [vmem:[%s9 + $0x64] sm:$0xf]
          %v10462 = vld [vmem:[%s9 + $0x68] sm:$0xf]
          %v10463 = vld [vmem:[%s9 + $0x6c] sm:$0xf]
          %v10464 = vld [vmem:[%s9 + $0x70] sm:$0xf]
          %v10465 = vld [vmem:[%s9 + $0x74] sm:$0xf]
          %v10466 = vld [vmem:[%s9 + $0x78] sm:$0xf]
          %v10467 = vld [vmem:[%s9 + $0x7c] sm:$0xf]
          %v10468 = vld [vmem:[%s9 + $0x80] sm:$0xf]
          %v10469 = vld [vmem:[%s9 + $0x84] sm:$0xf]
          %v10470 = vld [vmem:[%s9 + $0x88] sm:$0xf]
          %v10471 = vld [vmem:[%s9 + $0x8c] sm:$0xf]
          %v10472 = vld [vmem:[%s9 + $0x90] sm:$0xf]
          %v10473 = vld [vmem:[%s9 + $0x94] sm:$0xf]
          %v10474 = vld [vmem:[%s9 + $0x98] sm:$0xf]
          %v10475 = vld [vmem:[%s9 + $0x9c] sm:$0xf]
          %v10476 = vld [vmem:[%s9 + $0xa0] sm:$0xf]
          %v10477 = vld [vmem:[%s9 + $0xa4] sm:$0xf]
          %v10478 = vld [vmem:[%s9 + $0xa8] sm:$0xf]
          %v10479 = vld [vmem:[%s9 + $0xac] sm:$0xf]
          %v10480 = vld [vmem:[%s9 + $0xb0] sm:$0xf]
          %v10481 = vld [vmem:[%s9 + $0xb4] sm:$0xf]
          %v10482 = vld [vmem:[%s9 + $0xb8] sm:$0xf]
          %v10483 = vld [vmem:[%s9 + $0xbc] sm:$0xf]
          %v10484 = vld [vmem:[%s9 + $0xc0] sm:$0xf]
          %v10485 = vld [vmem:[%s9 + $0xc4] sm:$0xf]
          %v10486 = vld [vmem:[%s9 + $0xc8] sm:$0xf]
          %v10487 = vld [vmem:[%s9 + $0xcc] sm:$0xf]
          %v10488 = vld [vmem:[%s9 + $0xd0] sm:$0xf]
          %v10489 = vld [vmem:[%s9 + $0xd4] sm:$0xf]
          %v10490 = vld [vmem:[%s9 + $0xd8] sm:$0xf]
          %v10491 = vld [vmem:[%s9 + $0xdc] sm:$0xf]
          %v10492 = vld [vmem:[%s9 + $0xe0] sm:$0xf]
          %v10493 = vld [vmem:[%s9 + $0xe4] sm:$0xf]
          %v10494 = vld [vmem:[%s9 + $0xe8] sm:$0xf]
          %v10495 = vld [vmem:[%s9 + $0xec] sm:$0xf]
          %v10496 = vld [vmem:[%s9 + $0xf0] sm:$0xf]
          %v10497 = vld [vmem:[%s9 + $0xf4] sm:$0xf]
          %v10498 = vld [vmem:[%s9 + $0xf8] sm:$0xf]
          %v10499 = vld [vmem:[%s9 + $0xfc] sm:$0xf]
          %v10500 = vld [vmem:[%s9 + $0x100] sm:$0xf]
          %v10501 = vld [vmem:[%s9 + $0x104] sm:$0xf]
          %v10502 = vld [vmem:[%s9 + $0x108] sm:$0xf]
          %v10503 = vld [vmem:[%s9 + $0x10c] sm:$0xf]
          %v10504 = vld [vmem:[%s9 + $0x110] sm:$0xf]
          %v10505 = vld [vmem:[%s9 + $0x114] sm:$0xf]
          %v10506 = vld [vmem:[%s9 + $0x118] sm:$0xf]
          %v10507 = vld [vmem:[%s9 + $0x11c] sm:$0xf]
          %v10508 = vld [vmem:[%s9 + $0x120] sm:$0xf]
          %v10509 = vld [vmem:[%s9 + $0x124] sm:$0xf]
          %v10510 = vld [vmem:[%s9 + $0x128] sm:$0xf]
          %v10511 = vld [vmem:[%s9 + $0x12c] sm:$0xf]
          %v10512 = vld [vmem:[%s9 + $0x130] sm:$0xf]
          %v10513 = vld [vmem:[%s9 + $0x134] sm:$0xf]
          %v10514 = vld [vmem:[%s9 + $0x138] sm:$0xf]
          %v10515 = vld [vmem:[%s9 + $0x13c] sm:$0xf]
          %v10516 = vld [vmem:[%s9 + $0x140] sm:$0xf]
          %v10517 = vld [vmem:[%s9 + $0x144] sm:$0xf]
          %v10518 = vld [vmem:[%s9 + $0x148] sm:$0xf]
          %v10519 = vld [vmem:[%s9 + $0x14c] sm:$0xf]
          %v10520 = vld [vmem:[%s9 + $0x150] sm:$0xf]
          %v10521 = vld [vmem:[%s9 + $0x154] sm:$0xf]
          %v10522 = vld [vmem:[%s9 + $0x158] sm:$0xf]
          %v10523 = vld [vmem:[%s9 + $0x15c] sm:$0xf]
          %v10524 = vld [vmem:[%s9 + $0x160] sm:$0xf]
          %v10525 = vld [vmem:[%s9 + $0x164] sm:$0xf]
          %v10526 = vld [vmem:[%s9 + $0x168] sm:$0xf]
          %v10527 = vld [vmem:[%s9 + $0x16c] sm:$0xf]
          %v10528 = vld [vmem:[%s9 + $0x170] sm:$0xf]
          %v10529 = vld [vmem:[%s9 + $0x174] sm:$0xf]
          %v10530 = vld [vmem:[%s9 + $0x178] sm:$0xf]
          %v10531 = vld [vmem:[%s9 + $0x17c] sm:$0xf]
          %v10532 = vld [vmem:[%s9 + $0x180] sm:$0xf]
          %v10533 = vld [vmem:[%s9 + $0x184] sm:$0xf]
          %v10534 = vld [vmem:[%s9 + $0x188] sm:$0xf]
          %v10535 = vld [vmem:[%s9 + $0x18c] sm:$0xf]
          %v10536 = vld [vmem:[%s9 + $0x190] sm:$0xf]
          %v10537 = vld [vmem:[%s9 + $0x194] sm:$0xf]
          %v10538 = vld [vmem:[%s9 + $0x198] sm:$0xf]
          %v10539 = vld [vmem:[%s9 + $0x19c] sm:$0xf]
          %v10540 = vld [vmem:[%s9 + $0x1a0] sm:$0xf]
          %v10541 = vld [vmem:[%s9 + $0x1a4] sm:$0xf]
          %v10542 = vld [vmem:[%s9 + $0x1a8] sm:$0xf]
          %v10543 = vld [vmem:[%s9 + $0x1ac] sm:$0xf]
          %v10544 = vld [vmem:[%s9 + $0x1b0] sm:$0xf]
          %v10545 = vld [vmem:[%s9 + $0x1b4] sm:$0xf]
          %v10546 = vld [vmem:[%s9 + $0x1b8] sm:$0xf]
          %v10547 = vld [vmem:[%s9 + $0x1bc] sm:$0xf]
          %v10548 = vld [vmem:[%s9 + $0x1c0] sm:$0xf]
          %v10549 = vld [vmem:[%s9 + $0x1c4] sm:$0xf]
          %v10550 = vld [vmem:[%s9 + $0x1c8] sm:$0xf]
          %v10551 = vld [vmem:[%s9 + $0x1cc] sm:$0xf]
          %v10552 = vld [vmem:[%s9 + $0x1d0] sm:$0xf]
          %v10553 = vld [vmem:[%s9 + $0x1d4] sm:$0xf]
          %v10554 = vld [vmem:[%s9 + $0x1d8] sm:$0xf]
          %v10555 = vld [vmem:[%s9 + $0x1dc] sm:$0xf]
          %v10556 = vld [vmem:[%s9 + $0x1e0] sm:$0xf]
          %v10557 = vld [vmem:[%s9 + $0x1e4] sm:$0xf]
          %v10558 = vld [vmem:[%s9 + $0x1e8] sm:$0xf]
          %v10559 = vld [vmem:[%s9 + $0x1ec] sm:$0xf]
          %v10560 = vld [vmem:[%s9 + $0x1f0] sm:$0xf]
          %v10561 = vld [vmem:[%s9 + $0x1f4] sm:$0xf]
          %v10562 = vld [vmem:[%s9 + $0x1f8] sm:$0xf]
          %v10563 = vld [vmem:[%s9 + $0x1fc] sm:$0xf]
          %v10564 = vld [vmem:[%s10] sm:$0x1]
          %v10566 = vperm.slane %v10564, 0
          %v10696 = vunpack.c.l.b16 %v10436
          %v10697 = vunpack.c.l.b16 %v10437
          %v10698 = vunpack.c.l.b16 %v10438
          %v10699 = vunpack.c.l.b16 %v10439
          %v10700 = vunpack.c.l.b16 %v10440
          %v10701 = vunpack.c.l.b16 %v10441
          %v10702 = vunpack.c.l.b16 %v10442
          %v10703 = vunpack.c.l.b16 %v10443
          %v10704 = vunpack.c.l.b16 %v10444
          %v10705 = vunpack.c.l.b16 %v10445
          %v10706 = vunpack.c.l.b16 %v10446
          %v10707 = vunpack.c.l.b16 %v10447
          %v10708 = vunpack.c.l.b16 %v10448
          %v10709 = vunpack.c.l.b16 %v10449
          %v10710 = vunpack.c.l.b16 %v10450
          %v10711 = vunpack.c.l.b16 %v10451
          %v10712 = vunpack.c.l.b16 %v10452
          %v10713 = vunpack.c.l.b16 %v10453
          %v10714 = vunpack.c.l.b16 %v10454
          %v10715 = vunpack.c.l.b16 %v10455
          %v10716 = vunpack.c.l.b16 %v10456
          %v10717 = vunpack.c.l.b16 %v10457
          %v10718 = vunpack.c.l.b16 %v10458
          %v10719 = vunpack.c.l.b16 %v10459
          %v10720 = vunpack.c.l.b16 %v10460
          %v10721 = vunpack.c.l.b16 %v10461
          %v10722 = vunpack.c.l.b16 %v10462
          %v10723 = vunpack.c.l.b16 %v10463
          %v10724 = vunpack.c.l.b16 %v10464
          %v10725 = vunpack.c.l.b16 %v10465
          %v10726 = vunpack.c.l.b16 %v10466
          %v10727 = vunpack.c.l.b16 %v10467
          %v10728 = vunpack.c.l.b16 %v10468
          %v10729 = vunpack.c.l.b16 %v10469
          %v10730 = vunpack.c.l.b16 %v10470
          %v10731 = vunpack.c.l.b16 %v10471
          %v10732 = vunpack.c.l.b16 %v10472
          %v10733 = vunpack.c.l.b16 %v10473
          %v10734 = vunpack.c.l.b16 %v10474
          %v10735 = vunpack.c.l.b16 %v10475
          %v10736 = vunpack.c.l.b16 %v10476
          %v10737 = vunpack.c.l.b16 %v10477
          %v10738 = vunpack.c.l.b16 %v10478
          %v10739 = vunpack.c.l.b16 %v10479
          %v10740 = vunpack.c.l.b16 %v10480
          %v10741 = vunpack.c.l.b16 %v10481
          %v10742 = vunpack.c.l.b16 %v10482
          %v10743 = vunpack.c.l.b16 %v10483
          %v10744 = vunpack.c.l.b16 %v10484
          %v10745 = vunpack.c.l.b16 %v10485
          %v10746 = vunpack.c.l.b16 %v10486
          %v10747 = vunpack.c.l.b16 %v10487
          %v10748 = vunpack.c.l.b16 %v10488
          %v10749 = vunpack.c.l.b16 %v10489
          %v10750 = vunpack.c.l.b16 %v10490
          %v10751 = vunpack.c.l.b16 %v10491
          %v10752 = vunpack.c.l.b16 %v10492
          %v10753 = vunpack.c.l.b16 %v10493
          %v10754 = vunpack.c.l.b16 %v10494
          %v10755 = vunpack.c.l.b16 %v10495
          %v10756 = vunpack.c.l.b16 %v10496
          %v10757 = vunpack.c.l.b16 %v10497
          %v10758 = vunpack.c.l.b16 %v10498
          %v10759 = vunpack.c.l.b16 %v10499
          %v10760 = vunpack.c.l.b16 %v10500
          %v10761 = vunpack.c.l.b16 %v10501
          %v10762 = vunpack.c.l.b16 %v10502
          %v10763 = vunpack.c.l.b16 %v10503
          %v10764 = vunpack.c.l.b16 %v10504
          %v10765 = vunpack.c.l.b16 %v10505
          %v10766 = vunpack.c.l.b16 %v10506
          %v10767 = vunpack.c.l.b16 %v10507
          %v10768 = vunpack.c.l.b16 %v10508
          %v10769 = vunpack.c.l.b16 %v10509
          %v10770 = vunpack.c.l.b16 %v10510
          %v10771 = vunpack.c.l.b16 %v10511
          %v10772 = vunpack.c.l.b16 %v10512
          %v10773 = vunpack.c.l.b16 %v10513
          %v10774 = vunpack.c.l.b16 %v10514
          %v10775 = vunpack.c.l.b16 %v10515
          %v10776 = vunpack.c.l.b16 %v10516
          %v10777 = vunpack.c.l.b16 %v10517
          %v10778 = vunpack.c.l.b16 %v10518
          %v10779 = vunpack.c.l.b16 %v10519
          %v10780 = vunpack.c.l.b16 %v10520
          %v10781 = vunpack.c.l.b16 %v10521
          %v10782 = vunpack.c.l.b16 %v10522
          %v10783 = vunpack.c.l.b16 %v10523
          %v10784 = vunpack.c.l.b16 %v10524
          %v10785 = vunpack.c.l.b16 %v10525
          %v10786 = vunpack.c.l.b16 %v10526
          %v10787 = vunpack.c.l.b16 %v10527
          %v10788 = vunpack.c.l.b16 %v10528
          %v10789 = vunpack.c.l.b16 %v10529
          %v10790 = vunpack.c.l.b16 %v10530
          %v10791 = vunpack.c.l.b16 %v10531
          %v10792 = vunpack.c.l.b16 %v10532
          %v10793 = vunpack.c.l.b16 %v10533
          %v10794 = vunpack.c.l.b16 %v10534
          %v10795 = vunpack.c.l.b16 %v10535
          %v10796 = vunpack.c.l.b16 %v10536
          %v10797 = vunpack.c.l.b16 %v10537
          %v10798 = vunpack.c.l.b16 %v10538
          %v10799 = vunpack.c.l.b16 %v10539
          %v10800 = vunpack.c.l.b16 %v10540
          %v10801 = vunpack.c.l.b16 %v10541
          %v10802 = vunpack.c.l.b16 %v10542
          %v10803 = vunpack.c.l.b16 %v10543
          %v10804 = vunpack.c.l.b16 %v10544
          %v10805 = vunpack.c.l.b16 %v10545
          %v10806 = vunpack.c.l.b16 %v10546
          %v10807 = vunpack.c.l.b16 %v10547
          %v10808 = vunpack.c.l.b16 %v10548
          %v10809 = vunpack.c.l.b16 %v10549
          %v10810 = vunpack.c.l.b16 %v10550
          %v10811 = vunpack.c.l.b16 %v10551
          %v10812 = vunpack.c.l.b16 %v10552
          %v10813 = vunpack.c.l.b16 %v10553
          %v10814 = vunpack.c.l.b16 %v10554
          %v10815 = vunpack.c.l.b16 %v10555
          %v10816 = vunpack.c.l.b16 %v10556
          %v10817 = vunpack.c.l.b16 %v10557
          %v10818 = vunpack.c.l.b16 %v10558
          %v10819 = vunpack.c.l.b16 %v10559
          %v10820 = vunpack.c.l.b16 %v10560
          %v10821 = vunpack.c.l.b16 %v10561
          %v10822 = vunpack.c.l.b16 %v10562
          %v10823 = vunpack.c.l.b16 %v10563
          %v10824 = vpack.c.b16 %v10697, %v10696
          %v10825 = vpack.c.b16 %v10699, %v10698
          %v10826 = vpack.c.b16 %v10701, %v10700
          %v10827 = vpack.c.b16 %v10703, %v10702
          %v10828 = vpack.c.b16 %v10705, %v10704
          %v10829 = vpack.c.b16 %v10707, %v10706
          %v10830 = vpack.c.b16 %v10709, %v10708
          %v10831 = vpack.c.b16 %v10711, %v10710
          %v10832 = vpack.c.b16 %v10713, %v10712
          %v10833 = vpack.c.b16 %v10715, %v10714
          %v10834 = vpack.c.b16 %v10717, %v10716
          %v10835 = vpack.c.b16 %v10719, %v10718
          %v10836 = vpack.c.b16 %v10721, %v10720
          %v10837 = vpack.c.b16 %v10723, %v10722
          %v10838 = vpack.c.b16 %v10725, %v10724
          %v10839 = vpack.c.b16 %v10727, %v10726
          %v10840 = vpack.c.b16 %v10729, %v10728
          %v10841 = vpack.c.b16 %v10731, %v10730
          %v10842 = vpack.c.b16 %v10733, %v10732
          %v10843 = vpack.c.b16 %v10735, %v10734
          %v10844 = vpack.c.b16 %v10737, %v10736
          %v10845 = vpack.c.b16 %v10739, %v10738
          %v10846 = vpack.c.b16 %v10741, %v10740
          %v10847 = vpack.c.b16 %v10743, %v10742
          %v10848 = vpack.c.b16 %v10745, %v10744
          %v10849 = vpack.c.b16 %v10747, %v10746
          %v10850 = vpack.c.b16 %v10749, %v10748
          %v10851 = vpack.c.b16 %v10751, %v10750
          %v10852 = vpack.c.b16 %v10753, %v10752
          %v10853 = vpack.c.b16 %v10755, %v10754
          %v10854 = vpack.c.b16 %v10757, %v10756
          %v10855 = vpack.c.b16 %v10759, %v10758
          %v10856 = vpack.c.b16 %v10761, %v10760
          %v10857 = vpack.c.b16 %v10763, %v10762
          %v10858 = vpack.c.b16 %v10765, %v10764
          %v10859 = vpack.c.b16 %v10767, %v10766
          %v10860 = vpack.c.b16 %v10769, %v10768
          %v10861 = vpack.c.b16 %v10771, %v10770
          %v10862 = vpack.c.b16 %v10773, %v10772
          %v10863 = vpack.c.b16 %v10775, %v10774
          %v10864 = vpack.c.b16 %v10777, %v10776
          %v10865 = vpack.c.b16 %v10779, %v10778
          %v10866 = vpack.c.b16 %v10781, %v10780
          %v10867 = vpack.c.b16 %v10783, %v10782
          %v10868 = vpack.c.b16 %v10785, %v10784
          %v10869 = vpack.c.b16 %v10787, %v10786
          %v10870 = vpack.c.b16 %v10789, %v10788
          %v10871 = vpack.c.b16 %v10791, %v10790
          %v10872 = vpack.c.b16 %v10793, %v10792
          %v10873 = vpack.c.b16 %v10795, %v10794
          %v10874 = vpack.c.b16 %v10797, %v10796
          %v10875 = vpack.c.b16 %v10799, %v10798
          %v10876 = vpack.c.b16 %v10801, %v10800
          %v10877 = vpack.c.b16 %v10803, %v10802
          %v10878 = vpack.c.b16 %v10805, %v10804
          %v10879 = vpack.c.b16 %v10807, %v10806
          %v10880 = vpack.c.b16 %v10809, %v10808
          %v10881 = vpack.c.b16 %v10811, %v10810
          %v10882 = vpack.c.b16 %v10813, %v10812
          %v10883 = vpack.c.b16 %v10815, %v10814
          %v10884 = vpack.c.b16 %v10817, %v10816
          %v10885 = vpack.c.b16 %v10819, %v10818
          %v10886 = vpack.c.b16 %v10821, %v10820
          %v10887 = vpack.c.b16 %v10823, %v10822
          %10952 = vmatpush.bf16.msra.mxu0 %v10831
          %10953 = vmatpush.bf16.msra.mxu0 %v10830
          %10954 = vmatpush.bf16.msra.mxu0 %v10829
          %10955 = vmatpush.bf16.msra.mxu0 %v10828
          %10956 = vmatpush.bf16.msra.mxu0 %v10827
          %10957 = vmatpush.bf16.msra.mxu0 %v10826
          %10958 = vmatpush.bf16.msra.mxu0 %v10825
          %10959 = vmatpush.bf16.msra.mxu0 %v10824
          %10960 = vmatmul.bf16.gmra.mxu0 %v10428
          %v10961 = vpop.f32.mrf.mxu0
          %v10962 = vadd.f32 %v10566, %v10961
          %v10963 = vpop.f32.mrf.mxu0
          %10964 = vdwg.mxu0
          %10965 = vmatpush.bf16.msra.mxu0 %v10839
          %10966 = vmatpush.bf16.msra.mxu0 %v10838
          %10967 = vmatpush.bf16.msra.mxu0 %v10837
          %10968 = vmatpush.bf16.msra.mxu0 %v10836
          %10969 = vmatpush.bf16.msra.mxu0 %v10835
          %10970 = vmatpush.bf16.msra.mxu0 %v10834
          %10971 = vmatpush.bf16.msra.mxu0 %v10833
          %10972 = vmatpush.bf16.msra.mxu0 %v10832
          %10973 = vmatmul.bf16.gmra.mxu0 %v10429
          %v10974 = vpop.f32.mrf.mxu0
          %v10975 = vadd.f32 %v10962, %v10974
          %v10976 = vpop.f32.mrf.mxu0
          %10977 = vdwg.mxu0
          %10978 = vmatpush.bf16.msra.mxu0 %v10847
          %10979 = vmatpush.bf16.msra.mxu0 %v10846
          %10980 = vmatpush.bf16.msra.mxu0 %v10845
          %10981 = vmatpush.bf16.msra.mxu0 %v10844
          %10982 = vmatpush.bf16.msra.mxu0 %v10843
          %10983 = vmatpush.bf16.msra.mxu0 %v10842
          %10984 = vmatpush.bf16.msra.mxu0 %v10841
          %10985 = vmatpush.bf16.msra.mxu0 %v10840
          %10986 = vmatmul.bf16.gmra.mxu0 %v10430
          %v10987 = vpop.f32.mrf.mxu0
          %v10988 = vadd.f32 %v10975, %v10987
          %v10989 = vpop.f32.mrf.mxu0
          %10990 = vdwg.mxu0
          %10991 = vmatpush.bf16.msra.mxu0 %v10855
          %10992 = vmatpush.bf16.msra.mxu0 %v10854
          %10993 = vmatpush.bf16.msra.mxu0 %v10853
          %10994 = vmatpush.bf16.msra.mxu0 %v10852
          %10995 = vmatpush.bf16.msra.mxu0 %v10851
          %10996 = vmatpush.bf16.msra.mxu0 %v10850
          %10997 = vmatpush.bf16.msra.mxu0 %v10849
          %10998 = vmatpush.bf16.msra.mxu0 %v10848
          %10999 = vmatmul.bf16.gmra.mxu0 %v10431
          %v11000 = vpop.f32.mrf.mxu0
          %v11001 = vadd.f32 %v10988, %v11000
          %v11002 = vpop.f32.mrf.mxu0
          %11003 = vdwg.mxu0
          %11004 = vmatpush.bf16.msra.mxu0 %v10863
          %11005 = vmatpush.bf16.msra.mxu0 %v10862
          %11006 = vmatpush.bf16.msra.mxu0 %v10861
          %11007 = vmatpush.bf16.msra.mxu0 %v10860
          %11008 = vmatpush.bf16.msra.mxu0 %v10859
          %11009 = vmatpush.bf16.msra.mxu0 %v10858
          %11010 = vmatpush.bf16.msra.mxu0 %v10857
          %11011 = vmatpush.bf16.msra.mxu0 %v10856
          %11012 = vmatmul.bf16.gmra.mxu0 %v10432
          %v11013 = vpop.f32.mrf.mxu0
          %v11014 = vadd.f32 %v11001, %v11013
          %v11015 = vpop.f32.mrf.mxu0
          %11016 = vdwg.mxu0
          %11017 = vmatpush.bf16.msra.mxu0 %v10871
          %11018 = vmatpush.bf16.msra.mxu0 %v10870
          %11019 = vmatpush.bf16.msra.mxu0 %v10869
          %11020 = vmatpush.bf16.msra.mxu0 %v10868
          %11021 = vmatpush.bf16.msra.mxu0 %v10867
          %11022 = vmatpush.bf16.msra.mxu0 %v10866
          %11023 = vmatpush.bf16.msra.mxu0 %v10865
          %11024 = vmatpush.bf16.msra.mxu0 %v10864
          %11025 = vmatmul.bf16.gmra.mxu0 %v10433
          %v11026 = vpop.f32.mrf.mxu0
          %v11027 = vadd.f32 %v11014, %v11026
          %v11028 = vpop.f32.mrf.mxu0
          %11029 = vdwg.mxu0
          %11030 = vmatpush.bf16.msra.mxu0 %v10879
          %11031 = vmatpush.bf16.msra.mxu0 %v10878
          %11032 = vmatpush.bf16.msra.mxu0 %v10877
          %11033 = vmatpush.bf16.msra.mxu0 %v10876
          %11034 = vmatpush.bf16.msra.mxu0 %v10875
          %11035 = vmatpush.bf16.msra.mxu0 %v10874
          %11036 = vmatpush.bf16.msra.mxu0 %v10873
          %11037 = vmatpush.bf16.msra.mxu0 %v10872
          %11038 = vmatmul.bf16.gmra.mxu0 %v10434
          %v11039 = vpop.f32.mrf.mxu0
          %v11040 = vadd.f32 %v11027, %v11039
          %v11041 = vpop.f32.mrf.mxu0
          %11042 = vdwg.mxu0
          %11043 = vmatpush.bf16.msra.mxu0 %v10887
          %11044 = vmatpush.bf16.msra.mxu0 %v10886
          %11045 = vmatpush.bf16.msra.mxu0 %v10885
          %11046 = vmatpush.bf16.msra.mxu0 %v10884
          %11047 = vmatpush.bf16.msra.mxu0 %v10883
          %11048 = vmatpush.bf16.msra.mxu0 %v10882
          %11049 = vmatpush.bf16.msra.mxu0 %v10881
          %11050 = vmatpush.bf16.msra.mxu0 %v10880
          %11051 = vmatmul.bf16.gmra.mxu0 %v10435
          %v11052 = vpop.f32.mrf.mxu0
          %v11053 = vadd.f32 %v11040, %v11052
          %v11054 = vpop.f32.mrf.mxu0
          %11055 = vdwg.mxu0
          %vm11056 = vcmask 25600
          %11057 = vst.msk [vmem:[#allocation5] sm:$0x3] %vm11056, %v11053
        $region72: #{dqn_forward.1} parent=63 // pred_fallthru
          _
        // Predicated region
        $region73: #{dqn_forward.1} parent=63 // pred_check
          %p11058 = pneg %p272
        $region74: #{dqn_forward.1} parent=63 // pred_check_branch
          %11060 = sbr.rel (%p11058) target = $region76
        $region75: #{dqn_forward.1} parent=63 // pred_region
          %11062 = vsyncadd [#allocation6], 0
          %s11064 = sshll.u32 [#allocation5], 4
          %s11065 = int_to_ptr.vmem [resolvable:$true] %s11064
          %s11066 = sshll.u32 %s11, 4
          %s11067 = int_to_ptr.hbm [resolvable:$true] %s11066
          %11069 = dma.vmem_to_hbm [thread:$0]  %s11065, 32, %s11067, [#allocation6]
        $region76: #{dqn_forward.1} parent=63 // pred_fallthru
          _
        // Predicated region
        $region77: #{dqn_forward.1} parent=63 // pred_check
          %p11070 = pneg %p272
        $region78: #{dqn_forward.1} parent=63 // pred_check_branch
          %11072 = sbr.rel (%p11070) target = $region80
        $region79: #{dqn_forward.1} parent=63 // pred_region
          %11074 = dma.done [#allocation6], 32
        $region80: #{dqn_forward.1} parent=63 // pred_fallthru
          _
      $region64: #{dqn_forward.1} parent=5 // pred_fallthru
        _
      %p11075 = scmp.le.s32.totalorder 2, %s18
      // Predicated region
      $region81: #{dqn_forward.1} parent=5 // pred_check
        %p11076 = pneg %p11075
      $region82: #{dqn_forward.1} parent=5 // pred_check_branch
        %11078 = sbr.rel (%p11076) target = $region84
      $region83: #{dqn_forward.1} parent=5 // pred_region
        %s11079 = ssub.s32 %s18, 2
      $region84: #{dqn_forward.1} parent=5 // pred_fallthru
        _
    $region6: #{dqn_forward.1} parent=1 // loop_footer
      %s22 = sadd.s32 1, %s18
    $region7: #{dqn_forward.1} parent=1 // loop_footer_branch
      %17 = sbr.rel target = $region3
    $region8: #{dqn_forward.1} parent=1 // loop_exit
      _
    %11080 = vsyncpa [#allocation6], 1
    %s11081 = scalar_lea.sflag [#allocation6], 1
    %11082 = vsyncpa %s11081, 1

</llo_original>
